<compile_context>
chip_gen: v5e
topology: v5e:2x2
jax: 0.10.0
libtpu: 0.0.40
codegen_flags: <defaults>
</compile_context>

<pallas_src>
import numpy as np
import jax
import jax.numpy as jnp
from jax import lax
from jax.experimental import pallas as pl
from jax.experimental.pallas import tpu as pltpu

NUM_ACTIONS = 3
PAD_N = 128        # lane padding for the merged actor/critic head
PLANE = 112        # rows per (parity-plane) block of conv1 output: 10*10 real + 12 pad
GRID2 = 96         # conv2/conv3 are evaluated on 96 rows of the padded 10x10 grid
NEG = -1e30        # softmax mask baked into the actor bias lanes

# 49 valid conv3 positions (7x7 inside the padded 10x10 grid) + 3 dummies so the
# flattened hidden-layer K = 52*32 = 1664 is a multiple of 128 lanes.
VALID_IDX = np.array([oh * 10 + ow for oh in range(7) for ow in range(7)] + [0, 0, 0],
                     dtype=np.int32)
HID_K = VALID_IDX.size * 32     # 1664


# ----------------------------- Pallas kernels ------------------------------

def _convnet_kernel(x1_ref, w1_ref, b1_ref, w2_ref, b2_ref, w3_ref, b3_ref,
                    out_ref, a1_s, s2_s):
    """Fused conv1+conv2+conv3 for one batch element (one grid step)."""
    # conv1 (8x8, stride 4): one big im2col matmul; rows are parity-plane ordered.
    a1 = jnp.dot(x1_ref[0], w1_ref[...], preferred_element_type=jnp.float32)
    a1_s[...] = jnp.maximum(a1 + b1_ref[...], 0.0)          # (448, 32) f32 in VMEM

    # conv2 (4x4, stride 2): 16 shifted matmuls over the parity planes.
    acc2 = jnp.zeros((GRID2, 64), jnp.float32)
    for ki in range(4):
        for kj in range(4):
            plane = (ki % 2) * 2 + (kj % 2)
            start = plane * PLANE + (ki // 2) * 10 + (kj // 2)
            src = a1_s[start:start + GRID2, :].astype(jnp.bfloat16)
            wblk = w2_ref[(ki * 4 + kj) * 32:(ki * 4 + kj) * 32 + 32, :]
            acc2 = acc2 + jnp.dot(src, wblk, preferred_element_type=jnp.float32)
    # Store on a padded grid (rows >= 96 zeroed so conv3's shifted reads are finite).
    s2_s[GRID2:128, :] = jnp.zeros((128 - GRID2, 64), jnp.float32)
    s2_s[0:GRID2, :] = jnp.maximum(acc2 + b2_ref[...], 0.0)

    # conv3 (3x3, stride 1): 9 shifted matmuls.
    acc3 = jnp.zeros((GRID2, 32), jnp.float32)
    for ki in range(3):
        for kj in range(3):
            start = ki * 10 + kj
            src = s2_s[start:start + GRID2, :].astype(jnp.bfloat16)
            wblk = w3_ref[(ki * 3 + kj) * 64:(ki * 3 + kj) * 64 + 64, :]
            acc3 = acc3 + jnp.dot(src, wblk, preferred_element_type=jnp.float32)
    out_ref[0] = jnp.maximum(acc3 + b3_ref[...], 0.0).astype(out_ref.dtype)


def _mlp_heads_kernel(flat_ref, wh_ref, bh_ref, whd_ref, bhd_ref, amask_ref,
                      actor_ref, z_ref):
    """hidden linear + merged actor/critic head (actor lanes 0-2, critic lane 3)."""
    hid = jnp.dot(flat_ref[...], wh_ref[...], preferred_element_type=jnp.float32)
    hid = jnp.maximum(hid + bh_ref[...], 0.0).astype(jnp.bfloat16)
    z = jnp.dot(hid, whd_ref[...], preferred_element_type=jnp.float32)
    z_ref[...] = z + bhd_ref[...]                  # lane 3 carries the critic value
    logits = z + amask_ref[...]                    # actor bias on lanes 0-2, -1e30 elsewhere
    m = jnp.max(logits, axis=1, keepdims=True)
    e = jnp.exp(logits - m)
    actor_ref[...] = e / jnp.sum(e, axis=1, keepdims=True)


# ------------------------------- wrappers ----------------------------------

def _im2col_conv1_parity(x):
    """x:(B,4,84,84) NCHW -> (B, 4*PLANE, 256) bf16.

    conv1 im2col rows ordered by stride-2 parity planes (pi,pj) of the 20x20
    output, 10x10 real rows + 12 zero rows per plane, features in (c,ki,kj)
    order (matching PyTorch's weight.reshape(32, 256))."""
    B = x.shape[0]
    slabs = []
    for ki in range(8):
        for kj in range(8):
            slabs.append(x[:, :, ki:ki + 77:4, kj:kj + 77:4])      # (B,4,20,20)
    col = jnp.stack(slabs, axis=0).reshape(8, 8, B, 4, 20, 20)
    col = col.reshape(8, 8, B, 4, 10, 2, 10, 2)      # (ki,kj,b,c,i,pi,j,pj)
    col = col.transpose(2, 5, 7, 4, 6, 3, 0, 1)      # (b,pi,pj,i,j,c,ki,kj)
    col = col.reshape(B, 4, 100, 256)
    col = jnp.pad(col, ((0, 0), (0, 0), (0, PLANE - 100), (0, 0)))
    return col.reshape(B, 4 * PLANE, 256).astype(jnp.bfloat16)


def conv_stack(x1, kp):
    B = x1.shape[0]
    return pl.pallas_call(
        _convnet_kernel,
        out_shape=jax.ShapeDtypeStruct((B, GRID2, 32), jnp.bfloat16),
        grid_spec=pltpu.PrefetchScalarGridSpec(
            num_scalar_prefetch=0,
            grid=(B,),
            in_specs=[
                pl.BlockSpec((1, 4 * PLANE, 256), lambda b: (b, 0, 0)),
                pl.BlockSpec((256, 32), lambda b: (0, 0)),
                pl.BlockSpec((1, 32), lambda b: (0, 0)),
                pl.BlockSpec((512, 64), lambda b: (0, 0)),
                pl.BlockSpec((1, 64), lambda b: (0, 0)),
                pl.BlockSpec((576, 32), lambda b: (0, 0)),
                pl.BlockSpec((1, 32), lambda b: (0, 0)),
            ],
            out_specs=pl.BlockSpec((1, GRID2, 32), lambda b: (b, 0, 0)),
            scratch_shapes=[pltpu.VMEM((4 * PLANE, 32), jnp.float32),   # conv1 out
                            pltpu.VMEM((128, 64), jnp.float32)],        # conv2 out
        ),
        compiler_params=pltpu.CompilerParams(dimension_semantics=("parallel",)),
    )(x1, kp["w1"], kp["b1"], kp["w2"], kp["b2"], kp["w3"], kp["b3"])


def mlp_heads(flat, kp):
    B = flat.shape[0]
    actor_p, z = pl.pallas_call(
        _mlp_heads_kernel,
        out_shape=(jax.ShapeDtypeStruct((B, PAD_N), jnp.float32),
                   jax.ShapeDtypeStruct((B, PAD_N), jnp.float32)),
        in_specs=[pl.BlockSpec(memory_space=pltpu.MemorySpace.VMEM)] * 6,
        out_specs=(pl.BlockSpec(memory_space=pltpu.MemorySpace.VMEM),
                   pl.BlockSpec(memory_space=pltpu.MemorySpace.VMEM)),
    )(flat, kp["wh"], kp["bh"], kp["whd"], kp["bhd"], kp["amask"])
    return actor_p[:, :NUM_ACTIONS], z[:, NUM_ACTIONS:NUM_ACTIONS + 1]


def actor_critic_forward(x, kp):
    B = x.shape[0]
    x1 = _im2col_conv1_parity(x)                      # (B, 448, 256) bf16
    out1 = conv_stack(x1, kp)                         # (B, 96, 32) bf16 conv3 grid
    flat = out1[:, VALID_IDX, :].reshape(B, HID_K)    # (B, 1664) bf16 (tiny gather)
    return mlp_heads(flat, kp)


# ----------------------------- parameter init ------------------------------

def orthogonal(key, shape, gain):
    """Deterministic orthogonal init (QR of a Gaussian), PyTorch-style flatten."""
    rows = shape[0]
    cols = int(np.prod(shape[1:]))
    big, small = max(rows, cols), min(rows, cols)
    a = jax.random.normal(key, (big, small), dtype=jnp.float32)
    q, r = jnp.linalg.qr(a)
    q = q * jnp.sign(jnp.diagonal(r))
    if rows < cols:
        q = q.T
    return (gain * q).reshape(shape).astype(jnp.float32)


def init_params(key):
    ks = jax.random.split(key, 6)
    g = 2.0 ** 0.5
    return {
        "w1": orthogonal(ks[0], (32, 4, 8, 8), g),   "b1": jnp.zeros((32,), jnp.float32),
        "w2": orthogonal(ks[1], (64, 32, 4, 4), g),  "b2": jnp.zeros((64,), jnp.float32),
        "w3": orthogonal(ks[2], (32, 64, 3, 3), g),  "b3": jnp.zeros((32,), jnp.float32),
        "wh": orthogonal(ks[3], (512, 32 * 7 * 7), g), "bh": jnp.zeros((512,), jnp.float32),
        "wa": orthogonal(ks[4], (3, 512), 1.0),      "ba": jnp.zeros((3,), jnp.float32),
        "wc": orthogonal(ks[5], (1, 512), 1.0),      "bc": jnp.zeros((1,), jnp.float32),
    }


def prepare_params(p):
    """One-time kernel-ready layout of the weights (no per-step transposes)."""
    bf = lambda a: a.astype(jnp.bfloat16)
    w1 = bf(p["w1"].reshape(32, 256).T)                              # K order (c,ki,kj)
    w2 = bf(p["w2"].transpose(2, 3, 1, 0).reshape(16 * 32, 64))      # rows (ki,kj,cin)
    w3 = bf(p["w3"].transpose(2, 3, 1, 0).reshape(9 * 64, 32))       # rows (ki,kj,cin)
    # hidden: PyTorch flatten order (c,oh,ow) -> our gathered order (oh,ow,c),
    # zero-padded to HID_K rows (3 dummy spatial positions).
    wh = p["wh"].reshape(512, 32, 7, 7).transpose(0, 2, 3, 1).reshape(512, 49 * 32).T
    wh = bf(jnp.zeros((HID_K, 512), jnp.float32).at[:49 * 32, :].set(wh))
    # merged head: actor in lanes 0-2, critic in lane 3, rest zero.
    whd = jnp.zeros((512, PAD_N), jnp.float32)
    whd = whd.at[:, 0:NUM_ACTIONS].set(p["wa"].T)
    whd = whd.at[:, NUM_ACTIONS:NUM_ACTIONS + 1].set(p["wc"].T)
    bhd = jnp.zeros((1, PAD_N), jnp.float32)
    bhd = bhd.at[0, 0:NUM_ACTIONS].set(p["ba"]).at[0, NUM_ACTIONS].set(p["bc"][0])
    amask = jnp.full((1, PAD_N), NEG, jnp.float32).at[0, 0:NUM_ACTIONS].set(p["ba"])
    return {
        "w1": w1, "b1": p["b1"].reshape(1, 32),
        "w2": w2, "b2": p["b2"].reshape(1, 64),
        "w3": w3, "b3": p["b3"].reshape(1, 32),
        "wh": wh, "bh": p["bh"].reshape(1, 512),
        "whd": bf(whd), "bhd": bhd, "amask": amask,
    }


# ------------------------------ reference ----------------------------------

def reference_forward(x, p):
    def conv(x, w, b, s):
        y = lax.conv_general_dilated(x, w, (s, s), "VALID",
                                     dimension_numbers=("NCHW", "OIHW", "NCHW"))
        return jax.nn.relu(y + b[None, :, None, None])
    h = conv(x, p["w1"], p["b1"], 4)
    h = conv(h, p["w2"], p["b2"], 2)
    h = conv(h, p["w3"], p["b3"], 1)
    flat = h.reshape(x.shape[0], -1)
    hid = jax.nn.relu(flat @ p["wh"].T + p["bh"])
    actor = jax.nn.softmax(hid @ p["wa"].T + p["ba"], axis=1)
    critic = hid @ p["wc"].T + p["bc"]
    return actor, critic


if __name__ == "__main__":
    key = jax.random.PRNGKey(0)
    kx, kparam = jax.random.split(key)
    # The architecture (hidden = Linear(32*7*7, 512)) implies 84x84 spatial input.
    x = jax.random.normal(kx, (2, 4, 84, 84), dtype=jnp.float32)
    params = init_params(kparam)
    kernel_params = prepare_params(params)          # one-time weight layout / padding

    fwd = jax.jit(actor_critic_forward)
    actor, critic = fwd(x, kernel_params)
    actor = jax.block_until_ready(actor)
    critic = jax.block_until_ready(critic)

    assert actor.shape == (2, 3) and critic.shape == (2, 1)
    assert bool(jnp.all(jnp.isfinite(actor))) and bool(jnp.all(jnp.isfinite(critic)))
    assert bool(jnp.allclose(jnp.sum(actor, axis=1), 1.0, atol=1e-5))

    a_ref, c_ref = reference_forward(x, params)
    # bf16 matmul operands with f32 accumulation -> compare at 2e-2.
    assert bool(jnp.allclose(actor, a_ref, rtol=2e-2, atol=2e-2))
    assert bool(jnp.allclose(critic, c_ref, rtol=2e-2, atol=2e-2))

    print("KERNEL_OK")
</pallas_src>

<mosaic_0001>
module attributes {stable_mosaic.version = 11 : i64} {
  func.func @_convnet_kernel(%arg0: i32, %arg1: memref<1x448x256xbf16, #tpu.memory_space<vmem>>, %arg2: memref<256x32xbf16, #tpu.memory_space<vmem>>, %arg3: memref<1x32xf32, #tpu.memory_space<vmem>>, %arg4: memref<512x64xbf16, #tpu.memory_space<vmem>>, %arg5: memref<1x64xf32, #tpu.memory_space<vmem>>, %arg6: memref<576x32xbf16, #tpu.memory_space<vmem>>, %arg7: memref<1x32xf32, #tpu.memory_space<vmem>>, %arg8: memref<1x96x32xbf16, #tpu.memory_space<vmem>>, %arg9: memref<448x32xf32, #tpu.memory_space<vmem>>, %arg10: memref<128x64xf32, #tpu.memory_space<vmem>>) attributes {dimension_semantics = [#tpu.dimension_semantics<parallel>], iteration_bounds = array<i64: 2>, scalar_prefetch = 0 : i64, scratch_operands = 2 : i64, tpu.core_type = #tpu.core_type<tc>, window_params = [{transform_indices = @transform_0, window_bounds = array<i64: 1, 448, 256>}, {pipeline_mode = #tpu.pipeline_mode<synchronous>, transform_indices = @transform_1, window_bounds = array<i64: 256, 32>}, {pipeline_mode = #tpu.pipeline_mode<synchronous>, transform_indices = @transform_2, window_bounds = array<i64: 1, 32>}, {pipeline_mode = #tpu.pipeline_mode<synchronous>, transform_indices = @transform_3, window_bounds = array<i64: 512, 64>}, {pipeline_mode = #tpu.pipeline_mode<synchronous>, transform_indices = @transform_4, window_bounds = array<i64: 1, 64>}, {pipeline_mode = #tpu.pipeline_mode<synchronous>, transform_indices = @transform_5, window_bounds = array<i64: 576, 32>}, {pipeline_mode = #tpu.pipeline_mode<synchronous>, transform_indices = @transform_6, window_bounds = array<i64: 1, 32>}, {transform_indices = @transform_7, window_bounds = array<i64: 1, 96, 32>}]} {
    %c0 = arith.constant 0 : index
    %c0_0 = arith.constant 0 : index
    %c0_1 = arith.constant 0 : index
    %0 = vector.load %arg1[%c0, %c0_0, %c0_1] : memref<1x448x256xbf16, #tpu.memory_space<vmem>>, vector<1x448x256xbf16>
    %1 = vector.shape_cast %0 : vector<1x448x256xbf16> to vector<448x256xbf16>
    %c0_2 = arith.constant 0 : index
    %c0_3 = arith.constant 0 : index
    %2 = vector.load %arg2[%c0_2, %c0_3] : memref<256x32xbf16, #tpu.memory_space<vmem>>, vector<256x32xbf16>
    %cst = arith.constant dense<0.000000e+00> : vector<448x32xf32>
    %3 = tpu.matmul %1, %2, %cst {dimension_numbers = #tpu.dot_dimension_numbers<[1], [0], [0], [1], [0, 0, 1, 1], [], []>} : vector<448x256xbf16>, vector<256x32xbf16>, vector<448x32xf32> -> vector<448x32xf32>
    %c0_4 = arith.constant 0 : index
    %c0_5 = arith.constant 0 : index
    %4 = vector.load %arg3[%c0_4, %c0_5] : memref<1x32xf32, #tpu.memory_space<vmem>>, vector<1x32xf32>
    %5 = vector.broadcast %4 : vector<1x32xf32> to vector<448x32xf32>
    %6 = arith.addf %3, %5 : vector<448x32xf32>
    %cst_6 = arith.constant 0.000000e+00 : f32
    %7 = vector.broadcast %cst_6 : f32 to vector<448x32xf32>
    %8 = arith.maximumf %6, %7 : vector<448x32xf32>
    %c0_7 = arith.constant 0 : index
    %c0_8 = arith.constant 0 : index
    %9 = vector.load %arg9[%c0_7, %c0_8] : memref<448x32xf32, #tpu.memory_space<vmem>>, vector<448x32xf32>
    tpu.vector_store %arg9[%c0_7, %c0_8], %8 {strides = array<i32>} : memref<448x32xf32, #tpu.memory_space<vmem>>, vector<448x32xf32>,
    %cst_9 = arith.constant 0.000000e+00 : f32
    %10 = vector.broadcast %cst_9 : f32 to vector<96x64xf32>
    %c0_10 = arith.constant 0 : index
    %c0_11 = arith.constant 0 : index
    %11 = vector.load %arg9[%c0_10, %c0_11] : memref<448x32xf32, #tpu.memory_space<vmem>>, vector<96x32xf32>
    %12 = arith.truncf %11 : vector<96x32xf32> to vector<96x32xbf16>
    %c0_12 = arith.constant 0 : index
    %c0_13 = arith.constant 0 : index
    %13 = vector.load %arg4[%c0_12, %c0_13] : memref<512x64xbf16, #tpu.memory_space<vmem>>, vector<32x64xbf16>
    %cst_14 = arith.constant dense<0.000000e+00> : vector<96x64xf32>
    %14 = tpu.matmul %12, %13, %cst_14 {dimension_numbers = #tpu.dot_dimension_numbers<[1], [0], [0], [1], [0, 0, 1, 1], [], []>} : vector<96x32xbf16>, vector<32x64xbf16>, vector<96x64xf32> -> vector<96x64xf32>
    %15 = arith.addf %10, %14 : vector<96x64xf32>
    %c112 = arith.constant 112 : index
    %c0_15 = arith.constant 0 : index
    %16 = vector.load %arg9[%c112, %c0_15] : memref<448x32xf32, #tpu.memory_space<vmem>>, vector<96x32xf32>
    %17 = arith.truncf %16 : vector<96x32xf32> to vector<96x32xbf16>
    %c32 = arith.constant 32 : index
    %c0_16 = arith.constant 0 : index
    %18 = vector.load %arg4[%c32, %c0_16] : memref<512x64xbf16, #tpu.memory_space<vmem>>, vector<32x64xbf16>
    %cst_17 = arith.constant dense<0.000000e+00> : vector<96x64xf32>
    %19 = tpu.matmul %17, %18, %cst_17 {dimension_numbers = #tpu.dot_dimension_numbers<[1], [0], [0], [1], [0, 0, 1, 1], [], []>} : vector<96x32xbf16>, vector<32x64xbf16>, vector<96x64xf32> -> vector<96x64xf32>
    %20 = arith.addf %15, %19 : vector<96x64xf32>
    %c1 = arith.constant 1 : index
    %c0_18 = arith.constant 0 : index
    %21 = vector.load %arg9[%c1, %c0_18] : memref<448x32xf32, #tpu.memory_space<vmem>>, vector<96x32xf32>
    %22 = arith.truncf %21 : vector<96x32xf32> to vector<96x32xbf16>
    %c64 = arith.constant 64 : index
    %c0_19 = arith.constant 0 : index
    %23 = vector.load %arg4[%c64, %c0_19] : memref<512x64xbf16, #tpu.memory_space<vmem>>, vector<32x64xbf16>
    %cst_20 = arith.constant dense<0.000000e+00> : vector<96x64xf32>
    %24 = tpu.matmul %22, %23, %cst_20 {dimension_numbers = #tpu.dot_dimension_numbers<[1], [0], [0], [1], [0, 0, 1, 1], [], []>} : vector<96x32xbf16>, vector<32x64xbf16>, vector<96x64xf32> -> vector<96x64xf32>
    %25 = arith.addf %20, %24 : vector<96x64xf32>
    %c113 = arith.constant 113 : index
    %c0_21 = arith.constant 0 : index
    %26 = vector.load %arg9[%c113, %c0_21] : memref<448x32xf32, #tpu.memory_space<vmem>>, vector<96x32xf32>
    %27 = arith.truncf %26 : vector<96x32xf32> to vector<96x32xbf16>
    %c96 = arith.constant 96 : index
    %c0_22 = arith.constant 0 : index
    %28 = vector.load %arg4[%c96, %c0_22] : memref<512x64xbf16, #tpu.memory_space<vmem>>, vector<32x64xbf16>
    %cst_23 = arith.constant dense<0.000000e+00> : vector<96x64xf32>
    %29 = tpu.matmul %27, %28, %cst_23 {dimension_numbers = #tpu.dot_dimension_numbers<[1], [0], [0], [1], [0, 0, 1, 1], [], []>} : vector<96x32xbf16>, vector<32x64xbf16>, vector<96x64xf32> -> vector<96x64xf32>
    %30 = arith.addf %25, %29 : vector<96x64xf32>
    %c224 = arith.constant 224 : index
    %c0_24 = arith.constant 0 : index
    %31 = vector.load %arg9[%c224, %c0_24] : memref<448x32xf32, #tpu.memory_space<vmem>>, vector<96x32xf32>
    %32 = arith.truncf %31 : vector<96x32xf32> to vector<96x32xbf16>
    %c128 = arith.constant 128 : index
    %c0_25 = arith.constant 0 : index
    %33 = vector.load %arg4[%c128, %c0_25] : memref<512x64xbf16, #tpu.memory_space<vmem>>, vector<32x64xbf16>
    %cst_26 = arith.constant dense<0.000000e+00> : vector<96x64xf32>
    %34 = tpu.matmul %32, %33, %cst_26 {dimension_numbers = #tpu.dot_dimension_numbers<[1], [0], [0], [1], [0, 0, 1, 1], [], []>} : vector<96x32xbf16>, vector<32x64xbf16>, vector<96x64xf32> -> vector<96x64xf32>
    %35 = arith.addf %30, %34 : vector<96x64xf32>
    %c336 = arith.constant 336 : index
    %c0_27 = arith.constant 0 : index
    %36 = vector.load %arg9[%c336, %c0_27] : memref<448x32xf32, #tpu.memory_space<vmem>>, vector<96x32xf32>
    %37 = arith.truncf %36 : vector<96x32xf32> to vector<96x32xbf16>
    %c160 = arith.constant 160 : index
    %c0_28 = arith.constant 0 : index
    %38 = vector.load %arg4[%c160, %c0_28] : memref<512x64xbf16, #tpu.memory_space<vmem>>, vector<32x64xbf16>
    %cst_29 = arith.constant dense<0.000000e+00> : vector<96x64xf32>
    %39 = tpu.matmul %37, %38, %cst_29 {dimension_numbers = #tpu.dot_dimension_numbers<[1], [0], [0], [1], [0, 0, 1, 1], [], []>} : vector<96x32xbf16>, vector<32x64xbf16>, vector<96x64xf32> -> vector<96x64xf32>
    %40 = arith.addf %35, %39 : vector<96x64xf32>
    %c225 = arith.constant 225 : index
    %c0_30 = arith.constant 0 : index
    %41 = vector.load %arg9[%c225, %c0_30] : memref<448x32xf32, #tpu.memory_space<vmem>>, vector<96x32xf32>
    %42 = arith.truncf %41 : vector<96x32xf32> to vector<96x32xbf16>
    %c192 = arith.constant 192 : index
    %c0_31 = arith.constant 0 : index
    %43 = vector.load %arg4[%c192, %c0_31] : memref<512x64xbf16, #tpu.memory_space<vmem>>, vector<32x64xbf16>
    %cst_32 = arith.constant dense<0.000000e+00> : vector<96x64xf32>
    %44 = tpu.matmul %42, %43, %cst_32 {dimension_numbers = #tpu.dot_dimension_numbers<[1], [0], [0], [1], [0, 0, 1, 1], [], []>} : vector<96x32xbf16>, vector<32x64xbf16>, vector<96x64xf32> -> vector<96x64xf32>
    %45 = arith.addf %40, %44 : vector<96x64xf32>
    %c337 = arith.constant 337 : index
    %c0_33 = arith.constant 0 : index
    %46 = vector.load %arg9[%c337, %c0_33] : memref<448x32xf32, #tpu.memory_space<vmem>>, vector<96x32xf32>
    %47 = arith.truncf %46 : vector<96x32xf32> to vector<96x32xbf16>
    %c224_34 = arith.constant 224 : index
    %c0_35 = arith.constant 0 : index
    %48 = vector.load %arg4[%c224_34, %c0_35] : memref<512x64xbf16, #tpu.memory_space<vmem>>, vector<32x64xbf16>
    %cst_36 = arith.constant dense<0.000000e+00> : vector<96x64xf32>
    %49 = tpu.matmul %47, %48, %cst_36 {dimension_numbers = #tpu.dot_dimension_numbers<[1], [0], [0], [1], [0, 0, 1, 1], [], []>} : vector<96x32xbf16>, vector<32x64xbf16>, vector<96x64xf32> -> vector<96x64xf32>
    %50 = arith.addf %45, %49 : vector<96x64xf32>
    %c10 = arith.constant 10 : index
    %c0_37 = arith.constant 0 : index
    %51 = vector.load %arg9[%c10, %c0_37] : memref<448x32xf32, #tpu.memory_space<vmem>>, vector<96x32xf32>
    %52 = arith.truncf %51 : vector<96x32xf32> to vector<96x32xbf16>
    %c256 = arith.constant 256 : index
    %c0_38 = arith.constant 0 : index
    %53 = vector.load %arg4[%c256, %c0_38] : memref<512x64xbf16, #tpu.memory_space<vmem>>, vector<32x64xbf16>
    %cst_39 = arith.constant dense<0.000000e+00> : vector<96x64xf32>
    %54 = tpu.matmul %52, %53, %cst_39 {dimension_numbers = #tpu.dot_dimension_numbers<[1], [0], [0], [1], [0, 0, 1, 1], [], []>} : vector<96x32xbf16>, vector<32x64xbf16>, vector<96x64xf32> -> vector<96x64xf32>
    %55 = arith.addf %50, %54 : vector<96x64xf32>
    %c122 = arith.constant 122 : index
    %c0_40 = arith.constant 0 : index
    %56 = vector.load %arg9[%c122, %c0_40] : memref<448x32xf32, #tpu.memory_space<vmem>>, vector<96x32xf32>
    %57 = arith.truncf %56 : vector<96x32xf32> to vector<96x32xbf16>
    %c288 = arith.constant 288 : index
    %c0_41 = arith.constant 0 : index
    %58 = vector.load %arg4[%c288, %c0_41] : memref<512x64xbf16, #tpu.memory_space<vmem>>, vector<32x64xbf16>
    %cst_42 = arith.constant dense<0.000000e+00> : vector<96x64xf32>
    %59 = tpu.matmul %57, %58, %cst_42 {dimension_numbers = #tpu.dot_dimension_numbers<[1], [0], [0], [1], [0, 0, 1, 1], [], []>} : vector<96x32xbf16>, vector<32x64xbf16>, vector<96x64xf32> -> vector<96x64xf32>
    %60 = arith.addf %55, %59 : vector<96x64xf32>
    %c11 = arith.constant 11 : index
    %c0_43 = arith.constant 0 : index
    %61 = vector.load %arg9[%c11, %c0_43] : memref<448x32xf32, #tpu.memory_space<vmem>>, vector<96x32xf32>
    %62 = arith.truncf %61 : vector<96x32xf32> to vector<96x32xbf16>
    %c320 = arith.constant 320 : index
    %c0_44 = arith.constant 0 : index
    %63 = vector.load %arg4[%c320, %c0_44] : memref<512x64xbf16, #tpu.memory_space<vmem>>, vector<32x64xbf16>
    %cst_45 = arith.constant dense<0.000000e+00> : vector<96x64xf32>
    %64 = tpu.matmul %62, %63, %cst_45 {dimension_numbers = #tpu.dot_dimension_numbers<[1], [0], [0], [1], [0, 0, 1, 1], [], []>} : vector<96x32xbf16>, vector<32x64xbf16>, vector<96x64xf32> -> vector<96x64xf32>
    %65 = arith.addf %60, %64 : vector<96x64xf32>
    %c123 = arith.constant 123 : index
    %c0_46 = arith.constant 0 : index
    %66 = vector.load %arg9[%c123, %c0_46] : memref<448x32xf32, #tpu.memory_space<vmem>>, vector<96x32xf32>
    %67 = arith.truncf %66 : vector<96x32xf32> to vector<96x32xbf16>
    %c352 = arith.constant 352 : index
    %c0_47 = arith.constant 0 : index
    %68 = vector.load %arg4[%c352, %c0_47] : memref<512x64xbf16, #tpu.memory_space<vmem>>, vector<32x64xbf16>
    %cst_48 = arith.constant dense<0.000000e+00> : vector<96x64xf32>
    %69 = tpu.matmul %67, %68, %cst_48 {dimension_numbers = #tpu.dot_dimension_numbers<[1], [0], [0], [1], [0, 0, 1, 1], [], []>} : vector<96x32xbf16>, vector<32x64xbf16>, vector<96x64xf32> -> vector<96x64xf32>
    %70 = arith.addf %65, %69 : vector<96x64xf32>
    %c234 = arith.constant 234 : index
    %c0_49 = arith.constant 0 : index
    %71 = vector.load %arg9[%c234, %c0_49] : memref<448x32xf32, #tpu.memory_space<vmem>>, vector<96x32xf32>
    %72 = arith.truncf %71 : vector<96x32xf32> to vector<96x32xbf16>
    %c384 = arith.constant 384 : index
    %c0_50 = arith.constant 0 : index
    %73 = vector.load %arg4[%c384, %c0_50] : memref<512x64xbf16, #tpu.memory_space<vmem>>, vector<32x64xbf16>
    %cst_51 = arith.constant dense<0.000000e+00> : vector<96x64xf32>
    %74 = tpu.matmul %72, %73, %cst_51 {dimension_numbers = #tpu.dot_dimension_numbers<[1], [0], [0], [1], [0, 0, 1, 1], [], []>} : vector<96x32xbf16>, vector<32x64xbf16>, vector<96x64xf32> -> vector<96x64xf32>
    %75 = arith.addf %70, %74 : vector<96x64xf32>
    %c346 = arith.constant 346 : index
    %c0_52 = arith.constant 0 : index
    %76 = vector.load %arg9[%c346, %c0_52] : memref<448x32xf32, #tpu.memory_space<vmem>>, vector<96x32xf32>
    %77 = arith.truncf %76 : vector<96x32xf32> to vector<96x32xbf16>
    %c416 = arith.constant 416 : index
    %c0_53 = arith.constant 0 : index
    %78 = vector.load %arg4[%c416, %c0_53] : memref<512x64xbf16, #tpu.memory_space<vmem>>, vector<32x64xbf16>
    %cst_54 = arith.constant dense<0.000000e+00> : vector<96x64xf32>
    %79 = tpu.matmul %77, %78, %cst_54 {dimension_numbers = #tpu.dot_dimension_numbers<[1], [0], [0], [1], [0, 0, 1, 1], [], []>} : vector<96x32xbf16>, vector<32x64xbf16>, vector<96x64xf32> -> vector<96x64xf32>
    %80 = arith.addf %75, %79 : vector<96x64xf32>
    %c235 = arith.constant 235 : index
    %c0_55 = arith.constant 0 : index
    %81 = vector.load %arg9[%c235, %c0_55] : memref<448x32xf32, #tpu.memory_space<vmem>>, vector<96x32xf32>
    %82 = arith.truncf %81 : vector<96x32xf32> to vector<96x32xbf16>
    %c448 = arith.constant 448 : index
    %c0_56 = arith.constant 0 : index
    %83 = vector.load %arg4[%c448, %c0_56] : memref<512x64xbf16, #tpu.memory_space<vmem>>, vector<32x64xbf16>
    %cst_57 = arith.constant dense<0.000000e+00> : vector<96x64xf32>
    %84 = tpu.matmul %82, %83, %cst_57 {dimension_numbers = #tpu.dot_dimension_numbers<[1], [0], [0], [1], [0, 0, 1, 1], [], []>} : vector<96x32xbf16>, vector<32x64xbf16>, vector<96x64xf32> -> vector<96x64xf32>
    %85 = arith.addf %80, %84 : vector<96x64xf32>
    %c347 = arith.constant 347 : index
    %c0_58 = arith.constant 0 : index
    %86 = vector.load %arg9[%c347, %c0_58] : memref<448x32xf32, #tpu.memory_space<vmem>>, vector<96x32xf32>
    %87 = arith.truncf %86 : vector<96x32xf32> to vector<96x32xbf16>
    %c480 = arith.constant 480 : index
    %c0_59 = arith.constant 0 : index
    %88 = vector.load %arg4[%c480, %c0_59] : memref<512x64xbf16, #tpu.memory_space<vmem>>, vector<32x64xbf16>
    %cst_60 = arith.constant dense<0.000000e+00> : vector<96x64xf32>
    %89 = tpu.matmul %87, %88, %cst_60 {dimension_numbers = #tpu.dot_dimension_numbers<[1], [0], [0], [1], [0, 0, 1, 1], [], []>} : vector<96x32xbf16>, vector<32x64xbf16>, vector<96x64xf32> -> vector<96x64xf32>
    %90 = arith.addf %85, %89 : vector<96x64xf32>
    %cst_61 = arith.constant 0.000000e+00 : f32
    %91 = vector.broadcast %cst_61 : f32 to vector<32x64xf32>
    %c96_62 = arith.constant 96 : index
    %c0_63 = arith.constant 0 : index
    %92 = vector.load %arg10[%c96_62, %c0_63] : memref<128x64xf32, #tpu.memory_space<vmem>>, vector<32x64xf32>
    tpu.vector_store %arg10[%c96_62, %c0_63], %91 {strides = array<i32>} : memref<128x64xf32, #tpu.memory_space<vmem>>, vector<32x64xf32>,
    %c0_64 = arith.constant 0 : index
    %c0_65 = arith.constant 0 : index
    %93 = vector.load %arg5[%c0_64, %c0_65] : memref<1x64xf32, #tpu.memory_space<vmem>>, vector<1x64xf32>
    %94 = vector.broadcast %93 : vector<1x64xf32> to vector<96x64xf32>
    %95 = arith.addf %90, %94 : vector<96x64xf32>
    %cst_66 = arith.constant 0.000000e+00 : f32
    %96 = vector.broadcast %cst_66 : f32 to vector<96x64xf32>
    %97 = arith.maximumf %95, %96 : vector<96x64xf32>
    %c0_67 = arith.constant 0 : index
    %c0_68 = arith.constant 0 : index
    %98 = vector.load %arg10[%c0_67, %c0_68] : memref<128x64xf32, #tpu.memory_space<vmem>>, vector<96x64xf32>
    tpu.vector_store %arg10[%c0_67, %c0_68], %97 {strides = array<i32>} : memref<128x64xf32, #tpu.memory_space<vmem>>, vector<96x64xf32>,
    %cst_69 = arith.constant 0.000000e+00 : f32
    %99 = vector.broadcast %cst_69 : f32 to vector<96x32xf32>
    %c0_70 = arith.constant 0 : index
    %c0_71 = arith.constant 0 : index
    %100 = vector.load %arg10[%c0_70, %c0_71] : memref<128x64xf32, #tpu.memory_space<vmem>>, vector<96x64xf32>
    %101 = arith.truncf %100 : vector<96x64xf32> to vector<96x64xbf16>
    %c0_72 = arith.constant 0 : index
    %c0_73 = arith.constant 0 : index
    %102 = vector.load %arg6[%c0_72, %c0_73] : memref<576x32xbf16, #tpu.memory_space<vmem>>, vector<64x32xbf16>
    %cst_74 = arith.constant dense<0.000000e+00> : vector<96x32xf32>
    %103 = tpu.matmul %101, %102, %cst_74 {dimension_numbers = #tpu.dot_dimension_numbers<[1], [0], [0], [1], [0, 0, 1, 1], [], []>} : vector<96x64xbf16>, vector<64x32xbf16>, vector<96x32xf32> -> vector<96x32xf32>
    %104 = arith.addf %99, %103 : vector<96x32xf32>
    %c1_75 = arith.constant 1 : index
    %c0_76 = arith.constant 0 : index
    %105 = vector.load %arg10[%c1_75, %c0_76] : memref<128x64xf32, #tpu.memory_space<vmem>>, vector<96x64xf32>
    %106 = arith.truncf %105 : vector<96x64xf32> to vector<96x64xbf16>
    %c64_77 = arith.constant 64 : index
    %c0_78 = arith.constant 0 : index
    %107 = vector.load %arg6[%c64_77, %c0_78] : memref<576x32xbf16, #tpu.memory_space<vmem>>, vector<64x32xbf16>
    %cst_79 = arith.constant dense<0.000000e+00> : vector<96x32xf32>
    %108 = tpu.matmul %106, %107, %cst_79 {dimension_numbers = #tpu.dot_dimension_numbers<[1], [0], [0], [1], [0, 0, 1, 1], [], []>} : vector<96x64xbf16>, vector<64x32xbf16>, vector<96x32xf32> -> vector<96x32xf32>
    %109 = arith.addf %104, %108 : vector<96x32xf32>
    %c2 = arith.constant 2 : index
    %c0_80 = arith.constant 0 : index
    %110 = vector.load %arg10[%c2, %c0_80] : memref<128x64xf32, #tpu.memory_space<vmem>>, vector<96x64xf32>
    %111 = arith.truncf %110 : vector<96x64xf32> to vector<96x64xbf16>
    %c128_81 = arith.constant 128 : index
    %c0_82 = arith.constant 0 : index
    %112 = vector.load %arg6[%c128_81, %c0_82] : memref<576x32xbf16, #tpu.memory_space<vmem>>, vector<64x32xbf16>
    %cst_83 = arith.constant dense<0.000000e+00> : vector<96x32xf32>
    %113 = tpu.matmul %111, %112, %cst_83 {dimension_numbers = #tpu.dot_dimension_numbers<[1], [0], [0], [1], [0, 0, 1, 1], [], []>} : vector<96x64xbf16>, vector<64x32xbf16>, vector<96x32xf32> -> vector<96x32xf32>
    %114 = arith.addf %109, %113 : vector<96x32xf32>
    %c10_84 = arith.constant 10 : index
    %c0_85 = arith.constant 0 : index
    %115 = vector.load %arg10[%c10_84, %c0_85] : memref<128x64xf32, #tpu.memory_space<vmem>>, vector<96x64xf32>
    %116 = arith.truncf %115 : vector<96x64xf32> to vector<96x64xbf16>
    %c192_86 = arith.constant 192 : index
    %c0_87 = arith.constant 0 : index
    %117 = vector.load %arg6[%c192_86, %c0_87] : memref<576x32xbf16, #tpu.memory_space<vmem>>, vector<64x32xbf16>
    %cst_88 = arith.constant dense<0.000000e+00> : vector<96x32xf32>
    %118 = tpu.matmul %116, %117, %cst_88 {dimension_numbers = #tpu.dot_dimension_numbers<[1], [0], [0], [1], [0, 0, 1, 1], [], []>} : vector<96x64xbf16>, vector<64x32xbf16>, vector<96x32xf32> -> vector<96x32xf32>
    %119 = arith.addf %114, %118 : vector<96x32xf32>
    %c11_89 = arith.constant 11 : index
    %c0_90 = arith.constant 0 : index
    %120 = vector.load %arg10[%c11_89, %c0_90] : memref<128x64xf32, #tpu.memory_space<vmem>>, vector<96x64xf32>
    %121 = arith.truncf %120 : vector<96x64xf32> to vector<96x64xbf16>
    %c256_91 = arith.constant 256 : index
    %c0_92 = arith.constant 0 : index
    %122 = vector.load %arg6[%c256_91, %c0_92] : memref<576x32xbf16, #tpu.memory_space<vmem>>, vector<64x32xbf16>
    %cst_93 = arith.constant dense<0.000000e+00> : vector<96x32xf32>
    %123 = tpu.matmul %121, %122, %cst_93 {dimension_numbers = #tpu.dot_dimension_numbers<[1], [0], [0], [1], [0, 0, 1, 1], [], []>} : vector<96x64xbf16>, vector<64x32xbf16>, vector<96x32xf32> -> vector<96x32xf32>
    %124 = arith.addf %119, %123 : vector<96x32xf32>
    %c12 = arith.constant 12 : index
    %c0_94 = arith.constant 0 : index
    %125 = vector.load %arg10[%c12, %c0_94] : memref<128x64xf32, #tpu.memory_space<vmem>>, vector<96x64xf32>
    %126 = arith.truncf %125 : vector<96x64xf32> to vector<96x64xbf16>
    %c320_95 = arith.constant 320 : index
    %c0_96 = arith.constant 0 : index
    %127 = vector.load %arg6[%c320_95, %c0_96] : memref<576x32xbf16, #tpu.memory_space<vmem>>, vector<64x32xbf16>
    %cst_97 = arith.constant dense<0.000000e+00> : vector<96x32xf32>
    %128 = tpu.matmul %126, %127, %cst_97 {dimension_numbers = #tpu.dot_dimension_numbers<[1], [0], [0], [1], [0, 0, 1, 1], [], []>} : vector<96x64xbf16>, vector<64x32xbf16>, vector<96x32xf32> -> vector<96x32xf32>
    %129 = arith.addf %124, %128 : vector<96x32xf32>
    %c20 = arith.constant 20 : index
    %c0_98 = arith.constant 0 : index
    %130 = vector.load %arg10[%c20, %c0_98] : memref<128x64xf32, #tpu.memory_space<vmem>>, vector<96x64xf32>
    %131 = arith.truncf %130 : vector<96x64xf32> to vector<96x64xbf16>
    %c384_99 = arith.constant 384 : index
    %c0_100 = arith.constant 0 : index
    %132 = vector.load %arg6[%c384_99, %c0_100] : memref<576x32xbf16, #tpu.memory_space<vmem>>, vector<64x32xbf16>
    %cst_101 = arith.constant dense<0.000000e+00> : vector<96x32xf32>
    %133 = tpu.matmul %131, %132, %cst_101 {dimension_numbers = #tpu.dot_dimension_numbers<[1], [0], [0], [1], [0, 0, 1, 1], [], []>} : vector<96x64xbf16>, vector<64x32xbf16>, vector<96x32xf32> -> vector<96x32xf32>
    %134 = arith.addf %129, %133 : vector<96x32xf32>
    %c21 = arith.constant 21 : index
    %c0_102 = arith.constant 0 : index
    %135 = vector.load %arg10[%c21, %c0_102] : memref<128x64xf32, #tpu.memory_space<vmem>>, vector<96x64xf32>
    %136 = arith.truncf %135 : vector<96x64xf32> to vector<96x64xbf16>
    %c448_103 = arith.constant 448 : index
    %c0_104 = arith.constant 0 : index
    %137 = vector.load %arg6[%c448_103, %c0_104] : memref<576x32xbf16, #tpu.memory_space<vmem>>, vector<64x32xbf16>
    %cst_105 = arith.constant dense<0.000000e+00> : vector<96x32xf32>
    %138 = tpu.matmul %136, %137, %cst_105 {dimension_numbers = #tpu.dot_dimension_numbers<[1], [0], [0], [1], [0, 0, 1, 1], [], []>} : vector<96x64xbf16>, vector<64x32xbf16>, vector<96x32xf32> -> vector<96x32xf32>
    %139 = arith.addf %134, %138 : vector<96x32xf32>
    %c22 = arith.constant 22 : index
    %c0_106 = arith.constant 0 : index
    %140 = vector.load %arg10[%c22, %c0_106] : memref<128x64xf32, #tpu.memory_space<vmem>>, vector<96x64xf32>
    %141 = arith.truncf %140 : vector<96x64xf32> to vector<96x64xbf16>
    %c512 = arith.constant 512 : index
    %c0_107 = arith.constant 0 : index
    %142 = vector.load %arg6[%c512, %c0_107] : memref<576x32xbf16, #tpu.memory_space<vmem>>, vector<64x32xbf16>
    %cst_108 = arith.constant dense<0.000000e+00> : vector<96x32xf32>
    %143 = tpu.matmul %141, %142, %cst_108 {dimension_numbers = #tpu.dot_dimension_numbers<[1], [0], [0], [1], [0, 0, 1, 1], [], []>} : vector<96x64xbf16>, vector<64x32xbf16>, vector<96x32xf32> -> vector<96x32xf32>
    %144 = arith.addf %139, %143 : vector<96x32xf32>
    %c0_109 = arith.constant 0 : index
    %c0_110 = arith.constant 0 : index
    %145 = vector.load %arg7[%c0_109, %c0_110] : memref<1x32xf32, #tpu.memory_space<vmem>>, vector<1x32xf32>
    %146 = vector.broadcast %145 : vector<1x32xf32> to vector<96x32xf32>
    %147 = arith.addf %144, %146 : vector<96x32xf32>
    %cst_111 = arith.constant 0.000000e+00 : f32
    %148 = vector.broadcast %cst_111 : f32 to vector<96x32xf32>
    %149 = arith.maximumf %147, %148 : vector<96x32xf32>
    %150 = arith.truncf %149 : vector<96x32xf32> to vector<96x32xbf16>
    %c0_112 = arith.constant 0 : index
    %c0_113 = arith.constant 0 : index
    %c0_114 = arith.constant 0 : index
    %151 = vector.load %arg8[%c0_112, %c0_113, %c0_114] : memref<1x96x32xbf16, #tpu.memory_space<vmem>>, vector<1x96x32xbf16>
    %152 = vector.shape_cast %151 : vector<1x96x32xbf16> to vector<96x32xbf16>
    %153 = vector.shape_cast %150 : vector<96x32xbf16> to vector<1x96x32xbf16>
    tpu.vector_store %arg8[%c0_112, %c0_113, %c0_114], %153 {strides = array<i32>} : memref<1x96x32xbf16, #tpu.memory_space<vmem>>, vector<1x96x32xbf16>,
    return
  }
  func.func @transform_0(%arg0: i32) -> (i32, i32, i32) {
    %c0_i32 = arith.constant 0 : i32
    %c0_i32_0 = arith.constant 0 : i32
    %c0_i32_1 = arith.constant 0 : i32
    return %arg0, %c0_i32, %c0_i32_0 : i32, i32, i32
  }
  func.func @transform_1(%arg0: i32) -> (i32, i32) {
    %c0_i32 = arith.constant 0 : i32
    %c0_i32_0 = arith.constant 0 : i32
    %c0_i32_1 = arith.constant 0 : i32
    return %c0_i32, %c0_i32_0 : i32, i32
  }
  func.func @transform_2(%arg0: i32) -> (i32, i32) {
    %c0_i32 = arith.constant 0 : i32
    %c0_i32_0 = arith.constant 0 : i32
    %c0_i32_1 = arith.constant 0 : i32
    return %c0_i32, %c0_i32_0 : i32, i32
  }
  func.func @transform_3(%arg0: i32) -> (i32, i32) {
    %c0_i32 = arith.constant 0 : i32
    %c0_i32_0 = arith.constant 0 : i32
    %c0_i32_1 = arith.constant 0 : i32
    return %c0_i32, %c0_i32_0 : i32, i32
  }
  func.func @transform_4(%arg0: i32) -> (i32, i32) {
    %c0_i32 = arith.constant 0 : i32
    %c0_i32_0 = arith.constant 0 : i32
    %c0_i32_1 = arith.constant 0 : i32
    return %c0_i32, %c0_i32_0 : i32, i32
  }
  func.func @transform_5(%arg0: i32) -> (i32, i32) {
    %c0_i32 = arith.constant 0 : i32
    %c0_i32_0 = arith.constant 0 : i32
    %c0_i32_1 = arith.constant 0 : i32
    return %c0_i32, %c0_i32_0 : i32, i32
  }
  func.func @transform_6(%arg0: i32) -> (i32, i32) {
    %c0_i32 = arith.constant 0 : i32
    %c0_i32_0 = arith.constant 0 : i32
    %c0_i32_1 = arith.constant 0 : i32
    return %c0_i32, %c0_i32_0 : i32, i32
  }
  func.func @transform_7(%arg0: i32) -> (i32, i32, i32) {
    %c0_i32 = arith.constant 0 : i32
    %c0_i32_0 = arith.constant 0 : i32
    %c0_i32_1 = arith.constant 0 : i32
    return %arg0, %c0_i32, %c0_i32_0 : i32, i32, i32
  }
}

module attributes {stable_mosaic.version = 11 : i64} {
  func.func @_mlp_heads_kernel(%arg0: memref<2x1664xbf16, #tpu.memory_space<vmem>>, %arg1: memref<1664x512xbf16, #tpu.memory_space<vmem>>, %arg2: memref<1x512xf32, #tpu.memory_space<vmem>>, %arg3: memref<512x128xbf16, #tpu.memory_space<vmem>>, %arg4: memref<1x128xf32, #tpu.memory_space<vmem>>, %arg5: memref<1x128xf32, #tpu.memory_space<vmem>>, %arg6: memref<2x128xf32, #tpu.memory_space<vmem>>, %arg7: memref<2x128xf32, #tpu.memory_space<vmem>>) attributes {dimension_semantics = [], scalar_prefetch = 0 : i64, scratch_operands = 0 : i64, tpu.core_type = #tpu.core_type<tc>} {
    %c0 = arith.constant 0 : index
    %c0_0 = arith.constant 0 : index
    %0 = vector.load %arg0[%c0, %c0_0] : memref<2x1664xbf16, #tpu.memory_space<vmem>>, vector<2x1664xbf16>
    %c0_1 = arith.constant 0 : index
    %c0_2 = arith.constant 0 : index
    %1 = vector.load %arg1[%c0_1, %c0_2] : memref<1664x512xbf16, #tpu.memory_space<vmem>>, vector<1664x512xbf16>
    %cst = arith.constant dense<0.000000e+00> : vector<2x512xf32>
    %2 = tpu.matmul %0, %1, %cst {dimension_numbers = #tpu.dot_dimension_numbers<[1], [0], [0], [1], [0, 0, 1, 1], [], []>} : vector<2x1664xbf16>, vector<1664x512xbf16>, vector<2x512xf32> -> vector<2x512xf32>
    %c0_3 = arith.constant 0 : index
    %c0_4 = arith.constant 0 : index
    %3 = vector.load %arg2[%c0_3, %c0_4] : memref<1x512xf32, #tpu.memory_space<vmem>>, vector<1x512xf32>
    %4 = vector.broadcast %3 : vector<1x512xf32> to vector<2x512xf32>
    %5 = arith.addf %2, %4 : vector<2x512xf32>
    %cst_5 = arith.constant 0.000000e+00 : f32
    %6 = vector.broadcast %cst_5 : f32 to vector<2x512xf32>
    %7 = arith.maximumf %5, %6 : vector<2x512xf32>
    %8 = arith.truncf %7 : vector<2x512xf32> to vector<2x512xbf16>
    %c0_6 = arith.constant 0 : index
    %c0_7 = arith.constant 0 : index
    %9 = vector.load %arg3[%c0_6, %c0_7] : memref<512x128xbf16, #tpu.memory_space<vmem>>, vector<512x128xbf16>
    %cst_8 = arith.constant dense<0.000000e+00> : vector<2x128xf32>
    %10 = tpu.matmul %8, %9, %cst_8 {dimension_numbers = #tpu.dot_dimension_numbers<[1], [0], [0], [1], [0, 0, 1, 1], [], []>} : vector<2x512xbf16>, vector<512x128xbf16>, vector<2x128xf32> -> vector<2x128xf32>
    %c0_9 = arith.constant 0 : index
    %c0_10 = arith.constant 0 : index
    %11 = vector.load %arg4[%c0_9, %c0_10] : memref<1x128xf32, #tpu.memory_space<vmem>>, vector<1x128xf32>
    %12 = vector.broadcast %11 : vector<1x128xf32> to vector<2x128xf32>
    %13 = arith.addf %10, %12 : vector<2x128xf32>
    %c0_11 = arith.constant 0 : index
    %c0_12 = arith.constant 0 : index
    %14 = vector.load %arg7[%c0_11, %c0_12] : memref<2x128xf32, #tpu.memory_space<vmem>>, vector<2x128xf32>
    tpu.vector_store %arg7[%c0_11, %c0_12], %13 {strides = array<i32>} : memref<2x128xf32, #tpu.memory_space<vmem>>, vector<2x128xf32>,
    %c0_13 = arith.constant 0 : index
    %c0_14 = arith.constant 0 : index
    %15 = vector.load %arg5[%c0_13, %c0_14] : memref<1x128xf32, #tpu.memory_space<vmem>>, vector<1x128xf32>
    %16 = vector.broadcast %15 : vector<1x128xf32> to vector<2x128xf32>
    %17 = arith.addf %10, %16 : vector<2x128xf32>
    %cst_15 = arith.constant dense<0xFF800000> : vector<2xf32>
    %18 = vector.multi_reduction <maximumf>, %17, %cst_15 [1] : vector<2x128xf32> to vector<2xf32>
    %19 = vector.shape_cast %18 : vector<2xf32> to vector<2x1xf32>
    %20 = vector.broadcast %19 : vector<2x1xf32> to vector<2x128xf32>
    %21 = arith.subf %17, %20 : vector<2x128xf32>
    %22 = math.exp %21 : vector<2x128xf32>
    %cst_16 = arith.constant dense<0.000000e+00> : vector<2xf32>
    %23 = vector.multi_reduction <add>, %22, %cst_16 [1] : vector<2x128xf32> to vector<2xf32>
    %24 = vector.shape_cast %23 : vector<2xf32> to vector<2x1xf32>
    %25 = vector.broadcast %24 : vector<2x1xf32> to vector<2x128xf32>
    %26 = arith.divf %22, %25 : vector<2x128xf32>
    %c0_17 = arith.constant 0 : index
    %c0_18 = arith.constant 0 : index
    %27 = vector.load %arg6[%c0_17, %c0_18] : memref<2x128xf32, #tpu.memory_space<vmem>>, vector<2x128xf32>
    tpu.vector_store %arg6[%c0_17, %c0_18], %26 {strides = array<i32>} : memref<2x128xf32, #tpu.memory_space<vmem>>, vector<2x128xf32>,
    return
  }
}

</mosaic_0001>

<llo_original>
// kernel: actor_critic_forward.2
$region0: #{actor_critic_forward.2}
  #allocation0 [shape = 'u32[]', space=smem, size = 0x4, offset = 0x4, fixed_abs, tag = 'smem constant byte address 0x4 - core index']
  #allocation1 [shape = 'u32[72,128]{1,0:T(1,128)}', space=vmem, size = 0x9000, scoped, tag = 'internal scratch']
  #allocation2 [shape = 'f32[448,32]{1,0:T(8,128)}', space=vmem, size = 0x38000, scoped, tag = 'scratch operand']
  #allocation3 [shape = 'f32[128,64]{1,0:T(8,128)}', space=vmem, size = 0x10000, scoped, tag = 'scratch operand']
  %s0 = inlined_call_operand.vmem [shape: bf16[2,448,256], index: 0, kind: input, shape index: {}]
  %s1 = inlined_call_operand.vmem [shape: bf16[256,32], index: 1, kind: input, shape index: {}]
  %s2 = inlined_call_operand.vmem [shape: f32[1,32], index: 2, kind: input, shape index: {}]
  %s3 = inlined_call_operand.vmem [shape: bf16[512,64], index: 3, kind: input, shape index: {}]
  %s4 = inlined_call_operand.vmem [shape: f32[1,64], index: 4, kind: input, shape index: {}]
  %s5 = inlined_call_operand.vmem [shape: bf16[576,32], index: 5, kind: input, shape index: {}]
  %s6 = inlined_call_operand.vmem [shape: f32[1,32], index: 6, kind: input, shape index: {}]
  %s7 = inlined_call_operand.vmem [shape: bf16[2,96,32], index: 7, kind: output, shape index: {}]
  %s8 = sld [smem:[#allocation0]]
  $region61: #{actor_critic_forward.2} parent=0
    _
  %s10 = ssub.s32 1, %s8
  %s11 = scalar_select 0, %s10, %s8
  loop: start=0, step=1, limit=4
  $region2: #{actor_critic_forward.2} parent=0 // loop_pre_header
    _
  $region3: #{actor_critic_forward.2} parent=0 // loop_header
    %s13 = sphi 0, %s17
    %p14 = scmp.ge.s32.totalorder %s13, 4
    %s23 = sphi 0, %s25
    %s26 = sphi 0, %s23
    %s27 = sphi 0, %s26
    %s43 = sphi 0, %s27
    %s47 = sphi 0, %s47
    %s49 = sphi 0, %s47
    %s50 = sphi 0, %s49
    %s64 = sphi 0, %s50
    %s68 = sphi 0, %s68
    %s70 = sphi 0, %s68
    %s71 = sphi 0, %s70
    %s85 = sphi 0, %s71
    %s89 = sphi 0, %s89
    %s91 = sphi 0, %s89
    %s92 = sphi 0, %s91
    %s106 = sphi 0, %s92
    %s110 = sphi 0, %s110
    %s112 = sphi 0, %s110
    %s113 = sphi 0, %s112
    %s127 = sphi 0, %s113
    %s131 = sphi 0, %s131
    %s133 = sphi 0, %s131
    %s134 = sphi 0, %s133
    %s148 = sphi 0, %s134
    %s152 = sphi 0, %s152
    %s154 = sphi 0, %s152
    %s155 = sphi 0, %s154
    %s169 = sphi 0, %s155
    %s175 = sphi 0, %s177
    %s178 = sphi 0, %s175
    %s179 = sphi 0, %s178
    %s195 = sphi 0, %s179
  $region4: #{actor_critic_forward.2} parent=0 // loop_header_branch
    %16 = sbr.rel (%p14) target = $region8
  $region5: #{actor_critic_forward.2} parent=0 // loop_body
    %s18 = ssub.s32 %s13, 1
    %s19 = ssub.s32 %s13, 2
    %s20 = sadd.s32 %s13, 1
    %s21 = ssub.s32 %s13, %s20
    %p22 = scmp.eq.s32.totalorder %s21, 0
    %s24 = sadd.s32 %s23, 1
    %s25 = scalar_select %p22, %s23, %s24
    %p28 = pneg %p22
    %p29 = scmp.eq.s32.totalorder %s13, 1
    %p30 = por %p28, %p29
    %p31 = scmp.ne.s32.totalorder %s23, %s26
    %p32 = scmp.eq.s32.totalorder %s13, 0
    %p33 = por %p31, %p32
    %p34 = scmp.ne.s32.totalorder %s23, %s26
    %p35 = scmp.eq.s32.totalorder %s18, 1
    %p36 = por %p34, %p35
    %p37 = scmp.ne.s32.totalorder %s26, %s27
    %p38 = scmp.eq.s32.totalorder %s18, 0
    %p39 = por %p37, %p38
    %p40 = scmp.ne.s32.totalorder %s26, %s27
    %p41 = scmp.eq.s32.totalorder %s19, 1
    %p42 = por %p40, %p41
    %p44 = scmp.ne.s32.totalorder %s27, %s43
    %p45 = scmp.eq.s32.totalorder %s19, 0
    %p46 = por %p44, %p45
    %s48 = sadd.s32 %s47, 1
    %p51 = scmp.eq.s32.totalorder %s13, 1
    %p52 = scmp.ne.s32.totalorder %s47, %s49
    %p53 = scmp.eq.s32.totalorder %s13, 0
    %p54 = por %p52, %p53
    %p55 = scmp.ne.s32.totalorder %s47, %s49
    %p56 = scmp.eq.s32.totalorder %s18, 1
    %p57 = por %p55, %p56
    %p58 = scmp.ne.s32.totalorder %s49, %s50
    %p59 = scmp.eq.s32.totalorder %s18, 0
    %p60 = por %p58, %p59
    %p61 = scmp.ne.s32.totalorder %s49, %s50
    %p62 = scmp.eq.s32.totalorder %s19, 1
    %p63 = por %p61, %p62
    %p65 = scmp.ne.s32.totalorder %s50, %s64
    %p66 = scmp.eq.s32.totalorder %s19, 0
    %p67 = por %p65, %p66
    %s69 = sadd.s32 %s68, 1
    %p72 = scmp.eq.s32.totalorder %s13, 1
    %p73 = scmp.ne.s32.totalorder %s68, %s70
    %p74 = scmp.eq.s32.totalorder %s13, 0
    %p75 = por %p73, %p74
    %p76 = scmp.ne.s32.totalorder %s68, %s70
    %p77 = scmp.eq.s32.totalorder %s18, 1
    %p78 = por %p76, %p77
    %p79 = scmp.ne.s32.totalorder %s70, %s71
    %p80 = scmp.eq.s32.totalorder %s18, 0
    %p81 = por %p79, %p80
    %p82 = scmp.ne.s32.totalorder %s70, %s71
    %p83 = scmp.eq.s32.totalorder %s19, 1
    %p84 = por %p82, %p83
    %p86 = scmp.ne.s32.totalorder %s71, %s85
    %p87 = scmp.eq.s32.totalorder %s19, 0
    %p88 = por %p86, %p87
    %s90 = sadd.s32 %s89, 1
    %p93 = scmp.eq.s32.totalorder %s13, 1
    %p94 = scmp.ne.s32.totalorder %s89, %s91
    %p95 = scmp.eq.s32.totalorder %s13, 0
    %p96 = por %p94, %p95
    %p97 = scmp.ne.s32.totalorder %s89, %s91
    %p98 = scmp.eq.s32.totalorder %s18, 1
    %p99 = por %p97, %p98
    %p100 = scmp.ne.s32.totalorder %s91, %s92
    %p101 = scmp.eq.s32.totalorder %s18, 0
    %p102 = por %p100, %p101
    %p103 = scmp.ne.s32.totalorder %s91, %s92
    %p104 = scmp.eq.s32.totalorder %s19, 1
    %p105 = por %p103, %p104
    %p107 = scmp.ne.s32.totalorder %s92, %s106
    %p108 = scmp.eq.s32.totalorder %s19, 0
    %p109 = por %p107, %p108
    %s111 = sadd.s32 %s110, 1
    %p114 = scmp.eq.s32.totalorder %s13, 1
    %p115 = scmp.ne.s32.totalorder %s110, %s112
    %p116 = scmp.eq.s32.totalorder %s13, 0
    %p117 = por %p115, %p116
    %p118 = scmp.ne.s32.totalorder %s110, %s112
    %p119 = scmp.eq.s32.totalorder %s18, 1
    %p120 = por %p118, %p119
    %p121 = scmp.ne.s32.totalorder %s112, %s113
    %p122 = scmp.eq.s32.totalorder %s18, 0
    %p123 = por %p121, %p122
    %p124 = scmp.ne.s32.totalorder %s112, %s113
    %p125 = scmp.eq.s32.totalorder %s19, 1
    %p126 = por %p124, %p125
    %p128 = scmp.ne.s32.totalorder %s113, %s127
    %p129 = scmp.eq.s32.totalorder %s19, 0
    %p130 = por %p128, %p129
    %s132 = sadd.s32 %s131, 1
    %p135 = scmp.eq.s32.totalorder %s13, 1
    %p136 = scmp.ne.s32.totalorder %s131, %s133
    %p137 = scmp.eq.s32.totalorder %s13, 0
    %p138 = por %p136, %p137
    %p139 = scmp.ne.s32.totalorder %s131, %s133
    %p140 = scmp.eq.s32.totalorder %s18, 1
    %p141 = por %p139, %p140
    %p142 = scmp.ne.s32.totalorder %s133, %s134
    %p143 = scmp.eq.s32.totalorder %s18, 0
    %p144 = por %p142, %p143
    %p145 = scmp.ne.s32.totalorder %s133, %s134
    %p146 = scmp.eq.s32.totalorder %s19, 1
    %p147 = por %p145, %p146
    %p149 = scmp.ne.s32.totalorder %s134, %s148
    %p150 = scmp.eq.s32.totalorder %s19, 0
    %p151 = por %p149, %p150
    %s153 = sadd.s32 %s152, 1
    %p156 = scmp.eq.s32.totalorder %s13, 1
    %p157 = scmp.ne.s32.totalorder %s152, %s154
    %p158 = scmp.eq.s32.totalorder %s13, 0
    %p159 = por %p157, %p158
    %p160 = scmp.ne.s32.totalorder %s152, %s154
    %p161 = scmp.eq.s32.totalorder %s18, 1
    %p162 = por %p160, %p161
    %p163 = scmp.ne.s32.totalorder %s154, %s155
    %p164 = scmp.eq.s32.totalorder %s18, 0
    %p165 = por %p163, %p164
    %p166 = scmp.ne.s32.totalorder %s154, %s155
    %p167 = scmp.eq.s32.totalorder %s19, 1
    %p168 = por %p166, %p167
    %p170 = scmp.ne.s32.totalorder %s155, %s169
    %p171 = scmp.eq.s32.totalorder %s19, 0
    %p172 = por %p170, %p171
    %s173 = ssub.s32 %s13, %s20
    %p174 = scmp.eq.s32.totalorder %s173, 0
    %s176 = sadd.s32 %s175, 1
    %s177 = scalar_select %p174, %s175, %s176
    %p180 = pneg %p174
    %p181 = scmp.eq.s32.totalorder %s13, 1
    %p182 = por %p180, %p181
    %p183 = scmp.ne.s32.totalorder %s175, %s178
    %p184 = scmp.eq.s32.totalorder %s13, 0
    %p185 = por %p183, %p184
    %p186 = scmp.ne.s32.totalorder %s175, %s178
    %p187 = scmp.eq.s32.totalorder %s18, 1
    %p188 = por %p186, %p187
    %p189 = scmp.ne.s32.totalorder %s178, %s179
    %p190 = scmp.eq.s32.totalorder %s18, 0
    %p191 = por %p189, %p190
    %p192 = scmp.ne.s32.totalorder %s178, %s179
    %p193 = scmp.eq.s32.totalorder %s19, 1
    %p194 = por %p192, %p193
    %p196 = scmp.ne.s32.totalorder %s179, %s195
    %p197 = scmp.eq.s32.totalorder %s19, 0
    %p198 = por %p196, %p197
    %p199 = scmp.le.s32.totalorder 1, %s13
    %p200 = scmp.lt.s32.totalorder %s13, 3
    %p201 = pnand %p199, %p200
    %p202 = pneg %p201
    // Predicated region
    $region9: #{actor_critic_forward.2} parent=5 // pred_check
      _
    $region10: #{actor_critic_forward.2} parent=5 // pred_check_branch
      %204 = sbr.rel (%p201) target = $region12
    $region11: #{actor_critic_forward.2} parent=5 // pred_region
      %s205 = ssub.s32 %s13, 1
      // Predicated region
      $region13: #{actor_critic_forward.2} parent=11 // pred_check
        %p206 = pneg %p60
      $region14: #{actor_critic_forward.2} parent=11 // pred_check_branch
        %208 = sbr.rel (%p206) target = $region16
      $region15: #{actor_critic_forward.2} parent=11 // pred_region
        _
      $region16: #{actor_critic_forward.2} parent=11 // pred_fallthru
        _
      // Predicated region
      $region17: #{actor_critic_forward.2} parent=11 // pred_check
        %p209 = pneg %p81
      $region18: #{actor_critic_forward.2} parent=11 // pred_check_branch
        %211 = sbr.rel (%p209) target = $region20
      $region19: #{actor_critic_forward.2} parent=11 // pred_region
        _
      $region20: #{actor_critic_forward.2} parent=11 // pred_fallthru
        _
      // Predicated region
      $region21: #{actor_critic_forward.2} parent=11 // pred_check
        %p212 = pneg %p102
      $region22: #{actor_critic_forward.2} parent=11 // pred_check_branch
        %214 = sbr.rel (%p212) target = $region24
      $region23: #{actor_critic_forward.2} parent=11 // pred_region
        _
      $region24: #{actor_critic_forward.2} parent=11 // pred_fallthru
        _
      // Predicated region
      $region25: #{actor_critic_forward.2} parent=11 // pred_check
        %p215 = pneg %p123
      $region26: #{actor_critic_forward.2} parent=11 // pred_check_branch
        %217 = sbr.rel (%p215) target = $region28
      $region27: #{actor_critic_forward.2} parent=11 // pred_region
        _
      $region28: #{actor_critic_forward.2} parent=11 // pred_fallthru
        _
      // Predicated region
      $region29: #{actor_critic_forward.2} parent=11 // pred_check
        %p218 = pneg %p144
      $region30: #{actor_critic_forward.2} parent=11 // pred_check_branch
        %220 = sbr.rel (%p218) target = $region32
      $region31: #{actor_critic_forward.2} parent=11 // pred_region
        _
      $region32: #{actor_critic_forward.2} parent=11 // pred_fallthru
        _
      // Predicated region
      $region33: #{actor_critic_forward.2} parent=11 // pred_check
        %p221 = pneg %p165
      $region34: #{actor_critic_forward.2} parent=11 // pred_check_branch
        %223 = sbr.rel (%p221) target = $region36
      $region35: #{actor_critic_forward.2} parent=11 // pred_region
        _
      $region36: #{actor_critic_forward.2} parent=11 // pred_fallthru
        _
    $region12: #{actor_critic_forward.2} parent=5 // pred_fallthru
      _
    %p224 = scmp.lt.s32.totalorder %s13, 2
    // Predicated region
    $region37: #{actor_critic_forward.2} parent=5 // pred_check
      %p225 = pneg %p224
    $region38: #{actor_critic_forward.2} parent=5 // pred_check_branch
      %227 = sbr.rel (%p225) target = $region40
    $region39: #{actor_critic_forward.2} parent=5 // pred_region
      // Predicated region
      $region41: #{actor_critic_forward.2} parent=39 // pred_check
        %p228 = pneg %p33
      $region42: #{actor_critic_forward.2} parent=39 // pred_check_branch
        %230 = sbr.rel (%p228) target = $region44
      $region43: #{actor_critic_forward.2} parent=39 // pred_region
        %p231 = scmp.lt.s32.totalorder %s13, 1
        %s232 = scalar_select %p231, %s13, 1
        %s233 = smul.addr %s232, 112
        %s234 = smul.addr %s233, 4
        %s235 = scalar_lea.vmem %s0, %s234
      $region44: #{actor_critic_forward.2} parent=39 // pred_fallthru
        _
    $region40: #{actor_critic_forward.2} parent=5 // pred_fallthru
      _
    %p236 = scmp.le.s32.totalorder 1, %s13
    %p237 = scmp.lt.s32.totalorder %s13, 3
    %p238 = pnand %p236, %p237
    %p239 = pneg %p238
    // Predicated region
    $region45: #{actor_critic_forward.2} parent=5 // pred_check
      _
    $region46: #{actor_critic_forward.2} parent=5 // pred_check_branch
      %241 = sbr.rel (%p238) target = $region48
    $region47: #{actor_critic_forward.2} parent=5 // pred_region
      %s242 = ssub.s32 %s13, 1
      %p243 = scmp.lt.s32.totalorder %s18, 1
      %s244 = scalar_select %p243, %s18, 1
      %s245 = smul.addr %s244, 112
      %s246 = smul.addr %s245, 4
      %s247 = scalar_lea.vmem %s0, %s246
      %p248 = pneg %p39
      %p249 = pneg %p36
      %p250 = pneg %p60
      %p251 = pneg %p57
      %p252 = pneg %p81
      %p253 = pneg %p78
      %p254 = pneg %p102
      %p255 = pneg %p99
      %p256 = pneg %p123
      %p257 = pneg %p120
      %p258 = pneg %p144
      %p259 = pneg %p141
      %p260 = pneg %p165
      %p261 = pneg %p162
      %p262 = pneg %p191
      %p263 = pneg %p188
      %p264 = scmp.lt.s32.totalorder %s18, 1
      %s265 = scalar_select %p264, %s18, 1
      %s266 = smul.addr %s265, 12
      %s267 = smul.addr %s266, 4
      %s268 = scalar_lea.vmem %s7, %s267
      %p269 = scmp.lt.s32.totalorder %s18, 1
      %s270 = scalar_select %p269, %s18, 1
      %s271 = smul.addr %s270, 112
      %s272 = smul.addr %s271, 4
      %s273 = scalar_lea.vmem %s0, %s272
      %p274 = scmp.lt.s32.totalorder %s18, 1
      %s275 = scalar_select %p274, %s18, 1
      %s276 = smul.addr %s275, 12
      %s277 = smul.addr %s276, 4
      %s278 = scalar_lea.vmem %s7, %s277
      %v280 = vld [vmem:[%s273] sm:$0xff]
      %v281 = vld [vmem:[%s273 + $0x8] sm:$0xff]
      %v282 = vld [vmem:[%s273 + $0x10] sm:$0xff]
      %v283 = vld [vmem:[%s273 + $0x18] sm:$0xff]
      %v284 = vld [vmem:[%s273 + $0x20] sm:$0xff]
      %v285 = vld [vmem:[%s273 + $0x28] sm:$0xff]
      %v286 = vld [vmem:[%s273 + $0x30] sm:$0xff]
      %v287 = vld [vmem:[%s273 + $0x38] sm:$0xff]
      %v288 = vld [vmem:[%s273 + $0x40] sm:$0xff]
      %v289 = vld [vmem:[%s273 + $0x48] sm:$0xff]
      %v290 = vld [vmem:[%s273 + $0x50] sm:$0xff]
      %v291 = vld [vmem:[%s273 + $0x58] sm:$0xff]
      %v292 = vld [vmem:[%s273 + $0x60] sm:$0xff]
      %v293 = vld [vmem:[%s273 + $0x68] sm:$0xff]
      %v294 = vld [vmem:[%s273 + $0x70] sm:$0xff]
      %v295 = vld [vmem:[%s273 + $0x78] sm:$0xff]
      %v296 = vld [vmem:[%s273 + $0x80] sm:$0xff]
      %v297 = vld [vmem:[%s273 + $0x88] sm:$0xff]
      %v298 = vld [vmem:[%s273 + $0x90] sm:$0xff]
      %v299 = vld [vmem:[%s273 + $0x98] sm:$0xff]
      %v300 = vld [vmem:[%s273 + $0xa0] sm:$0xff]
      %v301 = vld [vmem:[%s273 + $0xa8] sm:$0xff]
      %v302 = vld [vmem:[%s273 + $0xb0] sm:$0xff]
      %v303 = vld [vmem:[%s273 + $0xb8] sm:$0xff]
      %v304 = vld [vmem:[%s273 + $0xc0] sm:$0xff]
      %v305 = vld [vmem:[%s273 + $0xc8] sm:$0xff]
      %v306 = vld [vmem:[%s273 + $0xd0] sm:$0xff]
      %v307 = vld [vmem:[%s273 + $0xd8] sm:$0xff]
      %v308 = vld [vmem:[%s273 + $0xe0] sm:$0xff]
      %v309 = vld [vmem:[%s273 + $0xe8] sm:$0xff]
      %v310 = vld [vmem:[%s273 + $0xf0] sm:$0xff]
      %v311 = vld [vmem:[%s273 + $0xf8] sm:$0xff]
      %v312 = vld [vmem:[%s273 + $0x100] sm:$0xff]
      %v313 = vld [vmem:[%s273 + $0x108] sm:$0xff]
      %v314 = vld [vmem:[%s273 + $0x110] sm:$0xff]
      %v315 = vld [vmem:[%s273 + $0x118] sm:$0xff]
      %v316 = vld [vmem:[%s273 + $0x120] sm:$0xff]
      %v317 = vld [vmem:[%s273 + $0x128] sm:$0xff]
      %v318 = vld [vmem:[%s273 + $0x130] sm:$0xff]
      %v319 = vld [vmem:[%s273 + $0x138] sm:$0xff]
      %v320 = vld [vmem:[%s273 + $0x140] sm:$0xff]
      %v321 = vld [vmem:[%s273 + $0x148] sm:$0xff]
      %v322 = vld [vmem:[%s273 + $0x150] sm:$0xff]
      %v323 = vld [vmem:[%s273 + $0x158] sm:$0xff]
      %v324 = vld [vmem:[%s273 + $0x160] sm:$0xff]
      %v325 = vld [vmem:[%s273 + $0x168] sm:$0xff]
      %v326 = vld [vmem:[%s273 + $0x170] sm:$0xff]
      %v327 = vld [vmem:[%s273 + $0x178] sm:$0xff]
      %v328 = vld [vmem:[%s273 + $0x180] sm:$0xff]
      %v329 = vld [vmem:[%s273 + $0x188] sm:$0xff]
      %v330 = vld [vmem:[%s273 + $0x190] sm:$0xff]
      %v331 = vld [vmem:[%s273 + $0x198] sm:$0xff]
      %v332 = vld [vmem:[%s273 + $0x1a0] sm:$0xff]
      %v333 = vld [vmem:[%s273 + $0x1a8] sm:$0xff]
      %v334 = vld [vmem:[%s273 + $0x1b0] sm:$0xff]
      %v335 = vld [vmem:[%s273 + $0x1b8] sm:$0xff]
      %v336 = vld [vmem:[%s1] sm:$0xf]
      %v337 = vld [vmem:[%s1 + $0x4] sm:$0xf]
      %v338 = vld [vmem:[%s1 + $0x8] sm:$0xf]
      %v339 = vld [vmem:[%s1 + $0xc] sm:$0xf]
      %v340 = vld [vmem:[%s1 + $0x10] sm:$0xf]
      %v341 = vld [vmem:[%s1 + $0x14] sm:$0xf]
      %v342 = vld [vmem:[%s1 + $0x18] sm:$0xf]
      %v343 = vld [vmem:[%s1 + $0x1c] sm:$0xf]
      %v344 = vld [vmem:[%s1 + $0x20] sm:$0xf]
      %v345 = vld [vmem:[%s1 + $0x24] sm:$0xf]
      %v346 = vld [vmem:[%s1 + $0x28] sm:$0xf]
      %v347 = vld [vmem:[%s1 + $0x2c] sm:$0xf]
      %v348 = vld [vmem:[%s1 + $0x30] sm:$0xf]
      %v349 = vld [vmem:[%s1 + $0x34] sm:$0xf]
      %v350 = vld [vmem:[%s1 + $0x38] sm:$0xf]
      %v351 = vld [vmem:[%s1 + $0x3c] sm:$0xf]
      %v352 = vld [vmem:[%s1 + $0x40] sm:$0xf]
      %v353 = vld [vmem:[%s1 + $0x44] sm:$0xf]
      %v354 = vld [vmem:[%s1 + $0x48] sm:$0xf]
      %v355 = vld [vmem:[%s1 + $0x4c] sm:$0xf]
      %v356 = vld [vmem:[%s1 + $0x50] sm:$0xf]
      %v357 = vld [vmem:[%s1 + $0x54] sm:$0xf]
      %v358 = vld [vmem:[%s1 + $0x58] sm:$0xf]
      %v359 = vld [vmem:[%s1 + $0x5c] sm:$0xf]
      %v360 = vld [vmem:[%s1 + $0x60] sm:$0xf]
      %v361 = vld [vmem:[%s1 + $0x64] sm:$0xf]
      %v362 = vld [vmem:[%s1 + $0x68] sm:$0xf]
      %v363 = vld [vmem:[%s1 + $0x6c] sm:$0xf]
      %v364 = vld [vmem:[%s1 + $0x70] sm:$0xf]
      %v365 = vld [vmem:[%s1 + $0x74] sm:$0xf]
      %v366 = vld [vmem:[%s1 + $0x78] sm:$0xf]
      %v367 = vld [vmem:[%s1 + $0x7c] sm:$0xf]
      %v368 = vld [vmem:[%s2] sm:$0x1]
      %v370 = vperm.slane %v368, 0
      %v428 = vunpack.c.l.b16 %v280
      %v429 = vunpack.c.h.b16 %v280
      %v430 = vunpack.c.l.b16 %v281
      %v431 = vunpack.c.h.b16 %v281
      %v432 = vunpack.c.l.b16 %v282
      %v433 = vunpack.c.h.b16 %v282
      %v434 = vunpack.c.l.b16 %v283
      %v435 = vunpack.c.h.b16 %v283
      %v436 = vunpack.c.l.b16 %v284
      %v437 = vunpack.c.h.b16 %v284
      %v438 = vunpack.c.l.b16 %v285
      %v439 = vunpack.c.h.b16 %v285
      %v440 = vunpack.c.l.b16 %v286
      %v441 = vunpack.c.h.b16 %v286
      %v442 = vunpack.c.l.b16 %v287
      %v443 = vunpack.c.h.b16 %v287
      %v444 = vunpack.c.l.b16 %v288
      %v445 = vunpack.c.h.b16 %v288
      %v446 = vunpack.c.l.b16 %v289
      %v447 = vunpack.c.h.b16 %v289
      %v448 = vunpack.c.l.b16 %v290
      %v449 = vunpack.c.h.b16 %v290
      %v450 = vunpack.c.l.b16 %v291
      %v451 = vunpack.c.h.b16 %v291
      %v452 = vunpack.c.l.b16 %v292
      %v453 = vunpack.c.h.b16 %v292
      %v454 = vunpack.c.l.b16 %v293
      %v455 = vunpack.c.h.b16 %v293
      %v456 = vunpack.c.l.b16 %v294
      %v457 = vunpack.c.h.b16 %v294
      %v458 = vunpack.c.l.b16 %v295
      %v459 = vunpack.c.h.b16 %v295
      %v460 = vunpack.c.l.b16 %v296
      %v461 = vunpack.c.h.b16 %v296
      %v462 = vunpack.c.l.b16 %v297
      %v463 = vunpack.c.h.b16 %v297
      %v464 = vunpack.c.l.b16 %v298
      %v465 = vunpack.c.h.b16 %v298
      %v466 = vunpack.c.l.b16 %v299
      %v467 = vunpack.c.h.b16 %v299
      %v468 = vunpack.c.l.b16 %v300
      %v469 = vunpack.c.h.b16 %v300
      %v470 = vunpack.c.l.b16 %v301
      %v471 = vunpack.c.h.b16 %v301
      %v472 = vunpack.c.l.b16 %v302
      %v473 = vunpack.c.h.b16 %v302
      %v474 = vunpack.c.l.b16 %v303
      %v475 = vunpack.c.h.b16 %v303
      %v476 = vunpack.c.l.b16 %v304
      %v477 = vunpack.c.h.b16 %v304
      %v478 = vunpack.c.l.b16 %v305
      %v479 = vunpack.c.h.b16 %v305
      %v480 = vunpack.c.l.b16 %v306
      %v481 = vunpack.c.h.b16 %v306
      %v482 = vunpack.c.l.b16 %v307
      %v483 = vunpack.c.h.b16 %v307
      %v484 = vunpack.c.l.b16 %v308
      %v485 = vunpack.c.h.b16 %v308
      %v486 = vunpack.c.l.b16 %v309
      %v487 = vunpack.c.h.b16 %v309
      %v488 = vunpack.c.l.b16 %v310
      %v489 = vunpack.c.h.b16 %v310
      %v490 = vunpack.c.l.b16 %v311
      %v491 = vunpack.c.h.b16 %v311
      %v492 = vunpack.c.l.b16 %v312
      %v493 = vunpack.c.h.b16 %v312
      %v494 = vunpack.c.l.b16 %v313
      %v495 = vunpack.c.h.b16 %v313
      %v496 = vunpack.c.l.b16 %v314
      %v497 = vunpack.c.h.b16 %v314
      %v498 = vunpack.c.l.b16 %v315
      %v499 = vunpack.c.h.b16 %v315
      %v500 = vunpack.c.l.b16 %v316
      %v501 = vunpack.c.h.b16 %v316
      %v502 = vunpack.c.l.b16 %v317
      %v503 = vunpack.c.h.b16 %v317
      %v504 = vunpack.c.l.b16 %v318
      %v505 = vunpack.c.h.b16 %v318
      %v506 = vunpack.c.l.b16 %v319
      %v507 = vunpack.c.h.b16 %v319
      %v508 = vunpack.c.l.b16 %v320
      %v509 = vunpack.c.h.b16 %v320
      %v510 = vunpack.c.l.b16 %v321
      %v511 = vunpack.c.h.b16 %v321
      %v512 = vunpack.c.l.b16 %v322
      %v513 = vunpack.c.h.b16 %v322
      %v514 = vunpack.c.l.b16 %v323
      %v515 = vunpack.c.h.b16 %v323
      %v516 = vunpack.c.l.b16 %v324
      %v517 = vunpack.c.h.b16 %v324
      %v518 = vunpack.c.l.b16 %v325
      %v519 = vunpack.c.h.b16 %v325
      %v520 = vunpack.c.l.b16 %v326
      %v521 = vunpack.c.h.b16 %v326
      %v522 = vunpack.c.l.b16 %v327
      %v523 = vunpack.c.h.b16 %v327
      %v524 = vunpack.c.l.b16 %v328
      %v525 = vunpack.c.h.b16 %v328
      %v526 = vunpack.c.l.b16 %v329
      %v527 = vunpack.c.h.b16 %v329
      %v528 = vunpack.c.l.b16 %v330
      %v529 = vunpack.c.h.b16 %v330
      %v530 = vunpack.c.l.b16 %v331
      %v531 = vunpack.c.h.b16 %v331
      %v532 = vunpack.c.l.b16 %v332
      %v533 = vunpack.c.h.b16 %v332
      %v534 = vunpack.c.l.b16 %v333
      %v535 = vunpack.c.h.b16 %v333
      %v536 = vunpack.c.l.b16 %v334
      %v537 = vunpack.c.h.b16 %v334
      %v538 = vunpack.c.l.b16 %v335
      %v539 = vunpack.c.h.b16 %v335
      %v540 = vpack.c.b16 %v430, %v428
      %v541 = vpack.c.b16 %v431, %v429
      %v542 = vpack.c.b16 %v434, %v432
      %v543 = vpack.c.b16 %v435, %v433
      %v544 = vpack.c.b16 %v438, %v436
      %v545 = vpack.c.b16 %v439, %v437
      %v546 = vpack.c.b16 %v442, %v440
      %v547 = vpack.c.b16 %v443, %v441
      %v548 = vpack.c.b16 %v446, %v444
      %v549 = vpack.c.b16 %v447, %v445
      %v550 = vpack.c.b16 %v450, %v448
      %v551 = vpack.c.b16 %v451, %v449
      %v552 = vpack.c.b16 %v454, %v452
      %v553 = vpack.c.b16 %v455, %v453
      %v554 = vpack.c.b16 %v458, %v456
      %v555 = vpack.c.b16 %v459, %v457
      %v556 = vpack.c.b16 %v462, %v460
      %v557 = vpack.c.b16 %v463, %v461
      %v558 = vpack.c.b16 %v466, %v464
      %v559 = vpack.c.b16 %v467, %v465
      %v560 = vpack.c.b16 %v470, %v468
      %v561 = vpack.c.b16 %v471, %v469
      %v562 = vpack.c.b16 %v474, %v472
      %v563 = vpack.c.b16 %v475, %v473
      %v564 = vpack.c.b16 %v478, %v476
      %v565 = vpack.c.b16 %v479, %v477
      %v566 = vpack.c.b16 %v482, %v480
      %v567 = vpack.c.b16 %v483, %v481
      %v568 = vpack.c.b16 %v486, %v484
      %v569 = vpack.c.b16 %v487, %v485
      %v570 = vpack.c.b16 %v490, %v488
      %v571 = vpack.c.b16 %v491, %v489
      %v572 = vpack.c.b16 %v494, %v492
      %v573 = vpack.c.b16 %v495, %v493
      %v574 = vpack.c.b16 %v498, %v496
      %v575 = vpack.c.b16 %v499, %v497
      %v576 = vpack.c.b16 %v502, %v500
      %v577 = vpack.c.b16 %v503, %v501
      %v578 = vpack.c.b16 %v506, %v504
      %v579 = vpack.c.b16 %v507, %v505
      %v580 = vpack.c.b16 %v510, %v508
      %v581 = vpack.c.b16 %v511, %v509
      %v582 = vpack.c.b16 %v514, %v512
      %v583 = vpack.c.b16 %v515, %v513
      %v584 = vpack.c.b16 %v518, %v516
      %v585 = vpack.c.b16 %v519, %v517
      %v586 = vpack.c.b16 %v522, %v520
      %v587 = vpack.c.b16 %v523, %v521
      %v588 = vpack.c.b16 %v526, %v524
      %v589 = vpack.c.b16 %v527, %v525
      %v590 = vpack.c.b16 %v530, %v528
      %v591 = vpack.c.b16 %v531, %v529
      %v592 = vpack.c.b16 %v534, %v532
      %v593 = vpack.c.b16 %v535, %v533
      %v594 = vpack.c.b16 %v538, %v536
      %v595 = vpack.c.b16 %v539, %v537
      %v684 = vunpack.c.l.b16 %v336
      %v685 = vunpack.c.l.b16 %v337
      %v686 = vunpack.c.l.b16 %v338
      %v687 = vunpack.c.l.b16 %v339
      %v688 = vunpack.c.l.b16 %v340
      %v689 = vunpack.c.l.b16 %v341
      %v690 = vunpack.c.l.b16 %v342
      %v691 = vunpack.c.l.b16 %v343
      %v692 = vunpack.c.l.b16 %v344
      %v693 = vunpack.c.l.b16 %v345
      %v694 = vunpack.c.l.b16 %v346
      %v695 = vunpack.c.l.b16 %v347
      %v696 = vunpack.c.l.b16 %v348
      %v697 = vunpack.c.l.b16 %v349
      %v698 = vunpack.c.l.b16 %v350
      %v699 = vunpack.c.l.b16 %v351
      %v700 = vunpack.c.l.b16 %v352
      %v701 = vunpack.c.l.b16 %v353
      %v702 = vunpack.c.l.b16 %v354
      %v703 = vunpack.c.l.b16 %v355
      %v704 = vunpack.c.l.b16 %v356
      %v705 = vunpack.c.l.b16 %v357
      %v706 = vunpack.c.l.b16 %v358
      %v707 = vunpack.c.l.b16 %v359
      %v708 = vunpack.c.l.b16 %v360
      %v709 = vunpack.c.l.b16 %v361
      %v710 = vunpack.c.l.b16 %v362
      %v711 = vunpack.c.l.b16 %v363
      %v712 = vunpack.c.l.b16 %v364
      %v713 = vunpack.c.l.b16 %v365
      %v714 = vunpack.c.l.b16 %v366
      %v715 = vunpack.c.l.b16 %v367
      %v716 = vpack.c.b16 %v685, %v684
      %v717 = vpack.c.b16 %v687, %v686
      %v718 = vpack.c.b16 %v689, %v688
      %v719 = vpack.c.b16 %v691, %v690
      %v720 = vpack.c.b16 %v693, %v692
      %v721 = vpack.c.b16 %v695, %v694
      %v722 = vpack.c.b16 %v697, %v696
      %v723 = vpack.c.b16 %v699, %v698
      %v724 = vpack.c.b16 %v701, %v700
      %v725 = vpack.c.b16 %v703, %v702
      %v726 = vpack.c.b16 %v705, %v704
      %v727 = vpack.c.b16 %v707, %v706
      %v728 = vpack.c.b16 %v709, %v708
      %v729 = vpack.c.b16 %v711, %v710
      %v730 = vpack.c.b16 %v713, %v712
      %v731 = vpack.c.b16 %v715, %v714
      %748 = vmatpush.bf16.msra.mxu0 %v723
      %749 = vmatpush.bf16.msra.mxu0 %v722
      %750 = vmatpush.bf16.msra.mxu0 %v721
      %751 = vmatpush.bf16.msra.mxu0 %v720
      %752 = vmatpush.bf16.msra.mxu0 %v719
      %753 = vmatpush.bf16.msra.mxu0 %v718
      %754 = vmatpush.bf16.msra.mxu0 %v717
      %755 = vmatpush.bf16.msra.mxu0 %v716
      %756 = vmatmul.bf16.gmra.mxu0 %v540
      %v757 = vpop.f32.mrf.mxu0
      %v758 = vadd.f32 %v370, %v757
      %v759 = vpop.f32.mrf.mxu0
      %v760 = vadd.f32 %v370, %v759
      %761 = vmatmul.bf16.gmra.mxu0 %v542
      %v762 = vpop.f32.mrf.mxu0
      %v763 = vadd.f32 %v370, %v762
      %v764 = vpop.f32.mrf.mxu0
      %v765 = vadd.f32 %v370, %v764
      %766 = vmatmul.bf16.gmra.mxu0 %v544
      %v767 = vpop.f32.mrf.mxu0
      %v768 = vadd.f32 %v370, %v767
      %v769 = vpop.f32.mrf.mxu0
      %v770 = vadd.f32 %v370, %v769
      %771 = vmatmul.bf16.gmra.mxu0 %v546
      %v772 = vpop.f32.mrf.mxu0
      %v773 = vadd.f32 %v370, %v772
      %v774 = vpop.f32.mrf.mxu0
      %v775 = vadd.f32 %v370, %v774
      %776 = vmatmul.bf16.gmra.mxu0 %v548
      %v777 = vpop.f32.mrf.mxu0
      %v778 = vadd.f32 %v370, %v777
      %v779 = vpop.f32.mrf.mxu0
      %v780 = vadd.f32 %v370, %v779
      %781 = vmatmul.bf16.gmra.mxu0 %v550
      %v782 = vpop.f32.mrf.mxu0
      %v783 = vadd.f32 %v370, %v782
      %v784 = vpop.f32.mrf.mxu0
      %v785 = vadd.f32 %v370, %v784
      %786 = vmatmul.bf16.gmra.mxu0 %v552
      %v787 = vpop.f32.mrf.mxu0
      %v788 = vadd.f32 %v370, %v787
      %v789 = vpop.f32.mrf.mxu0
      %v790 = vadd.f32 %v370, %v789
      %791 = vmatmul.bf16.gmra.mxu0 %v554
      %v792 = vpop.f32.mrf.mxu0
      %v793 = vadd.f32 %v370, %v792
      %v794 = vpop.f32.mrf.mxu0
      %v795 = vadd.f32 %v370, %v794
      %796 = vmatmul.bf16.gmra.mxu0 %v556
      %v797 = vpop.f32.mrf.mxu0
      %v798 = vadd.f32 %v370, %v797
      %v799 = vpop.f32.mrf.mxu0
      %v800 = vadd.f32 %v370, %v799
      %801 = vmatmul.bf16.gmra.mxu0 %v558
      %v802 = vpop.f32.mrf.mxu0
      %v803 = vadd.f32 %v370, %v802
      %v804 = vpop.f32.mrf.mxu0
      %v805 = vadd.f32 %v370, %v804
      %806 = vmatmul.bf16.gmra.mxu0 %v560
      %v807 = vpop.f32.mrf.mxu0
      %v808 = vadd.f32 %v370, %v807
      %v809 = vpop.f32.mrf.mxu0
      %v810 = vadd.f32 %v370, %v809
      %811 = vmatmul.bf16.gmra.mxu0 %v562
      %v812 = vpop.f32.mrf.mxu0
      %v813 = vadd.f32 %v370, %v812
      %v814 = vpop.f32.mrf.mxu0
      %v815 = vadd.f32 %v370, %v814
      %816 = vmatmul.bf16.gmra.mxu0 %v564
      %v817 = vpop.f32.mrf.mxu0
      %v818 = vadd.f32 %v370, %v817
      %v819 = vpop.f32.mrf.mxu0
      %v820 = vadd.f32 %v370, %v819
      %821 = vmatmul.bf16.gmra.mxu0 %v566
      %v822 = vpop.f32.mrf.mxu0
      %v823 = vadd.f32 %v370, %v822
      %v824 = vpop.f32.mrf.mxu0
      %v825 = vadd.f32 %v370, %v824
      %826 = vmatmul.bf16.gmra.mxu0 %v568
      %v827 = vpop.f32.mrf.mxu0
      %v828 = vadd.f32 %v370, %v827
      %v829 = vpop.f32.mrf.mxu0
      %v830 = vadd.f32 %v370, %v829
      %831 = vmatmul.bf16.gmra.mxu0 %v570
      %v832 = vpop.f32.mrf.mxu0
      %v833 = vadd.f32 %v370, %v832
      %v834 = vpop.f32.mrf.mxu0
      %v835 = vadd.f32 %v370, %v834
      %836 = vmatmul.bf16.gmra.mxu0 %v572
      %v837 = vpop.f32.mrf.mxu0
      %v838 = vadd.f32 %v370, %v837
      %v839 = vpop.f32.mrf.mxu0
      %v840 = vadd.f32 %v370, %v839
      %841 = vmatmul.bf16.gmra.mxu0 %v574
      %v842 = vpop.f32.mrf.mxu0
      %v843 = vadd.f32 %v370, %v842
      %v844 = vpop.f32.mrf.mxu0
      %v845 = vadd.f32 %v370, %v844
      %846 = vmatmul.bf16.gmra.mxu0 %v576
      %v847 = vpop.f32.mrf.mxu0
      %v848 = vadd.f32 %v370, %v847
      %v849 = vpop.f32.mrf.mxu0
      %v850 = vadd.f32 %v370, %v849
      %851 = vmatmul.bf16.gmra.mxu0 %v578
      %v852 = vpop.f32.mrf.mxu0
      %v853 = vadd.f32 %v370, %v852
      %v854 = vpop.f32.mrf.mxu0
      %v855 = vadd.f32 %v370, %v854
      %856 = vmatmul.bf16.gmra.mxu0 %v580
      %v857 = vpop.f32.mrf.mxu0
      %v858 = vadd.f32 %v370, %v857
      %v859 = vpop.f32.mrf.mxu0
      %v860 = vadd.f32 %v370, %v859
      %861 = vmatmul.bf16.gmra.mxu0 %v582
      %v862 = vpop.f32.mrf.mxu0
      %v863 = vadd.f32 %v370, %v862
      %v864 = vpop.f32.mrf.mxu0
      %v865 = vadd.f32 %v370, %v864
      %866 = vmatmul.bf16.gmra.mxu0 %v584
      %v867 = vpop.f32.mrf.mxu0
      %v868 = vadd.f32 %v370, %v867
      %v869 = vpop.f32.mrf.mxu0
      %v870 = vadd.f32 %v370, %v869
      %871 = vmatmul.bf16.gmra.mxu0 %v586
      %v872 = vpop.f32.mrf.mxu0
      %v873 = vadd.f32 %v370, %v872
      %v874 = vpop.f32.mrf.mxu0
      %v875 = vadd.f32 %v370, %v874
      %876 = vmatmul.bf16.gmra.mxu0 %v588
      %v877 = vpop.f32.mrf.mxu0
      %v878 = vadd.f32 %v370, %v877
      %v879 = vpop.f32.mrf.mxu0
      %v880 = vadd.f32 %v370, %v879
      %881 = vmatmul.bf16.gmra.mxu0 %v590
      %v882 = vpop.f32.mrf.mxu0
      %v883 = vadd.f32 %v370, %v882
      %v884 = vpop.f32.mrf.mxu0
      %v885 = vadd.f32 %v370, %v884
      %886 = vmatmul.bf16.gmra.mxu0 %v592
      %v887 = vpop.f32.mrf.mxu0
      %v888 = vadd.f32 %v370, %v887
      %v889 = vpop.f32.mrf.mxu0
      %v890 = vadd.f32 %v370, %v889
      %891 = vmatmul.bf16.gmra.mxu0 %v594
      %v892 = vpop.f32.mrf.mxu0
      %v893 = vadd.f32 %v370, %v892
      %v894 = vpop.f32.mrf.mxu0
      %v895 = vadd.f32 %v370, %v894
      %896 = vdwg.mxu0
      %897 = vmatpush.bf16.msra.mxu0 %v731
      %898 = vmatpush.bf16.msra.mxu0 %v730
      %899 = vmatpush.bf16.msra.mxu0 %v729
      %900 = vmatpush.bf16.msra.mxu0 %v728
      %901 = vmatpush.bf16.msra.mxu0 %v727
      %902 = vmatpush.bf16.msra.mxu0 %v726
      %903 = vmatpush.bf16.msra.mxu0 %v725
      %904 = vmatpush.bf16.msra.mxu0 %v724
      %905 = vmatmul.bf16.gmra.mxu0 %v541
      %v906 = vpop.f32.mrf.mxu0
      %v907 = vadd.f32 %v758, %v906
      %v908 = vpop.f32.mrf.mxu0
      %v909 = vadd.f32 %v760, %v908
      %910 = vmatmul.bf16.gmra.mxu0 %v543
      %v911 = vpop.f32.mrf.mxu0
      %v912 = vadd.f32 %v763, %v911
      %v913 = vpop.f32.mrf.mxu0
      %v914 = vadd.f32 %v765, %v913
      %915 = vmatmul.bf16.gmra.mxu0 %v545
      %v916 = vpop.f32.mrf.mxu0
      %v917 = vadd.f32 %v768, %v916
      %v918 = vpop.f32.mrf.mxu0
      %v919 = vadd.f32 %v770, %v918
      %920 = vmatmul.bf16.gmra.mxu0 %v547
      %v921 = vpop.f32.mrf.mxu0
      %v922 = vadd.f32 %v773, %v921
      %v923 = vpop.f32.mrf.mxu0
      %v924 = vadd.f32 %v775, %v923
      %925 = vmatmul.bf16.gmra.mxu0 %v549
      %v926 = vpop.f32.mrf.mxu0
      %v927 = vadd.f32 %v778, %v926
      %v928 = vpop.f32.mrf.mxu0
      %v929 = vadd.f32 %v780, %v928
      %930 = vmatmul.bf16.gmra.mxu0 %v551
      %v931 = vpop.f32.mrf.mxu0
      %v932 = vadd.f32 %v783, %v931
      %v933 = vpop.f32.mrf.mxu0
      %v934 = vadd.f32 %v785, %v933
      %935 = vmatmul.bf16.gmra.mxu0 %v553
      %v936 = vpop.f32.mrf.mxu0
      %v937 = vadd.f32 %v788, %v936
      %v938 = vpop.f32.mrf.mxu0
      %v939 = vadd.f32 %v790, %v938
      %940 = vmatmul.bf16.gmra.mxu0 %v555
      %v941 = vpop.f32.mrf.mxu0
      %v942 = vadd.f32 %v793, %v941
      %v943 = vpop.f32.mrf.mxu0
      %v944 = vadd.f32 %v795, %v943
      %945 = vmatmul.bf16.gmra.mxu0 %v557
      %v946 = vpop.f32.mrf.mxu0
      %v947 = vadd.f32 %v798, %v946
      %v948 = vpop.f32.mrf.mxu0
      %v949 = vadd.f32 %v800, %v948
      %950 = vmatmul.bf16.gmra.mxu0 %v559
      %v951 = vpop.f32.mrf.mxu0
      %v952 = vadd.f32 %v803, %v951
      %v953 = vpop.f32.mrf.mxu0
      %v954 = vadd.f32 %v805, %v953
      %955 = vmatmul.bf16.gmra.mxu0 %v561
      %v956 = vpop.f32.mrf.mxu0
      %v957 = vadd.f32 %v808, %v956
      %v958 = vpop.f32.mrf.mxu0
      %v959 = vadd.f32 %v810, %v958
      %960 = vmatmul.bf16.gmra.mxu0 %v563
      %v961 = vpop.f32.mrf.mxu0
      %v962 = vadd.f32 %v813, %v961
      %v963 = vpop.f32.mrf.mxu0
      %v964 = vadd.f32 %v815, %v963
      %965 = vmatmul.bf16.gmra.mxu0 %v565
      %v966 = vpop.f32.mrf.mxu0
      %v967 = vadd.f32 %v818, %v966
      %v968 = vpop.f32.mrf.mxu0
      %v969 = vadd.f32 %v820, %v968
      %970 = vmatmul.bf16.gmra.mxu0 %v567
      %v971 = vpop.f32.mrf.mxu0
      %v972 = vadd.f32 %v823, %v971
      %v973 = vpop.f32.mrf.mxu0
      %v974 = vadd.f32 %v825, %v973
      %975 = vmatmul.bf16.gmra.mxu0 %v569
      %v976 = vpop.f32.mrf.mxu0
      %v977 = vadd.f32 %v828, %v976
      %v978 = vpop.f32.mrf.mxu0
      %v979 = vadd.f32 %v830, %v978
      %980 = vmatmul.bf16.gmra.mxu0 %v571
      %v981 = vpop.f32.mrf.mxu0
      %v982 = vadd.f32 %v833, %v981
      %v983 = vpop.f32.mrf.mxu0
      %v984 = vadd.f32 %v835, %v983
      %985 = vmatmul.bf16.gmra.mxu0 %v573
      %v986 = vpop.f32.mrf.mxu0
      %v987 = vadd.f32 %v838, %v986
      %v988 = vpop.f32.mrf.mxu0
      %v989 = vadd.f32 %v840, %v988
      %990 = vmatmul.bf16.gmra.mxu0 %v575
      %v991 = vpop.f32.mrf.mxu0
      %v992 = vadd.f32 %v843, %v991
      %v993 = vpop.f32.mrf.mxu0
      %v994 = vadd.f32 %v845, %v993
      %995 = vmatmul.bf16.gmra.mxu0 %v577
      %v996 = vpop.f32.mrf.mxu0
      %v997 = vadd.f32 %v848, %v996
      %v998 = vpop.f32.mrf.mxu0
      %v999 = vadd.f32 %v850, %v998
      %1000 = vmatmul.bf16.gmra.mxu0 %v579
      %v1001 = vpop.f32.mrf.mxu0
      %v1002 = vadd.f32 %v853, %v1001
      %v1003 = vpop.f32.mrf.mxu0
      %v1004 = vadd.f32 %v855, %v1003
      %1005 = vmatmul.bf16.gmra.mxu0 %v581
      %v1006 = vpop.f32.mrf.mxu0
      %v1007 = vadd.f32 %v858, %v1006
      %v1008 = vpop.f32.mrf.mxu0
      %v1009 = vadd.f32 %v860, %v1008
      %1010 = vmatmul.bf16.gmra.mxu0 %v583
      %v1011 = vpop.f32.mrf.mxu0
      %v1012 = vadd.f32 %v863, %v1011
      %v1013 = vpop.f32.mrf.mxu0
      %v1014 = vadd.f32 %v865, %v1013
      %1015 = vmatmul.bf16.gmra.mxu0 %v585
      %v1016 = vpop.f32.mrf.mxu0
      %v1017 = vadd.f32 %v868, %v1016
      %v1018 = vpop.f32.mrf.mxu0
      %v1019 = vadd.f32 %v870, %v1018
      %1020 = vmatmul.bf16.gmra.mxu0 %v587
      %v1021 = vpop.f32.mrf.mxu0
      %v1022 = vadd.f32 %v873, %v1021
      %v1023 = vpop.f32.mrf.mxu0
      %v1024 = vadd.f32 %v875, %v1023
      %1025 = vmatmul.bf16.gmra.mxu0 %v589
      %v1026 = vpop.f32.mrf.mxu0
      %v1027 = vadd.f32 %v878, %v1026
      %v1028 = vpop.f32.mrf.mxu0
      %v1029 = vadd.f32 %v880, %v1028
      %1030 = vmatmul.bf16.gmra.mxu0 %v591
      %v1031 = vpop.f32.mrf.mxu0
      %v1032 = vadd.f32 %v883, %v1031
      %v1033 = vpop.f32.mrf.mxu0
      %v1034 = vadd.f32 %v885, %v1033
      %1035 = vmatmul.bf16.gmra.mxu0 %v593
      %v1036 = vpop.f32.mrf.mxu0
      %v1037 = vadd.f32 %v888, %v1036
      %v1038 = vpop.f32.mrf.mxu0
      %v1039 = vadd.f32 %v890, %v1038
      %1040 = vmatmul.bf16.gmra.mxu0 %v595
      %v1041 = vpop.f32.mrf.mxu0
      %v1042 = vadd.f32 %v893, %v1041
      %v1043 = vpop.f32.mrf.mxu0
      %v1044 = vadd.f32 %v895, %v1043
      %1045 = vdwg.mxu0
      %v1046 = vmax.f32 %v907, 0.0
      %v1047 = vmax.f32 %v909, 0.0
      %v1048 = vmax.f32 %v912, 0.0
      %v1049 = vmax.f32 %v914, 0.0
      %v1050 = vmax.f32 %v917, 0.0
      %v1051 = vmax.f32 %v919, 0.0
      %v1052 = vmax.f32 %v922, 0.0
      %v1053 = vmax.f32 %v924, 0.0
      %v1054 = vmax.f32 %v927, 0.0
      %v1055 = vmax.f32 %v929, 0.0
      %v1056 = vmax.f32 %v932, 0.0
      %v1057 = vmax.f32 %v934, 0.0
      %v1058 = vmax.f32 %v937, 0.0
      %v1059 = vmax.f32 %v939, 0.0
      %v1060 = vmax.f32 %v942, 0.0
      %v1061 = vmax.f32 %v944, 0.0
      %v1062 = vmax.f32 %v947, 0.0
      %v1063 = vmax.f32 %v949, 0.0
      %v1064 = vmax.f32 %v952, 0.0
      %v1065 = vmax.f32 %v954, 0.0
      %v1066 = vmax.f32 %v957, 0.0
      %v1067 = vmax.f32 %v959, 0.0
      %v1068 = vmax.f32 %v962, 0.0
      %v1069 = vmax.f32 %v964, 0.0
      %v1070 = vmax.f32 %v967, 0.0
      %v1071 = vmax.f32 %v969, 0.0
      %v1072 = vmax.f32 %v972, 0.0
      %v1073 = vmax.f32 %v974, 0.0
      %v1074 = vmax.f32 %v977, 0.0
      %v1075 = vmax.f32 %v979, 0.0
      %v1076 = vmax.f32 %v982, 0.0
      %v1077 = vmax.f32 %v984, 0.0
      %v1078 = vmax.f32 %v987, 0.0
      %v1079 = vmax.f32 %v989, 0.0
      %v1080 = vmax.f32 %v992, 0.0
      %v1081 = vmax.f32 %v994, 0.0
      %v1082 = vmax.f32 %v997, 0.0
      %v1083 = vmax.f32 %v999, 0.0
      %v1084 = vmax.f32 %v1002, 0.0
      %v1085 = vmax.f32 %v1004, 0.0
      %v1086 = vmax.f32 %v1007, 0.0
      %v1087 = vmax.f32 %v1009, 0.0
      %v1088 = vmax.f32 %v1012, 0.0
      %v1089 = vmax.f32 %v1014, 0.0
      %v1090 = vmax.f32 %v1017, 0.0
      %v1091 = vmax.f32 %v1019, 0.0
      %v1092 = vmax.f32 %v1022, 0.0
      %v1093 = vmax.f32 %v1024, 0.0
      %v1094 = vmax.f32 %v1027, 0.0
      %v1095 = vmax.f32 %v1029, 0.0
      %v1096 = vmax.f32 %v1032, 0.0
      %v1097 = vmax.f32 %v1034, 0.0
      %v1098 = vmax.f32 %v1037, 0.0
      %v1099 = vmax.f32 %v1039, 0.0
      %v1100 = vmax.f32 %v1042, 0.0
      %v1101 = vmax.f32 %v1044, 0.0
      %vm1102 = vcmask 261120
      %1103 = vst.msk [vmem:[#allocation2] sm:$0xff] %vm1102, %v1046
      %1104 = vst.msk [vmem:[#allocation2 + $0x8] sm:$0xff] %vm1102, %v1047
      %1105 = vst.msk [vmem:[#allocation2 + $0x10] sm:$0xff] %vm1102, %v1048
      %1106 = vst.msk [vmem:[#allocation2 + $0x18] sm:$0xff] %vm1102, %v1049
      %1107 = vst.msk [vmem:[#allocation2 + $0x20] sm:$0xff] %vm1102, %v1050
      %1108 = vst.msk [vmem:[#allocation2 + $0x28] sm:$0xff] %vm1102, %v1051
      %1109 = vst.msk [vmem:[#allocation2 + $0x30] sm:$0xff] %vm1102, %v1052
      %1110 = vst.msk [vmem:[#allocation2 + $0x38] sm:$0xff] %vm1102, %v1053
      %1111 = vst.msk [vmem:[#allocation2 + $0x40] sm:$0xff] %vm1102, %v1054
      %1112 = vst.msk [vmem:[#allocation2 + $0x48] sm:$0xff] %vm1102, %v1055
      %1113 = vst.msk [vmem:[#allocation2 + $0x50] sm:$0xff] %vm1102, %v1056
      %1114 = vst.msk [vmem:[#allocation2 + $0x58] sm:$0xff] %vm1102, %v1057
      %1115 = vst.msk [vmem:[#allocation2 + $0x60] sm:$0xff] %vm1102, %v1058
      %1116 = vst.msk [vmem:[#allocation2 + $0x68] sm:$0xff] %vm1102, %v1059
      %1117 = vst.msk [vmem:[#allocation2 + $0x70] sm:$0xff] %vm1102, %v1060
      %1118 = vst.msk [vmem:[#allocation2 + $0x78] sm:$0xff] %vm1102, %v1061
      %1119 = vst.msk [vmem:[#allocation2 + $0x80] sm:$0xff] %vm1102, %v1062
      %1120 = vst.msk [vmem:[#allocation2 + $0x88] sm:$0xff] %vm1102, %v1063
      %1121 = vst.msk [vmem:[#allocation2 + $0x90] sm:$0xff] %vm1102, %v1064
      %1122 = vst.msk [vmem:[#allocation2 + $0x98] sm:$0xff] %vm1102, %v1065
      %1123 = vst.msk [vmem:[#allocation2 + $0xa0] sm:$0xff] %vm1102, %v1066
      %1124 = vst.msk [vmem:[#allocation2 + $0xa8] sm:$0xff] %vm1102, %v1067
      %1125 = vst.msk [vmem:[#allocation2 + $0xb0] sm:$0xff] %vm1102, %v1068
      %1126 = vst.msk [vmem:[#allocation2 + $0xb8] sm:$0xff] %vm1102, %v1069
      %1127 = vst.msk [vmem:[#allocation2 + $0xc0] sm:$0xff] %vm1102, %v1070
      %1128 = vst.msk [vmem:[#allocation2 + $0xc8] sm:$0xff] %vm1102, %v1071
      %1129 = vst.msk [vmem:[#allocation2 + $0xd0] sm:$0xff] %vm1102, %v1072
      %1130 = vst.msk [vmem:[#allocation2 + $0xd8] sm:$0xff] %vm1102, %v1073
      %1131 = vst.msk [vmem:[#allocation2 + $0xe0] sm:$0xff] %vm1102, %v1074
      %1132 = vst.msk [vmem:[#allocation2 + $0xe8] sm:$0xff] %vm1102, %v1075
      %1133 = vst.msk [vmem:[#allocation2 + $0xf0] sm:$0xff] %vm1102, %v1076
      %1134 = vst.msk [vmem:[#allocation2 + $0xf8] sm:$0xff] %vm1102, %v1077
      %1135 = vst.msk [vmem:[#allocation2 + $0x100] sm:$0xff] %vm1102, %v1078
      %1136 = vst.msk [vmem:[#allocation2 + $0x108] sm:$0xff] %vm1102, %v1079
      %1137 = vst.msk [vmem:[#allocation2 + $0x110] sm:$0xff] %vm1102, %v1080
      %1138 = vst.msk [vmem:[#allocation2 + $0x118] sm:$0xff] %vm1102, %v1081
      %1139 = vst.msk [vmem:[#allocation2 + $0x120] sm:$0xff] %vm1102, %v1082
      %1140 = vst.msk [vmem:[#allocation2 + $0x128] sm:$0xff] %vm1102, %v1083
      %1141 = vst.msk [vmem:[#allocation2 + $0x130] sm:$0xff] %vm1102, %v1084
      %1142 = vst.msk [vmem:[#allocation2 + $0x138] sm:$0xff] %vm1102, %v1085
      %1143 = vst.msk [vmem:[#allocation2 + $0x140] sm:$0xff] %vm1102, %v1086
      %1144 = vst.msk [vmem:[#allocation2 + $0x148] sm:$0xff] %vm1102, %v1087
      %1145 = vst.msk [vmem:[#allocation2 + $0x150] sm:$0xff] %vm1102, %v1088
      %1146 = vst.msk [vmem:[#allocation2 + $0x158] sm:$0xff] %vm1102, %v1089
      %1147 = vst.msk [vmem:[#allocation2 + $0x160] sm:$0xff] %vm1102, %v1090
      %1148 = vst.msk [vmem:[#allocation2 + $0x168] sm:$0xff] %vm1102, %v1091
      %1149 = vst.msk [vmem:[#allocation2 + $0x170] sm:$0xff] %vm1102, %v1092
      %1150 = vst.msk [vmem:[#allocation2 + $0x178] sm:$0xff] %vm1102, %v1093
      %1151 = vst.msk [vmem:[#allocation2 + $0x180] sm:$0xff] %vm1102, %v1094
      %1152 = vst.msk [vmem:[#allocation2 + $0x188] sm:$0xff] %vm1102, %v1095
      %1153 = vst.msk [vmem:[#allocation2 + $0x190] sm:$0xff] %vm1102, %v1096
      %1154 = vst.msk [vmem:[#allocation2 + $0x198] sm:$0xff] %vm1102, %v1097
      %1155 = vst.msk [vmem:[#allocation2 + $0x1a0] sm:$0xff] %vm1102, %v1098
      %1156 = vst.msk [vmem:[#allocation2 + $0x1a8] sm:$0xff] %vm1102, %v1099
      %1157 = vst.msk [vmem:[#allocation2 + $0x1b0] sm:$0xff] %vm1102, %v1100
      %1158 = vst.msk [vmem:[#allocation2 + $0x1b8] sm:$0xff] %vm1102, %v1101
      %v1159 = vld [vmem:[#allocation2] sm:$0xff]
      %v1160 = vld [vmem:[#allocation2 + $0x8] sm:$0xff]
      %v1161 = vld [vmem:[#allocation2 + $0x10] sm:$0xff]
      %v1162 = vld [vmem:[#allocation2 + $0x18] sm:$0xff]
      %v1163 = vld [vmem:[#allocation2 + $0x20] sm:$0xff]
      %v1164 = vld [vmem:[#allocation2 + $0x28] sm:$0xff]
      %v1165 = vld [vmem:[#allocation2 + $0x30] sm:$0xff]
      %v1166 = vld [vmem:[#allocation2 + $0x38] sm:$0xff]
      %v1167 = vld [vmem:[#allocation2 + $0x40] sm:$0xff]
      %v1168 = vld [vmem:[#allocation2 + $0x48] sm:$0xff]
      %v1169 = vld [vmem:[#allocation2 + $0x50] sm:$0xff]
      %v1170 = vld [vmem:[#allocation2 + $0x58] sm:$0xff]
      %v1171 = vpack.c.bf16 %v1160, %v1159
      %v1172 = vpack.c.bf16 %v1162, %v1161
      %v1173 = vpack.c.bf16 %v1164, %v1163
      %v1174 = vpack.c.bf16 %v1166, %v1165
      %v1175 = vpack.c.bf16 %v1168, %v1167
      %v1176 = vpack.c.bf16 %v1170, %v1169
      %v1177 = vld [vmem:[%s3] sm:$0xf]
      %v1178 = vld [vmem:[%s3 + $0x4] sm:$0xf]
      %v1179 = vld [vmem:[%s3 + $0x8] sm:$0xf]
      %v1180 = vld [vmem:[%s3 + $0xc] sm:$0xf]
      %v1181 = vld [vmem:[#allocation2 + $0x70] sm:$0xff]
      %v1182 = vld [vmem:[#allocation2 + $0x78] sm:$0xff]
      %v1183 = vld [vmem:[#allocation2 + $0x80] sm:$0xff]
      %v1184 = vld [vmem:[#allocation2 + $0x88] sm:$0xff]
      %v1185 = vld [vmem:[#allocation2 + $0x90] sm:$0xff]
      %v1186 = vld [vmem:[#allocation2 + $0x98] sm:$0xff]
      %v1187 = vld [vmem:[#allocation2 + $0xa0] sm:$0xff]
      %v1188 = vld [vmem:[#allocation2 + $0xa8] sm:$0xff]
      %v1189 = vld [vmem:[#allocation2 + $0xb0] sm:$0xff]
      %v1190 = vld [vmem:[#allocation2 + $0xb8] sm:$0xff]
      %v1191 = vld [vmem:[#allocation2 + $0xc0] sm:$0xff]
      %v1192 = vld [vmem:[#allocation2 + $0xc8] sm:$0xff]
      %v1193 = vpack.c.bf16 %v1182, %v1181
      %v1194 = vpack.c.bf16 %v1184, %v1183
      %v1195 = vpack.c.bf16 %v1186, %v1185
      %v1196 = vpack.c.bf16 %v1188, %v1187
      %v1197 = vpack.c.bf16 %v1190, %v1189
      %v1198 = vpack.c.bf16 %v1192, %v1191
      %v1199 = vld [vmem:[%s3 + $0x10] sm:$0xf]
      %v1200 = vld [vmem:[%s3 + $0x14] sm:$0xf]
      %v1201 = vld [vmem:[%s3 + $0x18] sm:$0xf]
      %v1202 = vld [vmem:[%s3 + $0x1c] sm:$0xf]
      %v1207 = vunpack.c.l.b16 %v1199
      %v1208 = vunpack.c.l.b16 %v1200
      %v1209 = vunpack.c.l.b16 %v1201
      %v1210 = vunpack.c.l.b16 %v1202
      %v1211 = vpack.c.b16 %v1208, %v1207
      %v1212 = vpack.c.b16 %v1210, %v1209
      %v1216 = vsel %vm1102, %v1193, 0
      %v1219 = vsel %vm1102, %v1194, 0
      %v1222 = vsel %vm1102, %v1195, 0
      %v1225 = vsel %vm1102, %v1196, 0
      %v1228 = vsel %vm1102, %v1197, 0
      %v1231 = vsel %vm1102, %v1198, 0
      %1233 = vmatpush.bf16.msra.mxu0 0
      %1234 = vmatpush.bf16.msra.mxu0 0
      %1235 = vmatpush.bf16.msra.mxu0 0
      %1236 = vmatpush.bf16.msra.mxu0 0
      %1237 = vmatpush.bf16.msra.mxu0 0
      %1238 = vmatpush.bf16.msra.mxu0 0
      %1239 = vmatpush.bf16.msra.mxu0 %v1212
      %1240 = vmatpush.bf16.msra.mxu0 %v1211
      %1241 = vmatmul.bf16.gmra.mxu0 %v1216
      %v1242 = vpop.f32.mrf.mxu0
      %v1243 = vadd.f32 0.0, %v1242
      %v1244 = vpop.f32.mrf.mxu0
      %v1245 = vadd.f32 0.0, %v1244
      %1246 = vmatmul.bf16.gmra.mxu0 %v1219
      %v1247 = vpop.f32.mrf.mxu0
      %v1248 = vadd.f32 0.0, %v1247
      %v1249 = vpop.f32.mrf.mxu0
      %v1250 = vadd.f32 0.0, %v1249
      %1251 = vmatmul.bf16.gmra.mxu0 %v1222
      %v1252 = vpop.f32.mrf.mxu0
      %v1253 = vadd.f32 0.0, %v1252
      %v1254 = vpop.f32.mrf.mxu0
      %v1255 = vadd.f32 0.0, %v1254
      %1256 = vmatmul.bf16.gmra.mxu0 %v1225
      %v1257 = vpop.f32.mrf.mxu0
      %v1258 = vadd.f32 0.0, %v1257
      %v1259 = vpop.f32.mrf.mxu0
      %v1260 = vadd.f32 0.0, %v1259
      %1261 = vmatmul.bf16.gmra.mxu0 %v1228
      %v1262 = vpop.f32.mrf.mxu0
      %v1263 = vadd.f32 0.0, %v1262
      %v1264 = vpop.f32.mrf.mxu0
      %v1265 = vadd.f32 0.0, %v1264
      %1266 = vmatmul.bf16.gmra.mxu0 %v1231
      %v1267 = vpop.f32.mrf.mxu0
      %v1268 = vadd.f32 0.0, %v1267
      %v1269 = vpop.f32.mrf.mxu0
      %v1270 = vadd.f32 0.0, %v1269
      %1271 = vdwg.mxu0
      %v1276 = vunpack.c.l.b16 %v1177
      %v1277 = vunpack.c.l.b16 %v1178
      %v1278 = vunpack.c.l.b16 %v1179
      %v1279 = vunpack.c.l.b16 %v1180
      %v1280 = vpack.c.b16 %v1277, %v1276
      %v1281 = vpack.c.b16 %v1279, %v1278
      %v1285 = vsel %vm1102, %v1171, 0
      %v1288 = vsel %vm1102, %v1172, 0
      %v1291 = vsel %vm1102, %v1173, 0
      %v1294 = vsel %vm1102, %v1174, 0
      %v1297 = vsel %vm1102, %v1175, 0
      %v1300 = vsel %vm1102, %v1176, 0
      %1302 = vmatpush.bf16.msra.mxu0 0
      %1303 = vmatpush.bf16.msra.mxu0 0
      %1304 = vmatpush.bf16.msra.mxu0 0
      %1305 = vmatpush.bf16.msra.mxu0 0
      %1306 = vmatpush.bf16.msra.mxu0 0
      %1307 = vmatpush.bf16.msra.mxu0 0
      %1308 = vmatpush.bf16.msra.mxu0 %v1281
      %1309 = vmatpush.bf16.msra.mxu0 %v1280
      %1310 = vmatmul.bf16.gmra.mxu0 %v1285
      %v1311 = vpop.f32.mrf.mxu0
      %v1312 = vadd.f32 %v1243, %v1311
      %v1313 = vpop.f32.mrf.mxu0
      %v1314 = vadd.f32 %v1245, %v1313
      %1315 = vmatmul.bf16.gmra.mxu0 %v1288
      %v1316 = vpop.f32.mrf.mxu0
      %v1317 = vadd.f32 %v1248, %v1316
      %v1318 = vpop.f32.mrf.mxu0
      %v1319 = vadd.f32 %v1250, %v1318
      %1320 = vmatmul.bf16.gmra.mxu0 %v1291
      %v1321 = vpop.f32.mrf.mxu0
      %v1322 = vadd.f32 %v1253, %v1321
      %v1323 = vpop.f32.mrf.mxu0
      %v1324 = vadd.f32 %v1255, %v1323
      %1325 = vmatmul.bf16.gmra.mxu0 %v1294
      %v1326 = vpop.f32.mrf.mxu0
      %v1327 = vadd.f32 %v1258, %v1326
      %v1328 = vpop.f32.mrf.mxu0
      %v1329 = vadd.f32 %v1260, %v1328
      %1330 = vmatmul.bf16.gmra.mxu0 %v1297
      %v1331 = vpop.f32.mrf.mxu0
      %v1332 = vadd.f32 %v1263, %v1331
      %v1333 = vpop.f32.mrf.mxu0
      %v1334 = vadd.f32 %v1265, %v1333
      %1335 = vmatmul.bf16.gmra.mxu0 %v1300
      %v1336 = vpop.f32.mrf.mxu0
      %v1337 = vadd.f32 %v1268, %v1336
      %v1338 = vpop.f32.mrf.mxu0
      %v1339 = vadd.f32 %v1270, %v1338
      %1340 = vdwg.mxu0
      %v1341 = vld [vmem:[#allocation2 + $0x1] sm:$0xff]
      %v1342 = vld [vmem:[#allocation2 + $0x9] sm:$0xff]
      %v1343 = vld [vmem:[#allocation2 + $0x11] sm:$0xff]
      %v1344 = vld [vmem:[#allocation2 + $0x19] sm:$0xff]
      %v1345 = vld [vmem:[#allocation2 + $0x21] sm:$0xff]
      %v1346 = vld [vmem:[#allocation2 + $0x29] sm:$0xff]
      %v1347 = vld [vmem:[#allocation2 + $0x31] sm:$0xff]
      %v1348 = vld [vmem:[#allocation2 + $0x39] sm:$0xff]
      %v1349 = vld [vmem:[#allocation2 + $0x41] sm:$0xff]
      %v1350 = vld [vmem:[#allocation2 + $0x49] sm:$0xff]
      %v1351 = vld [vmem:[#allocation2 + $0x51] sm:$0xff]
      %v1352 = vld [vmem:[#allocation2 + $0x59] sm:$0xff]
      %v1353 = vpack.c.bf16 %v1342, %v1341
      %v1354 = vpack.c.bf16 %v1344, %v1343
      %v1355 = vpack.c.bf16 %v1346, %v1345
      %v1356 = vpack.c.bf16 %v1348, %v1347
      %v1357 = vpack.c.bf16 %v1350, %v1349
      %v1358 = vpack.c.bf16 %v1352, %v1351
      %v1359 = vld [vmem:[%s3 + $0x20] sm:$0xf]
      %v1360 = vld [vmem:[%s3 + $0x24] sm:$0xf]
      %v1361 = vld [vmem:[%s3 + $0x28] sm:$0xf]
      %v1362 = vld [vmem:[%s3 + $0x2c] sm:$0xf]
      %v1367 = vunpack.c.l.b16 %v1359
      %v1368 = vunpack.c.l.b16 %v1360
      %v1369 = vunpack.c.l.b16 %v1361
      %v1370 = vunpack.c.l.b16 %v1362
      %v1371 = vpack.c.b16 %v1368, %v1367
      %v1372 = vpack.c.b16 %v1370, %v1369
      %v1376 = vsel %vm1102, %v1353, 0
      %v1379 = vsel %vm1102, %v1354, 0
      %v1382 = vsel %vm1102, %v1355, 0
      %v1385 = vsel %vm1102, %v1356, 0
      %v1388 = vsel %vm1102, %v1357, 0
      %v1391 = vsel %vm1102, %v1358, 0
      %1393 = vmatpush.bf16.msra.mxu0 0
      %1394 = vmatpush.bf16.msra.mxu0 0
      %1395 = vmatpush.bf16.msra.mxu0 0
      %1396 = vmatpush.bf16.msra.mxu0 0
      %1397 = vmatpush.bf16.msra.mxu0 0
      %1398 = vmatpush.bf16.msra.mxu0 0
      %1399 = vmatpush.bf16.msra.mxu0 %v1372
      %1400 = vmatpush.bf16.msra.mxu0 %v1371
      %1401 = vmatmul.bf16.gmra.mxu0 %v1376
      %v1402 = vpop.f32.mrf.mxu0
      %v1403 = vadd.f32 0.0, %v1402
      %v1404 = vpop.f32.mrf.mxu0
      %v1405 = vadd.f32 0.0, %v1404
      %1406 = vmatmul.bf16.gmra.mxu0 %v1379
      %v1407 = vpop.f32.mrf.mxu0
      %v1408 = vadd.f32 0.0, %v1407
      %v1409 = vpop.f32.mrf.mxu0
      %v1410 = vadd.f32 0.0, %v1409
      %1411 = vmatmul.bf16.gmra.mxu0 %v1382
      %v1412 = vpop.f32.mrf.mxu0
      %v1413 = vadd.f32 0.0, %v1412
      %v1414 = vpop.f32.mrf.mxu0
      %v1415 = vadd.f32 0.0, %v1414
      %1416 = vmatmul.bf16.gmra.mxu0 %v1385
      %v1417 = vpop.f32.mrf.mxu0
      %v1418 = vadd.f32 0.0, %v1417
      %v1419 = vpop.f32.mrf.mxu0
      %v1420 = vadd.f32 0.0, %v1419
      %1421 = vmatmul.bf16.gmra.mxu0 %v1388
      %v1422 = vpop.f32.mrf.mxu0
      %v1423 = vadd.f32 0.0, %v1422
      %v1424 = vpop.f32.mrf.mxu0
      %v1425 = vadd.f32 0.0, %v1424
      %1426 = vmatmul.bf16.gmra.mxu0 %v1391
      %v1427 = vpop.f32.mrf.mxu0
      %v1428 = vadd.f32 0.0, %v1427
      %v1429 = vpop.f32.mrf.mxu0
      %v1430 = vadd.f32 0.0, %v1429
      %1431 = vdwg.mxu0
      %v1432 = vadd.f32 %v1312, %v1403
      %v1433 = vadd.f32 %v1314, %v1405
      %v1434 = vadd.f32 %v1317, %v1408
      %v1435 = vadd.f32 %v1319, %v1410
      %v1436 = vadd.f32 %v1322, %v1413
      %v1437 = vadd.f32 %v1324, %v1415
      %v1438 = vadd.f32 %v1327, %v1418
      %v1439 = vadd.f32 %v1329, %v1420
      %v1440 = vadd.f32 %v1332, %v1423
      %v1441 = vadd.f32 %v1334, %v1425
      %v1442 = vadd.f32 %v1337, %v1428
      %v1443 = vadd.f32 %v1339, %v1430
      %v1444 = vld [vmem:[#allocation2 + $0x71] sm:$0xff]
      %v1445 = vld [vmem:[#allocation2 + $0x79] sm:$0xff]
      %v1446 = vld [vmem:[#allocation2 + $0x81] sm:$0xff]
      %v1447 = vld [vmem:[#allocation2 + $0x89] sm:$0xff]
      %v1448 = vld [vmem:[#allocation2 + $0x91] sm:$0xff]
      %v1449 = vld [vmem:[#allocation2 + $0x99] sm:$0xff]
      %v1450 = vld [vmem:[#allocation2 + $0xa1] sm:$0xff]
      %v1451 = vld [vmem:[#allocation2 + $0xa9] sm:$0xff]
      %v1452 = vld [vmem:[#allocation2 + $0xb1] sm:$0xff]
      %v1453 = vld [vmem:[#allocation2 + $0xb9] sm:$0xff]
      %v1454 = vld [vmem:[#allocation2 + $0xc1] sm:$0xff]
      %v1455 = vld [vmem:[#allocation2 + $0xc9] sm:$0xff]
      %v1456 = vpack.c.bf16 %v1445, %v1444
      %v1457 = vpack.c.bf16 %v1447, %v1446
      %v1458 = vpack.c.bf16 %v1449, %v1448
      %v1459 = vpack.c.bf16 %v1451, %v1450
      %v1460 = vpack.c.bf16 %v1453, %v1452
      %v1461 = vpack.c.bf16 %v1455, %v1454
      %v1462 = vld [vmem:[%s3 + $0x30] sm:$0xf]
      %v1463 = vld [vmem:[%s3 + $0x34] sm:$0xf]
      %v1464 = vld [vmem:[%s3 + $0x38] sm:$0xf]
      %v1465 = vld [vmem:[%s3 + $0x3c] sm:$0xf]
      %v1470 = vunpack.c.l.b16 %v1462
      %v1471 = vunpack.c.l.b16 %v1463
      %v1472 = vunpack.c.l.b16 %v1464
      %v1473 = vunpack.c.l.b16 %v1465
      %v1474 = vpack.c.b16 %v1471, %v1470
      %v1475 = vpack.c.b16 %v1473, %v1472
      %v1479 = vsel %vm1102, %v1456, 0
      %v1482 = vsel %vm1102, %v1457, 0
      %v1485 = vsel %vm1102, %v1458, 0
      %v1488 = vsel %vm1102, %v1459, 0
      %v1491 = vsel %vm1102, %v1460, 0
      %v1494 = vsel %vm1102, %v1461, 0
      %1496 = vmatpush.bf16.msra.mxu0 0
      %1497 = vmatpush.bf16.msra.mxu0 0
      %1498 = vmatpush.bf16.msra.mxu0 0
      %1499 = vmatpush.bf16.msra.mxu0 0
      %1500 = vmatpush.bf16.msra.mxu0 0
      %1501 = vmatpush.bf16.msra.mxu0 0
      %1502 = vmatpush.bf16.msra.mxu0 %v1475
      %1503 = vmatpush.bf16.msra.mxu0 %v1474
      %1504 = vmatmul.bf16.gmra.mxu0 %v1479
      %v1505 = vpop.f32.mrf.mxu0
      %v1506 = vadd.f32 0.0, %v1505
      %v1507 = vpop.f32.mrf.mxu0
      %v1508 = vadd.f32 0.0, %v1507
      %1509 = vmatmul.bf16.gmra.mxu0 %v1482
      %v1510 = vpop.f32.mrf.mxu0
      %v1511 = vadd.f32 0.0, %v1510
      %v1512 = vpop.f32.mrf.mxu0
      %v1513 = vadd.f32 0.0, %v1512
      %1514 = vmatmul.bf16.gmra.mxu0 %v1485
      %v1515 = vpop.f32.mrf.mxu0
      %v1516 = vadd.f32 0.0, %v1515
      %v1517 = vpop.f32.mrf.mxu0
      %v1518 = vadd.f32 0.0, %v1517
      %1519 = vmatmul.bf16.gmra.mxu0 %v1488
      %v1520 = vpop.f32.mrf.mxu0
      %v1521 = vadd.f32 0.0, %v1520
      %v1522 = vpop.f32.mrf.mxu0
      %v1523 = vadd.f32 0.0, %v1522
      %1524 = vmatmul.bf16.gmra.mxu0 %v1491
      %v1525 = vpop.f32.mrf.mxu0
      %v1526 = vadd.f32 0.0, %v1525
      %v1527 = vpop.f32.mrf.mxu0
      %v1528 = vadd.f32 0.0, %v1527
      %1529 = vmatmul.bf16.gmra.mxu0 %v1494
      %v1530 = vpop.f32.mrf.mxu0
      %v1531 = vadd.f32 0.0, %v1530
      %v1532 = vpop.f32.mrf.mxu0
      %v1533 = vadd.f32 0.0, %v1532
      %1534 = vdwg.mxu0
      %v1535 = vadd.f32 %v1432, %v1506
      %v1536 = vadd.f32 %v1433, %v1508
      %v1537 = vadd.f32 %v1434, %v1511
      %v1538 = vadd.f32 %v1435, %v1513
      %v1539 = vadd.f32 %v1436, %v1516
      %v1540 = vadd.f32 %v1437, %v1518
      %v1541 = vadd.f32 %v1438, %v1521
      %v1542 = vadd.f32 %v1439, %v1523
      %v1543 = vadd.f32 %v1440, %v1526
      %v1544 = vadd.f32 %v1441, %v1528
      %v1545 = vadd.f32 %v1442, %v1531
      %v1546 = vadd.f32 %v1443, %v1533
      %v1547 = vld [vmem:[#allocation2 + $0xe0] sm:$0xff]
      %v1548 = vld [vmem:[#allocation2 + $0xe8] sm:$0xff]
      %v1549 = vld [vmem:[#allocation2 + $0xf0] sm:$0xff]
      %v1550 = vld [vmem:[#allocation2 + $0xf8] sm:$0xff]
      %v1551 = vld [vmem:[#allocation2 + $0x100] sm:$0xff]
      %v1552 = vld [vmem:[#allocation2 + $0x108] sm:$0xff]
      %v1553 = vld [vmem:[#allocation2 + $0x110] sm:$0xff]
      %v1554 = vld [vmem:[#allocation2 + $0x118] sm:$0xff]
      %v1555 = vld [vmem:[#allocation2 + $0x120] sm:$0xff]
      %v1556 = vld [vmem:[#allocation2 + $0x128] sm:$0xff]
      %v1557 = vld [vmem:[#allocation2 + $0x130] sm:$0xff]
      %v1558 = vld [vmem:[#allocation2 + $0x138] sm:$0xff]
      %v1559 = vpack.c.bf16 %v1548, %v1547
      %v1560 = vpack.c.bf16 %v1550, %v1549
      %v1561 = vpack.c.bf16 %v1552, %v1551
      %v1562 = vpack.c.bf16 %v1554, %v1553
      %v1563 = vpack.c.bf16 %v1556, %v1555
      %v1564 = vpack.c.bf16 %v1558, %v1557
      %v1565 = vld [vmem:[%s3 + $0x40] sm:$0xf]
      %v1566 = vld [vmem:[%s3 + $0x44] sm:$0xf]
      %v1567 = vld [vmem:[%s3 + $0x48] sm:$0xf]
      %v1568 = vld [vmem:[%s3 + $0x4c] sm:$0xf]
      %v1573 = vunpack.c.l.b16 %v1565
      %v1574 = vunpack.c.l.b16 %v1566
      %v1575 = vunpack.c.l.b16 %v1567
      %v1576 = vunpack.c.l.b16 %v1568
      %v1577 = vpack.c.b16 %v1574, %v1573
      %v1578 = vpack.c.b16 %v1576, %v1575
      %v1582 = vsel %vm1102, %v1559, 0
      %v1585 = vsel %vm1102, %v1560, 0
      %v1588 = vsel %vm1102, %v1561, 0
      %v1591 = vsel %vm1102, %v1562, 0
      %v1594 = vsel %vm1102, %v1563, 0
      %v1597 = vsel %vm1102, %v1564, 0
      %1599 = vmatpush.bf16.msra.mxu0 0
      %1600 = vmatpush.bf16.msra.mxu0 0
      %1601 = vmatpush.bf16.msra.mxu0 0
      %1602 = vmatpush.bf16.msra.mxu0 0
      %1603 = vmatpush.bf16.msra.mxu0 0
      %1604 = vmatpush.bf16.msra.mxu0 0
      %1605 = vmatpush.bf16.msra.mxu0 %v1578
      %1606 = vmatpush.bf16.msra.mxu0 %v1577
      %1607 = vmatmul.bf16.gmra.mxu0 %v1582
      %v1608 = vpop.f32.mrf.mxu0
      %v1609 = vadd.f32 0.0, %v1608
      %v1610 = vpop.f32.mrf.mxu0
      %v1611 = vadd.f32 0.0, %v1610
      %1612 = vmatmul.bf16.gmra.mxu0 %v1585
      %v1613 = vpop.f32.mrf.mxu0
      %v1614 = vadd.f32 0.0, %v1613
      %v1615 = vpop.f32.mrf.mxu0
      %v1616 = vadd.f32 0.0, %v1615
      %1617 = vmatmul.bf16.gmra.mxu0 %v1588
      %v1618 = vpop.f32.mrf.mxu0
      %v1619 = vadd.f32 0.0, %v1618
      %v1620 = vpop.f32.mrf.mxu0
      %v1621 = vadd.f32 0.0, %v1620
      %1622 = vmatmul.bf16.gmra.mxu0 %v1591
      %v1623 = vpop.f32.mrf.mxu0
      %v1624 = vadd.f32 0.0, %v1623
      %v1625 = vpop.f32.mrf.mxu0
      %v1626 = vadd.f32 0.0, %v1625
      %1627 = vmatmul.bf16.gmra.mxu0 %v1594
      %v1628 = vpop.f32.mrf.mxu0
      %v1629 = vadd.f32 0.0, %v1628
      %v1630 = vpop.f32.mrf.mxu0
      %v1631 = vadd.f32 0.0, %v1630
      %1632 = vmatmul.bf16.gmra.mxu0 %v1597
      %v1633 = vpop.f32.mrf.mxu0
      %v1634 = vadd.f32 0.0, %v1633
      %v1635 = vpop.f32.mrf.mxu0
      %v1636 = vadd.f32 0.0, %v1635
      %1637 = vdwg.mxu0
      %v1638 = vadd.f32 %v1535, %v1609
      %v1639 = vadd.f32 %v1536, %v1611
      %v1640 = vadd.f32 %v1537, %v1614
      %v1641 = vadd.f32 %v1538, %v1616
      %v1642 = vadd.f32 %v1539, %v1619
      %v1643 = vadd.f32 %v1540, %v1621
      %v1644 = vadd.f32 %v1541, %v1624
      %v1645 = vadd.f32 %v1542, %v1626
      %v1646 = vadd.f32 %v1543, %v1629
      %v1647 = vadd.f32 %v1544, %v1631
      %v1648 = vadd.f32 %v1545, %v1634
      %v1649 = vadd.f32 %v1546, %v1636
      %v1650 = vld [vmem:[#allocation2 + $0x150] sm:$0xff]
      %v1651 = vld [vmem:[#allocation2 + $0x158] sm:$0xff]
      %v1652 = vld [vmem:[#allocation2 + $0x160] sm:$0xff]
      %v1653 = vld [vmem:[#allocation2 + $0x168] sm:$0xff]
      %v1654 = vld [vmem:[#allocation2 + $0x170] sm:$0xff]
      %v1655 = vld [vmem:[#allocation2 + $0x178] sm:$0xff]
      %v1656 = vld [vmem:[#allocation2 + $0x180] sm:$0xff]
      %v1657 = vld [vmem:[#allocation2 + $0x188] sm:$0xff]
      %v1658 = vld [vmem:[#allocation2 + $0x190] sm:$0xff]
      %v1659 = vld [vmem:[#allocation2 + $0x198] sm:$0xff]
      %v1660 = vld [vmem:[#allocation2 + $0x1a0] sm:$0xff]
      %v1661 = vld [vmem:[#allocation2 + $0x1a8] sm:$0xff]
      %v1662 = vpack.c.bf16 %v1651, %v1650
      %v1663 = vpack.c.bf16 %v1653, %v1652
      %v1664 = vpack.c.bf16 %v1655, %v1654
      %v1665 = vpack.c.bf16 %v1657, %v1656
      %v1666 = vpack.c.bf16 %v1659, %v1658
      %v1667 = vpack.c.bf16 %v1661, %v1660
      %v1668 = vld [vmem:[%s3 + $0x50] sm:$0xf]
      %v1669 = vld [vmem:[%s3 + $0x54] sm:$0xf]
      %v1670 = vld [vmem:[%s3 + $0x58] sm:$0xf]
      %v1671 = vld [vmem:[%s3 + $0x5c] sm:$0xf]
      %v1676 = vunpack.c.l.b16 %v1668
      %v1677 = vunpack.c.l.b16 %v1669
      %v1678 = vunpack.c.l.b16 %v1670
      %v1679 = vunpack.c.l.b16 %v1671
      %v1680 = vpack.c.b16 %v1677, %v1676
      %v1681 = vpack.c.b16 %v1679, %v1678
      %v1685 = vsel %vm1102, %v1662, 0
      %v1688 = vsel %vm1102, %v1663, 0
      %v1691 = vsel %vm1102, %v1664, 0
      %v1694 = vsel %vm1102, %v1665, 0
      %v1697 = vsel %vm1102, %v1666, 0
      %v1700 = vsel %vm1102, %v1667, 0
      %1702 = vmatpush.bf16.msra.mxu0 0
      %1703 = vmatpush.bf16.msra.mxu0 0
      %1704 = vmatpush.bf16.msra.mxu0 0
      %1705 = vmatpush.bf16.msra.mxu0 0
      %1706 = vmatpush.bf16.msra.mxu0 0
      %1707 = vmatpush.bf16.msra.mxu0 0
      %1708 = vmatpush.bf16.msra.mxu0 %v1681
      %1709 = vmatpush.bf16.msra.mxu0 %v1680
      %1710 = vmatmul.bf16.gmra.mxu0 %v1685
      %v1711 = vpop.f32.mrf.mxu0
      %v1712 = vadd.f32 0.0, %v1711
      %v1713 = vpop.f32.mrf.mxu0
      %v1714 = vadd.f32 0.0, %v1713
      %1715 = vmatmul.bf16.gmra.mxu0 %v1688
      %v1716 = vpop.f32.mrf.mxu0
      %v1717 = vadd.f32 0.0, %v1716
      %v1718 = vpop.f32.mrf.mxu0
      %v1719 = vadd.f32 0.0, %v1718
      %1720 = vmatmul.bf16.gmra.mxu0 %v1691
      %v1721 = vpop.f32.mrf.mxu0
      %v1722 = vadd.f32 0.0, %v1721
      %v1723 = vpop.f32.mrf.mxu0
      %v1724 = vadd.f32 0.0, %v1723
      %1725 = vmatmul.bf16.gmra.mxu0 %v1694
      %v1726 = vpop.f32.mrf.mxu0
      %v1727 = vadd.f32 0.0, %v1726
      %v1728 = vpop.f32.mrf.mxu0
      %v1729 = vadd.f32 0.0, %v1728
      %1730 = vmatmul.bf16.gmra.mxu0 %v1697
      %v1731 = vpop.f32.mrf.mxu0
      %v1732 = vadd.f32 0.0, %v1731
      %v1733 = vpop.f32.mrf.mxu0
      %v1734 = vadd.f32 0.0, %v1733
      %1735 = vmatmul.bf16.gmra.mxu0 %v1700
      %v1736 = vpop.f32.mrf.mxu0
      %v1737 = vadd.f32 0.0, %v1736
      %v1738 = vpop.f32.mrf.mxu0
      %v1739 = vadd.f32 0.0, %v1738
      %1740 = vdwg.mxu0
      %v1741 = vadd.f32 %v1638, %v1712
      %v1742 = vadd.f32 %v1639, %v1714
      %v1743 = vadd.f32 %v1640, %v1717
      %v1744 = vadd.f32 %v1641, %v1719
      %v1745 = vadd.f32 %v1642, %v1722
      %v1746 = vadd.f32 %v1643, %v1724
      %v1747 = vadd.f32 %v1644, %v1727
      %v1748 = vadd.f32 %v1645, %v1729
      %v1749 = vadd.f32 %v1646, %v1732
      %v1750 = vadd.f32 %v1647, %v1734
      %v1751 = vadd.f32 %v1648, %v1737
      %v1752 = vadd.f32 %v1649, %v1739
      %v1753 = vld [vmem:[#allocation2 + $0xe1] sm:$0xff]
      %v1754 = vld [vmem:[#allocation2 + $0xe9] sm:$0xff]
      %v1755 = vld [vmem:[#allocation2 + $0xf1] sm:$0xff]
      %v1756 = vld [vmem:[#allocation2 + $0xf9] sm:$0xff]
      %v1757 = vld [vmem:[#allocation2 + $0x101] sm:$0xff]
      %v1758 = vld [vmem:[#allocation2 + $0x109] sm:$0xff]
      %v1759 = vld [vmem:[#allocation2 + $0x111] sm:$0xff]
      %v1760 = vld [vmem:[#allocation2 + $0x119] sm:$0xff]
      %v1761 = vld [vmem:[#allocation2 + $0x121] sm:$0xff]
      %v1762 = vld [vmem:[#allocation2 + $0x129] sm:$0xff]
      %v1763 = vld [vmem:[#allocation2 + $0x131] sm:$0xff]
      %v1764 = vld [vmem:[#allocation2 + $0x139] sm:$0xff]
      %v1765 = vpack.c.bf16 %v1754, %v1753
      %v1766 = vpack.c.bf16 %v1756, %v1755
      %v1767 = vpack.c.bf16 %v1758, %v1757
      %v1768 = vpack.c.bf16 %v1760, %v1759
      %v1769 = vpack.c.bf16 %v1762, %v1761
      %v1770 = vpack.c.bf16 %v1764, %v1763
      %v1771 = vld [vmem:[%s3 + $0x60] sm:$0xf]
      %v1772 = vld [vmem:[%s3 + $0x64] sm:$0xf]
      %v1773 = vld [vmem:[%s3 + $0x68] sm:$0xf]
      %v1774 = vld [vmem:[%s3 + $0x6c] sm:$0xf]
      %v1779 = vunpack.c.l.b16 %v1771
      %v1780 = vunpack.c.l.b16 %v1772
      %v1781 = vunpack.c.l.b16 %v1773
      %v1782 = vunpack.c.l.b16 %v1774
      %v1783 = vpack.c.b16 %v1780, %v1779
      %v1784 = vpack.c.b16 %v1782, %v1781
      %v1788 = vsel %vm1102, %v1765, 0
      %v1791 = vsel %vm1102, %v1766, 0
      %v1794 = vsel %vm1102, %v1767, 0
      %v1797 = vsel %vm1102, %v1768, 0
      %v1800 = vsel %vm1102, %v1769, 0
      %v1803 = vsel %vm1102, %v1770, 0
      %1805 = vmatpush.bf16.msra.mxu0 0
      %1806 = vmatpush.bf16.msra.mxu0 0
      %1807 = vmatpush.bf16.msra.mxu0 0
      %1808 = vmatpush.bf16.msra.mxu0 0
      %1809 = vmatpush.bf16.msra.mxu0 0
      %1810 = vmatpush.bf16.msra.mxu0 0
      %1811 = vmatpush.bf16.msra.mxu0 %v1784
      %1812 = vmatpush.bf16.msra.mxu0 %v1783
      %1813 = vmatmul.bf16.gmra.mxu0 %v1788
      %v1814 = vpop.f32.mrf.mxu0
      %v1815 = vadd.f32 0.0, %v1814
      %v1816 = vpop.f32.mrf.mxu0
      %v1817 = vadd.f32 0.0, %v1816
      %1818 = vmatmul.bf16.gmra.mxu0 %v1791
      %v1819 = vpop.f32.mrf.mxu0
      %v1820 = vadd.f32 0.0, %v1819
      %v1821 = vpop.f32.mrf.mxu0
      %v1822 = vadd.f32 0.0, %v1821
      %1823 = vmatmul.bf16.gmra.mxu0 %v1794
      %v1824 = vpop.f32.mrf.mxu0
      %v1825 = vadd.f32 0.0, %v1824
      %v1826 = vpop.f32.mrf.mxu0
      %v1827 = vadd.f32 0.0, %v1826
      %1828 = vmatmul.bf16.gmra.mxu0 %v1797
      %v1829 = vpop.f32.mrf.mxu0
      %v1830 = vadd.f32 0.0, %v1829
      %v1831 = vpop.f32.mrf.mxu0
      %v1832 = vadd.f32 0.0, %v1831
      %1833 = vmatmul.bf16.gmra.mxu0 %v1800
      %v1834 = vpop.f32.mrf.mxu0
      %v1835 = vadd.f32 0.0, %v1834
      %v1836 = vpop.f32.mrf.mxu0
      %v1837 = vadd.f32 0.0, %v1836
      %1838 = vmatmul.bf16.gmra.mxu0 %v1803
      %v1839 = vpop.f32.mrf.mxu0
      %v1840 = vadd.f32 0.0, %v1839
      %v1841 = vpop.f32.mrf.mxu0
      %v1842 = vadd.f32 0.0, %v1841
      %1843 = vdwg.mxu0
      %v1844 = vadd.f32 %v1741, %v1815
      %v1845 = vadd.f32 %v1742, %v1817
      %v1846 = vadd.f32 %v1743, %v1820
      %v1847 = vadd.f32 %v1744, %v1822
      %v1848 = vadd.f32 %v1745, %v1825
      %v1849 = vadd.f32 %v1746, %v1827
      %v1850 = vadd.f32 %v1747, %v1830
      %v1851 = vadd.f32 %v1748, %v1832
      %v1852 = vadd.f32 %v1749, %v1835
      %v1853 = vadd.f32 %v1750, %v1837
      %v1854 = vadd.f32 %v1751, %v1840
      %v1855 = vadd.f32 %v1752, %v1842
      %v1856 = vld [vmem:[#allocation2 + $0x151] sm:$0xff]
      %v1857 = vld [vmem:[#allocation2 + $0x159] sm:$0xff]
      %v1858 = vld [vmem:[#allocation2 + $0x161] sm:$0xff]
      %v1859 = vld [vmem:[#allocation2 + $0x169] sm:$0xff]
      %v1860 = vld [vmem:[#allocation2 + $0x171] sm:$0xff]
      %v1861 = vld [vmem:[#allocation2 + $0x179] sm:$0xff]
      %v1862 = vld [vmem:[#allocation2 + $0x181] sm:$0xff]
      %v1863 = vld [vmem:[#allocation2 + $0x189] sm:$0xff]
      %v1864 = vld [vmem:[#allocation2 + $0x191] sm:$0xff]
      %v1865 = vld [vmem:[#allocation2 + $0x199] sm:$0xff]
      %v1866 = vld [vmem:[#allocation2 + $0x1a1] sm:$0xff]
      %v1867 = vld [vmem:[#allocation2 + $0x1a9] sm:$0xff]
      %v1868 = vpack.c.bf16 %v1857, %v1856
      %v1869 = vpack.c.bf16 %v1859, %v1858
      %v1870 = vpack.c.bf16 %v1861, %v1860
      %v1871 = vpack.c.bf16 %v1863, %v1862
      %v1872 = vpack.c.bf16 %v1865, %v1864
      %v1873 = vpack.c.bf16 %v1867, %v1866
      %v1874 = vld [vmem:[%s3 + $0x70] sm:$0xf]
      %v1875 = vld [vmem:[%s3 + $0x74] sm:$0xf]
      %v1876 = vld [vmem:[%s3 + $0x78] sm:$0xf]
      %v1877 = vld [vmem:[%s3 + $0x7c] sm:$0xf]
      %v1882 = vunpack.c.l.b16 %v1874
      %v1883 = vunpack.c.l.b16 %v1875
      %v1884 = vunpack.c.l.b16 %v1876
      %v1885 = vunpack.c.l.b16 %v1877
      %v1886 = vpack.c.b16 %v1883, %v1882
      %v1887 = vpack.c.b16 %v1885, %v1884
      %v1891 = vsel %vm1102, %v1868, 0
      %v1894 = vsel %vm1102, %v1869, 0
      %v1897 = vsel %vm1102, %v1870, 0
      %v1900 = vsel %vm1102, %v1871, 0
      %v1903 = vsel %vm1102, %v1872, 0
      %v1906 = vsel %vm1102, %v1873, 0
      %1908 = vmatpush.bf16.msra.mxu0 0
      %1909 = vmatpush.bf16.msra.mxu0 0
      %1910 = vmatpush.bf16.msra.mxu0 0
      %1911 = vmatpush.bf16.msra.mxu0 0
      %1912 = vmatpush.bf16.msra.mxu0 0
      %1913 = vmatpush.bf16.msra.mxu0 0
      %1914 = vmatpush.bf16.msra.mxu0 %v1887
      %1915 = vmatpush.bf16.msra.mxu0 %v1886
      %1916 = vmatmul.bf16.gmra.mxu0 %v1891
      %v1917 = vpop.f32.mrf.mxu0
      %v1918 = vadd.f32 0.0, %v1917
      %v1919 = vpop.f32.mrf.mxu0
      %v1920 = vadd.f32 0.0, %v1919
      %1921 = vmatmul.bf16.gmra.mxu0 %v1894
      %v1922 = vpop.f32.mrf.mxu0
      %v1923 = vadd.f32 0.0, %v1922
      %v1924 = vpop.f32.mrf.mxu0
      %v1925 = vadd.f32 0.0, %v1924
      %1926 = vmatmul.bf16.gmra.mxu0 %v1897
      %v1927 = vpop.f32.mrf.mxu0
      %v1928 = vadd.f32 0.0, %v1927
      %v1929 = vpop.f32.mrf.mxu0
      %v1930 = vadd.f32 0.0, %v1929
      %1931 = vmatmul.bf16.gmra.mxu0 %v1900
      %v1932 = vpop.f32.mrf.mxu0
      %v1933 = vadd.f32 0.0, %v1932
      %v1934 = vpop.f32.mrf.mxu0
      %v1935 = vadd.f32 0.0, %v1934
      %1936 = vmatmul.bf16.gmra.mxu0 %v1903
      %v1937 = vpop.f32.mrf.mxu0
      %v1938 = vadd.f32 0.0, %v1937
      %v1939 = vpop.f32.mrf.mxu0
      %v1940 = vadd.f32 0.0, %v1939
      %1941 = vmatmul.bf16.gmra.mxu0 %v1906
      %v1942 = vpop.f32.mrf.mxu0
      %v1943 = vadd.f32 0.0, %v1942
      %v1944 = vpop.f32.mrf.mxu0
      %v1945 = vadd.f32 0.0, %v1944
      %1946 = vdwg.mxu0
      %v1947 = vadd.f32 %v1844, %v1918
      %v1948 = vadd.f32 %v1845, %v1920
      %v1949 = vadd.f32 %v1846, %v1923
      %v1950 = vadd.f32 %v1847, %v1925
      %v1951 = vadd.f32 %v1848, %v1928
      %v1952 = vadd.f32 %v1849, %v1930
      %v1953 = vadd.f32 %v1850, %v1933
      %v1954 = vadd.f32 %v1851, %v1935
      %v1955 = vadd.f32 %v1852, %v1938
      %v1956 = vadd.f32 %v1853, %v1940
      %v1957 = vadd.f32 %v1854, %v1943
      %v1958 = vadd.f32 %v1855, %v1945
      %v1959 = vld [vmem:[#allocation2 + $0xa] sm:$0xff]
      %v1960 = vld [vmem:[#allocation2 + $0x12] sm:$0xff]
      %v1961 = vld [vmem:[#allocation2 + $0x1a] sm:$0xff]
      %v1962 = vld [vmem:[#allocation2 + $0x22] sm:$0xff]
      %v1963 = vld [vmem:[#allocation2 + $0x2a] sm:$0xff]
      %v1964 = vld [vmem:[#allocation2 + $0x32] sm:$0xff]
      %v1965 = vld [vmem:[#allocation2 + $0x3a] sm:$0xff]
      %v1966 = vld [vmem:[#allocation2 + $0x42] sm:$0xff]
      %v1967 = vld [vmem:[#allocation2 + $0x4a] sm:$0xff]
      %v1968 = vld [vmem:[#allocation2 + $0x52] sm:$0xff]
      %v1969 = vld [vmem:[#allocation2 + $0x5a] sm:$0xff]
      %v1970 = vld [vmem:[#allocation2 + $0x62] sm:$0xff]
      %v1971 = vpack.c.bf16 %v1960, %v1959
      %v1972 = vpack.c.bf16 %v1962, %v1961
      %v1973 = vpack.c.bf16 %v1964, %v1963
      %v1974 = vpack.c.bf16 %v1966, %v1965
      %v1975 = vpack.c.bf16 %v1968, %v1967
      %v1976 = vpack.c.bf16 %v1970, %v1969
      %v1977 = vld [vmem:[%s3 + $0x80] sm:$0xf]
      %v1978 = vld [vmem:[%s3 + $0x84] sm:$0xf]
      %v1979 = vld [vmem:[%s3 + $0x88] sm:$0xf]
      %v1980 = vld [vmem:[%s3 + $0x8c] sm:$0xf]
      %v1985 = vunpack.c.l.b16 %v1977
      %v1986 = vunpack.c.l.b16 %v1978
      %v1987 = vunpack.c.l.b16 %v1979
      %v1988 = vunpack.c.l.b16 %v1980
      %v1989 = vpack.c.b16 %v1986, %v1985
      %v1990 = vpack.c.b16 %v1988, %v1987
      %v1994 = vsel %vm1102, %v1971, 0
      %v1997 = vsel %vm1102, %v1972, 0
      %v2000 = vsel %vm1102, %v1973, 0
      %v2003 = vsel %vm1102, %v1974, 0
      %v2006 = vsel %vm1102, %v1975, 0
      %v2009 = vsel %vm1102, %v1976, 0
      %2011 = vmatpush.bf16.msra.mxu0 0
      %2012 = vmatpush.bf16.msra.mxu0 0
      %2013 = vmatpush.bf16.msra.mxu0 0
      %2014 = vmatpush.bf16.msra.mxu0 0
      %2015 = vmatpush.bf16.msra.mxu0 0
      %2016 = vmatpush.bf16.msra.mxu0 0
      %2017 = vmatpush.bf16.msra.mxu0 %v1990
      %2018 = vmatpush.bf16.msra.mxu0 %v1989
      %2019 = vmatmul.bf16.gmra.mxu0 %v1994
      %v2020 = vpop.f32.mrf.mxu0
      %v2021 = vadd.f32 0.0, %v2020
      %v2022 = vpop.f32.mrf.mxu0
      %v2023 = vadd.f32 0.0, %v2022
      %2024 = vmatmul.bf16.gmra.mxu0 %v1997
      %v2025 = vpop.f32.mrf.mxu0
      %v2026 = vadd.f32 0.0, %v2025
      %v2027 = vpop.f32.mrf.mxu0
      %v2028 = vadd.f32 0.0, %v2027
      %2029 = vmatmul.bf16.gmra.mxu0 %v2000
      %v2030 = vpop.f32.mrf.mxu0
      %v2031 = vadd.f32 0.0, %v2030
      %v2032 = vpop.f32.mrf.mxu0
      %v2033 = vadd.f32 0.0, %v2032
      %2034 = vmatmul.bf16.gmra.mxu0 %v2003
      %v2035 = vpop.f32.mrf.mxu0
      %v2036 = vadd.f32 0.0, %v2035
      %v2037 = vpop.f32.mrf.mxu0
      %v2038 = vadd.f32 0.0, %v2037
      %2039 = vmatmul.bf16.gmra.mxu0 %v2006
      %v2040 = vpop.f32.mrf.mxu0
      %v2041 = vadd.f32 0.0, %v2040
      %v2042 = vpop.f32.mrf.mxu0
      %v2043 = vadd.f32 0.0, %v2042
      %2044 = vmatmul.bf16.gmra.mxu0 %v2009
      %v2045 = vpop.f32.mrf.mxu0
      %v2046 = vadd.f32 0.0, %v2045
      %v2047 = vpop.f32.mrf.mxu0
      %v2048 = vadd.f32 0.0, %v2047
      %2049 = vdwg.mxu0
      %v2050 = vadd.f32 %v1947, %v2021
      %v2051 = vadd.f32 %v1948, %v2023
      %v2052 = vadd.f32 %v1949, %v2026
      %v2053 = vadd.f32 %v1950, %v2028
      %v2054 = vadd.f32 %v1951, %v2031
      %v2055 = vadd.f32 %v1952, %v2033
      %v2056 = vadd.f32 %v1953, %v2036
      %v2057 = vadd.f32 %v1954, %v2038
      %v2058 = vadd.f32 %v1955, %v2041
      %v2059 = vadd.f32 %v1956, %v2043
      %v2060 = vadd.f32 %v1957, %v2046
      %v2061 = vadd.f32 %v1958, %v2048
      %v2062 = vld [vmem:[#allocation2 + $0x7a] sm:$0xff]
      %v2063 = vld [vmem:[#allocation2 + $0x82] sm:$0xff]
      %v2064 = vld [vmem:[#allocation2 + $0x8a] sm:$0xff]
      %v2065 = vld [vmem:[#allocation2 + $0x92] sm:$0xff]
      %v2066 = vld [vmem:[#allocation2 + $0x9a] sm:$0xff]
      %v2067 = vld [vmem:[#allocation2 + $0xa2] sm:$0xff]
      %v2068 = vld [vmem:[#allocation2 + $0xaa] sm:$0xff]
      %v2069 = vld [vmem:[#allocation2 + $0xb2] sm:$0xff]
      %v2070 = vld [vmem:[#allocation2 + $0xba] sm:$0xff]
      %v2071 = vld [vmem:[#allocation2 + $0xc2] sm:$0xff]
      %v2072 = vld [vmem:[#allocation2 + $0xca] sm:$0xff]
      %v2073 = vld [vmem:[#allocation2 + $0xd2] sm:$0xff]
      %v2074 = vpack.c.bf16 %v2063, %v2062
      %v2075 = vpack.c.bf16 %v2065, %v2064
      %v2076 = vpack.c.bf16 %v2067, %v2066
      %v2077 = vpack.c.bf16 %v2069, %v2068
      %v2078 = vpack.c.bf16 %v2071, %v2070
      %v2079 = vpack.c.bf16 %v2073, %v2072
      %v2080 = vld [vmem:[%s3 + $0x90] sm:$0xf]
      %v2081 = vld [vmem:[%s3 + $0x94] sm:$0xf]
      %v2082 = vld [vmem:[%s3 + $0x98] sm:$0xf]
      %v2083 = vld [vmem:[%s3 + $0x9c] sm:$0xf]
      %v2088 = vunpack.c.l.b16 %v2080
      %v2089 = vunpack.c.l.b16 %v2081
      %v2090 = vunpack.c.l.b16 %v2082
      %v2091 = vunpack.c.l.b16 %v2083
      %v2092 = vpack.c.b16 %v2089, %v2088
      %v2093 = vpack.c.b16 %v2091, %v2090
      %v2097 = vsel %vm1102, %v2074, 0
      %v2100 = vsel %vm1102, %v2075, 0
      %v2103 = vsel %vm1102, %v2076, 0
      %v2106 = vsel %vm1102, %v2077, 0
      %v2109 = vsel %vm1102, %v2078, 0
      %v2112 = vsel %vm1102, %v2079, 0
      %2114 = vmatpush.bf16.msra.mxu0 0
      %2115 = vmatpush.bf16.msra.mxu0 0
      %2116 = vmatpush.bf16.msra.mxu0 0
      %2117 = vmatpush.bf16.msra.mxu0 0
      %2118 = vmatpush.bf16.msra.mxu0 0
      %2119 = vmatpush.bf16.msra.mxu0 0
      %2120 = vmatpush.bf16.msra.mxu0 %v2093
      %2121 = vmatpush.bf16.msra.mxu0 %v2092
      %2122 = vmatmul.bf16.gmra.mxu0 %v2097
      %v2123 = vpop.f32.mrf.mxu0
      %v2124 = vadd.f32 0.0, %v2123
      %v2125 = vpop.f32.mrf.mxu0
      %v2126 = vadd.f32 0.0, %v2125
      %2127 = vmatmul.bf16.gmra.mxu0 %v2100
      %v2128 = vpop.f32.mrf.mxu0
      %v2129 = vadd.f32 0.0, %v2128
      %v2130 = vpop.f32.mrf.mxu0
      %v2131 = vadd.f32 0.0, %v2130
      %2132 = vmatmul.bf16.gmra.mxu0 %v2103
      %v2133 = vpop.f32.mrf.mxu0
      %v2134 = vadd.f32 0.0, %v2133
      %v2135 = vpop.f32.mrf.mxu0
      %v2136 = vadd.f32 0.0, %v2135
      %2137 = vmatmul.bf16.gmra.mxu0 %v2106
      %v2138 = vpop.f32.mrf.mxu0
      %v2139 = vadd.f32 0.0, %v2138
      %v2140 = vpop.f32.mrf.mxu0
      %v2141 = vadd.f32 0.0, %v2140
      %2142 = vmatmul.bf16.gmra.mxu0 %v2109
      %v2143 = vpop.f32.mrf.mxu0
      %v2144 = vadd.f32 0.0, %v2143
      %v2145 = vpop.f32.mrf.mxu0
      %v2146 = vadd.f32 0.0, %v2145
      %2147 = vmatmul.bf16.gmra.mxu0 %v2112
      %v2148 = vpop.f32.mrf.mxu0
      %v2149 = vadd.f32 0.0, %v2148
      %v2150 = vpop.f32.mrf.mxu0
      %v2151 = vadd.f32 0.0, %v2150
      %2152 = vdwg.mxu0
      %v2153 = vadd.f32 %v2050, %v2124
      %v2154 = vadd.f32 %v2051, %v2126
      %v2155 = vadd.f32 %v2052, %v2129
      %v2156 = vadd.f32 %v2053, %v2131
      %v2157 = vadd.f32 %v2054, %v2134
      %v2158 = vadd.f32 %v2055, %v2136
      %v2159 = vadd.f32 %v2056, %v2139
      %v2160 = vadd.f32 %v2057, %v2141
      %v2161 = vadd.f32 %v2058, %v2144
      %v2162 = vadd.f32 %v2059, %v2146
      %v2163 = vadd.f32 %v2060, %v2149
      %v2164 = vadd.f32 %v2061, %v2151
      %v2165 = vld [vmem:[#allocation2 + $0xb] sm:$0xff]
      %v2166 = vld [vmem:[#allocation2 + $0x13] sm:$0xff]
      %v2167 = vld [vmem:[#allocation2 + $0x1b] sm:$0xff]
      %v2168 = vld [vmem:[#allocation2 + $0x23] sm:$0xff]
      %v2169 = vld [vmem:[#allocation2 + $0x2b] sm:$0xff]
      %v2170 = vld [vmem:[#allocation2 + $0x33] sm:$0xff]
      %v2171 = vld [vmem:[#allocation2 + $0x3b] sm:$0xff]
      %v2172 = vld [vmem:[#allocation2 + $0x43] sm:$0xff]
      %v2173 = vld [vmem:[#allocation2 + $0x4b] sm:$0xff]
      %v2174 = vld [vmem:[#allocation2 + $0x53] sm:$0xff]
      %v2175 = vld [vmem:[#allocation2 + $0x5b] sm:$0xff]
      %v2176 = vld [vmem:[#allocation2 + $0x63] sm:$0xff]
      %v2177 = vpack.c.bf16 %v2166, %v2165
      %v2178 = vpack.c.bf16 %v2168, %v2167
      %v2179 = vpack.c.bf16 %v2170, %v2169
      %v2180 = vpack.c.bf16 %v2172, %v2171
      %v2181 = vpack.c.bf16 %v2174, %v2173
      %v2182 = vpack.c.bf16 %v2176, %v2175
      %v2183 = vld [vmem:[%s3 + $0xa0] sm:$0xf]
      %v2184 = vld [vmem:[%s3 + $0xa4] sm:$0xf]
      %v2185 = vld [vmem:[%s3 + $0xa8] sm:$0xf]
      %v2186 = vld [vmem:[%s3 + $0xac] sm:$0xf]
      %v2191 = vunpack.c.l.b16 %v2183
      %v2192 = vunpack.c.l.b16 %v2184
      %v2193 = vunpack.c.l.b16 %v2185
      %v2194 = vunpack.c.l.b16 %v2186
      %v2195 = vpack.c.b16 %v2192, %v2191
      %v2196 = vpack.c.b16 %v2194, %v2193
      %v2200 = vsel %vm1102, %v2177, 0
      %v2203 = vsel %vm1102, %v2178, 0
      %v2206 = vsel %vm1102, %v2179, 0
      %v2209 = vsel %vm1102, %v2180, 0
      %v2212 = vsel %vm1102, %v2181, 0
      %v2215 = vsel %vm1102, %v2182, 0
      %2217 = vmatpush.bf16.msra.mxu0 0
      %2218 = vmatpush.bf16.msra.mxu0 0
      %2219 = vmatpush.bf16.msra.mxu0 0
      %2220 = vmatpush.bf16.msra.mxu0 0
      %2221 = vmatpush.bf16.msra.mxu0 0
      %2222 = vmatpush.bf16.msra.mxu0 0
      %2223 = vmatpush.bf16.msra.mxu0 %v2196
      %2224 = vmatpush.bf16.msra.mxu0 %v2195
      %2225 = vmatmul.bf16.gmra.mxu0 %v2200
      %v2226 = vpop.f32.mrf.mxu0
      %v2227 = vadd.f32 0.0, %v2226
      %v2228 = vpop.f32.mrf.mxu0
      %v2229 = vadd.f32 0.0, %v2228
      %2230 = vmatmul.bf16.gmra.mxu0 %v2203
      %v2231 = vpop.f32.mrf.mxu0
      %v2232 = vadd.f32 0.0, %v2231
      %v2233 = vpop.f32.mrf.mxu0
      %v2234 = vadd.f32 0.0, %v2233
      %2235 = vmatmul.bf16.gmra.mxu0 %v2206
      %v2236 = vpop.f32.mrf.mxu0
      %v2237 = vadd.f32 0.0, %v2236
      %v2238 = vpop.f32.mrf.mxu0
      %v2239 = vadd.f32 0.0, %v2238
      %2240 = vmatmul.bf16.gmra.mxu0 %v2209
      %v2241 = vpop.f32.mrf.mxu0
      %v2242 = vadd.f32 0.0, %v2241
      %v2243 = vpop.f32.mrf.mxu0
      %v2244 = vadd.f32 0.0, %v2243
      %2245 = vmatmul.bf16.gmra.mxu0 %v2212
      %v2246 = vpop.f32.mrf.mxu0
      %v2247 = vadd.f32 0.0, %v2246
      %v2248 = vpop.f32.mrf.mxu0
      %v2249 = vadd.f32 0.0, %v2248
      %2250 = vmatmul.bf16.gmra.mxu0 %v2215
      %v2251 = vpop.f32.mrf.mxu0
      %v2252 = vadd.f32 0.0, %v2251
      %v2253 = vpop.f32.mrf.mxu0
      %v2254 = vadd.f32 0.0, %v2253
      %2255 = vdwg.mxu0
      %v2256 = vadd.f32 %v2153, %v2227
      %v2257 = vadd.f32 %v2154, %v2229
      %v2258 = vadd.f32 %v2155, %v2232
      %v2259 = vadd.f32 %v2156, %v2234
      %v2260 = vadd.f32 %v2157, %v2237
      %v2261 = vadd.f32 %v2158, %v2239
      %v2262 = vadd.f32 %v2159, %v2242
      %v2263 = vadd.f32 %v2160, %v2244
      %v2264 = vadd.f32 %v2161, %v2247
      %v2265 = vadd.f32 %v2162, %v2249
      %v2266 = vadd.f32 %v2163, %v2252
      %v2267 = vadd.f32 %v2164, %v2254
      %v2268 = vld [vmem:[#allocation2 + $0x7b] sm:$0xff]
      %v2269 = vld [vmem:[#allocation2 + $0x83] sm:$0xff]
      %v2270 = vld [vmem:[#allocation2 + $0x8b] sm:$0xff]
      %v2271 = vld [vmem:[#allocation2 + $0x93] sm:$0xff]
      %v2272 = vld [vmem:[#allocation2 + $0x9b] sm:$0xff]
      %v2273 = vld [vmem:[#allocation2 + $0xa3] sm:$0xff]
      %v2274 = vld [vmem:[#allocation2 + $0xab] sm:$0xff]
      %v2275 = vld [vmem:[#allocation2 + $0xb3] sm:$0xff]
      %v2276 = vld [vmem:[#allocation2 + $0xbb] sm:$0xff]
      %v2277 = vld [vmem:[#allocation2 + $0xc3] sm:$0xff]
      %v2278 = vld [vmem:[#allocation2 + $0xcb] sm:$0xff]
      %v2279 = vld [vmem:[#allocation2 + $0xd3] sm:$0xff]
      %v2280 = vpack.c.bf16 %v2269, %v2268
      %v2281 = vpack.c.bf16 %v2271, %v2270
      %v2282 = vpack.c.bf16 %v2273, %v2272
      %v2283 = vpack.c.bf16 %v2275, %v2274
      %v2284 = vpack.c.bf16 %v2277, %v2276
      %v2285 = vpack.c.bf16 %v2279, %v2278
      %v2286 = vld [vmem:[%s3 + $0xb0] sm:$0xf]
      %v2287 = vld [vmem:[%s3 + $0xb4] sm:$0xf]
      %v2288 = vld [vmem:[%s3 + $0xb8] sm:$0xf]
      %v2289 = vld [vmem:[%s3 + $0xbc] sm:$0xf]
      %v2294 = vunpack.c.l.b16 %v2286
      %v2295 = vunpack.c.l.b16 %v2287
      %v2296 = vunpack.c.l.b16 %v2288
      %v2297 = vunpack.c.l.b16 %v2289
      %v2298 = vpack.c.b16 %v2295, %v2294
      %v2299 = vpack.c.b16 %v2297, %v2296
      %v2303 = vsel %vm1102, %v2280, 0
      %v2306 = vsel %vm1102, %v2281, 0
      %v2309 = vsel %vm1102, %v2282, 0
      %v2312 = vsel %vm1102, %v2283, 0
      %v2315 = vsel %vm1102, %v2284, 0
      %v2318 = vsel %vm1102, %v2285, 0
      %2320 = vmatpush.bf16.msra.mxu0 0
      %2321 = vmatpush.bf16.msra.mxu0 0
      %2322 = vmatpush.bf16.msra.mxu0 0
      %2323 = vmatpush.bf16.msra.mxu0 0
      %2324 = vmatpush.bf16.msra.mxu0 0
      %2325 = vmatpush.bf16.msra.mxu0 0
      %2326 = vmatpush.bf16.msra.mxu0 %v2299
      %2327 = vmatpush.bf16.msra.mxu0 %v2298
      %2328 = vmatmul.bf16.gmra.mxu0 %v2303
      %v2329 = vpop.f32.mrf.mxu0
      %v2330 = vadd.f32 0.0, %v2329
      %v2331 = vpop.f32.mrf.mxu0
      %v2332 = vadd.f32 0.0, %v2331
      %2333 = vmatmul.bf16.gmra.mxu0 %v2306
      %v2334 = vpop.f32.mrf.mxu0
      %v2335 = vadd.f32 0.0, %v2334
      %v2336 = vpop.f32.mrf.mxu0
      %v2337 = vadd.f32 0.0, %v2336
      %2338 = vmatmul.bf16.gmra.mxu0 %v2309
      %v2339 = vpop.f32.mrf.mxu0
      %v2340 = vadd.f32 0.0, %v2339
      %v2341 = vpop.f32.mrf.mxu0
      %v2342 = vadd.f32 0.0, %v2341
      %2343 = vmatmul.bf16.gmra.mxu0 %v2312
      %v2344 = vpop.f32.mrf.mxu0
      %v2345 = vadd.f32 0.0, %v2344
      %v2346 = vpop.f32.mrf.mxu0
      %v2347 = vadd.f32 0.0, %v2346
      %2348 = vmatmul.bf16.gmra.mxu0 %v2315
      %v2349 = vpop.f32.mrf.mxu0
      %v2350 = vadd.f32 0.0, %v2349
      %v2351 = vpop.f32.mrf.mxu0
      %v2352 = vadd.f32 0.0, %v2351
      %2353 = vmatmul.bf16.gmra.mxu0 %v2318
      %v2354 = vpop.f32.mrf.mxu0
      %v2355 = vadd.f32 0.0, %v2354
      %v2356 = vpop.f32.mrf.mxu0
      %v2357 = vadd.f32 0.0, %v2356
      %2358 = vdwg.mxu0
      %v2359 = vadd.f32 %v2256, %v2330
      %v2360 = vadd.f32 %v2257, %v2332
      %v2361 = vadd.f32 %v2258, %v2335
      %v2362 = vadd.f32 %v2259, %v2337
      %v2363 = vadd.f32 %v2260, %v2340
      %v2364 = vadd.f32 %v2261, %v2342
      %v2365 = vadd.f32 %v2262, %v2345
      %v2366 = vadd.f32 %v2263, %v2347
      %v2367 = vadd.f32 %v2264, %v2350
      %v2368 = vadd.f32 %v2265, %v2352
      %v2369 = vadd.f32 %v2266, %v2355
      %v2370 = vadd.f32 %v2267, %v2357
      %v2371 = vld [vmem:[#allocation2 + $0xea] sm:$0xff]
      %v2372 = vld [vmem:[#allocation2 + $0xf2] sm:$0xff]
      %v2373 = vld [vmem:[#allocation2 + $0xfa] sm:$0xff]
      %v2374 = vld [vmem:[#allocation2 + $0x102] sm:$0xff]
      %v2375 = vld [vmem:[#allocation2 + $0x10a] sm:$0xff]
      %v2376 = vld [vmem:[#allocation2 + $0x112] sm:$0xff]
      %v2377 = vld [vmem:[#allocation2 + $0x11a] sm:$0xff]
      %v2378 = vld [vmem:[#allocation2 + $0x122] sm:$0xff]
      %v2379 = vld [vmem:[#allocation2 + $0x12a] sm:$0xff]
      %v2380 = vld [vmem:[#allocation2 + $0x132] sm:$0xff]
      %v2381 = vld [vmem:[#allocation2 + $0x13a] sm:$0xff]
      %v2382 = vld [vmem:[#allocation2 + $0x142] sm:$0xff]
      %v2383 = vpack.c.bf16 %v2372, %v2371
      %v2384 = vpack.c.bf16 %v2374, %v2373
      %v2385 = vpack.c.bf16 %v2376, %v2375
      %v2386 = vpack.c.bf16 %v2378, %v2377
      %v2387 = vpack.c.bf16 %v2380, %v2379
      %v2388 = vpack.c.bf16 %v2382, %v2381
      %v2389 = vld [vmem:[%s3 + $0xc0] sm:$0xf]
      %v2390 = vld [vmem:[%s3 + $0xc4] sm:$0xf]
      %v2391 = vld [vmem:[%s3 + $0xc8] sm:$0xf]
      %v2392 = vld [vmem:[%s3 + $0xcc] sm:$0xf]
      %v2397 = vunpack.c.l.b16 %v2389
      %v2398 = vunpack.c.l.b16 %v2390
      %v2399 = vunpack.c.l.b16 %v2391
      %v2400 = vunpack.c.l.b16 %v2392
      %v2401 = vpack.c.b16 %v2398, %v2397
      %v2402 = vpack.c.b16 %v2400, %v2399
      %v2406 = vsel %vm1102, %v2383, 0
      %v2409 = vsel %vm1102, %v2384, 0
      %v2412 = vsel %vm1102, %v2385, 0
      %v2415 = vsel %vm1102, %v2386, 0
      %v2418 = vsel %vm1102, %v2387, 0
      %v2421 = vsel %vm1102, %v2388, 0
      %2423 = vmatpush.bf16.msra.mxu0 0
      %2424 = vmatpush.bf16.msra.mxu0 0
      %2425 = vmatpush.bf16.msra.mxu0 0
      %2426 = vmatpush.bf16.msra.mxu0 0
      %2427 = vmatpush.bf16.msra.mxu0 0
      %2428 = vmatpush.bf16.msra.mxu0 0
      %2429 = vmatpush.bf16.msra.mxu0 %v2402
      %2430 = vmatpush.bf16.msra.mxu0 %v2401
      %2431 = vmatmul.bf16.gmra.mxu0 %v2406
      %v2432 = vpop.f32.mrf.mxu0
      %v2433 = vadd.f32 0.0, %v2432
      %v2434 = vpop.f32.mrf.mxu0
      %v2435 = vadd.f32 0.0, %v2434
      %2436 = vmatmul.bf16.gmra.mxu0 %v2409
      %v2437 = vpop.f32.mrf.mxu0
      %v2438 = vadd.f32 0.0, %v2437
      %v2439 = vpop.f32.mrf.mxu0
      %v2440 = vadd.f32 0.0, %v2439
      %2441 = vmatmul.bf16.gmra.mxu0 %v2412
      %v2442 = vpop.f32.mrf.mxu0
      %v2443 = vadd.f32 0.0, %v2442
      %v2444 = vpop.f32.mrf.mxu0
      %v2445 = vadd.f32 0.0, %v2444
      %2446 = vmatmul.bf16.gmra.mxu0 %v2415
      %v2447 = vpop.f32.mrf.mxu0
      %v2448 = vadd.f32 0.0, %v2447
      %v2449 = vpop.f32.mrf.mxu0
      %v2450 = vadd.f32 0.0, %v2449
      %2451 = vmatmul.bf16.gmra.mxu0 %v2418
      %v2452 = vpop.f32.mrf.mxu0
      %v2453 = vadd.f32 0.0, %v2452
      %v2454 = vpop.f32.mrf.mxu0
      %v2455 = vadd.f32 0.0, %v2454
      %2456 = vmatmul.bf16.gmra.mxu0 %v2421
      %v2457 = vpop.f32.mrf.mxu0
      %v2458 = vadd.f32 0.0, %v2457
      %v2459 = vpop.f32.mrf.mxu0
      %v2460 = vadd.f32 0.0, %v2459
      %2461 = vdwg.mxu0
      %v2462 = vadd.f32 %v2359, %v2433
      %v2463 = vadd.f32 %v2360, %v2435
      %v2464 = vadd.f32 %v2361, %v2438
      %v2465 = vadd.f32 %v2362, %v2440
      %v2466 = vadd.f32 %v2363, %v2443
      %v2467 = vadd.f32 %v2364, %v2445
      %v2468 = vadd.f32 %v2365, %v2448
      %v2469 = vadd.f32 %v2366, %v2450
      %v2470 = vadd.f32 %v2367, %v2453
      %v2471 = vadd.f32 %v2368, %v2455
      %v2472 = vadd.f32 %v2369, %v2458
      %v2473 = vadd.f32 %v2370, %v2460
      %v2474 = vld [vmem:[#allocation2 + $0x15a] sm:$0xff]
      %v2475 = vld [vmem:[#allocation2 + $0x162] sm:$0xff]
      %v2476 = vld [vmem:[#allocation2 + $0x16a] sm:$0xff]
      %v2477 = vld [vmem:[#allocation2 + $0x172] sm:$0xff]
      %v2478 = vld [vmem:[#allocation2 + $0x17a] sm:$0xff]
      %v2479 = vld [vmem:[#allocation2 + $0x182] sm:$0xff]
      %v2480 = vld [vmem:[#allocation2 + $0x18a] sm:$0xff]
      %v2481 = vld [vmem:[#allocation2 + $0x192] sm:$0xff]
      %v2482 = vld [vmem:[#allocation2 + $0x19a] sm:$0xff]
      %v2483 = vld [vmem:[#allocation2 + $0x1a2] sm:$0xff]
      %v2484 = vld [vmem:[#allocation2 + $0x1aa] sm:$0xff]
      %v2485 = vld [vmem:[#allocation2 + $0x1b2] sm:$0xff]
      %v2486 = vpack.c.bf16 %v2475, %v2474
      %v2487 = vpack.c.bf16 %v2477, %v2476
      %v2488 = vpack.c.bf16 %v2479, %v2478
      %v2489 = vpack.c.bf16 %v2481, %v2480
      %v2490 = vpack.c.bf16 %v2483, %v2482
      %v2491 = vpack.c.bf16 %v2485, %v2484
      %v2492 = vld [vmem:[%s3 + $0xd0] sm:$0xf]
      %v2493 = vld [vmem:[%s3 + $0xd4] sm:$0xf]
      %v2494 = vld [vmem:[%s3 + $0xd8] sm:$0xf]
      %v2495 = vld [vmem:[%s3 + $0xdc] sm:$0xf]
      %v2500 = vunpack.c.l.b16 %v2492
      %v2501 = vunpack.c.l.b16 %v2493
      %v2502 = vunpack.c.l.b16 %v2494
      %v2503 = vunpack.c.l.b16 %v2495
      %v2504 = vpack.c.b16 %v2501, %v2500
      %v2505 = vpack.c.b16 %v2503, %v2502
      %v2509 = vsel %vm1102, %v2486, 0
      %v2512 = vsel %vm1102, %v2487, 0
      %v2515 = vsel %vm1102, %v2488, 0
      %v2518 = vsel %vm1102, %v2489, 0
      %v2521 = vsel %vm1102, %v2490, 0
      %v2524 = vsel %vm1102, %v2491, 0
      %2526 = vmatpush.bf16.msra.mxu0 0
      %2527 = vmatpush.bf16.msra.mxu0 0
      %2528 = vmatpush.bf16.msra.mxu0 0
      %2529 = vmatpush.bf16.msra.mxu0 0
      %2530 = vmatpush.bf16.msra.mxu0 0
      %2531 = vmatpush.bf16.msra.mxu0 0
      %2532 = vmatpush.bf16.msra.mxu0 %v2505
      %2533 = vmatpush.bf16.msra.mxu0 %v2504
      %2534 = vmatmul.bf16.gmra.mxu0 %v2509
      %v2535 = vpop.f32.mrf.mxu0
      %v2536 = vadd.f32 0.0, %v2535
      %v2537 = vpop.f32.mrf.mxu0
      %v2538 = vadd.f32 0.0, %v2537
      %2539 = vmatmul.bf16.gmra.mxu0 %v2512
      %v2540 = vpop.f32.mrf.mxu0
      %v2541 = vadd.f32 0.0, %v2540
      %v2542 = vpop.f32.mrf.mxu0
      %v2543 = vadd.f32 0.0, %v2542
      %2544 = vmatmul.bf16.gmra.mxu0 %v2515
      %v2545 = vpop.f32.mrf.mxu0
      %v2546 = vadd.f32 0.0, %v2545
      %v2547 = vpop.f32.mrf.mxu0
      %v2548 = vadd.f32 0.0, %v2547
      %2549 = vmatmul.bf16.gmra.mxu0 %v2518
      %v2550 = vpop.f32.mrf.mxu0
      %v2551 = vadd.f32 0.0, %v2550
      %v2552 = vpop.f32.mrf.mxu0
      %v2553 = vadd.f32 0.0, %v2552
      %2554 = vmatmul.bf16.gmra.mxu0 %v2521
      %v2555 = vpop.f32.mrf.mxu0
      %v2556 = vadd.f32 0.0, %v2555
      %v2557 = vpop.f32.mrf.mxu0
      %v2558 = vadd.f32 0.0, %v2557
      %2559 = vmatmul.bf16.gmra.mxu0 %v2524
      %v2560 = vpop.f32.mrf.mxu0
      %v2561 = vadd.f32 0.0, %v2560
      %v2562 = vpop.f32.mrf.mxu0
      %v2563 = vadd.f32 0.0, %v2562
      %2564 = vdwg.mxu0
      %v2565 = vadd.f32 %v2462, %v2536
      %v2566 = vadd.f32 %v2463, %v2538
      %v2567 = vadd.f32 %v2464, %v2541
      %v2568 = vadd.f32 %v2465, %v2543
      %v2569 = vadd.f32 %v2466, %v2546
      %v2570 = vadd.f32 %v2467, %v2548
      %v2571 = vadd.f32 %v2468, %v2551
      %v2572 = vadd.f32 %v2469, %v2553
      %v2573 = vadd.f32 %v2470, %v2556
      %v2574 = vadd.f32 %v2471, %v2558
      %v2575 = vadd.f32 %v2472, %v2561
      %v2576 = vadd.f32 %v2473, %v2563
      %v2577 = vld [vmem:[#allocation2 + $0xeb] sm:$0xff]
      %v2578 = vld [vmem:[#allocation2 + $0xf3] sm:$0xff]
      %v2579 = vld [vmem:[#allocation2 + $0xfb] sm:$0xff]
      %v2580 = vld [vmem:[#allocation2 + $0x103] sm:$0xff]
      %v2581 = vld [vmem:[#allocation2 + $0x10b] sm:$0xff]
      %v2582 = vld [vmem:[#allocation2 + $0x113] sm:$0xff]
      %v2583 = vld [vmem:[#allocation2 + $0x11b] sm:$0xff]
      %v2584 = vld [vmem:[#allocation2 + $0x123] sm:$0xff]
      %v2585 = vld [vmem:[#allocation2 + $0x12b] sm:$0xff]
      %v2586 = vld [vmem:[#allocation2 + $0x133] sm:$0xff]
      %v2587 = vld [vmem:[#allocation2 + $0x13b] sm:$0xff]
      %v2588 = vld [vmem:[#allocation2 + $0x143] sm:$0xff]
      %v2589 = vpack.c.bf16 %v2578, %v2577
      %v2590 = vpack.c.bf16 %v2580, %v2579
      %v2591 = vpack.c.bf16 %v2582, %v2581
      %v2592 = vpack.c.bf16 %v2584, %v2583
      %v2593 = vpack.c.bf16 %v2586, %v2585
      %v2594 = vpack.c.bf16 %v2588, %v2587
      %v2595 = vld [vmem:[%s3 + $0xe0] sm:$0xf]
      %v2596 = vld [vmem:[%s3 + $0xe4] sm:$0xf]
      %v2597 = vld [vmem:[%s3 + $0xe8] sm:$0xf]
      %v2598 = vld [vmem:[%s3 + $0xec] sm:$0xf]
      %v2603 = vunpack.c.l.b16 %v2595
      %v2604 = vunpack.c.l.b16 %v2596
      %v2605 = vunpack.c.l.b16 %v2597
      %v2606 = vunpack.c.l.b16 %v2598
      %v2607 = vpack.c.b16 %v2604, %v2603
      %v2608 = vpack.c.b16 %v2606, %v2605
      %v2612 = vsel %vm1102, %v2589, 0
      %v2615 = vsel %vm1102, %v2590, 0
      %v2618 = vsel %vm1102, %v2591, 0
      %v2621 = vsel %vm1102, %v2592, 0
      %v2624 = vsel %vm1102, %v2593, 0
      %v2627 = vsel %vm1102, %v2594, 0
      %2629 = vmatpush.bf16.msra.mxu0 0
      %2630 = vmatpush.bf16.msra.mxu0 0
      %2631 = vmatpush.bf16.msra.mxu0 0
      %2632 = vmatpush.bf16.msra.mxu0 0
      %2633 = vmatpush.bf16.msra.mxu0 0
      %2634 = vmatpush.bf16.msra.mxu0 0
      %2635 = vmatpush.bf16.msra.mxu0 %v2608
      %2636 = vmatpush.bf16.msra.mxu0 %v2607
      %2637 = vmatmul.bf16.gmra.mxu0 %v2612
      %v2638 = vpop.f32.mrf.mxu0
      %v2639 = vadd.f32 0.0, %v2638
      %v2640 = vpop.f32.mrf.mxu0
      %v2641 = vadd.f32 0.0, %v2640
      %2642 = vmatmul.bf16.gmra.mxu0 %v2615
      %v2643 = vpop.f32.mrf.mxu0
      %v2644 = vadd.f32 0.0, %v2643
      %v2645 = vpop.f32.mrf.mxu0
      %v2646 = vadd.f32 0.0, %v2645
      %2647 = vmatmul.bf16.gmra.mxu0 %v2618
      %v2648 = vpop.f32.mrf.mxu0
      %v2649 = vadd.f32 0.0, %v2648
      %v2650 = vpop.f32.mrf.mxu0
      %v2651 = vadd.f32 0.0, %v2650
      %2652 = vmatmul.bf16.gmra.mxu0 %v2621
      %v2653 = vpop.f32.mrf.mxu0
      %v2654 = vadd.f32 0.0, %v2653
      %v2655 = vpop.f32.mrf.mxu0
      %v2656 = vadd.f32 0.0, %v2655
      %2657 = vmatmul.bf16.gmra.mxu0 %v2624
      %v2658 = vpop.f32.mrf.mxu0
      %v2659 = vadd.f32 0.0, %v2658
      %v2660 = vpop.f32.mrf.mxu0
      %v2661 = vadd.f32 0.0, %v2660
      %2662 = vmatmul.bf16.gmra.mxu0 %v2627
      %v2663 = vpop.f32.mrf.mxu0
      %v2664 = vadd.f32 0.0, %v2663
      %v2665 = vpop.f32.mrf.mxu0
      %v2666 = vadd.f32 0.0, %v2665
      %2667 = vdwg.mxu0
      %v2668 = vadd.f32 %v2565, %v2639
      %v2669 = vadd.f32 %v2566, %v2641
      %v2670 = vadd.f32 %v2567, %v2644
      %v2671 = vadd.f32 %v2568, %v2646
      %v2672 = vadd.f32 %v2569, %v2649
      %v2673 = vadd.f32 %v2570, %v2651
      %v2674 = vadd.f32 %v2571, %v2654
      %v2675 = vadd.f32 %v2572, %v2656
      %v2676 = vadd.f32 %v2573, %v2659
      %v2677 = vadd.f32 %v2574, %v2661
      %v2678 = vadd.f32 %v2575, %v2664
      %v2679 = vadd.f32 %v2576, %v2666
      %v2680 = vld [vmem:[#allocation2 + $0x15b] sm:$0xff]
      %v2681 = vld [vmem:[#allocation2 + $0x163] sm:$0xff]
      %v2682 = vld [vmem:[#allocation2 + $0x16b] sm:$0xff]
      %v2683 = vld [vmem:[#allocation2 + $0x173] sm:$0xff]
      %v2684 = vld [vmem:[#allocation2 + $0x17b] sm:$0xff]
      %v2685 = vld [vmem:[#allocation2 + $0x183] sm:$0xff]
      %v2686 = vld [vmem:[#allocation2 + $0x18b] sm:$0xff]
      %v2687 = vld [vmem:[#allocation2 + $0x193] sm:$0xff]
      %v2688 = vld [vmem:[#allocation2 + $0x19b] sm:$0xff]
      %v2689 = vld [vmem:[#allocation2 + $0x1a3] sm:$0xff]
      %v2690 = vld [vmem:[#allocation2 + $0x1ab] sm:$0xff]
      %v2691 = vld [vmem:[#allocation2 + $0x1b3] sm:$0xff]
      %v2692 = vpack.c.bf16 %v2681, %v2680
      %v2693 = vpack.c.bf16 %v2683, %v2682
      %v2694 = vpack.c.bf16 %v2685, %v2684
      %v2695 = vpack.c.bf16 %v2687, %v2686
      %v2696 = vpack.c.bf16 %v2689, %v2688
      %v2697 = vpack.c.bf16 %v2691, %v2690
      %v2698 = vld [vmem:[%s3 + $0xf0] sm:$0xf]
      %v2699 = vld [vmem:[%s3 + $0xf4] sm:$0xf]
      %v2700 = vld [vmem:[%s3 + $0xf8] sm:$0xf]
      %v2701 = vld [vmem:[%s3 + $0xfc] sm:$0xf]
      %v2706 = vunpack.c.l.b16 %v2698
      %v2707 = vunpack.c.l.b16 %v2699
      %v2708 = vunpack.c.l.b16 %v2700
      %v2709 = vunpack.c.l.b16 %v2701
      %v2710 = vpack.c.b16 %v2707, %v2706
      %v2711 = vpack.c.b16 %v2709, %v2708
      %v2715 = vsel %vm1102, %v2692, 0
      %v2718 = vsel %vm1102, %v2693, 0
      %v2721 = vsel %vm1102, %v2694, 0
      %v2724 = vsel %vm1102, %v2695, 0
      %v2727 = vsel %vm1102, %v2696, 0
      %v2730 = vsel %vm1102, %v2697, 0
      %2732 = vmatpush.bf16.msra.mxu0 0
      %2733 = vmatpush.bf16.msra.mxu0 0
      %2734 = vmatpush.bf16.msra.mxu0 0
      %2735 = vmatpush.bf16.msra.mxu0 0
      %2736 = vmatpush.bf16.msra.mxu0 0
      %2737 = vmatpush.bf16.msra.mxu0 0
      %2738 = vmatpush.bf16.msra.mxu0 %v2711
      %2739 = vmatpush.bf16.msra.mxu0 %v2710
      %2740 = vmatmul.bf16.gmra.mxu0 %v2715
      %v2741 = vpop.f32.mrf.mxu0
      %v2742 = vadd.f32 0.0, %v2741
      %v2743 = vpop.f32.mrf.mxu0
      %v2744 = vadd.f32 0.0, %v2743
      %2745 = vmatmul.bf16.gmra.mxu0 %v2718
      %v2746 = vpop.f32.mrf.mxu0
      %v2747 = vadd.f32 0.0, %v2746
      %v2748 = vpop.f32.mrf.mxu0
      %v2749 = vadd.f32 0.0, %v2748
      %2750 = vmatmul.bf16.gmra.mxu0 %v2721
      %v2751 = vpop.f32.mrf.mxu0
      %v2752 = vadd.f32 0.0, %v2751
      %v2753 = vpop.f32.mrf.mxu0
      %v2754 = vadd.f32 0.0, %v2753
      %2755 = vmatmul.bf16.gmra.mxu0 %v2724
      %v2756 = vpop.f32.mrf.mxu0
      %v2757 = vadd.f32 0.0, %v2756
      %v2758 = vpop.f32.mrf.mxu0
      %v2759 = vadd.f32 0.0, %v2758
      %2760 = vmatmul.bf16.gmra.mxu0 %v2727
      %v2761 = vpop.f32.mrf.mxu0
      %v2762 = vadd.f32 0.0, %v2761
      %v2763 = vpop.f32.mrf.mxu0
      %v2764 = vadd.f32 0.0, %v2763
      %2765 = vmatmul.bf16.gmra.mxu0 %v2730
      %v2766 = vpop.f32.mrf.mxu0
      %v2767 = vadd.f32 0.0, %v2766
      %v2768 = vpop.f32.mrf.mxu0
      %v2769 = vadd.f32 0.0, %v2768
      %2770 = vdwg.mxu0
      %v2771 = vadd.f32 %v2668, %v2742
      %v2772 = vadd.f32 %v2669, %v2744
      %v2773 = vadd.f32 %v2670, %v2747
      %v2774 = vadd.f32 %v2671, %v2749
      %v2775 = vadd.f32 %v2672, %v2752
      %v2776 = vadd.f32 %v2673, %v2754
      %v2777 = vadd.f32 %v2674, %v2757
      %v2778 = vadd.f32 %v2675, %v2759
      %v2779 = vadd.f32 %v2676, %v2762
      %v2780 = vadd.f32 %v2677, %v2764
      %v2781 = vadd.f32 %v2678, %v2767
      %v2782 = vadd.f32 %v2679, %v2769
      %vm2783 = vcmask 523264
      %2784 = vst.msk [vmem:[#allocation3 + $0x60] sm:$0xff] %vm2783, 0.0
      %2785 = vst.msk [vmem:[#allocation3 + $0x68] sm:$0xff] %vm2783, 0.0
      %2786 = vst.msk [vmem:[#allocation3 + $0x70] sm:$0xff] %vm2783, 0.0
      %2787 = vst.msk [vmem:[#allocation3 + $0x78] sm:$0xff] %vm2783, 0.0
      %v2788 = vld [vmem:[%s4] sm:$0x1]
      %v2790 = vperm.slane %v2788, 0
      %v2792 = vadd.f32 %v2771, %v2790
      %v2793 = vadd.f32 %v2772, %v2790
      %v2794 = vadd.f32 %v2773, %v2790
      %v2795 = vadd.f32 %v2774, %v2790
      %v2796 = vadd.f32 %v2775, %v2790
      %v2797 = vadd.f32 %v2776, %v2790
      %v2798 = vadd.f32 %v2777, %v2790
      %v2799 = vadd.f32 %v2778, %v2790
      %v2800 = vadd.f32 %v2779, %v2790
      %v2801 = vadd.f32 %v2780, %v2790
      %v2802 = vadd.f32 %v2781, %v2790
      %v2803 = vadd.f32 %v2782, %v2790
      %v2804 = vmax.f32 %v2792, 0.0
      %v2805 = vmax.f32 %v2793, 0.0
      %v2806 = vmax.f32 %v2794, 0.0
      %v2807 = vmax.f32 %v2795, 0.0
      %v2808 = vmax.f32 %v2796, 0.0
      %v2809 = vmax.f32 %v2797, 0.0
      %v2810 = vmax.f32 %v2798, 0.0
      %v2811 = vmax.f32 %v2799, 0.0
      %v2812 = vmax.f32 %v2800, 0.0
      %v2813 = vmax.f32 %v2801, 0.0
      %v2814 = vmax.f32 %v2802, 0.0
      %v2815 = vmax.f32 %v2803, 0.0
      %2816 = vst.msk [vmem:[#allocation3] sm:$0xff] %vm2783, %v2804
      %2817 = vst.msk [vmem:[#allocation3 + $0x8] sm:$0xff] %vm2783, %v2805
      %2818 = vst.msk [vmem:[#allocation3 + $0x10] sm:$0xff] %vm2783, %v2806
      %2819 = vst.msk [vmem:[#allocation3 + $0x18] sm:$0xff] %vm2783, %v2807
      %2820 = vst.msk [vmem:[#allocation3 + $0x20] sm:$0xff] %vm2783, %v2808
      %2821 = vst.msk [vmem:[#allocation3 + $0x28] sm:$0xff] %vm2783, %v2809
      %2822 = vst.msk [vmem:[#allocation3 + $0x30] sm:$0xff] %vm2783, %v2810
      %2823 = vst.msk [vmem:[#allocation3 + $0x38] sm:$0xff] %vm2783, %v2811
      %2824 = vst.msk [vmem:[#allocation3 + $0x40] sm:$0xff] %vm2783, %v2812
      %2825 = vst.msk [vmem:[#allocation3 + $0x48] sm:$0xff] %vm2783, %v2813
      %2826 = vst.msk [vmem:[#allocation3 + $0x50] sm:$0xff] %vm2783, %v2814
      %2827 = vst.msk [vmem:[#allocation3 + $0x58] sm:$0xff] %vm2783, %v2815
      %v2828 = vld [vmem:[#allocation3] sm:$0xff]
      %v2829 = vld [vmem:[#allocation3 + $0x8] sm:$0xff]
      %v2830 = vld [vmem:[#allocation3 + $0x10] sm:$0xff]
      %v2831 = vld [vmem:[#allocation3 + $0x18] sm:$0xff]
      %v2832 = vld [vmem:[#allocation3 + $0x20] sm:$0xff]
      %v2833 = vld [vmem:[#allocation3 + $0x28] sm:$0xff]
      %v2834 = vld [vmem:[#allocation3 + $0x30] sm:$0xff]
      %v2835 = vld [vmem:[#allocation3 + $0x38] sm:$0xff]
      %v2836 = vld [vmem:[#allocation3 + $0x40] sm:$0xff]
      %v2837 = vld [vmem:[#allocation3 + $0x48] sm:$0xff]
      %v2838 = vld [vmem:[#allocation3 + $0x50] sm:$0xff]
      %v2839 = vld [vmem:[#allocation3 + $0x58] sm:$0xff]
      %v2840 = vpack.c.bf16 %v2829, %v2828
      %v2841 = vpack.c.bf16 %v2831, %v2830
      %v2842 = vpack.c.bf16 %v2833, %v2832
      %v2843 = vpack.c.bf16 %v2835, %v2834
      %v2844 = vpack.c.bf16 %v2837, %v2836
      %v2845 = vpack.c.bf16 %v2839, %v2838
      %v2846 = vld [vmem:[%s5] sm:$0xf]
      %v2847 = vld [vmem:[%s5 + $0x4] sm:$0xf]
      %v2848 = vld [vmem:[%s5 + $0x8] sm:$0xf]
      %v2849 = vld [vmem:[%s5 + $0xc] sm:$0xf]
      %v2850 = vld [vmem:[%s5 + $0x10] sm:$0xf]
      %v2851 = vld [vmem:[%s5 + $0x14] sm:$0xf]
      %v2852 = vld [vmem:[%s5 + $0x18] sm:$0xf]
      %v2853 = vld [vmem:[%s5 + $0x1c] sm:$0xf]
      %v2854 = vld [vmem:[#allocation3 + $0x1] sm:$0xff]
      %v2855 = vld [vmem:[#allocation3 + $0x9] sm:$0xff]
      %v2856 = vld [vmem:[#allocation3 + $0x11] sm:$0xff]
      %v2857 = vld [vmem:[#allocation3 + $0x19] sm:$0xff]
      %v2858 = vld [vmem:[#allocation3 + $0x21] sm:$0xff]
      %v2859 = vld [vmem:[#allocation3 + $0x29] sm:$0xff]
      %v2860 = vld [vmem:[#allocation3 + $0x31] sm:$0xff]
      %v2861 = vld [vmem:[#allocation3 + $0x39] sm:$0xff]
      %v2862 = vld [vmem:[#allocation3 + $0x41] sm:$0xff]
      %v2863 = vld [vmem:[#allocation3 + $0x49] sm:$0xff]
      %v2864 = vld [vmem:[#allocation3 + $0x51] sm:$0xff]
      %v2865 = vld [vmem:[#allocation3 + $0x59] sm:$0xff]
      %v2866 = vpack.c.bf16 %v2855, %v2854
      %v2867 = vpack.c.bf16 %v2857, %v2856
      %v2868 = vpack.c.bf16 %v2859, %v2858
      %v2869 = vpack.c.bf16 %v2861, %v2860
      %v2870 = vpack.c.bf16 %v2863, %v2862
      %v2871 = vpack.c.bf16 %v2865, %v2864
      %v2872 = vld [vmem:[%s5 + $0x20] sm:$0xf]
      %v2873 = vld [vmem:[%s5 + $0x24] sm:$0xf]
      %v2874 = vld [vmem:[%s5 + $0x28] sm:$0xf]
      %v2875 = vld [vmem:[%s5 + $0x2c] sm:$0xf]
      %v2876 = vld [vmem:[%s5 + $0x30] sm:$0xf]
      %v2877 = vld [vmem:[%s5 + $0x34] sm:$0xf]
      %v2878 = vld [vmem:[%s5 + $0x38] sm:$0xf]
      %v2879 = vld [vmem:[%s5 + $0x3c] sm:$0xf]
      %v2888 = vunpack.c.l.b16 %v2872
      %v2889 = vunpack.c.l.b16 %v2873
      %v2890 = vunpack.c.l.b16 %v2874
      %v2891 = vunpack.c.l.b16 %v2875
      %v2892 = vunpack.c.l.b16 %v2876
      %v2893 = vunpack.c.l.b16 %v2877
      %v2894 = vunpack.c.l.b16 %v2878
      %v2895 = vunpack.c.l.b16 %v2879
      %v2896 = vpack.c.b16 %v2889, %v2888
      %v2897 = vpack.c.b16 %v2891, %v2890
      %v2898 = vpack.c.b16 %v2893, %v2892
      %v2899 = vpack.c.b16 %v2895, %v2894
      %v2905 = vsel %vm2783, %v2866, 0
      %v2908 = vsel %vm2783, %v2867, 0
      %v2911 = vsel %vm2783, %v2868, 0
      %v2914 = vsel %vm2783, %v2869, 0
      %v2917 = vsel %vm2783, %v2870, 0
      %v2920 = vsel %vm2783, %v2871, 0
      %2922 = vmatpush.bf16.msra.mxu0 0
      %2923 = vmatpush.bf16.msra.mxu0 0
      %2924 = vmatpush.bf16.msra.mxu0 0
      %2925 = vmatpush.bf16.msra.mxu0 0
      %2926 = vmatpush.bf16.msra.mxu0 %v2899
      %2927 = vmatpush.bf16.msra.mxu0 %v2898
      %2928 = vmatpush.bf16.msra.mxu0 %v2897
      %2929 = vmatpush.bf16.msra.mxu0 %v2896
      %2930 = vmatmul.bf16.gmra.mxu0 %v2905
      %v2931 = vpop.f32.mrf.mxu0
      %v2932 = vadd.f32 0.0, %v2931
      %v2933 = vpop.f32.mrf.mxu0
      %v2934 = vadd.f32 0.0, %v2933
      %2935 = vmatmul.bf16.gmra.mxu0 %v2908
      %v2936 = vpop.f32.mrf.mxu0
      %v2937 = vadd.f32 0.0, %v2936
      %v2938 = vpop.f32.mrf.mxu0
      %v2939 = vadd.f32 0.0, %v2938
      %2940 = vmatmul.bf16.gmra.mxu0 %v2911
      %v2941 = vpop.f32.mrf.mxu0
      %v2942 = vadd.f32 0.0, %v2941
      %v2943 = vpop.f32.mrf.mxu0
      %v2944 = vadd.f32 0.0, %v2943
      %2945 = vmatmul.bf16.gmra.mxu0 %v2914
      %v2946 = vpop.f32.mrf.mxu0
      %v2947 = vadd.f32 0.0, %v2946
      %v2948 = vpop.f32.mrf.mxu0
      %v2949 = vadd.f32 0.0, %v2948
      %2950 = vmatmul.bf16.gmra.mxu0 %v2917
      %v2951 = vpop.f32.mrf.mxu0
      %v2952 = vadd.f32 0.0, %v2951
      %v2953 = vpop.f32.mrf.mxu0
      %v2954 = vadd.f32 0.0, %v2953
      %2955 = vmatmul.bf16.gmra.mxu0 %v2920
      %v2956 = vpop.f32.mrf.mxu0
      %v2957 = vadd.f32 0.0, %v2956
      %v2958 = vpop.f32.mrf.mxu0
      %v2959 = vadd.f32 0.0, %v2958
      %2960 = vdwg.mxu0
      %v2969 = vunpack.c.l.b16 %v2846
      %v2970 = vunpack.c.l.b16 %v2847
      %v2971 = vunpack.c.l.b16 %v2848
      %v2972 = vunpack.c.l.b16 %v2849
      %v2973 = vunpack.c.l.b16 %v2850
      %v2974 = vunpack.c.l.b16 %v2851
      %v2975 = vunpack.c.l.b16 %v2852
      %v2976 = vunpack.c.l.b16 %v2853
      %v2977 = vpack.c.b16 %v2970, %v2969
      %v2978 = vpack.c.b16 %v2972, %v2971
      %v2979 = vpack.c.b16 %v2974, %v2973
      %v2980 = vpack.c.b16 %v2976, %v2975
      %v2986 = vsel %vm2783, %v2840, 0
      %v2989 = vsel %vm2783, %v2841, 0
      %v2992 = vsel %vm2783, %v2842, 0
      %v2995 = vsel %vm2783, %v2843, 0
      %v2998 = vsel %vm2783, %v2844, 0
      %v3001 = vsel %vm2783, %v2845, 0
      %3003 = vmatpush.bf16.msra.mxu0 0
      %3004 = vmatpush.bf16.msra.mxu0 0
      %3005 = vmatpush.bf16.msra.mxu0 0
      %3006 = vmatpush.bf16.msra.mxu0 0
      %3007 = vmatpush.bf16.msra.mxu0 %v2980
      %3008 = vmatpush.bf16.msra.mxu0 %v2979
      %3009 = vmatpush.bf16.msra.mxu0 %v2978
      %3010 = vmatpush.bf16.msra.mxu0 %v2977
      %3011 = vmatmul.bf16.gmra.mxu0 %v2986
      %v3012 = vpop.f32.mrf.mxu0
      %v3013 = vadd.f32 %v2932, %v3012
      %v3014 = vpop.f32.mrf.mxu0
      %v3015 = vadd.f32 %v2934, %v3014
      %3016 = vmatmul.bf16.gmra.mxu0 %v2989
      %v3017 = vpop.f32.mrf.mxu0
      %v3018 = vadd.f32 %v2937, %v3017
      %v3019 = vpop.f32.mrf.mxu0
      %v3020 = vadd.f32 %v2939, %v3019
      %3021 = vmatmul.bf16.gmra.mxu0 %v2992
      %v3022 = vpop.f32.mrf.mxu0
      %v3023 = vadd.f32 %v2942, %v3022
      %v3024 = vpop.f32.mrf.mxu0
      %v3025 = vadd.f32 %v2944, %v3024
      %3026 = vmatmul.bf16.gmra.mxu0 %v2995
      %v3027 = vpop.f32.mrf.mxu0
      %v3028 = vadd.f32 %v2947, %v3027
      %v3029 = vpop.f32.mrf.mxu0
      %v3030 = vadd.f32 %v2949, %v3029
      %3031 = vmatmul.bf16.gmra.mxu0 %v2998
      %v3032 = vpop.f32.mrf.mxu0
      %v3033 = vadd.f32 %v2952, %v3032
      %v3034 = vpop.f32.mrf.mxu0
      %v3035 = vadd.f32 %v2954, %v3034
      %3036 = vmatmul.bf16.gmra.mxu0 %v3001
      %v3037 = vpop.f32.mrf.mxu0
      %v3038 = vadd.f32 %v2957, %v3037
      %v3039 = vpop.f32.mrf.mxu0
      %v3040 = vadd.f32 %v2959, %v3039
      %3041 = vdwg.mxu0
      %v3042 = vld [vmem:[#allocation3 + $0x2] sm:$0xff]
      %v3043 = vld [vmem:[#allocation3 + $0xa] sm:$0xff]
      %v3044 = vld [vmem:[#allocation3 + $0x12] sm:$0xff]
      %v3045 = vld [vmem:[#allocation3 + $0x1a] sm:$0xff]
      %v3046 = vld [vmem:[#allocation3 + $0x22] sm:$0xff]
      %v3047 = vld [vmem:[#allocation3 + $0x2a] sm:$0xff]
      %v3048 = vld [vmem:[#allocation3 + $0x32] sm:$0xff]
      %v3049 = vld [vmem:[#allocation3 + $0x3a] sm:$0xff]
      %v3050 = vld [vmem:[#allocation3 + $0x42] sm:$0xff]
      %v3051 = vld [vmem:[#allocation3 + $0x4a] sm:$0xff]
      %v3052 = vld [vmem:[#allocation3 + $0x52] sm:$0xff]
      %v3053 = vld [vmem:[#allocation3 + $0x5a] sm:$0xff]
      %v3054 = vpack.c.bf16 %v3043, %v3042
      %v3055 = vpack.c.bf16 %v3045, %v3044
      %v3056 = vpack.c.bf16 %v3047, %v3046
      %v3057 = vpack.c.bf16 %v3049, %v3048
      %v3058 = vpack.c.bf16 %v3051, %v3050
      %v3059 = vpack.c.bf16 %v3053, %v3052
      %v3060 = vld [vmem:[%s5 + $0x40] sm:$0xf]
      %v3061 = vld [vmem:[%s5 + $0x44] sm:$0xf]
      %v3062 = vld [vmem:[%s5 + $0x48] sm:$0xf]
      %v3063 = vld [vmem:[%s5 + $0x4c] sm:$0xf]
      %v3064 = vld [vmem:[%s5 + $0x50] sm:$0xf]
      %v3065 = vld [vmem:[%s5 + $0x54] sm:$0xf]
      %v3066 = vld [vmem:[%s5 + $0x58] sm:$0xf]
      %v3067 = vld [vmem:[%s5 + $0x5c] sm:$0xf]
      %v3076 = vunpack.c.l.b16 %v3060
      %v3077 = vunpack.c.l.b16 %v3061
      %v3078 = vunpack.c.l.b16 %v3062
      %v3079 = vunpack.c.l.b16 %v3063
      %v3080 = vunpack.c.l.b16 %v3064
      %v3081 = vunpack.c.l.b16 %v3065
      %v3082 = vunpack.c.l.b16 %v3066
      %v3083 = vunpack.c.l.b16 %v3067
      %v3084 = vpack.c.b16 %v3077, %v3076
      %v3085 = vpack.c.b16 %v3079, %v3078
      %v3086 = vpack.c.b16 %v3081, %v3080
      %v3087 = vpack.c.b16 %v3083, %v3082
      %v3093 = vsel %vm2783, %v3054, 0
      %v3096 = vsel %vm2783, %v3055, 0
      %v3099 = vsel %vm2783, %v3056, 0
      %v3102 = vsel %vm2783, %v3057, 0
      %v3105 = vsel %vm2783, %v3058, 0
      %v3108 = vsel %vm2783, %v3059, 0
      %3110 = vmatpush.bf16.msra.mxu0 0
      %3111 = vmatpush.bf16.msra.mxu0 0
      %3112 = vmatpush.bf16.msra.mxu0 0
      %3113 = vmatpush.bf16.msra.mxu0 0
      %3114 = vmatpush.bf16.msra.mxu0 %v3087
      %3115 = vmatpush.bf16.msra.mxu0 %v3086
      %3116 = vmatpush.bf16.msra.mxu0 %v3085
      %3117 = vmatpush.bf16.msra.mxu0 %v3084
      %3118 = vmatmul.bf16.gmra.mxu0 %v3093
      %v3119 = vpop.f32.mrf.mxu0
      %v3120 = vadd.f32 0.0, %v3119
      %v3121 = vpop.f32.mrf.mxu0
      %v3122 = vadd.f32 0.0, %v3121
      %3123 = vmatmul.bf16.gmra.mxu0 %v3096
      %v3124 = vpop.f32.mrf.mxu0
      %v3125 = vadd.f32 0.0, %v3124
      %v3126 = vpop.f32.mrf.mxu0
      %v3127 = vadd.f32 0.0, %v3126
      %3128 = vmatmul.bf16.gmra.mxu0 %v3099
      %v3129 = vpop.f32.mrf.mxu0
      %v3130 = vadd.f32 0.0, %v3129
      %v3131 = vpop.f32.mrf.mxu0
      %v3132 = vadd.f32 0.0, %v3131
      %3133 = vmatmul.bf16.gmra.mxu0 %v3102
      %v3134 = vpop.f32.mrf.mxu0
      %v3135 = vadd.f32 0.0, %v3134
      %v3136 = vpop.f32.mrf.mxu0
      %v3137 = vadd.f32 0.0, %v3136
      %3138 = vmatmul.bf16.gmra.mxu0 %v3105
      %v3139 = vpop.f32.mrf.mxu0
      %v3140 = vadd.f32 0.0, %v3139
      %v3141 = vpop.f32.mrf.mxu0
      %v3142 = vadd.f32 0.0, %v3141
      %3143 = vmatmul.bf16.gmra.mxu0 %v3108
      %v3144 = vpop.f32.mrf.mxu0
      %v3145 = vadd.f32 0.0, %v3144
      %v3146 = vpop.f32.mrf.mxu0
      %v3147 = vadd.f32 0.0, %v3146
      %3148 = vdwg.mxu0
      %v3149 = vadd.f32 %v3013, %v3120
      %v3150 = vadd.f32 %v3015, %v3122
      %v3151 = vadd.f32 %v3018, %v3125
      %v3152 = vadd.f32 %v3020, %v3127
      %v3153 = vadd.f32 %v3023, %v3130
      %v3154 = vadd.f32 %v3025, %v3132
      %v3155 = vadd.f32 %v3028, %v3135
      %v3156 = vadd.f32 %v3030, %v3137
      %v3157 = vadd.f32 %v3033, %v3140
      %v3158 = vadd.f32 %v3035, %v3142
      %v3159 = vadd.f32 %v3038, %v3145
      %v3160 = vadd.f32 %v3040, %v3147
      %v3161 = vld [vmem:[#allocation3 + $0xa] sm:$0xff]
      %v3162 = vld [vmem:[#allocation3 + $0x12] sm:$0xff]
      %v3163 = vld [vmem:[#allocation3 + $0x1a] sm:$0xff]
      %v3164 = vld [vmem:[#allocation3 + $0x22] sm:$0xff]
      %v3165 = vld [vmem:[#allocation3 + $0x2a] sm:$0xff]
      %v3166 = vld [vmem:[#allocation3 + $0x32] sm:$0xff]
      %v3167 = vld [vmem:[#allocation3 + $0x3a] sm:$0xff]
      %v3168 = vld [vmem:[#allocation3 + $0x42] sm:$0xff]
      %v3169 = vld [vmem:[#allocation3 + $0x4a] sm:$0xff]
      %v3170 = vld [vmem:[#allocation3 + $0x52] sm:$0xff]
      %v3171 = vld [vmem:[#allocation3 + $0x5a] sm:$0xff]
      %v3172 = vld [vmem:[#allocation3 + $0x62] sm:$0xff]
      %v3173 = vpack.c.bf16 %v3162, %v3161
      %v3174 = vpack.c.bf16 %v3164, %v3163
      %v3175 = vpack.c.bf16 %v3166, %v3165
      %v3176 = vpack.c.bf16 %v3168, %v3167
      %v3177 = vpack.c.bf16 %v3170, %v3169
      %v3178 = vpack.c.bf16 %v3172, %v3171
      %v3179 = vld [vmem:[%s5 + $0x60] sm:$0xf]
      %v3180 = vld [vmem:[%s5 + $0x64] sm:$0xf]
      %v3181 = vld [vmem:[%s5 + $0x68] sm:$0xf]
      %v3182 = vld [vmem:[%s5 + $0x6c] sm:$0xf]
      %v3183 = vld [vmem:[%s5 + $0x70] sm:$0xf]
      %v3184 = vld [vmem:[%s5 + $0x74] sm:$0xf]
      %v3185 = vld [vmem:[%s5 + $0x78] sm:$0xf]
      %v3186 = vld [vmem:[%s5 + $0x7c] sm:$0xf]
      %v3195 = vunpack.c.l.b16 %v3179
      %v3196 = vunpack.c.l.b16 %v3180
      %v3197 = vunpack.c.l.b16 %v3181
      %v3198 = vunpack.c.l.b16 %v3182
      %v3199 = vunpack.c.l.b16 %v3183
      %v3200 = vunpack.c.l.b16 %v3184
      %v3201 = vunpack.c.l.b16 %v3185
      %v3202 = vunpack.c.l.b16 %v3186
      %v3203 = vpack.c.b16 %v3196, %v3195
      %v3204 = vpack.c.b16 %v3198, %v3197
      %v3205 = vpack.c.b16 %v3200, %v3199
      %v3206 = vpack.c.b16 %v3202, %v3201
      %v3212 = vsel %vm2783, %v3173, 0
      %v3215 = vsel %vm2783, %v3174, 0
      %v3218 = vsel %vm2783, %v3175, 0
      %v3221 = vsel %vm2783, %v3176, 0
      %v3224 = vsel %vm2783, %v3177, 0
      %v3227 = vsel %vm2783, %v3178, 0
      %3229 = vmatpush.bf16.msra.mxu0 0
      %3230 = vmatpush.bf16.msra.mxu0 0
      %3231 = vmatpush.bf16.msra.mxu0 0
      %3232 = vmatpush.bf16.msra.mxu0 0
      %3233 = vmatpush.bf16.msra.mxu0 %v3206
      %3234 = vmatpush.bf16.msra.mxu0 %v3205
      %3235 = vmatpush.bf16.msra.mxu0 %v3204
      %3236 = vmatpush.bf16.msra.mxu0 %v3203
      %3237 = vmatmul.bf16.gmra.mxu0 %v3212
      %v3238 = vpop.f32.mrf.mxu0
      %v3239 = vadd.f32 0.0, %v3238
      %v3240 = vpop.f32.mrf.mxu0
      %v3241 = vadd.f32 0.0, %v3240
      %3242 = vmatmul.bf16.gmra.mxu0 %v3215
      %v3243 = vpop.f32.mrf.mxu0
      %v3244 = vadd.f32 0.0, %v3243
      %v3245 = vpop.f32.mrf.mxu0
      %v3246 = vadd.f32 0.0, %v3245
      %3247 = vmatmul.bf16.gmra.mxu0 %v3218
      %v3248 = vpop.f32.mrf.mxu0
      %v3249 = vadd.f32 0.0, %v3248
      %v3250 = vpop.f32.mrf.mxu0
      %v3251 = vadd.f32 0.0, %v3250
      %3252 = vmatmul.bf16.gmra.mxu0 %v3221
      %v3253 = vpop.f32.mrf.mxu0
      %v3254 = vadd.f32 0.0, %v3253
      %v3255 = vpop.f32.mrf.mxu0
      %v3256 = vadd.f32 0.0, %v3255
      %3257 = vmatmul.bf16.gmra.mxu0 %v3224
      %v3258 = vpop.f32.mrf.mxu0
      %v3259 = vadd.f32 0.0, %v3258
      %v3260 = vpop.f32.mrf.mxu0
      %v3261 = vadd.f32 0.0, %v3260
      %3262 = vmatmul.bf16.gmra.mxu0 %v3227
      %v3263 = vpop.f32.mrf.mxu0
      %v3264 = vadd.f32 0.0, %v3263
      %v3265 = vpop.f32.mrf.mxu0
      %v3266 = vadd.f32 0.0, %v3265
      %3267 = vdwg.mxu0
      %v3268 = vadd.f32 %v3149, %v3239
      %v3269 = vadd.f32 %v3150, %v3241
      %v3270 = vadd.f32 %v3151, %v3244
      %v3271 = vadd.f32 %v3152, %v3246
      %v3272 = vadd.f32 %v3153, %v3249
      %v3273 = vadd.f32 %v3154, %v3251
      %v3274 = vadd.f32 %v3155, %v3254
      %v3275 = vadd.f32 %v3156, %v3256
      %v3276 = vadd.f32 %v3157, %v3259
      %v3277 = vadd.f32 %v3158, %v3261
      %v3278 = vadd.f32 %v3159, %v3264
      %v3279 = vadd.f32 %v3160, %v3266
      %v3280 = vld [vmem:[#allocation3 + $0xb] sm:$0xff]
      %v3281 = vld [vmem:[#allocation3 + $0x13] sm:$0xff]
      %v3282 = vld [vmem:[#allocation3 + $0x1b] sm:$0xff]
      %v3283 = vld [vmem:[#allocation3 + $0x23] sm:$0xff]
      %v3284 = vld [vmem:[#allocation3 + $0x2b] sm:$0xff]
      %v3285 = vld [vmem:[#allocation3 + $0x33] sm:$0xff]
      %v3286 = vld [vmem:[#allocation3 + $0x3b] sm:$0xff]
      %v3287 = vld [vmem:[#allocation3 + $0x43] sm:$0xff]
      %v3288 = vld [vmem:[#allocation3 + $0x4b] sm:$0xff]
      %v3289 = vld [vmem:[#allocation3 + $0x53] sm:$0xff]
      %v3290 = vld [vmem:[#allocation3 + $0x5b] sm:$0xff]
      %v3291 = vld [vmem:[#allocation3 + $0x63] sm:$0xff]
      %v3292 = vpack.c.bf16 %v3281, %v3280
      %v3293 = vpack.c.bf16 %v3283, %v3282
      %v3294 = vpack.c.bf16 %v3285, %v3284
      %v3295 = vpack.c.bf16 %v3287, %v3286
      %v3296 = vpack.c.bf16 %v3289, %v3288
      %v3297 = vpack.c.bf16 %v3291, %v3290
      %v3298 = vld [vmem:[%s5 + $0x80] sm:$0xf]
      %v3299 = vld [vmem:[%s5 + $0x84] sm:$0xf]
      %v3300 = vld [vmem:[%s5 + $0x88] sm:$0xf]
      %v3301 = vld [vmem:[%s5 + $0x8c] sm:$0xf]
      %v3302 = vld [vmem:[%s5 + $0x90] sm:$0xf]
      %v3303 = vld [vmem:[%s5 + $0x94] sm:$0xf]
      %v3304 = vld [vmem:[%s5 + $0x98] sm:$0xf]
      %v3305 = vld [vmem:[%s5 + $0x9c] sm:$0xf]
      %v3314 = vunpack.c.l.b16 %v3298
      %v3315 = vunpack.c.l.b16 %v3299
      %v3316 = vunpack.c.l.b16 %v3300
      %v3317 = vunpack.c.l.b16 %v3301
      %v3318 = vunpack.c.l.b16 %v3302
      %v3319 = vunpack.c.l.b16 %v3303
      %v3320 = vunpack.c.l.b16 %v3304
      %v3321 = vunpack.c.l.b16 %v3305
      %v3322 = vpack.c.b16 %v3315, %v3314
      %v3323 = vpack.c.b16 %v3317, %v3316
      %v3324 = vpack.c.b16 %v3319, %v3318
      %v3325 = vpack.c.b16 %v3321, %v3320
      %v3331 = vsel %vm2783, %v3292, 0
      %v3334 = vsel %vm2783, %v3293, 0
      %v3337 = vsel %vm2783, %v3294, 0
      %v3340 = vsel %vm2783, %v3295, 0
      %v3343 = vsel %vm2783, %v3296, 0
      %v3346 = vsel %vm2783, %v3297, 0
      %3348 = vmatpush.bf16.msra.mxu0 0
      %3349 = vmatpush.bf16.msra.mxu0 0
      %3350 = vmatpush.bf16.msra.mxu0 0
      %3351 = vmatpush.bf16.msra.mxu0 0
      %3352 = vmatpush.bf16.msra.mxu0 %v3325
      %3353 = vmatpush.bf16.msra.mxu0 %v3324
      %3354 = vmatpush.bf16.msra.mxu0 %v3323
      %3355 = vmatpush.bf16.msra.mxu0 %v3322
      %3356 = vmatmul.bf16.gmra.mxu0 %v3331
      %v3357 = vpop.f32.mrf.mxu0
      %v3358 = vadd.f32 0.0, %v3357
      %v3359 = vpop.f32.mrf.mxu0
      %v3360 = vadd.f32 0.0, %v3359
      %3361 = vmatmul.bf16.gmra.mxu0 %v3334
      %v3362 = vpop.f32.mrf.mxu0
      %v3363 = vadd.f32 0.0, %v3362
      %v3364 = vpop.f32.mrf.mxu0
      %v3365 = vadd.f32 0.0, %v3364
      %3366 = vmatmul.bf16.gmra.mxu0 %v3337
      %v3367 = vpop.f32.mrf.mxu0
      %v3368 = vadd.f32 0.0, %v3367
      %v3369 = vpop.f32.mrf.mxu0
      %v3370 = vadd.f32 0.0, %v3369
      %3371 = vmatmul.bf16.gmra.mxu0 %v3340
      %v3372 = vpop.f32.mrf.mxu0
      %v3373 = vadd.f32 0.0, %v3372
      %v3374 = vpop.f32.mrf.mxu0
      %v3375 = vadd.f32 0.0, %v3374
      %3376 = vmatmul.bf16.gmra.mxu0 %v3343
      %v3377 = vpop.f32.mrf.mxu0
      %v3378 = vadd.f32 0.0, %v3377
      %v3379 = vpop.f32.mrf.mxu0
      %v3380 = vadd.f32 0.0, %v3379
      %3381 = vmatmul.bf16.gmra.mxu0 %v3346
      %v3382 = vpop.f32.mrf.mxu0
      %v3383 = vadd.f32 0.0, %v3382
      %v3384 = vpop.f32.mrf.mxu0
      %v3385 = vadd.f32 0.0, %v3384
      %3386 = vdwg.mxu0
      %v3387 = vadd.f32 %v3268, %v3358
      %v3388 = vadd.f32 %v3269, %v3360
      %v3389 = vadd.f32 %v3270, %v3363
      %v3390 = vadd.f32 %v3271, %v3365
      %v3391 = vadd.f32 %v3272, %v3368
      %v3392 = vadd.f32 %v3273, %v3370
      %v3393 = vadd.f32 %v3274, %v3373
      %v3394 = vadd.f32 %v3275, %v3375
      %v3395 = vadd.f32 %v3276, %v3378
      %v3396 = vadd.f32 %v3277, %v3380
      %v3397 = vadd.f32 %v3278, %v3383
      %v3398 = vadd.f32 %v3279, %v3385
      %v3399 = vld [vmem:[#allocation3 + $0xc] sm:$0xff]
      %v3400 = vld [vmem:[#allocation3 + $0x14] sm:$0xff]
      %v3401 = vld [vmem:[#allocation3 + $0x1c] sm:$0xff]
      %v3402 = vld [vmem:[#allocation3 + $0x24] sm:$0xff]
      %v3403 = vld [vmem:[#allocation3 + $0x2c] sm:$0xff]
      %v3404 = vld [vmem:[#allocation3 + $0x34] sm:$0xff]
      %v3405 = vld [vmem:[#allocation3 + $0x3c] sm:$0xff]
      %v3406 = vld [vmem:[#allocation3 + $0x44] sm:$0xff]
      %v3407 = vld [vmem:[#allocation3 + $0x4c] sm:$0xff]
      %v3408 = vld [vmem:[#allocation3 + $0x54] sm:$0xff]
      %v3409 = vld [vmem:[#allocation3 + $0x5c] sm:$0xff]
      %v3410 = vld [vmem:[#allocation3 + $0x64] sm:$0xff]
      %v3411 = vpack.c.bf16 %v3400, %v3399
      %v3412 = vpack.c.bf16 %v3402, %v3401
      %v3413 = vpack.c.bf16 %v3404, %v3403
      %v3414 = vpack.c.bf16 %v3406, %v3405
      %v3415 = vpack.c.bf16 %v3408, %v3407
      %v3416 = vpack.c.bf16 %v3410, %v3409
      %v3417 = vld [vmem:[%s5 + $0xa0] sm:$0xf]
      %v3418 = vld [vmem:[%s5 + $0xa4] sm:$0xf]
      %v3419 = vld [vmem:[%s5 + $0xa8] sm:$0xf]
      %v3420 = vld [vmem:[%s5 + $0xac] sm:$0xf]
      %v3421 = vld [vmem:[%s5 + $0xb0] sm:$0xf]
      %v3422 = vld [vmem:[%s5 + $0xb4] sm:$0xf]
      %v3423 = vld [vmem:[%s5 + $0xb8] sm:$0xf]
      %v3424 = vld [vmem:[%s5 + $0xbc] sm:$0xf]
      %v3433 = vunpack.c.l.b16 %v3417
      %v3434 = vunpack.c.l.b16 %v3418
      %v3435 = vunpack.c.l.b16 %v3419
      %v3436 = vunpack.c.l.b16 %v3420
      %v3437 = vunpack.c.l.b16 %v3421
      %v3438 = vunpack.c.l.b16 %v3422
      %v3439 = vunpack.c.l.b16 %v3423
      %v3440 = vunpack.c.l.b16 %v3424
      %v3441 = vpack.c.b16 %v3434, %v3433
      %v3442 = vpack.c.b16 %v3436, %v3435
      %v3443 = vpack.c.b16 %v3438, %v3437
      %v3444 = vpack.c.b16 %v3440, %v3439
      %v3450 = vsel %vm2783, %v3411, 0
      %v3453 = vsel %vm2783, %v3412, 0
      %v3456 = vsel %vm2783, %v3413, 0
      %v3459 = vsel %vm2783, %v3414, 0
      %v3462 = vsel %vm2783, %v3415, 0
      %v3465 = vsel %vm2783, %v3416, 0
      %3467 = vmatpush.bf16.msra.mxu0 0
      %3468 = vmatpush.bf16.msra.mxu0 0
      %3469 = vmatpush.bf16.msra.mxu0 0
      %3470 = vmatpush.bf16.msra.mxu0 0
      %3471 = vmatpush.bf16.msra.mxu0 %v3444
      %3472 = vmatpush.bf16.msra.mxu0 %v3443
      %3473 = vmatpush.bf16.msra.mxu0 %v3442
      %3474 = vmatpush.bf16.msra.mxu0 %v3441
      %3475 = vmatmul.bf16.gmra.mxu0 %v3450
      %v3476 = vpop.f32.mrf.mxu0
      %v3477 = vadd.f32 0.0, %v3476
      %v3478 = vpop.f32.mrf.mxu0
      %v3479 = vadd.f32 0.0, %v3478
      %3480 = vmatmul.bf16.gmra.mxu0 %v3453
      %v3481 = vpop.f32.mrf.mxu0
      %v3482 = vadd.f32 0.0, %v3481
      %v3483 = vpop.f32.mrf.mxu0
      %v3484 = vadd.f32 0.0, %v3483
      %3485 = vmatmul.bf16.gmra.mxu0 %v3456
      %v3486 = vpop.f32.mrf.mxu0
      %v3487 = vadd.f32 0.0, %v3486
      %v3488 = vpop.f32.mrf.mxu0
      %v3489 = vadd.f32 0.0, %v3488
      %3490 = vmatmul.bf16.gmra.mxu0 %v3459
      %v3491 = vpop.f32.mrf.mxu0
      %v3492 = vadd.f32 0.0, %v3491
      %v3493 = vpop.f32.mrf.mxu0
      %v3494 = vadd.f32 0.0, %v3493
      %3495 = vmatmul.bf16.gmra.mxu0 %v3462
      %v3496 = vpop.f32.mrf.mxu0
      %v3497 = vadd.f32 0.0, %v3496
      %v3498 = vpop.f32.mrf.mxu0
      %v3499 = vadd.f32 0.0, %v3498
      %3500 = vmatmul.bf16.gmra.mxu0 %v3465
      %v3501 = vpop.f32.mrf.mxu0
      %v3502 = vadd.f32 0.0, %v3501
      %v3503 = vpop.f32.mrf.mxu0
      %v3504 = vadd.f32 0.0, %v3503
      %3505 = vdwg.mxu0
      %v3506 = vadd.f32 %v3387, %v3477
      %v3507 = vadd.f32 %v3388, %v3479
      %v3508 = vadd.f32 %v3389, %v3482
      %v3509 = vadd.f32 %v3390, %v3484
      %v3510 = vadd.f32 %v3391, %v3487
      %v3511 = vadd.f32 %v3392, %v3489
      %v3512 = vadd.f32 %v3393, %v3492
      %v3513 = vadd.f32 %v3394, %v3494
      %v3514 = vadd.f32 %v3395, %v3497
      %v3515 = vadd.f32 %v3396, %v3499
      %v3516 = vadd.f32 %v3397, %v3502
      %v3517 = vadd.f32 %v3398, %v3504
      %v3518 = vld [vmem:[#allocation3 + $0x14] sm:$0xff]
      %v3519 = vld [vmem:[#allocation3 + $0x1c] sm:$0xff]
      %v3520 = vld [vmem:[#allocation3 + $0x24] sm:$0xff]
      %v3521 = vld [vmem:[#allocation3 + $0x2c] sm:$0xff]
      %v3522 = vld [vmem:[#allocation3 + $0x34] sm:$0xff]
      %v3523 = vld [vmem:[#allocation3 + $0x3c] sm:$0xff]
      %v3524 = vld [vmem:[#allocation3 + $0x44] sm:$0xff]
      %v3525 = vld [vmem:[#allocation3 + $0x4c] sm:$0xff]
      %v3526 = vld [vmem:[#allocation3 + $0x54] sm:$0xff]
      %v3527 = vld [vmem:[#allocation3 + $0x5c] sm:$0xff]
      %v3528 = vld [vmem:[#allocation3 + $0x64] sm:$0xff]
      %v3529 = vld [vmem:[#allocation3 + $0x6c] sm:$0xff]
      %v3530 = vpack.c.bf16 %v3519, %v3518
      %v3531 = vpack.c.bf16 %v3521, %v3520
      %v3532 = vpack.c.bf16 %v3523, %v3522
      %v3533 = vpack.c.bf16 %v3525, %v3524
      %v3534 = vpack.c.bf16 %v3527, %v3526
      %v3535 = vpack.c.bf16 %v3529, %v3528
      %v3536 = vld [vmem:[%s5 + $0xc0] sm:$0xf]
      %v3537 = vld [vmem:[%s5 + $0xc4] sm:$0xf]
      %v3538 = vld [vmem:[%s5 + $0xc8] sm:$0xf]
      %v3539 = vld [vmem:[%s5 + $0xcc] sm:$0xf]
      %v3540 = vld [vmem:[%s5 + $0xd0] sm:$0xf]
      %v3541 = vld [vmem:[%s5 + $0xd4] sm:$0xf]
      %v3542 = vld [vmem:[%s5 + $0xd8] sm:$0xf]
      %v3543 = vld [vmem:[%s5 + $0xdc] sm:$0xf]
      %v3552 = vunpack.c.l.b16 %v3536
      %v3553 = vunpack.c.l.b16 %v3537
      %v3554 = vunpack.c.l.b16 %v3538
      %v3555 = vunpack.c.l.b16 %v3539
      %v3556 = vunpack.c.l.b16 %v3540
      %v3557 = vunpack.c.l.b16 %v3541
      %v3558 = vunpack.c.l.b16 %v3542
      %v3559 = vunpack.c.l.b16 %v3543
      %v3560 = vpack.c.b16 %v3553, %v3552
      %v3561 = vpack.c.b16 %v3555, %v3554
      %v3562 = vpack.c.b16 %v3557, %v3556
      %v3563 = vpack.c.b16 %v3559, %v3558
      %v3569 = vsel %vm2783, %v3530, 0
      %v3572 = vsel %vm2783, %v3531, 0
      %v3575 = vsel %vm2783, %v3532, 0
      %v3578 = vsel %vm2783, %v3533, 0
      %v3581 = vsel %vm2783, %v3534, 0
      %v3584 = vsel %vm2783, %v3535, 0
      %3586 = vmatpush.bf16.msra.mxu0 0
      %3587 = vmatpush.bf16.msra.mxu0 0
      %3588 = vmatpush.bf16.msra.mxu0 0
      %3589 = vmatpush.bf16.msra.mxu0 0
      %3590 = vmatpush.bf16.msra.mxu0 %v3563
      %3591 = vmatpush.bf16.msra.mxu0 %v3562
      %3592 = vmatpush.bf16.msra.mxu0 %v3561
      %3593 = vmatpush.bf16.msra.mxu0 %v3560
      %3594 = vmatmul.bf16.gmra.mxu0 %v3569
      %v3595 = vpop.f32.mrf.mxu0
      %v3596 = vadd.f32 0.0, %v3595
      %v3597 = vpop.f32.mrf.mxu0
      %v3598 = vadd.f32 0.0, %v3597
      %3599 = vmatmul.bf16.gmra.mxu0 %v3572
      %v3600 = vpop.f32.mrf.mxu0
      %v3601 = vadd.f32 0.0, %v3600
      %v3602 = vpop.f32.mrf.mxu0
      %v3603 = vadd.f32 0.0, %v3602
      %3604 = vmatmul.bf16.gmra.mxu0 %v3575
      %v3605 = vpop.f32.mrf.mxu0
      %v3606 = vadd.f32 0.0, %v3605
      %v3607 = vpop.f32.mrf.mxu0
      %v3608 = vadd.f32 0.0, %v3607
      %3609 = vmatmul.bf16.gmra.mxu0 %v3578
      %v3610 = vpop.f32.mrf.mxu0
      %v3611 = vadd.f32 0.0, %v3610
      %v3612 = vpop.f32.mrf.mxu0
      %v3613 = vadd.f32 0.0, %v3612
      %3614 = vmatmul.bf16.gmra.mxu0 %v3581
      %v3615 = vpop.f32.mrf.mxu0
      %v3616 = vadd.f32 0.0, %v3615
      %v3617 = vpop.f32.mrf.mxu0
      %v3618 = vadd.f32 0.0, %v3617
      %3619 = vmatmul.bf16.gmra.mxu0 %v3584
      %v3620 = vpop.f32.mrf.mxu0
      %v3621 = vadd.f32 0.0, %v3620
      %v3622 = vpop.f32.mrf.mxu0
      %v3623 = vadd.f32 0.0, %v3622
      %3624 = vdwg.mxu0
      %v3625 = vadd.f32 %v3506, %v3596
      %v3626 = vadd.f32 %v3507, %v3598
      %v3627 = vadd.f32 %v3508, %v3601
      %v3628 = vadd.f32 %v3509, %v3603
      %v3629 = vadd.f32 %v3510, %v3606
      %v3630 = vadd.f32 %v3511, %v3608
      %v3631 = vadd.f32 %v3512, %v3611
      %v3632 = vadd.f32 %v3513, %v3613
      %v3633 = vadd.f32 %v3514, %v3616
      %v3634 = vadd.f32 %v3515, %v3618
      %v3635 = vadd.f32 %v3516, %v3621
      %v3636 = vadd.f32 %v3517, %v3623
      %v3637 = vld [vmem:[#allocation3 + $0x15] sm:$0xff]
      %v3638 = vld [vmem:[#allocation3 + $0x1d] sm:$0xff]
      %v3639 = vld [vmem:[#allocation3 + $0x25] sm:$0xff]
      %v3640 = vld [vmem:[#allocation3 + $0x2d] sm:$0xff]
      %v3641 = vld [vmem:[#allocation3 + $0x35] sm:$0xff]
      %v3642 = vld [vmem:[#allocation3 + $0x3d] sm:$0xff]
      %v3643 = vld [vmem:[#allocation3 + $0x45] sm:$0xff]
      %v3644 = vld [vmem:[#allocation3 + $0x4d] sm:$0xff]
      %v3645 = vld [vmem:[#allocation3 + $0x55] sm:$0xff]
      %v3646 = vld [vmem:[#allocation3 + $0x5d] sm:$0xff]
      %v3647 = vld [vmem:[#allocation3 + $0x65] sm:$0xff]
      %v3648 = vld [vmem:[#allocation3 + $0x6d] sm:$0xff]
      %v3649 = vpack.c.bf16 %v3638, %v3637
      %v3650 = vpack.c.bf16 %v3640, %v3639
      %v3651 = vpack.c.bf16 %v3642, %v3641
      %v3652 = vpack.c.bf16 %v3644, %v3643
      %v3653 = vpack.c.bf16 %v3646, %v3645
      %v3654 = vpack.c.bf16 %v3648, %v3647
      %v3655 = vld [vmem:[%s5 + $0xe0] sm:$0xf]
      %v3656 = vld [vmem:[%s5 + $0xe4] sm:$0xf]
      %v3657 = vld [vmem:[%s5 + $0xe8] sm:$0xf]
      %v3658 = vld [vmem:[%s5 + $0xec] sm:$0xf]
      %v3659 = vld [vmem:[%s5 + $0xf0] sm:$0xf]
      %v3660 = vld [vmem:[%s5 + $0xf4] sm:$0xf]
      %v3661 = vld [vmem:[%s5 + $0xf8] sm:$0xf]
      %v3662 = vld [vmem:[%s5 + $0xfc] sm:$0xf]
      %v3671 = vunpack.c.l.b16 %v3655
      %v3672 = vunpack.c.l.b16 %v3656
      %v3673 = vunpack.c.l.b16 %v3657
      %v3674 = vunpack.c.l.b16 %v3658
      %v3675 = vunpack.c.l.b16 %v3659
      %v3676 = vunpack.c.l.b16 %v3660
      %v3677 = vunpack.c.l.b16 %v3661
      %v3678 = vunpack.c.l.b16 %v3662
      %v3679 = vpack.c.b16 %v3672, %v3671
      %v3680 = vpack.c.b16 %v3674, %v3673
      %v3681 = vpack.c.b16 %v3676, %v3675
      %v3682 = vpack.c.b16 %v3678, %v3677
      %v3688 = vsel %vm2783, %v3649, 0
      %v3691 = vsel %vm2783, %v3650, 0
      %v3694 = vsel %vm2783, %v3651, 0
      %v3697 = vsel %vm2783, %v3652, 0
      %v3700 = vsel %vm2783, %v3653, 0
      %v3703 = vsel %vm2783, %v3654, 0
      %3705 = vmatpush.bf16.msra.mxu0 0
      %3706 = vmatpush.bf16.msra.mxu0 0
      %3707 = vmatpush.bf16.msra.mxu0 0
      %3708 = vmatpush.bf16.msra.mxu0 0
      %3709 = vmatpush.bf16.msra.mxu0 %v3682
      %3710 = vmatpush.bf16.msra.mxu0 %v3681
      %3711 = vmatpush.bf16.msra.mxu0 %v3680
      %3712 = vmatpush.bf16.msra.mxu0 %v3679
      %3713 = vmatmul.bf16.gmra.mxu0 %v3688
      %v3714 = vpop.f32.mrf.mxu0
      %v3715 = vadd.f32 0.0, %v3714
      %v3716 = vpop.f32.mrf.mxu0
      %v3717 = vadd.f32 0.0, %v3716
      %3718 = vmatmul.bf16.gmra.mxu0 %v3691
      %v3719 = vpop.f32.mrf.mxu0
      %v3720 = vadd.f32 0.0, %v3719
      %v3721 = vpop.f32.mrf.mxu0
      %v3722 = vadd.f32 0.0, %v3721
      %3723 = vmatmul.bf16.gmra.mxu0 %v3694
      %v3724 = vpop.f32.mrf.mxu0
      %v3725 = vadd.f32 0.0, %v3724
      %v3726 = vpop.f32.mrf.mxu0
      %v3727 = vadd.f32 0.0, %v3726
      %3728 = vmatmul.bf16.gmra.mxu0 %v3697
      %v3729 = vpop.f32.mrf.mxu0
      %v3730 = vadd.f32 0.0, %v3729
      %v3731 = vpop.f32.mrf.mxu0
      %v3732 = vadd.f32 0.0, %v3731
      %3733 = vmatmul.bf16.gmra.mxu0 %v3700
      %v3734 = vpop.f32.mrf.mxu0
      %v3735 = vadd.f32 0.0, %v3734
      %v3736 = vpop.f32.mrf.mxu0
      %v3737 = vadd.f32 0.0, %v3736
      %3738 = vmatmul.bf16.gmra.mxu0 %v3703
      %v3739 = vpop.f32.mrf.mxu0
      %v3740 = vadd.f32 0.0, %v3739
      %v3741 = vpop.f32.mrf.mxu0
      %v3742 = vadd.f32 0.0, %v3741
      %3743 = vdwg.mxu0
      %v3744 = vadd.f32 %v3625, %v3715
      %v3745 = vadd.f32 %v3626, %v3717
      %v3746 = vadd.f32 %v3627, %v3720
      %v3747 = vadd.f32 %v3628, %v3722
      %v3748 = vadd.f32 %v3629, %v3725
      %v3749 = vadd.f32 %v3630, %v3727
      %v3750 = vadd.f32 %v3631, %v3730
      %v3751 = vadd.f32 %v3632, %v3732
      %v3752 = vadd.f32 %v3633, %v3735
      %v3753 = vadd.f32 %v3634, %v3737
      %v3754 = vadd.f32 %v3635, %v3740
      %v3755 = vadd.f32 %v3636, %v3742
      %v3756 = vld [vmem:[#allocation3 + $0x16] sm:$0xff]
      %v3757 = vld [vmem:[#allocation3 + $0x1e] sm:$0xff]
      %v3758 = vld [vmem:[#allocation3 + $0x26] sm:$0xff]
      %v3759 = vld [vmem:[#allocation3 + $0x2e] sm:$0xff]
      %v3760 = vld [vmem:[#allocation3 + $0x36] sm:$0xff]
      %v3761 = vld [vmem:[#allocation3 + $0x3e] sm:$0xff]
      %v3762 = vld [vmem:[#allocation3 + $0x46] sm:$0xff]
      %v3763 = vld [vmem:[#allocation3 + $0x4e] sm:$0xff]
      %v3764 = vld [vmem:[#allocation3 + $0x56] sm:$0xff]
      %v3765 = vld [vmem:[#allocation3 + $0x5e] sm:$0xff]
      %v3766 = vld [vmem:[#allocation3 + $0x66] sm:$0xff]
      %v3767 = vld [vmem:[#allocation3 + $0x6e] sm:$0xff]
      %v3768 = vpack.c.bf16 %v3757, %v3756
      %v3769 = vpack.c.bf16 %v3759, %v3758
      %v3770 = vpack.c.bf16 %v3761, %v3760
      %v3771 = vpack.c.bf16 %v3763, %v3762
      %v3772 = vpack.c.bf16 %v3765, %v3764
      %v3773 = vpack.c.bf16 %v3767, %v3766
      %v3774 = vld [vmem:[%s5 + $0x100] sm:$0xf]
      %v3775 = vld [vmem:[%s5 + $0x104] sm:$0xf]
      %v3776 = vld [vmem:[%s5 + $0x108] sm:$0xf]
      %v3777 = vld [vmem:[%s5 + $0x10c] sm:$0xf]
      %v3778 = vld [vmem:[%s5 + $0x110] sm:$0xf]
      %v3779 = vld [vmem:[%s5 + $0x114] sm:$0xf]
      %v3780 = vld [vmem:[%s5 + $0x118] sm:$0xf]
      %v3781 = vld [vmem:[%s5 + $0x11c] sm:$0xf]
      %v3790 = vunpack.c.l.b16 %v3774
      %v3791 = vunpack.c.l.b16 %v3775
      %v3792 = vunpack.c.l.b16 %v3776
      %v3793 = vunpack.c.l.b16 %v3777
      %v3794 = vunpack.c.l.b16 %v3778
      %v3795 = vunpack.c.l.b16 %v3779
      %v3796 = vunpack.c.l.b16 %v3780
      %v3797 = vunpack.c.l.b16 %v3781
      %v3798 = vpack.c.b16 %v3791, %v3790
      %v3799 = vpack.c.b16 %v3793, %v3792
      %v3800 = vpack.c.b16 %v3795, %v3794
      %v3801 = vpack.c.b16 %v3797, %v3796
      %v3807 = vsel %vm2783, %v3768, 0
      %v3810 = vsel %vm2783, %v3769, 0
      %v3813 = vsel %vm2783, %v3770, 0
      %v3816 = vsel %vm2783, %v3771, 0
      %v3819 = vsel %vm2783, %v3772, 0
      %v3822 = vsel %vm2783, %v3773, 0
      %3824 = vmatpush.bf16.msra.mxu0 0
      %3825 = vmatpush.bf16.msra.mxu0 0
      %3826 = vmatpush.bf16.msra.mxu0 0
      %3827 = vmatpush.bf16.msra.mxu0 0
      %3828 = vmatpush.bf16.msra.mxu0 %v3801
      %3829 = vmatpush.bf16.msra.mxu0 %v3800
      %3830 = vmatpush.bf16.msra.mxu0 %v3799
      %3831 = vmatpush.bf16.msra.mxu0 %v3798
      %3832 = vmatmul.bf16.gmra.mxu0 %v3807
      %v3833 = vpop.f32.mrf.mxu0
      %v3834 = vadd.f32 0.0, %v3833
      %v3835 = vpop.f32.mrf.mxu0
      %v3836 = vadd.f32 0.0, %v3835
      %3837 = vmatmul.bf16.gmra.mxu0 %v3810
      %v3838 = vpop.f32.mrf.mxu0
      %v3839 = vadd.f32 0.0, %v3838
      %v3840 = vpop.f32.mrf.mxu0
      %v3841 = vadd.f32 0.0, %v3840
      %3842 = vmatmul.bf16.gmra.mxu0 %v3813
      %v3843 = vpop.f32.mrf.mxu0
      %v3844 = vadd.f32 0.0, %v3843
      %v3845 = vpop.f32.mrf.mxu0
      %v3846 = vadd.f32 0.0, %v3845
      %3847 = vmatmul.bf16.gmra.mxu0 %v3816
      %v3848 = vpop.f32.mrf.mxu0
      %v3849 = vadd.f32 0.0, %v3848
      %v3850 = vpop.f32.mrf.mxu0
      %v3851 = vadd.f32 0.0, %v3850
      %3852 = vmatmul.bf16.gmra.mxu0 %v3819
      %v3853 = vpop.f32.mrf.mxu0
      %v3854 = vadd.f32 0.0, %v3853
      %v3855 = vpop.f32.mrf.mxu0
      %v3856 = vadd.f32 0.0, %v3855
      %3857 = vmatmul.bf16.gmra.mxu0 %v3822
      %v3858 = vpop.f32.mrf.mxu0
      %v3859 = vadd.f32 0.0, %v3858
      %v3860 = vpop.f32.mrf.mxu0
      %v3861 = vadd.f32 0.0, %v3860
      %3862 = vdwg.mxu0
      %v3863 = vadd.f32 %v3744, %v3834
      %v3864 = vadd.f32 %v3745, %v3836
      %v3865 = vadd.f32 %v3746, %v3839
      %v3866 = vadd.f32 %v3747, %v3841
      %v3867 = vadd.f32 %v3748, %v3844
      %v3868 = vadd.f32 %v3749, %v3846
      %v3869 = vadd.f32 %v3750, %v3849
      %v3870 = vadd.f32 %v3751, %v3851
      %v3871 = vadd.f32 %v3752, %v3854
      %v3872 = vadd.f32 %v3753, %v3856
      %v3873 = vadd.f32 %v3754, %v3859
      %v3874 = vadd.f32 %v3755, %v3861
      %v3875 = vld [vmem:[%s6] sm:$0x1]
      %v3877 = vperm.slane %v3875, 0
      %v3879 = vadd.f32 %v3863, %v3877
      %v3880 = vadd.f32 %v3864, %v3877
      %v3881 = vadd.f32 %v3865, %v3877
      %v3882 = vadd.f32 %v3866, %v3877
      %v3883 = vadd.f32 %v3867, %v3877
      %v3884 = vadd.f32 %v3868, %v3877
      %v3885 = vadd.f32 %v3869, %v3877
      %v3886 = vadd.f32 %v3870, %v3877
      %v3887 = vadd.f32 %v3871, %v3877
      %v3888 = vadd.f32 %v3872, %v3877
      %v3889 = vadd.f32 %v3873, %v3877
      %v3890 = vadd.f32 %v3874, %v3877
      %v3891 = vmax.f32 %v3879, 0.0
      %v3892 = vmax.f32 %v3880, 0.0
      %v3893 = vmax.f32 %v3881, 0.0
      %v3894 = vmax.f32 %v3882, 0.0
      %v3895 = vmax.f32 %v3883, 0.0
      %v3896 = vmax.f32 %v3884, 0.0
      %v3897 = vmax.f32 %v3885, 0.0
      %v3898 = vmax.f32 %v3886, 0.0
      %v3899 = vmax.f32 %v3887, 0.0
      %v3900 = vmax.f32 %v3888, 0.0
      %v3901 = vmax.f32 %v3889, 0.0
      %v3902 = vmax.f32 %v3890, 0.0
      %v3903 = vpack.c.bf16 %v3891, %v3891
      %v3904 = vpack.c.bf16 %v3892, %v3892
      %v3905 = vpack.c.bf16 %v3893, %v3893
      %v3906 = vpack.c.bf16 %v3894, %v3894
      %v3907 = vpack.c.bf16 %v3895, %v3895
      %v3908 = vpack.c.bf16 %v3896, %v3896
      %v3909 = vpack.c.bf16 %v3897, %v3897
      %v3910 = vpack.c.bf16 %v3898, %v3898
      %v3911 = vpack.c.bf16 %v3899, %v3899
      %v3912 = vpack.c.bf16 %v3900, %v3900
      %v3913 = vpack.c.bf16 %v3901, %v3901
      %v3914 = vpack.c.bf16 %v3902, %v3902
      %vm3915 = vcmask 257024
      %3916 = vst.msk [vmem:[%s278] sm:$0xf] %vm3915, %v3903
      %3917 = vst.msk [vmem:[%s278 + $0x4] sm:$0xf] %vm3915, %v3904
      %3918 = vst.msk [vmem:[%s278 + $0x8] sm:$0xf] %vm3915, %v3905
      %3919 = vst.msk [vmem:[%s278 + $0xc] sm:$0xf] %vm3915, %v3906
      %3920 = vst.msk [vmem:[%s278 + $0x10] sm:$0xf] %vm3915, %v3907
      %3921 = vst.msk [vmem:[%s278 + $0x14] sm:$0xf] %vm3915, %v3908
      %3922 = vst.msk [vmem:[%s278 + $0x18] sm:$0xf] %vm3915, %v3909
      %3923 = vst.msk [vmem:[%s278 + $0x1c] sm:$0xf] %vm3915, %v3910
      %3924 = vst.msk [vmem:[%s278 + $0x20] sm:$0xf] %vm3915, %v3911
      %3925 = vst.msk [vmem:[%s278 + $0x24] sm:$0xf] %vm3915, %v3912
      %3926 = vst.msk [vmem:[%s278 + $0x28] sm:$0xf] %vm3915, %v3913
      %3927 = vst.msk [vmem:[%s278 + $0x2c] sm:$0xf] %vm3915, %v3914
      %p3928 = scmp.lt.s32.totalorder %s18, 1
      %s3929 = scalar_select %p3928, %s18, 1
      %s3930 = smul.addr %s3929, 12
      %s3931 = smul.addr %s3930, 4
      %s3932 = scalar_lea.vmem %s7, %s3931
      // Predicated region
      $region49: #{actor_critic_forward.2} parent=47 // pred_check
        %p3933 = pneg %p188
      $region50: #{actor_critic_forward.2} parent=47 // pred_check_branch
        %3935 = sbr.rel (%p3933) target = $region52
      $region51: #{actor_critic_forward.2} parent=47 // pred_region
        _
      $region52: #{actor_critic_forward.2} parent=47 // pred_fallthru
        _
    $region48: #{actor_critic_forward.2} parent=5 // pred_fallthru
      _
    %p3936 = scmp.le.s32.totalorder 2, %s13
    // Predicated region
    $region53: #{actor_critic_forward.2} parent=5 // pred_check
      %p3937 = pneg %p3936
    $region54: #{actor_critic_forward.2} parent=5 // pred_check_branch
      %3939 = sbr.rel (%p3937) target = $region56
    $region55: #{actor_critic_forward.2} parent=5 // pred_region
      %s3940 = ssub.s32 %s13, 2
      // Predicated region
      $region57: #{actor_critic_forward.2} parent=55 // pred_check
        %p3941 = pneg %p194
      $region58: #{actor_critic_forward.2} parent=55 // pred_check_branch
        %3943 = sbr.rel (%p3941) target = $region60
      $region59: #{actor_critic_forward.2} parent=55 // pred_region
        %p3944 = scmp.lt.s32.totalorder %s19, 1
        %s3945 = scalar_select %p3944, %s19, 1
        %s3946 = smul.addr %s3945, 12
        %s3947 = smul.addr %s3946, 4
        %s3948 = scalar_lea.vmem %s7, %s3947
      $region60: #{actor_critic_forward.2} parent=55 // pred_fallthru
        _
    $region56: #{actor_critic_forward.2} parent=5 // pred_fallthru
      _
  $region6: #{actor_critic_forward.2} parent=0 // loop_footer
    %s17 = sadd.s32 1, %s13
  $region7: #{actor_critic_forward.2} parent=0 // loop_footer_branch
    %12 = sbr.rel target = $region3
  $region8: #{actor_critic_forward.2} parent=0 // loop_exit
    _

// kernel: actor_critic_forward.3
$region0: #{actor_critic_forward.3}
  #allocation0 [shape = 'u32[]', space=smem, size = 0x4, offset = 0x4, fixed_abs, tag = 'smem constant byte address 0x4 - core index']
  #allocation1 [shape = 'u32[72,128]{1,0:T(1,128)}', space=vmem, size = 0x9000, scoped, tag = 'internal scratch']
  %s0 = inlined_call_operand.vmem [shape: bf16[2,1664], index: 0, kind: input, shape index: {}]
  %s1 = inlined_call_operand.vmem [shape: bf16[1664,512], index: 1, kind: input, shape index: {}]
  %s2 = inlined_call_operand.vmem [shape: f32[1,512], index: 2, kind: input, shape index: {}]
  %s3 = inlined_call_operand.vmem [shape: bf16[512,128], index: 3, kind: input, shape index: {}]
  %s4 = inlined_call_operand.vmem [shape: f32[1,128], index: 4, kind: input, shape index: {}]
  %s5 = inlined_call_operand.vmem [shape: f32[1,128], index: 5, kind: input, shape index: {}]
  %s6 = inlined_call_operand.hbm [shape: f32[2,128], index: 6, kind: output, shape index: {0}]
  %s7 = inlined_call_operand.vmem [shape: f32[2,128], index: 7, kind: output, shape index: {1}]
  %8 = xla_tuple %s6, %s7
  %s9 = sld [smem:[#allocation0]]
  $region42: #{actor_critic_forward.3} parent=0
    _
  %s11 = ssub.s32 1, %s9
  %s12 = scalar_select 0, %s11, %s9
  $region1: #{actor_critic_forward.3} parent=0
    #allocation2 [shape = 'u8[1024]{0}', space=vmem, size = 0x400, scoped, tag = 'output window, operand 0, single buffered']
    #allocation3 [shape = 's32[1]{0}', space=sflag, size = 0x4, scoped, tag = 'scoped memory for actor_critic_forward.3']
    %13 = vsyncpa [#allocation3], 0
    // Predicated region
    $region2: #{actor_critic_forward.3} parent=1 // pred_check
      _
    $region3: #{actor_critic_forward.3} parent=1 // pred_check_branch
      %15 = sbr.rel (0) target = $region5
    $region4: #{actor_critic_forward.3} parent=1 // pred_region
      _
    $region5: #{actor_critic_forward.3} parent=1 // pred_fallthru
      _
    // Predicated region
    $region6: #{actor_critic_forward.3} parent=1 // pred_check
      _
    $region7: #{actor_critic_forward.3} parent=1 // pred_check_branch
      %17 = sbr.rel (0) target = $region9
    $region8: #{actor_critic_forward.3} parent=1 // pred_region
      _
    $region9: #{actor_critic_forward.3} parent=1 // pred_fallthru
      _
    // Predicated region
    $region10: #{actor_critic_forward.3} parent=1 // pred_check
      _
    $region11: #{actor_critic_forward.3} parent=1 // pred_check_branch
      %19 = sbr.rel (0) target = $region13
    $region12: #{actor_critic_forward.3} parent=1 // pred_region
      _
    $region13: #{actor_critic_forward.3} parent=1 // pred_fallthru
      _
    // Predicated region
    $region14: #{actor_critic_forward.3} parent=1 // pred_check
      _
    $region15: #{actor_critic_forward.3} parent=1 // pred_check_branch
      %21 = sbr.rel (0) target = $region17
    $region16: #{actor_critic_forward.3} parent=1 // pred_region
      _
    $region17: #{actor_critic_forward.3} parent=1 // pred_fallthru
      _
    // Predicated region
    $region18: #{actor_critic_forward.3} parent=1 // pred_check
      _
    $region19: #{actor_critic_forward.3} parent=1 // pred_check_branch
      %23 = sbr.rel (0) target = $region21
    $region20: #{actor_critic_forward.3} parent=1 // pred_region
      _
    $region21: #{actor_critic_forward.3} parent=1 // pred_fallthru
      _
    // Predicated region
    $region22: #{actor_critic_forward.3} parent=1 // pred_check
      _
    $region23: #{actor_critic_forward.3} parent=1 // pred_check_branch
      %25 = sbr.rel (0) target = $region25
    $region24: #{actor_critic_forward.3} parent=1 // pred_region
      _
    $region25: #{actor_critic_forward.3} parent=1 // pred_fallthru
      _
    %v26 = vld [vmem:[%s0] sm:$0xff]
    %v27 = vld [vmem:[%s0 + $0x8] sm:$0x1f]
    %v28 = vld [vmem:[%s1] sm:$0xff]
    %v29 = vld [vmem:[%s1 + $0x8] sm:$0xff]
    %v30 = vld [vmem:[%s1 + $0x10] sm:$0xff]
    %v31 = vld [vmem:[%s1 + $0x18] sm:$0xff]
    %v32 = vld [vmem:[%s1 + $0x20] sm:$0xff]
    %v33 = vld [vmem:[%s1 + $0x28] sm:$0xff]
    %v34 = vld [vmem:[%s1 + $0x30] sm:$0xff]
    %v35 = vld [vmem:[%s1 + $0x38] sm:$0xff]
    %v36 = vld [vmem:[%s1 + $0x40] sm:$0xff]
    %v37 = vld [vmem:[%s1 + $0x48] sm:$0xff]
    %v38 = vld [vmem:[%s1 + $0x50] sm:$0xff]
    %v39 = vld [vmem:[%s1 + $0x58] sm:$0xff]
    %v40 = vld [vmem:[%s1 + $0x60] sm:$0xff]
    %v41 = vld [vmem:[%s1 + $0x68] sm:$0xff]
    %v42 = vld [vmem:[%s1 + $0x70] sm:$0xff]
    %v43 = vld [vmem:[%s1 + $0x78] sm:$0xff]
    %v44 = vld [vmem:[%s1 + $0x80] sm:$0xff]
    %v45 = vld [vmem:[%s1 + $0x88] sm:$0xff]
    %v46 = vld [vmem:[%s1 + $0x90] sm:$0xff]
    %v47 = vld [vmem:[%s1 + $0x98] sm:$0xff]
    %v48 = vld [vmem:[%s1 + $0xa0] sm:$0xff]
    %v49 = vld [vmem:[%s1 + $0xa8] sm:$0xff]
    %v50 = vld [vmem:[%s1 + $0xb0] sm:$0xff]
    %v51 = vld [vmem:[%s1 + $0xb8] sm:$0xff]
    %v52 = vld [vmem:[%s1 + $0xc0] sm:$0xff]
    %v53 = vld [vmem:[%s1 + $0xc8] sm:$0xff]
    %v54 = vld [vmem:[%s1 + $0xd0] sm:$0xff]
    %v55 = vld [vmem:[%s1 + $0xd8] sm:$0xff]
    %v56 = vld [vmem:[%s1 + $0xe0] sm:$0xff]
    %v57 = vld [vmem:[%s1 + $0xe8] sm:$0xff]
    %v58 = vld [vmem:[%s1 + $0xf0] sm:$0xff]
    %v59 = vld [vmem:[%s1 + $0xf8] sm:$0xff]
    %v60 = vld [vmem:[%s1 + $0x100] sm:$0xff]
    %v61 = vld [vmem:[%s1 + $0x108] sm:$0xff]
    %v62 = vld [vmem:[%s1 + $0x110] sm:$0xff]
    %v63 = vld [vmem:[%s1 + $0x118] sm:$0xff]
    %v64 = vld [vmem:[%s1 + $0x120] sm:$0xff]
    %v65 = vld [vmem:[%s1 + $0x128] sm:$0xff]
    %v66 = vld [vmem:[%s1 + $0x130] sm:$0xff]
    %v67 = vld [vmem:[%s1 + $0x138] sm:$0xff]
    %v68 = vld [vmem:[%s1 + $0x140] sm:$0xff]
    %v69 = vld [vmem:[%s1 + $0x148] sm:$0xff]
    %v70 = vld [vmem:[%s1 + $0x150] sm:$0xff]
    %v71 = vld [vmem:[%s1 + $0x158] sm:$0xff]
    %v72 = vld [vmem:[%s1 + $0x160] sm:$0xff]
    %v73 = vld [vmem:[%s1 + $0x168] sm:$0xff]
    %v74 = vld [vmem:[%s1 + $0x170] sm:$0xff]
    %v75 = vld [vmem:[%s1 + $0x178] sm:$0xff]
    %v76 = vld [vmem:[%s1 + $0x180] sm:$0xff]
    %v77 = vld [vmem:[%s1 + $0x188] sm:$0xff]
    %v78 = vld [vmem:[%s1 + $0x190] sm:$0xff]
    %v79 = vld [vmem:[%s1 + $0x198] sm:$0xff]
    %v80 = vld [vmem:[%s1 + $0x1a0] sm:$0xff]
    %v81 = vld [vmem:[%s1 + $0x1a8] sm:$0xff]
    %v82 = vld [vmem:[%s1 + $0x1b0] sm:$0xff]
    %v83 = vld [vmem:[%s1 + $0x1b8] sm:$0xff]
    %v84 = vld [vmem:[%s1 + $0x1c0] sm:$0xff]
    %v85 = vld [vmem:[%s1 + $0x1c8] sm:$0xff]
    %v86 = vld [vmem:[%s1 + $0x1d0] sm:$0xff]
    %v87 = vld [vmem:[%s1 + $0x1d8] sm:$0xff]
    %v88 = vld [vmem:[%s1 + $0x1e0] sm:$0xff]
    %v89 = vld [vmem:[%s1 + $0x1e8] sm:$0xff]
    %v90 = vld [vmem:[%s1 + $0x1f0] sm:$0xff]
    %v91 = vld [vmem:[%s1 + $0x1f8] sm:$0xff]
    %v92 = vld [vmem:[%s1 + $0x200] sm:$0xff]
    %v93 = vld [vmem:[%s1 + $0x208] sm:$0xff]
    %v94 = vld [vmem:[%s1 + $0x210] sm:$0xff]
    %v95 = vld [vmem:[%s1 + $0x218] sm:$0xff]
    %v96 = vld [vmem:[%s1 + $0x220] sm:$0xff]
    %v97 = vld [vmem:[%s1 + $0x228] sm:$0xff]
    %v98 = vld [vmem:[%s1 + $0x230] sm:$0xff]
    %v99 = vld [vmem:[%s1 + $0x238] sm:$0xff]
    %v100 = vld [vmem:[%s1 + $0x240] sm:$0xff]
    %v101 = vld [vmem:[%s1 + $0x248] sm:$0xff]
    %v102 = vld [vmem:[%s1 + $0x250] sm:$0xff]
    %v103 = vld [vmem:[%s1 + $0x258] sm:$0xff]
    %v104 = vld [vmem:[%s1 + $0x260] sm:$0xff]
    %v105 = vld [vmem:[%s1 + $0x268] sm:$0xff]
    %v106 = vld [vmem:[%s1 + $0x270] sm:$0xff]
    %v107 = vld [vmem:[%s1 + $0x278] sm:$0xff]
    %v108 = vld [vmem:[%s1 + $0x280] sm:$0xff]
    %v109 = vld [vmem:[%s1 + $0x288] sm:$0xff]
    %v110 = vld [vmem:[%s1 + $0x290] sm:$0xff]
    %v111 = vld [vmem:[%s1 + $0x298] sm:$0xff]
    %v112 = vld [vmem:[%s1 + $0x2a0] sm:$0xff]
    %v113 = vld [vmem:[%s1 + $0x2a8] sm:$0xff]
    %v114 = vld [vmem:[%s1 + $0x2b0] sm:$0xff]
    %v115 = vld [vmem:[%s1 + $0x2b8] sm:$0xff]
    %v116 = vld [vmem:[%s1 + $0x2c0] sm:$0xff]
    %v117 = vld [vmem:[%s1 + $0x2c8] sm:$0xff]
    %v118 = vld [vmem:[%s1 + $0x2d0] sm:$0xff]
    %v119 = vld [vmem:[%s1 + $0x2d8] sm:$0xff]
    %v120 = vld [vmem:[%s1 + $0x2e0] sm:$0xff]
    %v121 = vld [vmem:[%s1 + $0x2e8] sm:$0xff]
    %v122 = vld [vmem:[%s1 + $0x2f0] sm:$0xff]
    %v123 = vld [vmem:[%s1 + $0x2f8] sm:$0xff]
    %v124 = vld [vmem:[%s1 + $0x300] sm:$0xff]
    %v125 = vld [vmem:[%s1 + $0x308] sm:$0xff]
    %v126 = vld [vmem:[%s1 + $0x310] sm:$0xff]
    %v127 = vld [vmem:[%s1 + $0x318] sm:$0xff]
    %v128 = vld [vmem:[%s1 + $0x320] sm:$0xff]
    %v129 = vld [vmem:[%s1 + $0x328] sm:$0xff]
    %v130 = vld [vmem:[%s1 + $0x330] sm:$0xff]
    %v131 = vld [vmem:[%s1 + $0x338] sm:$0xff]
    %v132 = vld [vmem:[%s1 + $0x340] sm:$0xff]
    %v133 = vld [vmem:[%s1 + $0x348] sm:$0xff]
    %v134 = vld [vmem:[%s1 + $0x350] sm:$0xff]
    %v135 = vld [vmem:[%s1 + $0x358] sm:$0xff]
    %v136 = vld [vmem:[%s1 + $0x360] sm:$0xff]
    %v137 = vld [vmem:[%s1 + $0x368] sm:$0xff]
    %v138 = vld [vmem:[%s1 + $0x370] sm:$0xff]
    %v139 = vld [vmem:[%s1 + $0x378] sm:$0xff]
    %v140 = vld [vmem:[%s1 + $0x380] sm:$0xff]
    %v141 = vld [vmem:[%s1 + $0x388] sm:$0xff]
    %v142 = vld [vmem:[%s1 + $0x390] sm:$0xff]
    %v143 = vld [vmem:[%s1 + $0x398] sm:$0xff]
    %v144 = vld [vmem:[%s1 + $0x3a0] sm:$0xff]
    %v145 = vld [vmem:[%s1 + $0x3a8] sm:$0xff]
    %v146 = vld [vmem:[%s1 + $0x3b0] sm:$0xff]
    %v147 = vld [vmem:[%s1 + $0x3b8] sm:$0xff]
    %v148 = vld [vmem:[%s1 + $0x3c0] sm:$0xff]
    %v149 = vld [vmem:[%s1 + $0x3c8] sm:$0xff]
    %v150 = vld [vmem:[%s1 + $0x3d0] sm:$0xff]
    %v151 = vld [vmem:[%s1 + $0x3d8] sm:$0xff]
    %v152 = vld [vmem:[%s1 + $0x3e0] sm:$0xff]
    %v153 = vld [vmem:[%s1 + $0x3e8] sm:$0xff]
    %v154 = vld [vmem:[%s1 + $0x3f0] sm:$0xff]
    %v155 = vld [vmem:[%s1 + $0x3f8] sm:$0xff]
    %v156 = vld [vmem:[%s1 + $0x400] sm:$0xff]
    %v157 = vld [vmem:[%s1 + $0x408] sm:$0xff]
    %v158 = vld [vmem:[%s1 + $0x410] sm:$0xff]
    %v159 = vld [vmem:[%s1 + $0x418] sm:$0xff]
    %v160 = vld [vmem:[%s1 + $0x420] sm:$0xff]
    %v161 = vld [vmem:[%s1 + $0x428] sm:$0xff]
    %v162 = vld [vmem:[%s1 + $0x430] sm:$0xff]
    %v163 = vld [vmem:[%s1 + $0x438] sm:$0xff]
    %v164 = vld [vmem:[%s1 + $0x440] sm:$0xff]
    %v165 = vld [vmem:[%s1 + $0x448] sm:$0xff]
    %v166 = vld [vmem:[%s1 + $0x450] sm:$0xff]
    %v167 = vld [vmem:[%s1 + $0x458] sm:$0xff]
    %v168 = vld [vmem:[%s1 + $0x460] sm:$0xff]
    %v169 = vld [vmem:[%s1 + $0x468] sm:$0xff]
    %v170 = vld [vmem:[%s1 + $0x470] sm:$0xff]
    %v171 = vld [vmem:[%s1 + $0x478] sm:$0xff]
    %v172 = vld [vmem:[%s1 + $0x480] sm:$0xff]
    %v173 = vld [vmem:[%s1 + $0x488] sm:$0xff]
    %v174 = vld [vmem:[%s1 + $0x490] sm:$0xff]
    %v175 = vld [vmem:[%s1 + $0x498] sm:$0xff]
    %v176 = vld [vmem:[%s1 + $0x4a0] sm:$0xff]
    %v177 = vld [vmem:[%s1 + $0x4a8] sm:$0xff]
    %v178 = vld [vmem:[%s1 + $0x4b0] sm:$0xff]
    %v179 = vld [vmem:[%s1 + $0x4b8] sm:$0xff]
    %v180 = vld [vmem:[%s1 + $0x4c0] sm:$0xff]
    %v181 = vld [vmem:[%s1 + $0x4c8] sm:$0xff]
    %v182 = vld [vmem:[%s1 + $0x4d0] sm:$0xff]
    %v183 = vld [vmem:[%s1 + $0x4d8] sm:$0xff]
    %v184 = vld [vmem:[%s1 + $0x4e0] sm:$0xff]
    %v185 = vld [vmem:[%s1 + $0x4e8] sm:$0xff]
    %v186 = vld [vmem:[%s1 + $0x4f0] sm:$0xff]
    %v187 = vld [vmem:[%s1 + $0x4f8] sm:$0xff]
    %v188 = vld [vmem:[%s1 + $0x500] sm:$0xff]
    %v189 = vld [vmem:[%s1 + $0x508] sm:$0xff]
    %v190 = vld [vmem:[%s1 + $0x510] sm:$0xff]
    %v191 = vld [vmem:[%s1 + $0x518] sm:$0xff]
    %v192 = vld [vmem:[%s1 + $0x520] sm:$0xff]
    %v193 = vld [vmem:[%s1 + $0x528] sm:$0xff]
    %v194 = vld [vmem:[%s1 + $0x530] sm:$0xff]
    %v195 = vld [vmem:[%s1 + $0x538] sm:$0xff]
    %v196 = vld [vmem:[%s1 + $0x540] sm:$0xff]
    %v197 = vld [vmem:[%s1 + $0x548] sm:$0xff]
    %v198 = vld [vmem:[%s1 + $0x550] sm:$0xff]
    %v199 = vld [vmem:[%s1 + $0x558] sm:$0xff]
    %v200 = vld [vmem:[%s1 + $0x560] sm:$0xff]
    %v201 = vld [vmem:[%s1 + $0x568] sm:$0xff]
    %v202 = vld [vmem:[%s1 + $0x570] sm:$0xff]
    %v203 = vld [vmem:[%s1 + $0x578] sm:$0xff]
    %v204 = vld [vmem:[%s1 + $0x580] sm:$0xff]
    %v205 = vld [vmem:[%s1 + $0x588] sm:$0xff]
    %v206 = vld [vmem:[%s1 + $0x590] sm:$0xff]
    %v207 = vld [vmem:[%s1 + $0x598] sm:$0xff]
    %v208 = vld [vmem:[%s1 + $0x5a0] sm:$0xff]
    %v209 = vld [vmem:[%s1 + $0x5a8] sm:$0xff]
    %v210 = vld [vmem:[%s1 + $0x5b0] sm:$0xff]
    %v211 = vld [vmem:[%s1 + $0x5b8] sm:$0xff]
    %v212 = vld [vmem:[%s1 + $0x5c0] sm:$0xff]
    %v213 = vld [vmem:[%s1 + $0x5c8] sm:$0xff]
    %v214 = vld [vmem:[%s1 + $0x5d0] sm:$0xff]
    %v215 = vld [vmem:[%s1 + $0x5d8] sm:$0xff]
    %v216 = vld [vmem:[%s1 + $0x5e0] sm:$0xff]
    %v217 = vld [vmem:[%s1 + $0x5e8] sm:$0xff]
    %v218 = vld [vmem:[%s1 + $0x5f0] sm:$0xff]
    %v219 = vld [vmem:[%s1 + $0x5f8] sm:$0xff]
    %v220 = vld [vmem:[%s1 + $0x600] sm:$0xff]
    %v221 = vld [vmem:[%s1 + $0x608] sm:$0xff]
    %v222 = vld [vmem:[%s1 + $0x610] sm:$0xff]
    %v223 = vld [vmem:[%s1 + $0x618] sm:$0xff]
    %v224 = vld [vmem:[%s1 + $0x620] sm:$0xff]
    %v225 = vld [vmem:[%s1 + $0x628] sm:$0xff]
    %v226 = vld [vmem:[%s1 + $0x630] sm:$0xff]
    %v227 = vld [vmem:[%s1 + $0x638] sm:$0xff]
    %v228 = vld [vmem:[%s1 + $0x640] sm:$0xff]
    %v229 = vld [vmem:[%s1 + $0x648] sm:$0xff]
    %v230 = vld [vmem:[%s1 + $0x650] sm:$0xff]
    %v231 = vld [vmem:[%s1 + $0x658] sm:$0xff]
    %v232 = vld [vmem:[%s1 + $0x660] sm:$0xff]
    %v233 = vld [vmem:[%s1 + $0x668] sm:$0xff]
    %v234 = vld [vmem:[%s1 + $0x670] sm:$0xff]
    %v235 = vld [vmem:[%s1 + $0x678] sm:$0xff]
    %v236 = vld [vmem:[%s1 + $0x680] sm:$0xff]
    %v237 = vld [vmem:[%s1 + $0x688] sm:$0xff]
    %v238 = vld [vmem:[%s1 + $0x690] sm:$0xff]
    %v239 = vld [vmem:[%s1 + $0x698] sm:$0xff]
    %v240 = vld [vmem:[%s1 + $0x6a0] sm:$0xff]
    %v241 = vld [vmem:[%s1 + $0x6a8] sm:$0xff]
    %v242 = vld [vmem:[%s1 + $0x6b0] sm:$0xff]
    %v243 = vld [vmem:[%s1 + $0x6b8] sm:$0xff]
    %v244 = vld [vmem:[%s1 + $0x6c0] sm:$0xff]
    %v245 = vld [vmem:[%s1 + $0x6c8] sm:$0xff]
    %v246 = vld [vmem:[%s1 + $0x6d0] sm:$0xff]
    %v247 = vld [vmem:[%s1 + $0x6d8] sm:$0xff]
    %v248 = vld [vmem:[%s1 + $0x6e0] sm:$0xff]
    %v249 = vld [vmem:[%s1 + $0x6e8] sm:$0xff]
    %v250 = vld [vmem:[%s1 + $0x6f0] sm:$0xff]
    %v251 = vld [vmem:[%s1 + $0x6f8] sm:$0xff]
    %v252 = vld [vmem:[%s1 + $0x700] sm:$0xff]
    %v253 = vld [vmem:[%s1 + $0x708] sm:$0xff]
    %v254 = vld [vmem:[%s1 + $0x710] sm:$0xff]
    %v255 = vld [vmem:[%s1 + $0x718] sm:$0xff]
    %v256 = vld [vmem:[%s1 + $0x720] sm:$0xff]
    %v257 = vld [vmem:[%s1 + $0x728] sm:$0xff]
    %v258 = vld [vmem:[%s1 + $0x730] sm:$0xff]
    %v259 = vld [vmem:[%s1 + $0x738] sm:$0xff]
    %v260 = vld [vmem:[%s1 + $0x740] sm:$0xff]
    %v261 = vld [vmem:[%s1 + $0x748] sm:$0xff]
    %v262 = vld [vmem:[%s1 + $0x750] sm:$0xff]
    %v263 = vld [vmem:[%s1 + $0x758] sm:$0xff]
    %v264 = vld [vmem:[%s1 + $0x760] sm:$0xff]
    %v265 = vld [vmem:[%s1 + $0x768] sm:$0xff]
    %v266 = vld [vmem:[%s1 + $0x770] sm:$0xff]
    %v267 = vld [vmem:[%s1 + $0x778] sm:$0xff]
    %v268 = vld [vmem:[%s1 + $0x780] sm:$0xff]
    %v269 = vld [vmem:[%s1 + $0x788] sm:$0xff]
    %v270 = vld [vmem:[%s1 + $0x790] sm:$0xff]
    %v271 = vld [vmem:[%s1 + $0x798] sm:$0xff]
    %v272 = vld [vmem:[%s1 + $0x7a0] sm:$0xff]
    %v273 = vld [vmem:[%s1 + $0x7a8] sm:$0xff]
    %v274 = vld [vmem:[%s1 + $0x7b0] sm:$0xff]
    %v275 = vld [vmem:[%s1 + $0x7b8] sm:$0xff]
    %v276 = vld [vmem:[%s1 + $0x7c0] sm:$0xff]
    %v277 = vld [vmem:[%s1 + $0x7c8] sm:$0xff]
    %v278 = vld [vmem:[%s1 + $0x7d0] sm:$0xff]
    %v279 = vld [vmem:[%s1 + $0x7d8] sm:$0xff]
    %v280 = vld [vmem:[%s1 + $0x7e0] sm:$0xff]
    %v281 = vld [vmem:[%s1 + $0x7e8] sm:$0xff]
    %v282 = vld [vmem:[%s1 + $0x7f0] sm:$0xff]
    %v283 = vld [vmem:[%s1 + $0x7f8] sm:$0xff]
    %v284 = vld [vmem:[%s1 + $0x800] sm:$0xff]
    %v285 = vld [vmem:[%s1 + $0x808] sm:$0xff]
    %v286 = vld [vmem:[%s1 + $0x810] sm:$0xff]
    %v287 = vld [vmem:[%s1 + $0x818] sm:$0xff]
    %v288 = vld [vmem:[%s1 + $0x820] sm:$0xff]
    %v289 = vld [vmem:[%s1 + $0x828] sm:$0xff]
    %v290 = vld [vmem:[%s1 + $0x830] sm:$0xff]
    %v291 = vld [vmem:[%s1 + $0x838] sm:$0xff]
    %v292 = vld [vmem:[%s1 + $0x840] sm:$0xff]
    %v293 = vld [vmem:[%s1 + $0x848] sm:$0xff]
    %v294 = vld [vmem:[%s1 + $0x850] sm:$0xff]
    %v295 = vld [vmem:[%s1 + $0x858] sm:$0xff]
    %v296 = vld [vmem:[%s1 + $0x860] sm:$0xff]
    %v297 = vld [vmem:[%s1 + $0x868] sm:$0xff]
    %v298 = vld [vmem:[%s1 + $0x870] sm:$0xff]
    %v299 = vld [vmem:[%s1 + $0x878] sm:$0xff]
    %v300 = vld [vmem:[%s1 + $0x880] sm:$0xff]
    %v301 = vld [vmem:[%s1 + $0x888] sm:$0xff]
    %v302 = vld [vmem:[%s1 + $0x890] sm:$0xff]
    %v303 = vld [vmem:[%s1 + $0x898] sm:$0xff]
    %v304 = vld [vmem:[%s1 + $0x8a0] sm:$0xff]
    %v305 = vld [vmem:[%s1 + $0x8a8] sm:$0xff]
    %v306 = vld [vmem:[%s1 + $0x8b0] sm:$0xff]
    %v307 = vld [vmem:[%s1 + $0x8b8] sm:$0xff]
    %v308 = vld [vmem:[%s1 + $0x8c0] sm:$0xff]
    %v309 = vld [vmem:[%s1 + $0x8c8] sm:$0xff]
    %v310 = vld [vmem:[%s1 + $0x8d0] sm:$0xff]
    %v311 = vld [vmem:[%s1 + $0x8d8] sm:$0xff]
    %v312 = vld [vmem:[%s1 + $0x8e0] sm:$0xff]
    %v313 = vld [vmem:[%s1 + $0x8e8] sm:$0xff]
    %v314 = vld [vmem:[%s1 + $0x8f0] sm:$0xff]
    %v315 = vld [vmem:[%s1 + $0x8f8] sm:$0xff]
    %v316 = vld [vmem:[%s1 + $0x900] sm:$0xff]
    %v317 = vld [vmem:[%s1 + $0x908] sm:$0xff]
    %v318 = vld [vmem:[%s1 + $0x910] sm:$0xff]
    %v319 = vld [vmem:[%s1 + $0x918] sm:$0xff]
    %v320 = vld [vmem:[%s1 + $0x920] sm:$0xff]
    %v321 = vld [vmem:[%s1 + $0x928] sm:$0xff]
    %v322 = vld [vmem:[%s1 + $0x930] sm:$0xff]
    %v323 = vld [vmem:[%s1 + $0x938] sm:$0xff]
    %v324 = vld [vmem:[%s1 + $0x940] sm:$0xff]
    %v325 = vld [vmem:[%s1 + $0x948] sm:$0xff]
    %v326 = vld [vmem:[%s1 + $0x950] sm:$0xff]
    %v327 = vld [vmem:[%s1 + $0x958] sm:$0xff]
    %v328 = vld [vmem:[%s1 + $0x960] sm:$0xff]
    %v329 = vld [vmem:[%s1 + $0x968] sm:$0xff]
    %v330 = vld [vmem:[%s1 + $0x970] sm:$0xff]
    %v331 = vld [vmem:[%s1 + $0x978] sm:$0xff]
    %v332 = vld [vmem:[%s1 + $0x980] sm:$0xff]
    %v333 = vld [vmem:[%s1 + $0x988] sm:$0xff]
    %v334 = vld [vmem:[%s1 + $0x990] sm:$0xff]
    %v335 = vld [vmem:[%s1 + $0x998] sm:$0xff]
    %v336 = vld [vmem:[%s1 + $0x9a0] sm:$0xff]
    %v337 = vld [vmem:[%s1 + $0x9a8] sm:$0xff]
    %v338 = vld [vmem:[%s1 + $0x9b0] sm:$0xff]
    %v339 = vld [vmem:[%s1 + $0x9b8] sm:$0xff]
    %v340 = vld [vmem:[%s1 + $0x9c0] sm:$0xff]
    %v341 = vld [vmem:[%s1 + $0x9c8] sm:$0xff]
    %v342 = vld [vmem:[%s1 + $0x9d0] sm:$0xff]
    %v343 = vld [vmem:[%s1 + $0x9d8] sm:$0xff]
    %v344 = vld [vmem:[%s1 + $0x9e0] sm:$0xff]
    %v345 = vld [vmem:[%s1 + $0x9e8] sm:$0xff]
    %v346 = vld [vmem:[%s1 + $0x9f0] sm:$0xff]
    %v347 = vld [vmem:[%s1 + $0x9f8] sm:$0xff]
    %v348 = vld [vmem:[%s1 + $0xa00] sm:$0xff]
    %v349 = vld [vmem:[%s1 + $0xa08] sm:$0xff]
    %v350 = vld [vmem:[%s1 + $0xa10] sm:$0xff]
    %v351 = vld [vmem:[%s1 + $0xa18] sm:$0xff]
    %v352 = vld [vmem:[%s1 + $0xa20] sm:$0xff]
    %v353 = vld [vmem:[%s1 + $0xa28] sm:$0xff]
    %v354 = vld [vmem:[%s1 + $0xa30] sm:$0xff]
    %v355 = vld [vmem:[%s1 + $0xa38] sm:$0xff]
    %v356 = vld [vmem:[%s1 + $0xa40] sm:$0xff]
    %v357 = vld [vmem:[%s1 + $0xa48] sm:$0xff]
    %v358 = vld [vmem:[%s1 + $0xa50] sm:$0xff]
    %v359 = vld [vmem:[%s1 + $0xa58] sm:$0xff]
    %v360 = vld [vmem:[%s1 + $0xa60] sm:$0xff]
    %v361 = vld [vmem:[%s1 + $0xa68] sm:$0xff]
    %v362 = vld [vmem:[%s1 + $0xa70] sm:$0xff]
    %v363 = vld [vmem:[%s1 + $0xa78] sm:$0xff]
    %v364 = vld [vmem:[%s1 + $0xa80] sm:$0xff]
    %v365 = vld [vmem:[%s1 + $0xa88] sm:$0xff]
    %v366 = vld [vmem:[%s1 + $0xa90] sm:$0xff]
    %v367 = vld [vmem:[%s1 + $0xa98] sm:$0xff]
    %v368 = vld [vmem:[%s1 + $0xaa0] sm:$0xff]
    %v369 = vld [vmem:[%s1 + $0xaa8] sm:$0xff]
    %v370 = vld [vmem:[%s1 + $0xab0] sm:$0xff]
    %v371 = vld [vmem:[%s1 + $0xab8] sm:$0xff]
    %v372 = vld [vmem:[%s1 + $0xac0] sm:$0xff]
    %v373 = vld [vmem:[%s1 + $0xac8] sm:$0xff]
    %v374 = vld [vmem:[%s1 + $0xad0] sm:$0xff]
    %v375 = vld [vmem:[%s1 + $0xad8] sm:$0xff]
    %v376 = vld [vmem:[%s1 + $0xae0] sm:$0xff]
    %v377 = vld [vmem:[%s1 + $0xae8] sm:$0xff]
    %v378 = vld [vmem:[%s1 + $0xaf0] sm:$0xff]
    %v379 = vld [vmem:[%s1 + $0xaf8] sm:$0xff]
    %v380 = vld [vmem:[%s1 + $0xb00] sm:$0xff]
    %v381 = vld [vmem:[%s1 + $0xb08] sm:$0xff]
    %v382 = vld [vmem:[%s1 + $0xb10] sm:$0xff]
    %v383 = vld [vmem:[%s1 + $0xb18] sm:$0xff]
    %v384 = vld [vmem:[%s1 + $0xb20] sm:$0xff]
    %v385 = vld [vmem:[%s1 + $0xb28] sm:$0xff]
    %v386 = vld [vmem:[%s1 + $0xb30] sm:$0xff]
    %v387 = vld [vmem:[%s1 + $0xb38] sm:$0xff]
    %v388 = vld [vmem:[%s1 + $0xb40] sm:$0xff]
    %v389 = vld [vmem:[%s1 + $0xb48] sm:$0xff]
    %v390 = vld [vmem:[%s1 + $0xb50] sm:$0xff]
    %v391 = vld [vmem:[%s1 + $0xb58] sm:$0xff]
    %v392 = vld [vmem:[%s1 + $0xb60] sm:$0xff]
    %v393 = vld [vmem:[%s1 + $0xb68] sm:$0xff]
    %v394 = vld [vmem:[%s1 + $0xb70] sm:$0xff]
    %v395 = vld [vmem:[%s1 + $0xb78] sm:$0xff]
    %v396 = vld [vmem:[%s1 + $0xb80] sm:$0xff]
    %v397 = vld [vmem:[%s1 + $0xb88] sm:$0xff]
    %v398 = vld [vmem:[%s1 + $0xb90] sm:$0xff]
    %v399 = vld [vmem:[%s1 + $0xb98] sm:$0xff]
    %v400 = vld [vmem:[%s1 + $0xba0] sm:$0xff]
    %v401 = vld [vmem:[%s1 + $0xba8] sm:$0xff]
    %v402 = vld [vmem:[%s1 + $0xbb0] sm:$0xff]
    %v403 = vld [vmem:[%s1 + $0xbb8] sm:$0xff]
    %v404 = vld [vmem:[%s1 + $0xbc0] sm:$0xff]
    %v405 = vld [vmem:[%s1 + $0xbc8] sm:$0xff]
    %v406 = vld [vmem:[%s1 + $0xbd0] sm:$0xff]
    %v407 = vld [vmem:[%s1 + $0xbd8] sm:$0xff]
    %v408 = vld [vmem:[%s1 + $0xbe0] sm:$0xff]
    %v409 = vld [vmem:[%s1 + $0xbe8] sm:$0xff]
    %v410 = vld [vmem:[%s1 + $0xbf0] sm:$0xff]
    %v411 = vld [vmem:[%s1 + $0xbf8] sm:$0xff]
    %v412 = vld [vmem:[%s1 + $0xc00] sm:$0xff]
    %v413 = vld [vmem:[%s1 + $0xc08] sm:$0xff]
    %v414 = vld [vmem:[%s1 + $0xc10] sm:$0xff]
    %v415 = vld [vmem:[%s1 + $0xc18] sm:$0xff]
    %v416 = vld [vmem:[%s1 + $0xc20] sm:$0xff]
    %v417 = vld [vmem:[%s1 + $0xc28] sm:$0xff]
    %v418 = vld [vmem:[%s1 + $0xc30] sm:$0xff]
    %v419 = vld [vmem:[%s1 + $0xc38] sm:$0xff]
    %v420 = vld [vmem:[%s1 + $0xc40] sm:$0xff]
    %v421 = vld [vmem:[%s1 + $0xc48] sm:$0xff]
    %v422 = vld [vmem:[%s1 + $0xc50] sm:$0xff]
    %v423 = vld [vmem:[%s1 + $0xc58] sm:$0xff]
    %v424 = vld [vmem:[%s1 + $0xc60] sm:$0xff]
    %v425 = vld [vmem:[%s1 + $0xc68] sm:$0xff]
    %v426 = vld [vmem:[%s1 + $0xc70] sm:$0xff]
    %v427 = vld [vmem:[%s1 + $0xc78] sm:$0xff]
    %v428 = vld [vmem:[%s1 + $0xc80] sm:$0xff]
    %v429 = vld [vmem:[%s1 + $0xc88] sm:$0xff]
    %v430 = vld [vmem:[%s1 + $0xc90] sm:$0xff]
    %v431 = vld [vmem:[%s1 + $0xc98] sm:$0xff]
    %v432 = vld [vmem:[%s1 + $0xca0] sm:$0xff]
    %v433 = vld [vmem:[%s1 + $0xca8] sm:$0xff]
    %v434 = vld [vmem:[%s1 + $0xcb0] sm:$0xff]
    %v435 = vld [vmem:[%s1 + $0xcb8] sm:$0xff]
    %v436 = vld [vmem:[%s1 + $0xcc0] sm:$0xff]
    %v437 = vld [vmem:[%s1 + $0xcc8] sm:$0xff]
    %v438 = vld [vmem:[%s1 + $0xcd0] sm:$0xff]
    %v439 = vld [vmem:[%s1 + $0xcd8] sm:$0xff]
    %v440 = vld [vmem:[%s1 + $0xce0] sm:$0xff]
    %v441 = vld [vmem:[%s1 + $0xce8] sm:$0xff]
    %v442 = vld [vmem:[%s1 + $0xcf0] sm:$0xff]
    %v443 = vld [vmem:[%s1 + $0xcf8] sm:$0xff]
    %v444 = vld [vmem:[%s2] sm:$0xf]
    %v446 = vperm.slane %v444, 0
    %v447 = vperm.slane %v444, 1
    %v448 = vperm.slane %v444, 2
    %v449 = vperm.slane %v444, 3
    %455 = vst [vmem:[#allocation1] ss:$9 sm:$0xff] %v26
    %v456 = vld [vmem:[#allocation1] sm:$0xff]
    %v457 = vld [vmem:[#allocation1 + $0x9] sm:$0xff]
    %v458 = vld [vmem:[#allocation1 + $0x12] sm:$0xff]
    %v459 = vld [vmem:[#allocation1 + $0x1b] sm:$0xff]
    %v460 = vld [vmem:[#allocation1 + $0x24] sm:$0xff]
    %v461 = vld [vmem:[#allocation1 + $0x2d] sm:$0xff]
    %v462 = vld [vmem:[#allocation1 + $0x36] sm:$0xff]
    %v463 = vld [vmem:[#allocation1 + $0x3f] sm:$0xff]
    %465 = vst [vmem:[#allocation1] ss:$9 sm:$0xff] %v27
    %v466 = vld [vmem:[#allocation1] sm:$0xff]
    %v467 = vld [vmem:[#allocation1 + $0x9] sm:$0xff]
    %v468 = vld [vmem:[#allocation1 + $0x12] sm:$0xff]
    %v469 = vld [vmem:[#allocation1 + $0x1b] sm:$0xff]
    %v470 = vld [vmem:[#allocation1 + $0x24] sm:$0xff]
    %v900 = vunpack.c.l.b16 %v28
    %v901 = vunpack.c.h.b16 %v28
    %v902 = vunpack.c.l.b16 %v29
    %v903 = vunpack.c.h.b16 %v29
    %v904 = vunpack.c.l.b16 %v30
    %v905 = vunpack.c.h.b16 %v30
    %v906 = vunpack.c.l.b16 %v31
    %v907 = vunpack.c.h.b16 %v31
    %v908 = vunpack.c.l.b16 %v32
    %v909 = vunpack.c.h.b16 %v32
    %v910 = vunpack.c.l.b16 %v33
    %v911 = vunpack.c.h.b16 %v33
    %v912 = vunpack.c.l.b16 %v34
    %v913 = vunpack.c.h.b16 %v34
    %v914 = vunpack.c.l.b16 %v35
    %v915 = vunpack.c.h.b16 %v35
    %v916 = vunpack.c.l.b16 %v36
    %v917 = vunpack.c.h.b16 %v36
    %v918 = vunpack.c.l.b16 %v37
    %v919 = vunpack.c.h.b16 %v37
    %v920 = vunpack.c.l.b16 %v38
    %v921 = vunpack.c.h.b16 %v38
    %v922 = vunpack.c.l.b16 %v39
    %v923 = vunpack.c.h.b16 %v39
    %v924 = vunpack.c.l.b16 %v40
    %v925 = vunpack.c.h.b16 %v40
    %v926 = vunpack.c.l.b16 %v41
    %v927 = vunpack.c.h.b16 %v41
    %v928 = vunpack.c.l.b16 %v42
    %v929 = vunpack.c.h.b16 %v42
    %v930 = vunpack.c.l.b16 %v43
    %v931 = vunpack.c.h.b16 %v43
    %v932 = vunpack.c.l.b16 %v44
    %v933 = vunpack.c.h.b16 %v44
    %v934 = vunpack.c.l.b16 %v45
    %v935 = vunpack.c.h.b16 %v45
    %v936 = vunpack.c.l.b16 %v46
    %v937 = vunpack.c.h.b16 %v46
    %v938 = vunpack.c.l.b16 %v47
    %v939 = vunpack.c.h.b16 %v47
    %v940 = vunpack.c.l.b16 %v48
    %v941 = vunpack.c.h.b16 %v48
    %v942 = vunpack.c.l.b16 %v49
    %v943 = vunpack.c.h.b16 %v49
    %v944 = vunpack.c.l.b16 %v50
    %v945 = vunpack.c.h.b16 %v50
    %v946 = vunpack.c.l.b16 %v51
    %v947 = vunpack.c.h.b16 %v51
    %v948 = vunpack.c.l.b16 %v52
    %v949 = vunpack.c.h.b16 %v52
    %v950 = vunpack.c.l.b16 %v53
    %v951 = vunpack.c.h.b16 %v53
    %v952 = vunpack.c.l.b16 %v54
    %v953 = vunpack.c.h.b16 %v54
    %v954 = vunpack.c.l.b16 %v55
    %v955 = vunpack.c.h.b16 %v55
    %v956 = vunpack.c.l.b16 %v56
    %v957 = vunpack.c.h.b16 %v56
    %v958 = vunpack.c.l.b16 %v57
    %v959 = vunpack.c.h.b16 %v57
    %v960 = vunpack.c.l.b16 %v58
    %v961 = vunpack.c.h.b16 %v58
    %v962 = vunpack.c.l.b16 %v59
    %v963 = vunpack.c.h.b16 %v59
    %v964 = vunpack.c.l.b16 %v60
    %v965 = vunpack.c.h.b16 %v60
    %v966 = vunpack.c.l.b16 %v61
    %v967 = vunpack.c.h.b16 %v61
    %v968 = vunpack.c.l.b16 %v62
    %v969 = vunpack.c.h.b16 %v62
    %v970 = vunpack.c.l.b16 %v63
    %v971 = vunpack.c.h.b16 %v63
    %v972 = vunpack.c.l.b16 %v64
    %v973 = vunpack.c.h.b16 %v64
    %v974 = vunpack.c.l.b16 %v65
    %v975 = vunpack.c.h.b16 %v65
    %v976 = vunpack.c.l.b16 %v66
    %v977 = vunpack.c.h.b16 %v66
    %v978 = vunpack.c.l.b16 %v67
    %v979 = vunpack.c.h.b16 %v67
    %v980 = vunpack.c.l.b16 %v68
    %v981 = vunpack.c.h.b16 %v68
    %v982 = vunpack.c.l.b16 %v69
    %v983 = vunpack.c.h.b16 %v69
    %v984 = vunpack.c.l.b16 %v70
    %v985 = vunpack.c.h.b16 %v70
    %v986 = vunpack.c.l.b16 %v71
    %v987 = vunpack.c.h.b16 %v71
    %v988 = vunpack.c.l.b16 %v72
    %v989 = vunpack.c.h.b16 %v72
    %v990 = vunpack.c.l.b16 %v73
    %v991 = vunpack.c.h.b16 %v73
    %v992 = vunpack.c.l.b16 %v74
    %v993 = vunpack.c.h.b16 %v74
    %v994 = vunpack.c.l.b16 %v75
    %v995 = vunpack.c.h.b16 %v75
    %v996 = vunpack.c.l.b16 %v76
    %v997 = vunpack.c.h.b16 %v76
    %v998 = vunpack.c.l.b16 %v77
    %v999 = vunpack.c.h.b16 %v77
    %v1000 = vunpack.c.l.b16 %v78
    %v1001 = vunpack.c.h.b16 %v78
    %v1002 = vunpack.c.l.b16 %v79
    %v1003 = vunpack.c.h.b16 %v79
    %v1004 = vunpack.c.l.b16 %v80
    %v1005 = vunpack.c.h.b16 %v80
    %v1006 = vunpack.c.l.b16 %v81
    %v1007 = vunpack.c.h.b16 %v81
    %v1008 = vunpack.c.l.b16 %v82
    %v1009 = vunpack.c.h.b16 %v82
    %v1010 = vunpack.c.l.b16 %v83
    %v1011 = vunpack.c.h.b16 %v83
    %v1012 = vunpack.c.l.b16 %v84
    %v1013 = vunpack.c.h.b16 %v84
    %v1014 = vunpack.c.l.b16 %v85
    %v1015 = vunpack.c.h.b16 %v85
    %v1016 = vunpack.c.l.b16 %v86
    %v1017 = vunpack.c.h.b16 %v86
    %v1018 = vunpack.c.l.b16 %v87
    %v1019 = vunpack.c.h.b16 %v87
    %v1020 = vunpack.c.l.b16 %v88
    %v1021 = vunpack.c.h.b16 %v88
    %v1022 = vunpack.c.l.b16 %v89
    %v1023 = vunpack.c.h.b16 %v89
    %v1024 = vunpack.c.l.b16 %v90
    %v1025 = vunpack.c.h.b16 %v90
    %v1026 = vunpack.c.l.b16 %v91
    %v1027 = vunpack.c.h.b16 %v91
    %v1028 = vunpack.c.l.b16 %v92
    %v1029 = vunpack.c.h.b16 %v92
    %v1030 = vunpack.c.l.b16 %v93
    %v1031 = vunpack.c.h.b16 %v93
    %v1032 = vunpack.c.l.b16 %v94
    %v1033 = vunpack.c.h.b16 %v94
    %v1034 = vunpack.c.l.b16 %v95
    %v1035 = vunpack.c.h.b16 %v95
    %v1036 = vunpack.c.l.b16 %v96
    %v1037 = vunpack.c.h.b16 %v96
    %v1038 = vunpack.c.l.b16 %v97
    %v1039 = vunpack.c.h.b16 %v97
    %v1040 = vunpack.c.l.b16 %v98
    %v1041 = vunpack.c.h.b16 %v98
    %v1042 = vunpack.c.l.b16 %v99
    %v1043 = vunpack.c.h.b16 %v99
    %v1044 = vunpack.c.l.b16 %v100
    %v1045 = vunpack.c.h.b16 %v100
    %v1046 = vunpack.c.l.b16 %v101
    %v1047 = vunpack.c.h.b16 %v101
    %v1048 = vunpack.c.l.b16 %v102
    %v1049 = vunpack.c.h.b16 %v102
    %v1050 = vunpack.c.l.b16 %v103
    %v1051 = vunpack.c.h.b16 %v103
    %v1052 = vunpack.c.l.b16 %v104
    %v1053 = vunpack.c.h.b16 %v104
    %v1054 = vunpack.c.l.b16 %v105
    %v1055 = vunpack.c.h.b16 %v105
    %v1056 = vunpack.c.l.b16 %v106
    %v1057 = vunpack.c.h.b16 %v106
    %v1058 = vunpack.c.l.b16 %v107
    %v1059 = vunpack.c.h.b16 %v107
    %v1060 = vunpack.c.l.b16 %v108
    %v1061 = vunpack.c.h.b16 %v108
    %v1062 = vunpack.c.l.b16 %v109
    %v1063 = vunpack.c.h.b16 %v109
    %v1064 = vunpack.c.l.b16 %v110
    %v1065 = vunpack.c.h.b16 %v110
    %v1066 = vunpack.c.l.b16 %v111
    %v1067 = vunpack.c.h.b16 %v111
    %v1068 = vunpack.c.l.b16 %v112
    %v1069 = vunpack.c.h.b16 %v112
    %v1070 = vunpack.c.l.b16 %v113
    %v1071 = vunpack.c.h.b16 %v113
    %v1072 = vunpack.c.l.b16 %v114
    %v1073 = vunpack.c.h.b16 %v114
    %v1074 = vunpack.c.l.b16 %v115
    %v1075 = vunpack.c.h.b16 %v115
    %v1076 = vunpack.c.l.b16 %v116
    %v1077 = vunpack.c.h.b16 %v116
    %v1078 = vunpack.c.l.b16 %v117
    %v1079 = vunpack.c.h.b16 %v117
    %v1080 = vunpack.c.l.b16 %v118
    %v1081 = vunpack.c.h.b16 %v118
    %v1082 = vunpack.c.l.b16 %v119
    %v1083 = vunpack.c.h.b16 %v119
    %v1084 = vunpack.c.l.b16 %v120
    %v1085 = vunpack.c.h.b16 %v120
    %v1086 = vunpack.c.l.b16 %v121
    %v1087 = vunpack.c.h.b16 %v121
    %v1088 = vunpack.c.l.b16 %v122
    %v1089 = vunpack.c.h.b16 %v122
    %v1090 = vunpack.c.l.b16 %v123
    %v1091 = vunpack.c.h.b16 %v123
    %v1092 = vunpack.c.l.b16 %v124
    %v1093 = vunpack.c.h.b16 %v124
    %v1094 = vunpack.c.l.b16 %v125
    %v1095 = vunpack.c.h.b16 %v125
    %v1096 = vunpack.c.l.b16 %v126
    %v1097 = vunpack.c.h.b16 %v126
    %v1098 = vunpack.c.l.b16 %v127
    %v1099 = vunpack.c.h.b16 %v127
    %v1100 = vunpack.c.l.b16 %v128
    %v1101 = vunpack.c.h.b16 %v128
    %v1102 = vunpack.c.l.b16 %v129
    %v1103 = vunpack.c.h.b16 %v129
    %v1104 = vunpack.c.l.b16 %v130
    %v1105 = vunpack.c.h.b16 %v130
    %v1106 = vunpack.c.l.b16 %v131
    %v1107 = vunpack.c.h.b16 %v131
    %v1108 = vunpack.c.l.b16 %v132
    %v1109 = vunpack.c.h.b16 %v132
    %v1110 = vunpack.c.l.b16 %v133
    %v1111 = vunpack.c.h.b16 %v133
    %v1112 = vunpack.c.l.b16 %v134
    %v1113 = vunpack.c.h.b16 %v134
    %v1114 = vunpack.c.l.b16 %v135
    %v1115 = vunpack.c.h.b16 %v135
    %v1116 = vunpack.c.l.b16 %v136
    %v1117 = vunpack.c.h.b16 %v136
    %v1118 = vunpack.c.l.b16 %v137
    %v1119 = vunpack.c.h.b16 %v137
    %v1120 = vunpack.c.l.b16 %v138
    %v1121 = vunpack.c.h.b16 %v138
    %v1122 = vunpack.c.l.b16 %v139
    %v1123 = vunpack.c.h.b16 %v139
    %v1124 = vunpack.c.l.b16 %v140
    %v1125 = vunpack.c.h.b16 %v140
    %v1126 = vunpack.c.l.b16 %v141
    %v1127 = vunpack.c.h.b16 %v141
    %v1128 = vunpack.c.l.b16 %v142
    %v1129 = vunpack.c.h.b16 %v142
    %v1130 = vunpack.c.l.b16 %v143
    %v1131 = vunpack.c.h.b16 %v143
    %v1132 = vunpack.c.l.b16 %v144
    %v1133 = vunpack.c.h.b16 %v144
    %v1134 = vunpack.c.l.b16 %v145
    %v1135 = vunpack.c.h.b16 %v145
    %v1136 = vunpack.c.l.b16 %v146
    %v1137 = vunpack.c.h.b16 %v146
    %v1138 = vunpack.c.l.b16 %v147
    %v1139 = vunpack.c.h.b16 %v147
    %v1140 = vunpack.c.l.b16 %v148
    %v1141 = vunpack.c.h.b16 %v148
    %v1142 = vunpack.c.l.b16 %v149
    %v1143 = vunpack.c.h.b16 %v149
    %v1144 = vunpack.c.l.b16 %v150
    %v1145 = vunpack.c.h.b16 %v150
    %v1146 = vunpack.c.l.b16 %v151
    %v1147 = vunpack.c.h.b16 %v151
    %v1148 = vunpack.c.l.b16 %v152
    %v1149 = vunpack.c.h.b16 %v152
    %v1150 = vunpack.c.l.b16 %v153
    %v1151 = vunpack.c.h.b16 %v153
    %v1152 = vunpack.c.l.b16 %v154
    %v1153 = vunpack.c.h.b16 %v154
    %v1154 = vunpack.c.l.b16 %v155
    %v1155 = vunpack.c.h.b16 %v155
    %v1156 = vunpack.c.l.b16 %v156
    %v1157 = vunpack.c.h.b16 %v156
    %v1158 = vunpack.c.l.b16 %v157
    %v1159 = vunpack.c.h.b16 %v157
    %v1160 = vunpack.c.l.b16 %v158
    %v1161 = vunpack.c.h.b16 %v158
    %v1162 = vunpack.c.l.b16 %v159
    %v1163 = vunpack.c.h.b16 %v159
    %v1164 = vunpack.c.l.b16 %v160
    %v1165 = vunpack.c.h.b16 %v160
    %v1166 = vunpack.c.l.b16 %v161
    %v1167 = vunpack.c.h.b16 %v161
    %v1168 = vunpack.c.l.b16 %v162
    %v1169 = vunpack.c.h.b16 %v162
    %v1170 = vunpack.c.l.b16 %v163
    %v1171 = vunpack.c.h.b16 %v163
    %v1172 = vunpack.c.l.b16 %v164
    %v1173 = vunpack.c.h.b16 %v164
    %v1174 = vunpack.c.l.b16 %v165
    %v1175 = vunpack.c.h.b16 %v165
    %v1176 = vunpack.c.l.b16 %v166
    %v1177 = vunpack.c.h.b16 %v166
    %v1178 = vunpack.c.l.b16 %v167
    %v1179 = vunpack.c.h.b16 %v167
    %v1180 = vunpack.c.l.b16 %v168
    %v1181 = vunpack.c.h.b16 %v168
    %v1182 = vunpack.c.l.b16 %v169
    %v1183 = vunpack.c.h.b16 %v169
    %v1184 = vunpack.c.l.b16 %v170
    %v1185 = vunpack.c.h.b16 %v170
    %v1186 = vunpack.c.l.b16 %v171
    %v1187 = vunpack.c.h.b16 %v171
    %v1188 = vunpack.c.l.b16 %v172
    %v1189 = vunpack.c.h.b16 %v172
    %v1190 = vunpack.c.l.b16 %v173
    %v1191 = vunpack.c.h.b16 %v173
    %v1192 = vunpack.c.l.b16 %v174
    %v1193 = vunpack.c.h.b16 %v174
    %v1194 = vunpack.c.l.b16 %v175
    %v1195 = vunpack.c.h.b16 %v175
    %v1196 = vunpack.c.l.b16 %v176
    %v1197 = vunpack.c.h.b16 %v176
    %v1198 = vunpack.c.l.b16 %v177
    %v1199 = vunpack.c.h.b16 %v177
    %v1200 = vunpack.c.l.b16 %v178
    %v1201 = vunpack.c.h.b16 %v178
    %v1202 = vunpack.c.l.b16 %v179
    %v1203 = vunpack.c.h.b16 %v179
    %v1204 = vunpack.c.l.b16 %v180
    %v1205 = vunpack.c.h.b16 %v180
    %v1206 = vunpack.c.l.b16 %v181
    %v1207 = vunpack.c.h.b16 %v181
    %v1208 = vunpack.c.l.b16 %v182
    %v1209 = vunpack.c.h.b16 %v182
    %v1210 = vunpack.c.l.b16 %v183
    %v1211 = vunpack.c.h.b16 %v183
    %v1212 = vunpack.c.l.b16 %v184
    %v1213 = vunpack.c.h.b16 %v184
    %v1214 = vunpack.c.l.b16 %v185
    %v1215 = vunpack.c.h.b16 %v185
    %v1216 = vunpack.c.l.b16 %v186
    %v1217 = vunpack.c.h.b16 %v186
    %v1218 = vunpack.c.l.b16 %v187
    %v1219 = vunpack.c.h.b16 %v187
    %v1220 = vunpack.c.l.b16 %v188
    %v1221 = vunpack.c.h.b16 %v188
    %v1222 = vunpack.c.l.b16 %v189
    %v1223 = vunpack.c.h.b16 %v189
    %v1224 = vunpack.c.l.b16 %v190
    %v1225 = vunpack.c.h.b16 %v190
    %v1226 = vunpack.c.l.b16 %v191
    %v1227 = vunpack.c.h.b16 %v191
    %v1228 = vunpack.c.l.b16 %v192
    %v1229 = vunpack.c.h.b16 %v192
    %v1230 = vunpack.c.l.b16 %v193
    %v1231 = vunpack.c.h.b16 %v193
    %v1232 = vunpack.c.l.b16 %v194
    %v1233 = vunpack.c.h.b16 %v194
    %v1234 = vunpack.c.l.b16 %v195
    %v1235 = vunpack.c.h.b16 %v195
    %v1236 = vunpack.c.l.b16 %v196
    %v1237 = vunpack.c.h.b16 %v196
    %v1238 = vunpack.c.l.b16 %v197
    %v1239 = vunpack.c.h.b16 %v197
    %v1240 = vunpack.c.l.b16 %v198
    %v1241 = vunpack.c.h.b16 %v198
    %v1242 = vunpack.c.l.b16 %v199
    %v1243 = vunpack.c.h.b16 %v199
    %v1244 = vunpack.c.l.b16 %v200
    %v1245 = vunpack.c.h.b16 %v200
    %v1246 = vunpack.c.l.b16 %v201
    %v1247 = vunpack.c.h.b16 %v201
    %v1248 = vunpack.c.l.b16 %v202
    %v1249 = vunpack.c.h.b16 %v202
    %v1250 = vunpack.c.l.b16 %v203
    %v1251 = vunpack.c.h.b16 %v203
    %v1252 = vunpack.c.l.b16 %v204
    %v1253 = vunpack.c.h.b16 %v204
    %v1254 = vunpack.c.l.b16 %v205
    %v1255 = vunpack.c.h.b16 %v205
    %v1256 = vunpack.c.l.b16 %v206
    %v1257 = vunpack.c.h.b16 %v206
    %v1258 = vunpack.c.l.b16 %v207
    %v1259 = vunpack.c.h.b16 %v207
    %v1260 = vunpack.c.l.b16 %v208
    %v1261 = vunpack.c.h.b16 %v208
    %v1262 = vunpack.c.l.b16 %v209
    %v1263 = vunpack.c.h.b16 %v209
    %v1264 = vunpack.c.l.b16 %v210
    %v1265 = vunpack.c.h.b16 %v210
    %v1266 = vunpack.c.l.b16 %v211
    %v1267 = vunpack.c.h.b16 %v211
    %v1268 = vunpack.c.l.b16 %v212
    %v1269 = vunpack.c.h.b16 %v212
    %v1270 = vunpack.c.l.b16 %v213
    %v1271 = vunpack.c.h.b16 %v213
    %v1272 = vunpack.c.l.b16 %v214
    %v1273 = vunpack.c.h.b16 %v214
    %v1274 = vunpack.c.l.b16 %v215
    %v1275 = vunpack.c.h.b16 %v215
    %v1276 = vunpack.c.l.b16 %v216
    %v1277 = vunpack.c.h.b16 %v216
    %v1278 = vunpack.c.l.b16 %v217
    %v1279 = vunpack.c.h.b16 %v217
    %v1280 = vunpack.c.l.b16 %v218
    %v1281 = vunpack.c.h.b16 %v218
    %v1282 = vunpack.c.l.b16 %v219
    %v1283 = vunpack.c.h.b16 %v219
    %v1284 = vunpack.c.l.b16 %v220
    %v1285 = vunpack.c.h.b16 %v220
    %v1286 = vunpack.c.l.b16 %v221
    %v1287 = vunpack.c.h.b16 %v221
    %v1288 = vunpack.c.l.b16 %v222
    %v1289 = vunpack.c.h.b16 %v222
    %v1290 = vunpack.c.l.b16 %v223
    %v1291 = vunpack.c.h.b16 %v223
    %v1292 = vunpack.c.l.b16 %v224
    %v1293 = vunpack.c.h.b16 %v224
    %v1294 = vunpack.c.l.b16 %v225
    %v1295 = vunpack.c.h.b16 %v225
    %v1296 = vunpack.c.l.b16 %v226
    %v1297 = vunpack.c.h.b16 %v226
    %v1298 = vunpack.c.l.b16 %v227
    %v1299 = vunpack.c.h.b16 %v227
    %v1300 = vunpack.c.l.b16 %v228
    %v1301 = vunpack.c.h.b16 %v228
    %v1302 = vunpack.c.l.b16 %v229
    %v1303 = vunpack.c.h.b16 %v229
    %v1304 = vunpack.c.l.b16 %v230
    %v1305 = vunpack.c.h.b16 %v230
    %v1306 = vunpack.c.l.b16 %v231
    %v1307 = vunpack.c.h.b16 %v231
    %v1308 = vunpack.c.l.b16 %v232
    %v1309 = vunpack.c.h.b16 %v232
    %v1310 = vunpack.c.l.b16 %v233
    %v1311 = vunpack.c.h.b16 %v233
    %v1312 = vunpack.c.l.b16 %v234
    %v1313 = vunpack.c.h.b16 %v234
    %v1314 = vunpack.c.l.b16 %v235
    %v1315 = vunpack.c.h.b16 %v235
    %v1316 = vunpack.c.l.b16 %v236
    %v1317 = vunpack.c.h.b16 %v236
    %v1318 = vunpack.c.l.b16 %v237
    %v1319 = vunpack.c.h.b16 %v237
    %v1320 = vunpack.c.l.b16 %v238
    %v1321 = vunpack.c.h.b16 %v238
    %v1322 = vunpack.c.l.b16 %v239
    %v1323 = vunpack.c.h.b16 %v239
    %v1324 = vunpack.c.l.b16 %v240
    %v1325 = vunpack.c.h.b16 %v240
    %v1326 = vunpack.c.l.b16 %v241
    %v1327 = vunpack.c.h.b16 %v241
    %v1328 = vunpack.c.l.b16 %v242
    %v1329 = vunpack.c.h.b16 %v242
    %v1330 = vunpack.c.l.b16 %v243
    %v1331 = vunpack.c.h.b16 %v243
    %v1332 = vunpack.c.l.b16 %v244
    %v1333 = vunpack.c.h.b16 %v244
    %v1334 = vunpack.c.l.b16 %v245
    %v1335 = vunpack.c.h.b16 %v245
    %v1336 = vunpack.c.l.b16 %v246
    %v1337 = vunpack.c.h.b16 %v246
    %v1338 = vunpack.c.l.b16 %v247
    %v1339 = vunpack.c.h.b16 %v247
    %v1340 = vunpack.c.l.b16 %v248
    %v1341 = vunpack.c.h.b16 %v248
    %v1342 = vunpack.c.l.b16 %v249
    %v1343 = vunpack.c.h.b16 %v249
    %v1344 = vunpack.c.l.b16 %v250
    %v1345 = vunpack.c.h.b16 %v250
    %v1346 = vunpack.c.l.b16 %v251
    %v1347 = vunpack.c.h.b16 %v251
    %v1348 = vunpack.c.l.b16 %v252
    %v1349 = vunpack.c.h.b16 %v252
    %v1350 = vunpack.c.l.b16 %v253
    %v1351 = vunpack.c.h.b16 %v253
    %v1352 = vunpack.c.l.b16 %v254
    %v1353 = vunpack.c.h.b16 %v254
    %v1354 = vunpack.c.l.b16 %v255
    %v1355 = vunpack.c.h.b16 %v255
    %v1356 = vunpack.c.l.b16 %v256
    %v1357 = vunpack.c.h.b16 %v256
    %v1358 = vunpack.c.l.b16 %v257
    %v1359 = vunpack.c.h.b16 %v257
    %v1360 = vunpack.c.l.b16 %v258
    %v1361 = vunpack.c.h.b16 %v258
    %v1362 = vunpack.c.l.b16 %v259
    %v1363 = vunpack.c.h.b16 %v259
    %v1364 = vunpack.c.l.b16 %v260
    %v1365 = vunpack.c.h.b16 %v260
    %v1366 = vunpack.c.l.b16 %v261
    %v1367 = vunpack.c.h.b16 %v261
    %v1368 = vunpack.c.l.b16 %v262
    %v1369 = vunpack.c.h.b16 %v262
    %v1370 = vunpack.c.l.b16 %v263
    %v1371 = vunpack.c.h.b16 %v263
    %v1372 = vunpack.c.l.b16 %v264
    %v1373 = vunpack.c.h.b16 %v264
    %v1374 = vunpack.c.l.b16 %v265
    %v1375 = vunpack.c.h.b16 %v265
    %v1376 = vunpack.c.l.b16 %v266
    %v1377 = vunpack.c.h.b16 %v266
    %v1378 = vunpack.c.l.b16 %v267
    %v1379 = vunpack.c.h.b16 %v267
    %v1380 = vunpack.c.l.b16 %v268
    %v1381 = vunpack.c.h.b16 %v268
    %v1382 = vunpack.c.l.b16 %v269
    %v1383 = vunpack.c.h.b16 %v269
    %v1384 = vunpack.c.l.b16 %v270
    %v1385 = vunpack.c.h.b16 %v270
    %v1386 = vunpack.c.l.b16 %v271
    %v1387 = vunpack.c.h.b16 %v271
    %v1388 = vunpack.c.l.b16 %v272
    %v1389 = vunpack.c.h.b16 %v272
    %v1390 = vunpack.c.l.b16 %v273
    %v1391 = vunpack.c.h.b16 %v273
    %v1392 = vunpack.c.l.b16 %v274
    %v1393 = vunpack.c.h.b16 %v274
    %v1394 = vunpack.c.l.b16 %v275
    %v1395 = vunpack.c.h.b16 %v275
    %v1396 = vunpack.c.l.b16 %v276
    %v1397 = vunpack.c.h.b16 %v276
    %v1398 = vunpack.c.l.b16 %v277
    %v1399 = vunpack.c.h.b16 %v277
    %v1400 = vunpack.c.l.b16 %v278
    %v1401 = vunpack.c.h.b16 %v278
    %v1402 = vunpack.c.l.b16 %v279
    %v1403 = vunpack.c.h.b16 %v279
    %v1404 = vunpack.c.l.b16 %v280
    %v1405 = vunpack.c.h.b16 %v280
    %v1406 = vunpack.c.l.b16 %v281
    %v1407 = vunpack.c.h.b16 %v281
    %v1408 = vunpack.c.l.b16 %v282
    %v1409 = vunpack.c.h.b16 %v282
    %v1410 = vunpack.c.l.b16 %v283
    %v1411 = vunpack.c.h.b16 %v283
    %v1412 = vunpack.c.l.b16 %v284
    %v1413 = vunpack.c.h.b16 %v284
    %v1414 = vunpack.c.l.b16 %v285
    %v1415 = vunpack.c.h.b16 %v285
    %v1416 = vunpack.c.l.b16 %v286
    %v1417 = vunpack.c.h.b16 %v286
    %v1418 = vunpack.c.l.b16 %v287
    %v1419 = vunpack.c.h.b16 %v287
    %v1420 = vunpack.c.l.b16 %v288
    %v1421 = vunpack.c.h.b16 %v288
    %v1422 = vunpack.c.l.b16 %v289
    %v1423 = vunpack.c.h.b16 %v289
    %v1424 = vunpack.c.l.b16 %v290
    %v1425 = vunpack.c.h.b16 %v290
    %v1426 = vunpack.c.l.b16 %v291
    %v1427 = vunpack.c.h.b16 %v291
    %v1428 = vunpack.c.l.b16 %v292
    %v1429 = vunpack.c.h.b16 %v292
    %v1430 = vunpack.c.l.b16 %v293
    %v1431 = vunpack.c.h.b16 %v293
    %v1432 = vunpack.c.l.b16 %v294
    %v1433 = vunpack.c.h.b16 %v294
    %v1434 = vunpack.c.l.b16 %v295
    %v1435 = vunpack.c.h.b16 %v295
    %v1436 = vunpack.c.l.b16 %v296
    %v1437 = vunpack.c.h.b16 %v296
    %v1438 = vunpack.c.l.b16 %v297
    %v1439 = vunpack.c.h.b16 %v297
    %v1440 = vunpack.c.l.b16 %v298
    %v1441 = vunpack.c.h.b16 %v298
    %v1442 = vunpack.c.l.b16 %v299
    %v1443 = vunpack.c.h.b16 %v299
    %v1444 = vunpack.c.l.b16 %v300
    %v1445 = vunpack.c.h.b16 %v300
    %v1446 = vunpack.c.l.b16 %v301
    %v1447 = vunpack.c.h.b16 %v301
    %v1448 = vunpack.c.l.b16 %v302
    %v1449 = vunpack.c.h.b16 %v302
    %v1450 = vunpack.c.l.b16 %v303
    %v1451 = vunpack.c.h.b16 %v303
    %v1452 = vunpack.c.l.b16 %v304
    %v1453 = vunpack.c.h.b16 %v304
    %v1454 = vunpack.c.l.b16 %v305
    %v1455 = vunpack.c.h.b16 %v305
    %v1456 = vunpack.c.l.b16 %v306
    %v1457 = vunpack.c.h.b16 %v306
    %v1458 = vunpack.c.l.b16 %v307
    %v1459 = vunpack.c.h.b16 %v307
    %v1460 = vunpack.c.l.b16 %v308
    %v1461 = vunpack.c.h.b16 %v308
    %v1462 = vunpack.c.l.b16 %v309
    %v1463 = vunpack.c.h.b16 %v309
    %v1464 = vunpack.c.l.b16 %v310
    %v1465 = vunpack.c.h.b16 %v310
    %v1466 = vunpack.c.l.b16 %v311
    %v1467 = vunpack.c.h.b16 %v311
    %v1468 = vunpack.c.l.b16 %v312
    %v1469 = vunpack.c.h.b16 %v312
    %v1470 = vunpack.c.l.b16 %v313
    %v1471 = vunpack.c.h.b16 %v313
    %v1472 = vunpack.c.l.b16 %v314
    %v1473 = vunpack.c.h.b16 %v314
    %v1474 = vunpack.c.l.b16 %v315
    %v1475 = vunpack.c.h.b16 %v315
    %v1476 = vunpack.c.l.b16 %v316
    %v1477 = vunpack.c.h.b16 %v316
    %v1478 = vunpack.c.l.b16 %v317
    %v1479 = vunpack.c.h.b16 %v317
    %v1480 = vunpack.c.l.b16 %v318
    %v1481 = vunpack.c.h.b16 %v318
    %v1482 = vunpack.c.l.b16 %v319
    %v1483 = vunpack.c.h.b16 %v319
    %v1484 = vunpack.c.l.b16 %v320
    %v1485 = vunpack.c.h.b16 %v320
    %v1486 = vunpack.c.l.b16 %v321
    %v1487 = vunpack.c.h.b16 %v321
    %v1488 = vunpack.c.l.b16 %v322
    %v1489 = vunpack.c.h.b16 %v322
    %v1490 = vunpack.c.l.b16 %v323
    %v1491 = vunpack.c.h.b16 %v323
    %v1492 = vunpack.c.l.b16 %v324
    %v1493 = vunpack.c.h.b16 %v324
    %v1494 = vunpack.c.l.b16 %v325
    %v1495 = vunpack.c.h.b16 %v325
    %v1496 = vunpack.c.l.b16 %v326
    %v1497 = vunpack.c.h.b16 %v326
    %v1498 = vunpack.c.l.b16 %v327
    %v1499 = vunpack.c.h.b16 %v327
    %v1500 = vunpack.c.l.b16 %v328
    %v1501 = vunpack.c.h.b16 %v328
    %v1502 = vunpack.c.l.b16 %v329
    %v1503 = vunpack.c.h.b16 %v329
    %v1504 = vunpack.c.l.b16 %v330
    %v1505 = vunpack.c.h.b16 %v330
    %v1506 = vunpack.c.l.b16 %v331
    %v1507 = vunpack.c.h.b16 %v331
    %v1508 = vunpack.c.l.b16 %v332
    %v1509 = vunpack.c.h.b16 %v332
    %v1510 = vunpack.c.l.b16 %v333
    %v1511 = vunpack.c.h.b16 %v333
    %v1512 = vunpack.c.l.b16 %v334
    %v1513 = vunpack.c.h.b16 %v334
    %v1514 = vunpack.c.l.b16 %v335
    %v1515 = vunpack.c.h.b16 %v335
    %v1516 = vunpack.c.l.b16 %v336
    %v1517 = vunpack.c.h.b16 %v336
    %v1518 = vunpack.c.l.b16 %v337
    %v1519 = vunpack.c.h.b16 %v337
    %v1520 = vunpack.c.l.b16 %v338
    %v1521 = vunpack.c.h.b16 %v338
    %v1522 = vunpack.c.l.b16 %v339
    %v1523 = vunpack.c.h.b16 %v339
    %v1524 = vunpack.c.l.b16 %v340
    %v1525 = vunpack.c.h.b16 %v340
    %v1526 = vunpack.c.l.b16 %v341
    %v1527 = vunpack.c.h.b16 %v341
    %v1528 = vunpack.c.l.b16 %v342
    %v1529 = vunpack.c.h.b16 %v342
    %v1530 = vunpack.c.l.b16 %v343
    %v1531 = vunpack.c.h.b16 %v343
    %v1532 = vunpack.c.l.b16 %v344
    %v1533 = vunpack.c.h.b16 %v344
    %v1534 = vunpack.c.l.b16 %v345
    %v1535 = vunpack.c.h.b16 %v345
    %v1536 = vunpack.c.l.b16 %v346
    %v1537 = vunpack.c.h.b16 %v346
    %v1538 = vunpack.c.l.b16 %v347
    %v1539 = vunpack.c.h.b16 %v347
    %v1540 = vunpack.c.l.b16 %v348
    %v1541 = vunpack.c.h.b16 %v348
    %v1542 = vunpack.c.l.b16 %v349
    %v1543 = vunpack.c.h.b16 %v349
    %v1544 = vunpack.c.l.b16 %v350
    %v1545 = vunpack.c.h.b16 %v350
    %v1546 = vunpack.c.l.b16 %v351
    %v1547 = vunpack.c.h.b16 %v351
    %v1548 = vunpack.c.l.b16 %v352
    %v1549 = vunpack.c.h.b16 %v352
    %v1550 = vunpack.c.l.b16 %v353
    %v1551 = vunpack.c.h.b16 %v353
    %v1552 = vunpack.c.l.b16 %v354
    %v1553 = vunpack.c.h.b16 %v354
    %v1554 = vunpack.c.l.b16 %v355
    %v1555 = vunpack.c.h.b16 %v355
    %v1556 = vunpack.c.l.b16 %v356
    %v1557 = vunpack.c.h.b16 %v356
    %v1558 = vunpack.c.l.b16 %v357
    %v1559 = vunpack.c.h.b16 %v357
    %v1560 = vunpack.c.l.b16 %v358
    %v1561 = vunpack.c.h.b16 %v358
    %v1562 = vunpack.c.l.b16 %v359
    %v1563 = vunpack.c.h.b16 %v359
    %v1564 = vunpack.c.l.b16 %v360
    %v1565 = vunpack.c.h.b16 %v360
    %v1566 = vunpack.c.l.b16 %v361
    %v1567 = vunpack.c.h.b16 %v361
    %v1568 = vunpack.c.l.b16 %v362
    %v1569 = vunpack.c.h.b16 %v362
    %v1570 = vunpack.c.l.b16 %v363
    %v1571 = vunpack.c.h.b16 %v363
    %v1572 = vunpack.c.l.b16 %v364
    %v1573 = vunpack.c.h.b16 %v364
    %v1574 = vunpack.c.l.b16 %v365
    %v1575 = vunpack.c.h.b16 %v365
    %v1576 = vunpack.c.l.b16 %v366
    %v1577 = vunpack.c.h.b16 %v366
    %v1578 = vunpack.c.l.b16 %v367
    %v1579 = vunpack.c.h.b16 %v367
    %v1580 = vunpack.c.l.b16 %v368
    %v1581 = vunpack.c.h.b16 %v368
    %v1582 = vunpack.c.l.b16 %v369
    %v1583 = vunpack.c.h.b16 %v369
    %v1584 = vunpack.c.l.b16 %v370
    %v1585 = vunpack.c.h.b16 %v370
    %v1586 = vunpack.c.l.b16 %v371
    %v1587 = vunpack.c.h.b16 %v371
    %v1588 = vunpack.c.l.b16 %v372
    %v1589 = vunpack.c.h.b16 %v372
    %v1590 = vunpack.c.l.b16 %v373
    %v1591 = vunpack.c.h.b16 %v373
    %v1592 = vunpack.c.l.b16 %v374
    %v1593 = vunpack.c.h.b16 %v374
    %v1594 = vunpack.c.l.b16 %v375
    %v1595 = vunpack.c.h.b16 %v375
    %v1596 = vunpack.c.l.b16 %v376
    %v1597 = vunpack.c.h.b16 %v376
    %v1598 = vunpack.c.l.b16 %v377
    %v1599 = vunpack.c.h.b16 %v377
    %v1600 = vunpack.c.l.b16 %v378
    %v1601 = vunpack.c.h.b16 %v378
    %v1602 = vunpack.c.l.b16 %v379
    %v1603 = vunpack.c.h.b16 %v379
    %v1604 = vunpack.c.l.b16 %v380
    %v1605 = vunpack.c.h.b16 %v380
    %v1606 = vunpack.c.l.b16 %v381
    %v1607 = vunpack.c.h.b16 %v381
    %v1608 = vunpack.c.l.b16 %v382
    %v1609 = vunpack.c.h.b16 %v382
    %v1610 = vunpack.c.l.b16 %v383
    %v1611 = vunpack.c.h.b16 %v383
    %v1612 = vunpack.c.l.b16 %v384
    %v1613 = vunpack.c.h.b16 %v384
    %v1614 = vunpack.c.l.b16 %v385
    %v1615 = vunpack.c.h.b16 %v385
    %v1616 = vunpack.c.l.b16 %v386
    %v1617 = vunpack.c.h.b16 %v386
    %v1618 = vunpack.c.l.b16 %v387
    %v1619 = vunpack.c.h.b16 %v387
    %v1620 = vunpack.c.l.b16 %v388
    %v1621 = vunpack.c.h.b16 %v388
    %v1622 = vunpack.c.l.b16 %v389
    %v1623 = vunpack.c.h.b16 %v389
    %v1624 = vunpack.c.l.b16 %v390
    %v1625 = vunpack.c.h.b16 %v390
    %v1626 = vunpack.c.l.b16 %v391
    %v1627 = vunpack.c.h.b16 %v391
    %v1628 = vunpack.c.l.b16 %v392
    %v1629 = vunpack.c.h.b16 %v392
    %v1630 = vunpack.c.l.b16 %v393
    %v1631 = vunpack.c.h.b16 %v393
    %v1632 = vunpack.c.l.b16 %v394
    %v1633 = vunpack.c.h.b16 %v394
    %v1634 = vunpack.c.l.b16 %v395
    %v1635 = vunpack.c.h.b16 %v395
    %v1636 = vunpack.c.l.b16 %v396
    %v1637 = vunpack.c.h.b16 %v396
    %v1638 = vunpack.c.l.b16 %v397
    %v1639 = vunpack.c.h.b16 %v397
    %v1640 = vunpack.c.l.b16 %v398
    %v1641 = vunpack.c.h.b16 %v398
    %v1642 = vunpack.c.l.b16 %v399
    %v1643 = vunpack.c.h.b16 %v399
    %v1644 = vunpack.c.l.b16 %v400
    %v1645 = vunpack.c.h.b16 %v400
    %v1646 = vunpack.c.l.b16 %v401
    %v1647 = vunpack.c.h.b16 %v401
    %v1648 = vunpack.c.l.b16 %v402
    %v1649 = vunpack.c.h.b16 %v402
    %v1650 = vunpack.c.l.b16 %v403
    %v1651 = vunpack.c.h.b16 %v403
    %v1652 = vunpack.c.l.b16 %v404
    %v1653 = vunpack.c.h.b16 %v404
    %v1654 = vunpack.c.l.b16 %v405
    %v1655 = vunpack.c.h.b16 %v405
    %v1656 = vunpack.c.l.b16 %v406
    %v1657 = vunpack.c.h.b16 %v406
    %v1658 = vunpack.c.l.b16 %v407
    %v1659 = vunpack.c.h.b16 %v407
    %v1660 = vunpack.c.l.b16 %v408
    %v1661 = vunpack.c.h.b16 %v408
    %v1662 = vunpack.c.l.b16 %v409
    %v1663 = vunpack.c.h.b16 %v409
    %v1664 = vunpack.c.l.b16 %v410
    %v1665 = vunpack.c.h.b16 %v410
    %v1666 = vunpack.c.l.b16 %v411
    %v1667 = vunpack.c.h.b16 %v411
    %v1668 = vunpack.c.l.b16 %v412
    %v1669 = vunpack.c.h.b16 %v412
    %v1670 = vunpack.c.l.b16 %v413
    %v1671 = vunpack.c.h.b16 %v413
    %v1672 = vunpack.c.l.b16 %v414
    %v1673 = vunpack.c.h.b16 %v414
    %v1674 = vunpack.c.l.b16 %v415
    %v1675 = vunpack.c.h.b16 %v415
    %v1676 = vunpack.c.l.b16 %v416
    %v1677 = vunpack.c.h.b16 %v416
    %v1678 = vunpack.c.l.b16 %v417
    %v1679 = vunpack.c.h.b16 %v417
    %v1680 = vunpack.c.l.b16 %v418
    %v1681 = vunpack.c.h.b16 %v418
    %v1682 = vunpack.c.l.b16 %v419
    %v1683 = vunpack.c.h.b16 %v419
    %v1684 = vunpack.c.l.b16 %v420
    %v1685 = vunpack.c.h.b16 %v420
    %v1686 = vunpack.c.l.b16 %v421
    %v1687 = vunpack.c.h.b16 %v421
    %v1688 = vunpack.c.l.b16 %v422
    %v1689 = vunpack.c.h.b16 %v422
    %v1690 = vunpack.c.l.b16 %v423
    %v1691 = vunpack.c.h.b16 %v423
    %v1692 = vunpack.c.l.b16 %v424
    %v1693 = vunpack.c.h.b16 %v424
    %v1694 = vunpack.c.l.b16 %v425
    %v1695 = vunpack.c.h.b16 %v425
    %v1696 = vunpack.c.l.b16 %v426
    %v1697 = vunpack.c.h.b16 %v426
    %v1698 = vunpack.c.l.b16 %v427
    %v1699 = vunpack.c.h.b16 %v427
    %v1700 = vunpack.c.l.b16 %v428
    %v1701 = vunpack.c.h.b16 %v428
    %v1702 = vunpack.c.l.b16 %v429
    %v1703 = vunpack.c.h.b16 %v429
    %v1704 = vunpack.c.l.b16 %v430
    %v1705 = vunpack.c.h.b16 %v430
    %v1706 = vunpack.c.l.b16 %v431
    %v1707 = vunpack.c.h.b16 %v431
    %v1708 = vunpack.c.l.b16 %v432
    %v1709 = vunpack.c.h.b16 %v432
    %v1710 = vunpack.c.l.b16 %v433
    %v1711 = vunpack.c.h.b16 %v433
    %v1712 = vunpack.c.l.b16 %v434
    %v1713 = vunpack.c.h.b16 %v434
    %v1714 = vunpack.c.l.b16 %v435
    %v1715 = vunpack.c.h.b16 %v435
    %v1716 = vunpack.c.l.b16 %v436
    %v1717 = vunpack.c.h.b16 %v436
    %v1718 = vunpack.c.l.b16 %v437
    %v1719 = vunpack.c.h.b16 %v437
    %v1720 = vunpack.c.l.b16 %v438
    %v1721 = vunpack.c.h.b16 %v438
    %v1722 = vunpack.c.l.b16 %v439
    %v1723 = vunpack.c.h.b16 %v439
    %v1724 = vunpack.c.l.b16 %v440
    %v1725 = vunpack.c.h.b16 %v440
    %v1726 = vunpack.c.l.b16 %v441
    %v1727 = vunpack.c.h.b16 %v441
    %v1728 = vunpack.c.l.b16 %v442
    %v1729 = vunpack.c.h.b16 %v442
    %v1730 = vunpack.c.l.b16 %v443
    %v1731 = vunpack.c.h.b16 %v443
    %v1732 = vpack.c.b16 %v904, %v900
    %v1733 = vpack.c.b16 %v905, %v901
    %v1734 = vpack.c.b16 %v906, %v902
    %v1735 = vpack.c.b16 %v907, %v903
    %v1736 = vpack.c.b16 %v912, %v908
    %v1737 = vpack.c.b16 %v913, %v909
    %v1738 = vpack.c.b16 %v914, %v910
    %v1739 = vpack.c.b16 %v915, %v911
    %v1740 = vpack.c.b16 %v920, %v916
    %v1741 = vpack.c.b16 %v921, %v917
    %v1742 = vpack.c.b16 %v922, %v918
    %v1743 = vpack.c.b16 %v923, %v919
    %v1744 = vpack.c.b16 %v928, %v924
    %v1745 = vpack.c.b16 %v929, %v925
    %v1746 = vpack.c.b16 %v930, %v926
    %v1747 = vpack.c.b16 %v931, %v927
    %v1748 = vpack.c.b16 %v936, %v932
    %v1749 = vpack.c.b16 %v937, %v933
    %v1750 = vpack.c.b16 %v938, %v934
    %v1751 = vpack.c.b16 %v939, %v935
    %v1752 = vpack.c.b16 %v944, %v940
    %v1753 = vpack.c.b16 %v945, %v941
    %v1754 = vpack.c.b16 %v946, %v942
    %v1755 = vpack.c.b16 %v947, %v943
    %v1756 = vpack.c.b16 %v952, %v948
    %v1757 = vpack.c.b16 %v953, %v949
    %v1758 = vpack.c.b16 %v954, %v950
    %v1759 = vpack.c.b16 %v955, %v951
    %v1760 = vpack.c.b16 %v960, %v956
    %v1761 = vpack.c.b16 %v961, %v957
    %v1762 = vpack.c.b16 %v962, %v958
    %v1763 = vpack.c.b16 %v963, %v959
    %v1764 = vpack.c.b16 %v968, %v964
    %v1765 = vpack.c.b16 %v969, %v965
    %v1766 = vpack.c.b16 %v970, %v966
    %v1767 = vpack.c.b16 %v971, %v967
    %v1768 = vpack.c.b16 %v976, %v972
    %v1769 = vpack.c.b16 %v977, %v973
    %v1770 = vpack.c.b16 %v978, %v974
    %v1771 = vpack.c.b16 %v979, %v975
    %v1772 = vpack.c.b16 %v984, %v980
    %v1773 = vpack.c.b16 %v985, %v981
    %v1774 = vpack.c.b16 %v986, %v982
    %v1775 = vpack.c.b16 %v987, %v983
    %v1776 = vpack.c.b16 %v992, %v988
    %v1777 = vpack.c.b16 %v993, %v989
    %v1778 = vpack.c.b16 %v994, %v990
    %v1779 = vpack.c.b16 %v995, %v991
    %v1780 = vpack.c.b16 %v1000, %v996
    %v1781 = vpack.c.b16 %v1001, %v997
    %v1782 = vpack.c.b16 %v1002, %v998
    %v1783 = vpack.c.b16 %v1003, %v999
    %v1784 = vpack.c.b16 %v1008, %v1004
    %v1785 = vpack.c.b16 %v1009, %v1005
    %v1786 = vpack.c.b16 %v1010, %v1006
    %v1787 = vpack.c.b16 %v1011, %v1007
    %v1788 = vpack.c.b16 %v1016, %v1012
    %v1789 = vpack.c.b16 %v1017, %v1013
    %v1790 = vpack.c.b16 %v1018, %v1014
    %v1791 = vpack.c.b16 %v1019, %v1015
    %v1792 = vpack.c.b16 %v1024, %v1020
    %v1793 = vpack.c.b16 %v1025, %v1021
    %v1794 = vpack.c.b16 %v1026, %v1022
    %v1795 = vpack.c.b16 %v1027, %v1023
    %v1796 = vpack.c.b16 %v1032, %v1028
    %v1797 = vpack.c.b16 %v1033, %v1029
    %v1798 = vpack.c.b16 %v1034, %v1030
    %v1799 = vpack.c.b16 %v1035, %v1031
    %v1800 = vpack.c.b16 %v1040, %v1036
    %v1801 = vpack.c.b16 %v1041, %v1037
    %v1802 = vpack.c.b16 %v1042, %v1038
    %v1803 = vpack.c.b16 %v1043, %v1039
    %v1804 = vpack.c.b16 %v1048, %v1044
    %v1805 = vpack.c.b16 %v1049, %v1045
    %v1806 = vpack.c.b16 %v1050, %v1046
    %v1807 = vpack.c.b16 %v1051, %v1047
    %v1808 = vpack.c.b16 %v1056, %v1052
    %v1809 = vpack.c.b16 %v1057, %v1053
    %v1810 = vpack.c.b16 %v1058, %v1054
    %v1811 = vpack.c.b16 %v1059, %v1055
    %v1812 = vpack.c.b16 %v1064, %v1060
    %v1813 = vpack.c.b16 %v1065, %v1061
    %v1814 = vpack.c.b16 %v1066, %v1062
    %v1815 = vpack.c.b16 %v1067, %v1063
    %v1816 = vpack.c.b16 %v1072, %v1068
    %v1817 = vpack.c.b16 %v1073, %v1069
    %v1818 = vpack.c.b16 %v1074, %v1070
    %v1819 = vpack.c.b16 %v1075, %v1071
    %v1820 = vpack.c.b16 %v1080, %v1076
    %v1821 = vpack.c.b16 %v1081, %v1077
    %v1822 = vpack.c.b16 %v1082, %v1078
    %v1823 = vpack.c.b16 %v1083, %v1079
    %v1824 = vpack.c.b16 %v1088, %v1084
    %v1825 = vpack.c.b16 %v1089, %v1085
    %v1826 = vpack.c.b16 %v1090, %v1086
    %v1827 = vpack.c.b16 %v1091, %v1087
    %v1828 = vpack.c.b16 %v1096, %v1092
    %v1829 = vpack.c.b16 %v1097, %v1093
    %v1830 = vpack.c.b16 %v1098, %v1094
    %v1831 = vpack.c.b16 %v1099, %v1095
    %v1832 = vpack.c.b16 %v1104, %v1100
    %v1833 = vpack.c.b16 %v1105, %v1101
    %v1834 = vpack.c.b16 %v1106, %v1102
    %v1835 = vpack.c.b16 %v1107, %v1103
    %v1836 = vpack.c.b16 %v1112, %v1108
    %v1837 = vpack.c.b16 %v1113, %v1109
    %v1838 = vpack.c.b16 %v1114, %v1110
    %v1839 = vpack.c.b16 %v1115, %v1111
    %v1840 = vpack.c.b16 %v1120, %v1116
    %v1841 = vpack.c.b16 %v1121, %v1117
    %v1842 = vpack.c.b16 %v1122, %v1118
    %v1843 = vpack.c.b16 %v1123, %v1119
    %v1844 = vpack.c.b16 %v1128, %v1124
    %v1845 = vpack.c.b16 %v1129, %v1125
    %v1846 = vpack.c.b16 %v1130, %v1126
    %v1847 = vpack.c.b16 %v1131, %v1127
    %v1848 = vpack.c.b16 %v1136, %v1132
    %v1849 = vpack.c.b16 %v1137, %v1133
    %v1850 = vpack.c.b16 %v1138, %v1134
    %v1851 = vpack.c.b16 %v1139, %v1135
    %v1852 = vpack.c.b16 %v1144, %v1140
    %v1853 = vpack.c.b16 %v1145, %v1141
    %v1854 = vpack.c.b16 %v1146, %v1142
    %v1855 = vpack.c.b16 %v1147, %v1143
    %v1856 = vpack.c.b16 %v1152, %v1148
    %v1857 = vpack.c.b16 %v1153, %v1149
    %v1858 = vpack.c.b16 %v1154, %v1150
    %v1859 = vpack.c.b16 %v1155, %v1151
    %v1860 = vpack.c.b16 %v1160, %v1156
    %v1861 = vpack.c.b16 %v1161, %v1157
    %v1862 = vpack.c.b16 %v1162, %v1158
    %v1863 = vpack.c.b16 %v1163, %v1159
    %v1864 = vpack.c.b16 %v1168, %v1164
    %v1865 = vpack.c.b16 %v1169, %v1165
    %v1866 = vpack.c.b16 %v1170, %v1166
    %v1867 = vpack.c.b16 %v1171, %v1167
    %v1868 = vpack.c.b16 %v1176, %v1172
    %v1869 = vpack.c.b16 %v1177, %v1173
    %v1870 = vpack.c.b16 %v1178, %v1174
    %v1871 = vpack.c.b16 %v1179, %v1175
    %v1872 = vpack.c.b16 %v1184, %v1180
    %v1873 = vpack.c.b16 %v1185, %v1181
    %v1874 = vpack.c.b16 %v1186, %v1182
    %v1875 = vpack.c.b16 %v1187, %v1183
    %v1876 = vpack.c.b16 %v1192, %v1188
    %v1877 = vpack.c.b16 %v1193, %v1189
    %v1878 = vpack.c.b16 %v1194, %v1190
    %v1879 = vpack.c.b16 %v1195, %v1191
    %v1880 = vpack.c.b16 %v1200, %v1196
    %v1881 = vpack.c.b16 %v1201, %v1197
    %v1882 = vpack.c.b16 %v1202, %v1198
    %v1883 = vpack.c.b16 %v1203, %v1199
    %v1884 = vpack.c.b16 %v1208, %v1204
    %v1885 = vpack.c.b16 %v1209, %v1205
    %v1886 = vpack.c.b16 %v1210, %v1206
    %v1887 = vpack.c.b16 %v1211, %v1207
    %v1888 = vpack.c.b16 %v1216, %v1212
    %v1889 = vpack.c.b16 %v1217, %v1213
    %v1890 = vpack.c.b16 %v1218, %v1214
    %v1891 = vpack.c.b16 %v1219, %v1215
    %v1892 = vpack.c.b16 %v1224, %v1220
    %v1893 = vpack.c.b16 %v1225, %v1221
    %v1894 = vpack.c.b16 %v1226, %v1222
    %v1895 = vpack.c.b16 %v1227, %v1223
    %v1896 = vpack.c.b16 %v1232, %v1228
    %v1897 = vpack.c.b16 %v1233, %v1229
    %v1898 = vpack.c.b16 %v1234, %v1230
    %v1899 = vpack.c.b16 %v1235, %v1231
    %v1900 = vpack.c.b16 %v1240, %v1236
    %v1901 = vpack.c.b16 %v1241, %v1237
    %v1902 = vpack.c.b16 %v1242, %v1238
    %v1903 = vpack.c.b16 %v1243, %v1239
    %v1904 = vpack.c.b16 %v1248, %v1244
    %v1905 = vpack.c.b16 %v1249, %v1245
    %v1906 = vpack.c.b16 %v1250, %v1246
    %v1907 = vpack.c.b16 %v1251, %v1247
    %v1908 = vpack.c.b16 %v1256, %v1252
    %v1909 = vpack.c.b16 %v1257, %v1253
    %v1910 = vpack.c.b16 %v1258, %v1254
    %v1911 = vpack.c.b16 %v1259, %v1255
    %v1912 = vpack.c.b16 %v1264, %v1260
    %v1913 = vpack.c.b16 %v1265, %v1261
    %v1914 = vpack.c.b16 %v1266, %v1262
    %v1915 = vpack.c.b16 %v1267, %v1263
    %v1916 = vpack.c.b16 %v1272, %v1268
    %v1917 = vpack.c.b16 %v1273, %v1269
    %v1918 = vpack.c.b16 %v1274, %v1270
    %v1919 = vpack.c.b16 %v1275, %v1271
    %v1920 = vpack.c.b16 %v1280, %v1276
    %v1921 = vpack.c.b16 %v1281, %v1277
    %v1922 = vpack.c.b16 %v1282, %v1278
    %v1923 = vpack.c.b16 %v1283, %v1279
    %v1924 = vpack.c.b16 %v1288, %v1284
    %v1925 = vpack.c.b16 %v1289, %v1285
    %v1926 = vpack.c.b16 %v1290, %v1286
    %v1927 = vpack.c.b16 %v1291, %v1287
    %v1928 = vpack.c.b16 %v1296, %v1292
    %v1929 = vpack.c.b16 %v1297, %v1293
    %v1930 = vpack.c.b16 %v1298, %v1294
    %v1931 = vpack.c.b16 %v1299, %v1295
    %v1932 = vpack.c.b16 %v1304, %v1300
    %v1933 = vpack.c.b16 %v1305, %v1301
    %v1934 = vpack.c.b16 %v1306, %v1302
    %v1935 = vpack.c.b16 %v1307, %v1303
    %v1936 = vpack.c.b16 %v1312, %v1308
    %v1937 = vpack.c.b16 %v1313, %v1309
    %v1938 = vpack.c.b16 %v1314, %v1310
    %v1939 = vpack.c.b16 %v1315, %v1311
    %v1940 = vpack.c.b16 %v1320, %v1316
    %v1941 = vpack.c.b16 %v1321, %v1317
    %v1942 = vpack.c.b16 %v1322, %v1318
    %v1943 = vpack.c.b16 %v1323, %v1319
    %v1944 = vpack.c.b16 %v1328, %v1324
    %v1945 = vpack.c.b16 %v1329, %v1325
    %v1946 = vpack.c.b16 %v1330, %v1326
    %v1947 = vpack.c.b16 %v1331, %v1327
    %v1948 = vpack.c.b16 %v1336, %v1332
    %v1949 = vpack.c.b16 %v1337, %v1333
    %v1950 = vpack.c.b16 %v1338, %v1334
    %v1951 = vpack.c.b16 %v1339, %v1335
    %v1952 = vpack.c.b16 %v1344, %v1340
    %v1953 = vpack.c.b16 %v1345, %v1341
    %v1954 = vpack.c.b16 %v1346, %v1342
    %v1955 = vpack.c.b16 %v1347, %v1343
    %v1956 = vpack.c.b16 %v1352, %v1348
    %v1957 = vpack.c.b16 %v1353, %v1349
    %v1958 = vpack.c.b16 %v1354, %v1350
    %v1959 = vpack.c.b16 %v1355, %v1351
    %v1960 = vpack.c.b16 %v1360, %v1356
    %v1961 = vpack.c.b16 %v1361, %v1357
    %v1962 = vpack.c.b16 %v1362, %v1358
    %v1963 = vpack.c.b16 %v1363, %v1359
    %v1964 = vpack.c.b16 %v1368, %v1364
    %v1965 = vpack.c.b16 %v1369, %v1365
    %v1966 = vpack.c.b16 %v1370, %v1366
    %v1967 = vpack.c.b16 %v1371, %v1367
    %v1968 = vpack.c.b16 %v1376, %v1372
    %v1969 = vpack.c.b16 %v1377, %v1373
    %v1970 = vpack.c.b16 %v1378, %v1374
    %v1971 = vpack.c.b16 %v1379, %v1375
    %v1972 = vpack.c.b16 %v1384, %v1380
    %v1973 = vpack.c.b16 %v1385, %v1381
    %v1974 = vpack.c.b16 %v1386, %v1382
    %v1975 = vpack.c.b16 %v1387, %v1383
    %v1976 = vpack.c.b16 %v1392, %v1388
    %v1977 = vpack.c.b16 %v1393, %v1389
    %v1978 = vpack.c.b16 %v1394, %v1390
    %v1979 = vpack.c.b16 %v1395, %v1391
    %v1980 = vpack.c.b16 %v1400, %v1396
    %v1981 = vpack.c.b16 %v1401, %v1397
    %v1982 = vpack.c.b16 %v1402, %v1398
    %v1983 = vpack.c.b16 %v1403, %v1399
    %v1984 = vpack.c.b16 %v1408, %v1404
    %v1985 = vpack.c.b16 %v1409, %v1405
    %v1986 = vpack.c.b16 %v1410, %v1406
    %v1987 = vpack.c.b16 %v1411, %v1407
    %v1988 = vpack.c.b16 %v1416, %v1412
    %v1989 = vpack.c.b16 %v1417, %v1413
    %v1990 = vpack.c.b16 %v1418, %v1414
    %v1991 = vpack.c.b16 %v1419, %v1415
    %v1992 = vpack.c.b16 %v1424, %v1420
    %v1993 = vpack.c.b16 %v1425, %v1421
    %v1994 = vpack.c.b16 %v1426, %v1422
    %v1995 = vpack.c.b16 %v1427, %v1423
    %v1996 = vpack.c.b16 %v1432, %v1428
    %v1997 = vpack.c.b16 %v1433, %v1429
    %v1998 = vpack.c.b16 %v1434, %v1430
    %v1999 = vpack.c.b16 %v1435, %v1431
    %v2000 = vpack.c.b16 %v1440, %v1436
    %v2001 = vpack.c.b16 %v1441, %v1437
    %v2002 = vpack.c.b16 %v1442, %v1438
    %v2003 = vpack.c.b16 %v1443, %v1439
    %v2004 = vpack.c.b16 %v1448, %v1444
    %v2005 = vpack.c.b16 %v1449, %v1445
    %v2006 = vpack.c.b16 %v1450, %v1446
    %v2007 = vpack.c.b16 %v1451, %v1447
    %v2008 = vpack.c.b16 %v1456, %v1452
    %v2009 = vpack.c.b16 %v1457, %v1453
    %v2010 = vpack.c.b16 %v1458, %v1454
    %v2011 = vpack.c.b16 %v1459, %v1455
    %v2012 = vpack.c.b16 %v1464, %v1460
    %v2013 = vpack.c.b16 %v1465, %v1461
    %v2014 = vpack.c.b16 %v1466, %v1462
    %v2015 = vpack.c.b16 %v1467, %v1463
    %v2016 = vpack.c.b16 %v1472, %v1468
    %v2017 = vpack.c.b16 %v1473, %v1469
    %v2018 = vpack.c.b16 %v1474, %v1470
    %v2019 = vpack.c.b16 %v1475, %v1471
    %v2020 = vpack.c.b16 %v1480, %v1476
    %v2021 = vpack.c.b16 %v1481, %v1477
    %v2022 = vpack.c.b16 %v1482, %v1478
    %v2023 = vpack.c.b16 %v1483, %v1479
    %v2024 = vpack.c.b16 %v1488, %v1484
    %v2025 = vpack.c.b16 %v1489, %v1485
    %v2026 = vpack.c.b16 %v1490, %v1486
    %v2027 = vpack.c.b16 %v1491, %v1487
    %v2028 = vpack.c.b16 %v1496, %v1492
    %v2029 = vpack.c.b16 %v1497, %v1493
    %v2030 = vpack.c.b16 %v1498, %v1494
    %v2031 = vpack.c.b16 %v1499, %v1495
    %v2032 = vpack.c.b16 %v1504, %v1500
    %v2033 = vpack.c.b16 %v1505, %v1501
    %v2034 = vpack.c.b16 %v1506, %v1502
    %v2035 = vpack.c.b16 %v1507, %v1503
    %v2036 = vpack.c.b16 %v1512, %v1508
    %v2037 = vpack.c.b16 %v1513, %v1509
    %v2038 = vpack.c.b16 %v1514, %v1510
    %v2039 = vpack.c.b16 %v1515, %v1511
    %v2040 = vpack.c.b16 %v1520, %v1516
    %v2041 = vpack.c.b16 %v1521, %v1517
    %v2042 = vpack.c.b16 %v1522, %v1518
    %v2043 = vpack.c.b16 %v1523, %v1519
    %v2044 = vpack.c.b16 %v1528, %v1524
    %v2045 = vpack.c.b16 %v1529, %v1525
    %v2046 = vpack.c.b16 %v1530, %v1526
    %v2047 = vpack.c.b16 %v1531, %v1527
    %v2048 = vpack.c.b16 %v1536, %v1532
    %v2049 = vpack.c.b16 %v1537, %v1533
    %v2050 = vpack.c.b16 %v1538, %v1534
    %v2051 = vpack.c.b16 %v1539, %v1535
    %v2052 = vpack.c.b16 %v1544, %v1540
    %v2053 = vpack.c.b16 %v1545, %v1541
    %v2054 = vpack.c.b16 %v1546, %v1542
    %v2055 = vpack.c.b16 %v1547, %v1543
    %v2056 = vpack.c.b16 %v1552, %v1548
    %v2057 = vpack.c.b16 %v1553, %v1549
    %v2058 = vpack.c.b16 %v1554, %v1550
    %v2059 = vpack.c.b16 %v1555, %v1551
    %v2060 = vpack.c.b16 %v1560, %v1556
    %v2061 = vpack.c.b16 %v1561, %v1557
    %v2062 = vpack.c.b16 %v1562, %v1558
    %v2063 = vpack.c.b16 %v1563, %v1559
    %v2064 = vpack.c.b16 %v1568, %v1564
    %v2065 = vpack.c.b16 %v1569, %v1565
    %v2066 = vpack.c.b16 %v1570, %v1566
    %v2067 = vpack.c.b16 %v1571, %v1567
    %v2068 = vpack.c.b16 %v1576, %v1572
    %v2069 = vpack.c.b16 %v1577, %v1573
    %v2070 = vpack.c.b16 %v1578, %v1574
    %v2071 = vpack.c.b16 %v1579, %v1575
    %v2072 = vpack.c.b16 %v1584, %v1580
    %v2073 = vpack.c.b16 %v1585, %v1581
    %v2074 = vpack.c.b16 %v1586, %v1582
    %v2075 = vpack.c.b16 %v1587, %v1583
    %v2076 = vpack.c.b16 %v1592, %v1588
    %v2077 = vpack.c.b16 %v1593, %v1589
    %v2078 = vpack.c.b16 %v1594, %v1590
    %v2079 = vpack.c.b16 %v1595, %v1591
    %v2080 = vpack.c.b16 %v1600, %v1596
    %v2081 = vpack.c.b16 %v1601, %v1597
    %v2082 = vpack.c.b16 %v1602, %v1598
    %v2083 = vpack.c.b16 %v1603, %v1599
    %v2084 = vpack.c.b16 %v1608, %v1604
    %v2085 = vpack.c.b16 %v1609, %v1605
    %v2086 = vpack.c.b16 %v1610, %v1606
    %v2087 = vpack.c.b16 %v1611, %v1607
    %v2088 = vpack.c.b16 %v1616, %v1612
    %v2089 = vpack.c.b16 %v1617, %v1613
    %v2090 = vpack.c.b16 %v1618, %v1614
    %v2091 = vpack.c.b16 %v1619, %v1615
    %v2092 = vpack.c.b16 %v1624, %v1620
    %v2093 = vpack.c.b16 %v1625, %v1621
    %v2094 = vpack.c.b16 %v1626, %v1622
    %v2095 = vpack.c.b16 %v1627, %v1623
    %v2096 = vpack.c.b16 %v1632, %v1628
    %v2097 = vpack.c.b16 %v1633, %v1629
    %v2098 = vpack.c.b16 %v1634, %v1630
    %v2099 = vpack.c.b16 %v1635, %v1631
    %v2100 = vpack.c.b16 %v1640, %v1636
    %v2101 = vpack.c.b16 %v1641, %v1637
    %v2102 = vpack.c.b16 %v1642, %v1638
    %v2103 = vpack.c.b16 %v1643, %v1639
    %v2104 = vpack.c.b16 %v1648, %v1644
    %v2105 = vpack.c.b16 %v1649, %v1645
    %v2106 = vpack.c.b16 %v1650, %v1646
    %v2107 = vpack.c.b16 %v1651, %v1647
    %v2108 = vpack.c.b16 %v1656, %v1652
    %v2109 = vpack.c.b16 %v1657, %v1653
    %v2110 = vpack.c.b16 %v1658, %v1654
    %v2111 = vpack.c.b16 %v1659, %v1655
    %v2112 = vpack.c.b16 %v1664, %v1660
    %v2113 = vpack.c.b16 %v1665, %v1661
    %v2114 = vpack.c.b16 %v1666, %v1662
    %v2115 = vpack.c.b16 %v1667, %v1663
    %v2116 = vpack.c.b16 %v1672, %v1668
    %v2117 = vpack.c.b16 %v1673, %v1669
    %v2118 = vpack.c.b16 %v1674, %v1670
    %v2119 = vpack.c.b16 %v1675, %v1671
    %v2120 = vpack.c.b16 %v1680, %v1676
    %v2121 = vpack.c.b16 %v1681, %v1677
    %v2122 = vpack.c.b16 %v1682, %v1678
    %v2123 = vpack.c.b16 %v1683, %v1679
    %v2124 = vpack.c.b16 %v1688, %v1684
    %v2125 = vpack.c.b16 %v1689, %v1685
    %v2126 = vpack.c.b16 %v1690, %v1686
    %v2127 = vpack.c.b16 %v1691, %v1687
    %v2128 = vpack.c.b16 %v1696, %v1692
    %v2129 = vpack.c.b16 %v1697, %v1693
    %v2130 = vpack.c.b16 %v1698, %v1694
    %v2131 = vpack.c.b16 %v1699, %v1695
    %v2132 = vpack.c.b16 %v1704, %v1700
    %v2133 = vpack.c.b16 %v1705, %v1701
    %v2134 = vpack.c.b16 %v1706, %v1702
    %v2135 = vpack.c.b16 %v1707, %v1703
    %v2136 = vpack.c.b16 %v1712, %v1708
    %v2137 = vpack.c.b16 %v1713, %v1709
    %v2138 = vpack.c.b16 %v1714, %v1710
    %v2139 = vpack.c.b16 %v1715, %v1711
    %v2140 = vpack.c.b16 %v1720, %v1716
    %v2141 = vpack.c.b16 %v1721, %v1717
    %v2142 = vpack.c.b16 %v1722, %v1718
    %v2143 = vpack.c.b16 %v1723, %v1719
    %v2144 = vpack.c.b16 %v1728, %v1724
    %v2145 = vpack.c.b16 %v1729, %v1725
    %v2146 = vpack.c.b16 %v1730, %v1726
    %v2147 = vpack.c.b16 %v1731, %v1727
    %2564 = vmatpush.bf16.msra.mxu0 %v1760
    %2565 = vmatpush.bf16.msra.mxu0 %v1756
    %2566 = vmatpush.bf16.msra.mxu0 %v1752
    %2567 = vmatpush.bf16.msra.mxu0 %v1748
    %2568 = vmatpush.bf16.msra.mxu0 %v1744
    %2569 = vmatpush.bf16.msra.mxu0 %v1740
    %2570 = vmatpush.bf16.msra.mxu0 %v1736
    %2571 = vmatpush.bf16.msra.mxu0 %v1732
    %2572 = vmatmul.bf16.gmra.mxu0 %v456
    %v2573 = vpop.f32.mrf.mxu0
    %v2574 = vadd.f32 %v446, %v2573
    %v2575 = vpop.f32.mrf.mxu0
    %2576 = vdwg.mxu0
    %2577 = vmatpush.bf16.msra.mxu0 %v1792
    %2578 = vmatpush.bf16.msra.mxu0 %v1788
    %2579 = vmatpush.bf16.msra.mxu0 %v1784
    %2580 = vmatpush.bf16.msra.mxu0 %v1780
    %2581 = vmatpush.bf16.msra.mxu0 %v1776
    %2582 = vmatpush.bf16.msra.mxu0 %v1772
    %2583 = vmatpush.bf16.msra.mxu0 %v1768
    %2584 = vmatpush.bf16.msra.mxu0 %v1764
    %2585 = vmatmul.bf16.gmra.mxu0 %v457
    %v2586 = vpop.f32.mrf.mxu0
    %v2587 = vadd.f32 %v2574, %v2586
    %v2588 = vpop.f32.mrf.mxu0
    %2589 = vdwg.mxu0
    %2590 = vmatpush.bf16.msra.mxu0 %v1824
    %2591 = vmatpush.bf16.msra.mxu0 %v1820
    %2592 = vmatpush.bf16.msra.mxu0 %v1816
    %2593 = vmatpush.bf16.msra.mxu0 %v1812
    %2594 = vmatpush.bf16.msra.mxu0 %v1808
    %2595 = vmatpush.bf16.msra.mxu0 %v1804
    %2596 = vmatpush.bf16.msra.mxu0 %v1800
    %2597 = vmatpush.bf16.msra.mxu0 %v1796
    %2598 = vmatmul.bf16.gmra.mxu0 %v458
    %v2599 = vpop.f32.mrf.mxu0
    %v2600 = vadd.f32 %v2587, %v2599
    %v2601 = vpop.f32.mrf.mxu0
    %2602 = vdwg.mxu0
    %2603 = vmatpush.bf16.msra.mxu0 %v1856
    %2604 = vmatpush.bf16.msra.mxu0 %v1852
    %2605 = vmatpush.bf16.msra.mxu0 %v1848
    %2606 = vmatpush.bf16.msra.mxu0 %v1844
    %2607 = vmatpush.bf16.msra.mxu0 %v1840
    %2608 = vmatpush.bf16.msra.mxu0 %v1836
    %2609 = vmatpush.bf16.msra.mxu0 %v1832
    %2610 = vmatpush.bf16.msra.mxu0 %v1828
    %2611 = vmatmul.bf16.gmra.mxu0 %v459
    %v2612 = vpop.f32.mrf.mxu0
    %v2613 = vadd.f32 %v2600, %v2612
    %v2614 = vpop.f32.mrf.mxu0
    %2615 = vdwg.mxu0
    %2616 = vmatpush.bf16.msra.mxu0 %v1888
    %2617 = vmatpush.bf16.msra.mxu0 %v1884
    %2618 = vmatpush.bf16.msra.mxu0 %v1880
    %2619 = vmatpush.bf16.msra.mxu0 %v1876
    %2620 = vmatpush.bf16.msra.mxu0 %v1872
    %2621 = vmatpush.bf16.msra.mxu0 %v1868
    %2622 = vmatpush.bf16.msra.mxu0 %v1864
    %2623 = vmatpush.bf16.msra.mxu0 %v1860
    %2624 = vmatmul.bf16.gmra.mxu0 %v460
    %v2625 = vpop.f32.mrf.mxu0
    %v2626 = vadd.f32 %v2613, %v2625
    %v2627 = vpop.f32.mrf.mxu0
    %2628 = vdwg.mxu0
    %2629 = vmatpush.bf16.msra.mxu0 %v1920
    %2630 = vmatpush.bf16.msra.mxu0 %v1916
    %2631 = vmatpush.bf16.msra.mxu0 %v1912
    %2632 = vmatpush.bf16.msra.mxu0 %v1908
    %2633 = vmatpush.bf16.msra.mxu0 %v1904
    %2634 = vmatpush.bf16.msra.mxu0 %v1900
    %2635 = vmatpush.bf16.msra.mxu0 %v1896
    %2636 = vmatpush.bf16.msra.mxu0 %v1892
    %2637 = vmatmul.bf16.gmra.mxu0 %v461
    %v2638 = vpop.f32.mrf.mxu0
    %v2639 = vadd.f32 %v2626, %v2638
    %v2640 = vpop.f32.mrf.mxu0
    %2641 = vdwg.mxu0
    %2642 = vmatpush.bf16.msra.mxu0 %v1952
    %2643 = vmatpush.bf16.msra.mxu0 %v1948
    %2644 = vmatpush.bf16.msra.mxu0 %v1944
    %2645 = vmatpush.bf16.msra.mxu0 %v1940
    %2646 = vmatpush.bf16.msra.mxu0 %v1936
    %2647 = vmatpush.bf16.msra.mxu0 %v1932
    %2648 = vmatpush.bf16.msra.mxu0 %v1928
    %2649 = vmatpush.bf16.msra.mxu0 %v1924
    %2650 = vmatmul.bf16.gmra.mxu0 %v462
    %v2651 = vpop.f32.mrf.mxu0
    %v2652 = vadd.f32 %v2639, %v2651
    %v2653 = vpop.f32.mrf.mxu0
    %2654 = vdwg.mxu0
    %2655 = vmatpush.bf16.msra.mxu0 %v1984
    %2656 = vmatpush.bf16.msra.mxu0 %v1980
    %2657 = vmatpush.bf16.msra.mxu0 %v1976
    %2658 = vmatpush.bf16.msra.mxu0 %v1972
    %2659 = vmatpush.bf16.msra.mxu0 %v1968
    %2660 = vmatpush.bf16.msra.mxu0 %v1964
    %2661 = vmatpush.bf16.msra.mxu0 %v1960
    %2662 = vmatpush.bf16.msra.mxu0 %v1956
    %2663 = vmatmul.bf16.gmra.mxu0 %v463
    %v2664 = vpop.f32.mrf.mxu0
    %v2665 = vadd.f32 %v2652, %v2664
    %v2666 = vpop.f32.mrf.mxu0
    %2667 = vdwg.mxu0
    %2668 = vmatpush.bf16.msra.mxu0 %v2016
    %2669 = vmatpush.bf16.msra.mxu0 %v2012
    %2670 = vmatpush.bf16.msra.mxu0 %v2008
    %2671 = vmatpush.bf16.msra.mxu0 %v2004
    %2672 = vmatpush.bf16.msra.mxu0 %v2000
    %2673 = vmatpush.bf16.msra.mxu0 %v1996
    %2674 = vmatpush.bf16.msra.mxu0 %v1992
    %2675 = vmatpush.bf16.msra.mxu0 %v1988
    %2676 = vmatmul.bf16.gmra.mxu0 %v466
    %v2677 = vpop.f32.mrf.mxu0
    %v2678 = vadd.f32 %v2665, %v2677
    %v2679 = vpop.f32.mrf.mxu0
    %2680 = vdwg.mxu0
    %2681 = vmatpush.bf16.msra.mxu0 %v2048
    %2682 = vmatpush.bf16.msra.mxu0 %v2044
    %2683 = vmatpush.bf16.msra.mxu0 %v2040
    %2684 = vmatpush.bf16.msra.mxu0 %v2036
    %2685 = vmatpush.bf16.msra.mxu0 %v2032
    %2686 = vmatpush.bf16.msra.mxu0 %v2028
    %2687 = vmatpush.bf16.msra.mxu0 %v2024
    %2688 = vmatpush.bf16.msra.mxu0 %v2020
    %2689 = vmatmul.bf16.gmra.mxu0 %v467
    %v2690 = vpop.f32.mrf.mxu0
    %v2691 = vadd.f32 %v2678, %v2690
    %v2692 = vpop.f32.mrf.mxu0
    %2693 = vdwg.mxu0
    %2694 = vmatpush.bf16.msra.mxu0 %v2080
    %2695 = vmatpush.bf16.msra.mxu0 %v2076
    %2696 = vmatpush.bf16.msra.mxu0 %v2072
    %2697 = vmatpush.bf16.msra.mxu0 %v2068
    %2698 = vmatpush.bf16.msra.mxu0 %v2064
    %2699 = vmatpush.bf16.msra.mxu0 %v2060
    %2700 = vmatpush.bf16.msra.mxu0 %v2056
    %2701 = vmatpush.bf16.msra.mxu0 %v2052
    %2702 = vmatmul.bf16.gmra.mxu0 %v468
    %v2703 = vpop.f32.mrf.mxu0
    %v2704 = vadd.f32 %v2691, %v2703
    %v2705 = vpop.f32.mrf.mxu0
    %2706 = vdwg.mxu0
    %2707 = vmatpush.bf16.msra.mxu0 %v2112
    %2708 = vmatpush.bf16.msra.mxu0 %v2108
    %2709 = vmatpush.bf16.msra.mxu0 %v2104
    %2710 = vmatpush.bf16.msra.mxu0 %v2100
    %2711 = vmatpush.bf16.msra.mxu0 %v2096
    %2712 = vmatpush.bf16.msra.mxu0 %v2092
    %2713 = vmatpush.bf16.msra.mxu0 %v2088
    %2714 = vmatpush.bf16.msra.mxu0 %v2084
    %2715 = vmatmul.bf16.gmra.mxu0 %v469
    %v2716 = vpop.f32.mrf.mxu0
    %v2717 = vadd.f32 %v2704, %v2716
    %v2718 = vpop.f32.mrf.mxu0
    %2719 = vdwg.mxu0
    %2720 = vmatpush.bf16.msra.mxu0 %v2144
    %2721 = vmatpush.bf16.msra.mxu0 %v2140
    %2722 = vmatpush.bf16.msra.mxu0 %v2136
    %2723 = vmatpush.bf16.msra.mxu0 %v2132
    %2724 = vmatpush.bf16.msra.mxu0 %v2128
    %2725 = vmatpush.bf16.msra.mxu0 %v2124
    %2726 = vmatpush.bf16.msra.mxu0 %v2120
    %2727 = vmatpush.bf16.msra.mxu0 %v2116
    %2728 = vmatmul.bf16.gmra.mxu0 %v470
    %v2729 = vpop.f32.mrf.mxu0
    %v2730 = vadd.f32 %v2717, %v2729
    %v2731 = vpop.f32.mrf.mxu0
    %2732 = vdwg.mxu0
    %2733 = vmatpush.bf16.msra.mxu0 %v1761
    %2734 = vmatpush.bf16.msra.mxu0 %v1757
    %2735 = vmatpush.bf16.msra.mxu0 %v1753
    %2736 = vmatpush.bf16.msra.mxu0 %v1749
    %2737 = vmatpush.bf16.msra.mxu0 %v1745
    %2738 = vmatpush.bf16.msra.mxu0 %v1741
    %2739 = vmatpush.bf16.msra.mxu0 %v1737
    %2740 = vmatpush.bf16.msra.mxu0 %v1733
    %2741 = vmatmul.bf16.gmra.mxu0 %v456
    %v2742 = vpop.f32.mrf.mxu0
    %v2743 = vadd.f32 %v447, %v2742
    %v2744 = vpop.f32.mrf.mxu0
    %2745 = vdwg.mxu0
    %2746 = vmatpush.bf16.msra.mxu0 %v1793
    %2747 = vmatpush.bf16.msra.mxu0 %v1789
    %2748 = vmatpush.bf16.msra.mxu0 %v1785
    %2749 = vmatpush.bf16.msra.mxu0 %v1781
    %2750 = vmatpush.bf16.msra.mxu0 %v1777
    %2751 = vmatpush.bf16.msra.mxu0 %v1773
    %2752 = vmatpush.bf16.msra.mxu0 %v1769
    %2753 = vmatpush.bf16.msra.mxu0 %v1765
    %2754 = vmatmul.bf16.gmra.mxu0 %v457
    %v2755 = vpop.f32.mrf.mxu0
    %v2756 = vadd.f32 %v2743, %v2755
    %v2757 = vpop.f32.mrf.mxu0
    %2758 = vdwg.mxu0
    %2759 = vmatpush.bf16.msra.mxu0 %v1825
    %2760 = vmatpush.bf16.msra.mxu0 %v1821
    %2761 = vmatpush.bf16.msra.mxu0 %v1817
    %2762 = vmatpush.bf16.msra.mxu0 %v1813
    %2763 = vmatpush.bf16.msra.mxu0 %v1809
    %2764 = vmatpush.bf16.msra.mxu0 %v1805
    %2765 = vmatpush.bf16.msra.mxu0 %v1801
    %2766 = vmatpush.bf16.msra.mxu0 %v1797
    %2767 = vmatmul.bf16.gmra.mxu0 %v458
    %v2768 = vpop.f32.mrf.mxu0
    %v2769 = vadd.f32 %v2756, %v2768
    %v2770 = vpop.f32.mrf.mxu0
    %2771 = vdwg.mxu0
    %2772 = vmatpush.bf16.msra.mxu0 %v1857
    %2773 = vmatpush.bf16.msra.mxu0 %v1853
    %2774 = vmatpush.bf16.msra.mxu0 %v1849
    %2775 = vmatpush.bf16.msra.mxu0 %v1845
    %2776 = vmatpush.bf16.msra.mxu0 %v1841
    %2777 = vmatpush.bf16.msra.mxu0 %v1837
    %2778 = vmatpush.bf16.msra.mxu0 %v1833
    %2779 = vmatpush.bf16.msra.mxu0 %v1829
    %2780 = vmatmul.bf16.gmra.mxu0 %v459
    %v2781 = vpop.f32.mrf.mxu0
    %v2782 = vadd.f32 %v2769, %v2781
    %v2783 = vpop.f32.mrf.mxu0
    %2784 = vdwg.mxu0
    %2785 = vmatpush.bf16.msra.mxu0 %v1889
    %2786 = vmatpush.bf16.msra.mxu0 %v1885
    %2787 = vmatpush.bf16.msra.mxu0 %v1881
    %2788 = vmatpush.bf16.msra.mxu0 %v1877
    %2789 = vmatpush.bf16.msra.mxu0 %v1873
    %2790 = vmatpush.bf16.msra.mxu0 %v1869
    %2791 = vmatpush.bf16.msra.mxu0 %v1865
    %2792 = vmatpush.bf16.msra.mxu0 %v1861
    %2793 = vmatmul.bf16.gmra.mxu0 %v460
    %v2794 = vpop.f32.mrf.mxu0
    %v2795 = vadd.f32 %v2782, %v2794
    %v2796 = vpop.f32.mrf.mxu0
    %2797 = vdwg.mxu0
    %2798 = vmatpush.bf16.msra.mxu0 %v1921
    %2799 = vmatpush.bf16.msra.mxu0 %v1917
    %2800 = vmatpush.bf16.msra.mxu0 %v1913
    %2801 = vmatpush.bf16.msra.mxu0 %v1909
    %2802 = vmatpush.bf16.msra.mxu0 %v1905
    %2803 = vmatpush.bf16.msra.mxu0 %v1901
    %2804 = vmatpush.bf16.msra.mxu0 %v1897
    %2805 = vmatpush.bf16.msra.mxu0 %v1893
    %2806 = vmatmul.bf16.gmra.mxu0 %v461
    %v2807 = vpop.f32.mrf.mxu0
    %v2808 = vadd.f32 %v2795, %v2807
    %v2809 = vpop.f32.mrf.mxu0
    %2810 = vdwg.mxu0
    %2811 = vmatpush.bf16.msra.mxu0 %v1953
    %2812 = vmatpush.bf16.msra.mxu0 %v1949
    %2813 = vmatpush.bf16.msra.mxu0 %v1945
    %2814 = vmatpush.bf16.msra.mxu0 %v1941
    %2815 = vmatpush.bf16.msra.mxu0 %v1937
    %2816 = vmatpush.bf16.msra.mxu0 %v1933
    %2817 = vmatpush.bf16.msra.mxu0 %v1929
    %2818 = vmatpush.bf16.msra.mxu0 %v1925
    %2819 = vmatmul.bf16.gmra.mxu0 %v462
    %v2820 = vpop.f32.mrf.mxu0
    %v2821 = vadd.f32 %v2808, %v2820
    %v2822 = vpop.f32.mrf.mxu0
    %2823 = vdwg.mxu0
    %2824 = vmatpush.bf16.msra.mxu0 %v1985
    %2825 = vmatpush.bf16.msra.mxu0 %v1981
    %2826 = vmatpush.bf16.msra.mxu0 %v1977
    %2827 = vmatpush.bf16.msra.mxu0 %v1973
    %2828 = vmatpush.bf16.msra.mxu0 %v1969
    %2829 = vmatpush.bf16.msra.mxu0 %v1965
    %2830 = vmatpush.bf16.msra.mxu0 %v1961
    %2831 = vmatpush.bf16.msra.mxu0 %v1957
    %2832 = vmatmul.bf16.gmra.mxu0 %v463
    %v2833 = vpop.f32.mrf.mxu0
    %v2834 = vadd.f32 %v2821, %v2833
    %v2835 = vpop.f32.mrf.mxu0
    %2836 = vdwg.mxu0
    %2837 = vmatpush.bf16.msra.mxu0 %v2017
    %2838 = vmatpush.bf16.msra.mxu0 %v2013
    %2839 = vmatpush.bf16.msra.mxu0 %v2009
    %2840 = vmatpush.bf16.msra.mxu0 %v2005
    %2841 = vmatpush.bf16.msra.mxu0 %v2001
    %2842 = vmatpush.bf16.msra.mxu0 %v1997
    %2843 = vmatpush.bf16.msra.mxu0 %v1993
    %2844 = vmatpush.bf16.msra.mxu0 %v1989
    %2845 = vmatmul.bf16.gmra.mxu0 %v466
    %v2846 = vpop.f32.mrf.mxu0
    %v2847 = vadd.f32 %v2834, %v2846
    %v2848 = vpop.f32.mrf.mxu0
    %2849 = vdwg.mxu0
    %2850 = vmatpush.bf16.msra.mxu0 %v2049
    %2851 = vmatpush.bf16.msra.mxu0 %v2045
    %2852 = vmatpush.bf16.msra.mxu0 %v2041
    %2853 = vmatpush.bf16.msra.mxu0 %v2037
    %2854 = vmatpush.bf16.msra.mxu0 %v2033
    %2855 = vmatpush.bf16.msra.mxu0 %v2029
    %2856 = vmatpush.bf16.msra.mxu0 %v2025
    %2857 = vmatpush.bf16.msra.mxu0 %v2021
    %2858 = vmatmul.bf16.gmra.mxu0 %v467
    %v2859 = vpop.f32.mrf.mxu0
    %v2860 = vadd.f32 %v2847, %v2859
    %v2861 = vpop.f32.mrf.mxu0
    %2862 = vdwg.mxu0
    %2863 = vmatpush.bf16.msra.mxu0 %v2081
    %2864 = vmatpush.bf16.msra.mxu0 %v2077
    %2865 = vmatpush.bf16.msra.mxu0 %v2073
    %2866 = vmatpush.bf16.msra.mxu0 %v2069
    %2867 = vmatpush.bf16.msra.mxu0 %v2065
    %2868 = vmatpush.bf16.msra.mxu0 %v2061
    %2869 = vmatpush.bf16.msra.mxu0 %v2057
    %2870 = vmatpush.bf16.msra.mxu0 %v2053
    %2871 = vmatmul.bf16.gmra.mxu0 %v468
    %v2872 = vpop.f32.mrf.mxu0
    %v2873 = vadd.f32 %v2860, %v2872
    %v2874 = vpop.f32.mrf.mxu0
    %2875 = vdwg.mxu0
    %2876 = vmatpush.bf16.msra.mxu0 %v2113
    %2877 = vmatpush.bf16.msra.mxu0 %v2109
    %2878 = vmatpush.bf16.msra.mxu0 %v2105
    %2879 = vmatpush.bf16.msra.mxu0 %v2101
    %2880 = vmatpush.bf16.msra.mxu0 %v2097
    %2881 = vmatpush.bf16.msra.mxu0 %v2093
    %2882 = vmatpush.bf16.msra.mxu0 %v2089
    %2883 = vmatpush.bf16.msra.mxu0 %v2085
    %2884 = vmatmul.bf16.gmra.mxu0 %v469
    %v2885 = vpop.f32.mrf.mxu0
    %v2886 = vadd.f32 %v2873, %v2885
    %v2887 = vpop.f32.mrf.mxu0
    %2888 = vdwg.mxu0
    %2889 = vmatpush.bf16.msra.mxu0 %v2145
    %2890 = vmatpush.bf16.msra.mxu0 %v2141
    %2891 = vmatpush.bf16.msra.mxu0 %v2137
    %2892 = vmatpush.bf16.msra.mxu0 %v2133
    %2893 = vmatpush.bf16.msra.mxu0 %v2129
    %2894 = vmatpush.bf16.msra.mxu0 %v2125
    %2895 = vmatpush.bf16.msra.mxu0 %v2121
    %2896 = vmatpush.bf16.msra.mxu0 %v2117
    %2897 = vmatmul.bf16.gmra.mxu0 %v470
    %v2898 = vpop.f32.mrf.mxu0
    %v2899 = vadd.f32 %v2886, %v2898
    %v2900 = vpop.f32.mrf.mxu0
    %2901 = vdwg.mxu0
    %2902 = vmatpush.bf16.msra.mxu0 %v1762
    %2903 = vmatpush.bf16.msra.mxu0 %v1758
    %2904 = vmatpush.bf16.msra.mxu0 %v1754
    %2905 = vmatpush.bf16.msra.mxu0 %v1750
    %2906 = vmatpush.bf16.msra.mxu0 %v1746
    %2907 = vmatpush.bf16.msra.mxu0 %v1742
    %2908 = vmatpush.bf16.msra.mxu0 %v1738
    %2909 = vmatpush.bf16.msra.mxu0 %v1734
    %2910 = vmatmul.bf16.gmra.mxu0 %v456
    %v2911 = vpop.f32.mrf.mxu0
    %v2912 = vadd.f32 %v448, %v2911
    %v2913 = vpop.f32.mrf.mxu0
    %2914 = vdwg.mxu0
    %2915 = vmatpush.bf16.msra.mxu0 %v1794
    %2916 = vmatpush.bf16.msra.mxu0 %v1790
    %2917 = vmatpush.bf16.msra.mxu0 %v1786
    %2918 = vmatpush.bf16.msra.mxu0 %v1782
    %2919 = vmatpush.bf16.msra.mxu0 %v1778
    %2920 = vmatpush.bf16.msra.mxu0 %v1774
    %2921 = vmatpush.bf16.msra.mxu0 %v1770
    %2922 = vmatpush.bf16.msra.mxu0 %v1766
    %2923 = vmatmul.bf16.gmra.mxu0 %v457
    %v2924 = vpop.f32.mrf.mxu0
    %v2925 = vadd.f32 %v2912, %v2924
    %v2926 = vpop.f32.mrf.mxu0
    %2927 = vdwg.mxu0
    %2928 = vmatpush.bf16.msra.mxu0 %v1826
    %2929 = vmatpush.bf16.msra.mxu0 %v1822
    %2930 = vmatpush.bf16.msra.mxu0 %v1818
    %2931 = vmatpush.bf16.msra.mxu0 %v1814
    %2932 = vmatpush.bf16.msra.mxu0 %v1810
    %2933 = vmatpush.bf16.msra.mxu0 %v1806
    %2934 = vmatpush.bf16.msra.mxu0 %v1802
    %2935 = vmatpush.bf16.msra.mxu0 %v1798
    %2936 = vmatmul.bf16.gmra.mxu0 %v458
    %v2937 = vpop.f32.mrf.mxu0
    %v2938 = vadd.f32 %v2925, %v2937
    %v2939 = vpop.f32.mrf.mxu0
    %2940 = vdwg.mxu0
    %2941 = vmatpush.bf16.msra.mxu0 %v1858
    %2942 = vmatpush.bf16.msra.mxu0 %v1854
    %2943 = vmatpush.bf16.msra.mxu0 %v1850
    %2944 = vmatpush.bf16.msra.mxu0 %v1846
    %2945 = vmatpush.bf16.msra.mxu0 %v1842
    %2946 = vmatpush.bf16.msra.mxu0 %v1838
    %2947 = vmatpush.bf16.msra.mxu0 %v1834
    %2948 = vmatpush.bf16.msra.mxu0 %v1830
    %2949 = vmatmul.bf16.gmra.mxu0 %v459
    %v2950 = vpop.f32.mrf.mxu0
    %v2951 = vadd.f32 %v2938, %v2950
    %v2952 = vpop.f32.mrf.mxu0
    %2953 = vdwg.mxu0
    %2954 = vmatpush.bf16.msra.mxu0 %v1890
    %2955 = vmatpush.bf16.msra.mxu0 %v1886
    %2956 = vmatpush.bf16.msra.mxu0 %v1882
    %2957 = vmatpush.bf16.msra.mxu0 %v1878
    %2958 = vmatpush.bf16.msra.mxu0 %v1874
    %2959 = vmatpush.bf16.msra.mxu0 %v1870
    %2960 = vmatpush.bf16.msra.mxu0 %v1866
    %2961 = vmatpush.bf16.msra.mxu0 %v1862
    %2962 = vmatmul.bf16.gmra.mxu0 %v460
    %v2963 = vpop.f32.mrf.mxu0
    %v2964 = vadd.f32 %v2951, %v2963
    %v2965 = vpop.f32.mrf.mxu0
    %2966 = vdwg.mxu0
    %2967 = vmatpush.bf16.msra.mxu0 %v1922
    %2968 = vmatpush.bf16.msra.mxu0 %v1918
    %2969 = vmatpush.bf16.msra.mxu0 %v1914
    %2970 = vmatpush.bf16.msra.mxu0 %v1910
    %2971 = vmatpush.bf16.msra.mxu0 %v1906
    %2972 = vmatpush.bf16.msra.mxu0 %v1902
    %2973 = vmatpush.bf16.msra.mxu0 %v1898
    %2974 = vmatpush.bf16.msra.mxu0 %v1894
    %2975 = vmatmul.bf16.gmra.mxu0 %v461
    %v2976 = vpop.f32.mrf.mxu0
    %v2977 = vadd.f32 %v2964, %v2976
    %v2978 = vpop.f32.mrf.mxu0
    %2979 = vdwg.mxu0
    %2980 = vmatpush.bf16.msra.mxu0 %v1954
    %2981 = vmatpush.bf16.msra.mxu0 %v1950
    %2982 = vmatpush.bf16.msra.mxu0 %v1946
    %2983 = vmatpush.bf16.msra.mxu0 %v1942
    %2984 = vmatpush.bf16.msra.mxu0 %v1938
    %2985 = vmatpush.bf16.msra.mxu0 %v1934
    %2986 = vmatpush.bf16.msra.mxu0 %v1930
    %2987 = vmatpush.bf16.msra.mxu0 %v1926
    %2988 = vmatmul.bf16.gmra.mxu0 %v462
    %v2989 = vpop.f32.mrf.mxu0
    %v2990 = vadd.f32 %v2977, %v2989
    %v2991 = vpop.f32.mrf.mxu0
    %2992 = vdwg.mxu0
    %2993 = vmatpush.bf16.msra.mxu0 %v1986
    %2994 = vmatpush.bf16.msra.mxu0 %v1982
    %2995 = vmatpush.bf16.msra.mxu0 %v1978
    %2996 = vmatpush.bf16.msra.mxu0 %v1974
    %2997 = vmatpush.bf16.msra.mxu0 %v1970
    %2998 = vmatpush.bf16.msra.mxu0 %v1966
    %2999 = vmatpush.bf16.msra.mxu0 %v1962
    %3000 = vmatpush.bf16.msra.mxu0 %v1958
    %3001 = vmatmul.bf16.gmra.mxu0 %v463
    %v3002 = vpop.f32.mrf.mxu0
    %v3003 = vadd.f32 %v2990, %v3002
    %v3004 = vpop.f32.mrf.mxu0
    %3005 = vdwg.mxu0
    %3006 = vmatpush.bf16.msra.mxu0 %v2018
    %3007 = vmatpush.bf16.msra.mxu0 %v2014
    %3008 = vmatpush.bf16.msra.mxu0 %v2010
    %3009 = vmatpush.bf16.msra.mxu0 %v2006
    %3010 = vmatpush.bf16.msra.mxu0 %v2002
    %3011 = vmatpush.bf16.msra.mxu0 %v1998
    %3012 = vmatpush.bf16.msra.mxu0 %v1994
    %3013 = vmatpush.bf16.msra.mxu0 %v1990
    %3014 = vmatmul.bf16.gmra.mxu0 %v466
    %v3015 = vpop.f32.mrf.mxu0
    %v3016 = vadd.f32 %v3003, %v3015
    %v3017 = vpop.f32.mrf.mxu0
    %3018 = vdwg.mxu0
    %3019 = vmatpush.bf16.msra.mxu0 %v2050
    %3020 = vmatpush.bf16.msra.mxu0 %v2046
    %3021 = vmatpush.bf16.msra.mxu0 %v2042
    %3022 = vmatpush.bf16.msra.mxu0 %v2038
    %3023 = vmatpush.bf16.msra.mxu0 %v2034
    %3024 = vmatpush.bf16.msra.mxu0 %v2030
    %3025 = vmatpush.bf16.msra.mxu0 %v2026
    %3026 = vmatpush.bf16.msra.mxu0 %v2022
    %3027 = vmatmul.bf16.gmra.mxu0 %v467
    %v3028 = vpop.f32.mrf.mxu0
    %v3029 = vadd.f32 %v3016, %v3028
    %v3030 = vpop.f32.mrf.mxu0
    %3031 = vdwg.mxu0
    %3032 = vmatpush.bf16.msra.mxu0 %v2082
    %3033 = vmatpush.bf16.msra.mxu0 %v2078
    %3034 = vmatpush.bf16.msra.mxu0 %v2074
    %3035 = vmatpush.bf16.msra.mxu0 %v2070
    %3036 = vmatpush.bf16.msra.mxu0 %v2066
    %3037 = vmatpush.bf16.msra.mxu0 %v2062
    %3038 = vmatpush.bf16.msra.mxu0 %v2058
    %3039 = vmatpush.bf16.msra.mxu0 %v2054
    %3040 = vmatmul.bf16.gmra.mxu0 %v468
    %v3041 = vpop.f32.mrf.mxu0
    %v3042 = vadd.f32 %v3029, %v3041
    %v3043 = vpop.f32.mrf.mxu0
    %3044 = vdwg.mxu0
    %3045 = vmatpush.bf16.msra.mxu0 %v2114
    %3046 = vmatpush.bf16.msra.mxu0 %v2110
    %3047 = vmatpush.bf16.msra.mxu0 %v2106
    %3048 = vmatpush.bf16.msra.mxu0 %v2102
    %3049 = vmatpush.bf16.msra.mxu0 %v2098
    %3050 = vmatpush.bf16.msra.mxu0 %v2094
    %3051 = vmatpush.bf16.msra.mxu0 %v2090
    %3052 = vmatpush.bf16.msra.mxu0 %v2086
    %3053 = vmatmul.bf16.gmra.mxu0 %v469
    %v3054 = vpop.f32.mrf.mxu0
    %v3055 = vadd.f32 %v3042, %v3054
    %v3056 = vpop.f32.mrf.mxu0
    %3057 = vdwg.mxu0
    %3058 = vmatpush.bf16.msra.mxu0 %v2146
    %3059 = vmatpush.bf16.msra.mxu0 %v2142
    %3060 = vmatpush.bf16.msra.mxu0 %v2138
    %3061 = vmatpush.bf16.msra.mxu0 %v2134
    %3062 = vmatpush.bf16.msra.mxu0 %v2130
    %3063 = vmatpush.bf16.msra.mxu0 %v2126
    %3064 = vmatpush.bf16.msra.mxu0 %v2122
    %3065 = vmatpush.bf16.msra.mxu0 %v2118
    %3066 = vmatmul.bf16.gmra.mxu0 %v470
    %v3067 = vpop.f32.mrf.mxu0
    %v3068 = vadd.f32 %v3055, %v3067
    %v3069 = vpop.f32.mrf.mxu0
    %3070 = vdwg.mxu0
    %3071 = vmatpush.bf16.msra.mxu0 %v1763
    %3072 = vmatpush.bf16.msra.mxu0 %v1759
    %3073 = vmatpush.bf16.msra.mxu0 %v1755
    %3074 = vmatpush.bf16.msra.mxu0 %v1751
    %3075 = vmatpush.bf16.msra.mxu0 %v1747
    %3076 = vmatpush.bf16.msra.mxu0 %v1743
    %3077 = vmatpush.bf16.msra.mxu0 %v1739
    %3078 = vmatpush.bf16.msra.mxu0 %v1735
    %3079 = vmatmul.bf16.gmra.mxu0 %v456
    %v3080 = vpop.f32.mrf.mxu0
    %v3081 = vadd.f32 %v449, %v3080
    %v3082 = vpop.f32.mrf.mxu0
    %3083 = vdwg.mxu0
    %3084 = vmatpush.bf16.msra.mxu0 %v1795
    %3085 = vmatpush.bf16.msra.mxu0 %v1791
    %3086 = vmatpush.bf16.msra.mxu0 %v1787
    %3087 = vmatpush.bf16.msra.mxu0 %v1783
    %3088 = vmatpush.bf16.msra.mxu0 %v1779
    %3089 = vmatpush.bf16.msra.mxu0 %v1775
    %3090 = vmatpush.bf16.msra.mxu0 %v1771
    %3091 = vmatpush.bf16.msra.mxu0 %v1767
    %3092 = vmatmul.bf16.gmra.mxu0 %v457
    %v3093 = vpop.f32.mrf.mxu0
    %v3094 = vadd.f32 %v3081, %v3093
    %v3095 = vpop.f32.mrf.mxu0
    %3096 = vdwg.mxu0
    %3097 = vmatpush.bf16.msra.mxu0 %v1827
    %3098 = vmatpush.bf16.msra.mxu0 %v1823
    %3099 = vmatpush.bf16.msra.mxu0 %v1819
    %3100 = vmatpush.bf16.msra.mxu0 %v1815
    %3101 = vmatpush.bf16.msra.mxu0 %v1811
    %3102 = vmatpush.bf16.msra.mxu0 %v1807
    %3103 = vmatpush.bf16.msra.mxu0 %v1803
    %3104 = vmatpush.bf16.msra.mxu0 %v1799
    %3105 = vmatmul.bf16.gmra.mxu0 %v458
    %v3106 = vpop.f32.mrf.mxu0
    %v3107 = vadd.f32 %v3094, %v3106
    %v3108 = vpop.f32.mrf.mxu0
    %3109 = vdwg.mxu0
    %3110 = vmatpush.bf16.msra.mxu0 %v1859
    %3111 = vmatpush.bf16.msra.mxu0 %v1855
    %3112 = vmatpush.bf16.msra.mxu0 %v1851
    %3113 = vmatpush.bf16.msra.mxu0 %v1847
    %3114 = vmatpush.bf16.msra.mxu0 %v1843
    %3115 = vmatpush.bf16.msra.mxu0 %v1839
    %3116 = vmatpush.bf16.msra.mxu0 %v1835
    %3117 = vmatpush.bf16.msra.mxu0 %v1831
    %3118 = vmatmul.bf16.gmra.mxu0 %v459
    %v3119 = vpop.f32.mrf.mxu0
    %v3120 = vadd.f32 %v3107, %v3119
    %v3121 = vpop.f32.mrf.mxu0
    %3122 = vdwg.mxu0
    %3123 = vmatpush.bf16.msra.mxu0 %v1891
    %3124 = vmatpush.bf16.msra.mxu0 %v1887
    %3125 = vmatpush.bf16.msra.mxu0 %v1883
    %3126 = vmatpush.bf16.msra.mxu0 %v1879
    %3127 = vmatpush.bf16.msra.mxu0 %v1875
    %3128 = vmatpush.bf16.msra.mxu0 %v1871
    %3129 = vmatpush.bf16.msra.mxu0 %v1867
    %3130 = vmatpush.bf16.msra.mxu0 %v1863
    %3131 = vmatmul.bf16.gmra.mxu0 %v460
    %v3132 = vpop.f32.mrf.mxu0
    %v3133 = vadd.f32 %v3120, %v3132
    %v3134 = vpop.f32.mrf.mxu0
    %3135 = vdwg.mxu0
    %3136 = vmatpush.bf16.msra.mxu0 %v1923
    %3137 = vmatpush.bf16.msra.mxu0 %v1919
    %3138 = vmatpush.bf16.msra.mxu0 %v1915
    %3139 = vmatpush.bf16.msra.mxu0 %v1911
    %3140 = vmatpush.bf16.msra.mxu0 %v1907
    %3141 = vmatpush.bf16.msra.mxu0 %v1903
    %3142 = vmatpush.bf16.msra.mxu0 %v1899
    %3143 = vmatpush.bf16.msra.mxu0 %v1895
    %3144 = vmatmul.bf16.gmra.mxu0 %v461
    %v3145 = vpop.f32.mrf.mxu0
    %v3146 = vadd.f32 %v3133, %v3145
    %v3147 = vpop.f32.mrf.mxu0
    %3148 = vdwg.mxu0
    %3149 = vmatpush.bf16.msra.mxu0 %v1955
    %3150 = vmatpush.bf16.msra.mxu0 %v1951
    %3151 = vmatpush.bf16.msra.mxu0 %v1947
    %3152 = vmatpush.bf16.msra.mxu0 %v1943
    %3153 = vmatpush.bf16.msra.mxu0 %v1939
    %3154 = vmatpush.bf16.msra.mxu0 %v1935
    %3155 = vmatpush.bf16.msra.mxu0 %v1931
    %3156 = vmatpush.bf16.msra.mxu0 %v1927
    %3157 = vmatmul.bf16.gmra.mxu0 %v462
    %v3158 = vpop.f32.mrf.mxu0
    %v3159 = vadd.f32 %v3146, %v3158
    %v3160 = vpop.f32.mrf.mxu0
    %3161 = vdwg.mxu0
    %3162 = vmatpush.bf16.msra.mxu0 %v1987
    %3163 = vmatpush.bf16.msra.mxu0 %v1983
    %3164 = vmatpush.bf16.msra.mxu0 %v1979
    %3165 = vmatpush.bf16.msra.mxu0 %v1975
    %3166 = vmatpush.bf16.msra.mxu0 %v1971
    %3167 = vmatpush.bf16.msra.mxu0 %v1967
    %3168 = vmatpush.bf16.msra.mxu0 %v1963
    %3169 = vmatpush.bf16.msra.mxu0 %v1959
    %3170 = vmatmul.bf16.gmra.mxu0 %v463
    %v3171 = vpop.f32.mrf.mxu0
    %v3172 = vadd.f32 %v3159, %v3171
    %v3173 = vpop.f32.mrf.mxu0
    %3174 = vdwg.mxu0
    %3175 = vmatpush.bf16.msra.mxu0 %v2019
    %3176 = vmatpush.bf16.msra.mxu0 %v2015
    %3177 = vmatpush.bf16.msra.mxu0 %v2011
    %3178 = vmatpush.bf16.msra.mxu0 %v2007
    %3179 = vmatpush.bf16.msra.mxu0 %v2003
    %3180 = vmatpush.bf16.msra.mxu0 %v1999
    %3181 = vmatpush.bf16.msra.mxu0 %v1995
    %3182 = vmatpush.bf16.msra.mxu0 %v1991
    %3183 = vmatmul.bf16.gmra.mxu0 %v466
    %v3184 = vpop.f32.mrf.mxu0
    %v3185 = vadd.f32 %v3172, %v3184
    %v3186 = vpop.f32.mrf.mxu0
    %3187 = vdwg.mxu0
    %3188 = vmatpush.bf16.msra.mxu0 %v2051
    %3189 = vmatpush.bf16.msra.mxu0 %v2047
    %3190 = vmatpush.bf16.msra.mxu0 %v2043
    %3191 = vmatpush.bf16.msra.mxu0 %v2039
    %3192 = vmatpush.bf16.msra.mxu0 %v2035
    %3193 = vmatpush.bf16.msra.mxu0 %v2031
    %3194 = vmatpush.bf16.msra.mxu0 %v2027
    %3195 = vmatpush.bf16.msra.mxu0 %v2023
    %3196 = vmatmul.bf16.gmra.mxu0 %v467
    %v3197 = vpop.f32.mrf.mxu0
    %v3198 = vadd.f32 %v3185, %v3197
    %v3199 = vpop.f32.mrf.mxu0
    %3200 = vdwg.mxu0
    %3201 = vmatpush.bf16.msra.mxu0 %v2083
    %3202 = vmatpush.bf16.msra.mxu0 %v2079
    %3203 = vmatpush.bf16.msra.mxu0 %v2075
    %3204 = vmatpush.bf16.msra.mxu0 %v2071
    %3205 = vmatpush.bf16.msra.mxu0 %v2067
    %3206 = vmatpush.bf16.msra.mxu0 %v2063
    %3207 = vmatpush.bf16.msra.mxu0 %v2059
    %3208 = vmatpush.bf16.msra.mxu0 %v2055
    %3209 = vmatmul.bf16.gmra.mxu0 %v468
    %v3210 = vpop.f32.mrf.mxu0
    %v3211 = vadd.f32 %v3198, %v3210
    %v3212 = vpop.f32.mrf.mxu0
    %3213 = vdwg.mxu0
    %3214 = vmatpush.bf16.msra.mxu0 %v2115
    %3215 = vmatpush.bf16.msra.mxu0 %v2111
    %3216 = vmatpush.bf16.msra.mxu0 %v2107
    %3217 = vmatpush.bf16.msra.mxu0 %v2103
    %3218 = vmatpush.bf16.msra.mxu0 %v2099
    %3219 = vmatpush.bf16.msra.mxu0 %v2095
    %3220 = vmatpush.bf16.msra.mxu0 %v2091
    %3221 = vmatpush.bf16.msra.mxu0 %v2087
    %3222 = vmatmul.bf16.gmra.mxu0 %v469
    %v3223 = vpop.f32.mrf.mxu0
    %v3224 = vadd.f32 %v3211, %v3223
    %v3225 = vpop.f32.mrf.mxu0
    %3226 = vdwg.mxu0
    %3227 = vmatpush.bf16.msra.mxu0 %v2147
    %3228 = vmatpush.bf16.msra.mxu0 %v2143
    %3229 = vmatpush.bf16.msra.mxu0 %v2139
    %3230 = vmatpush.bf16.msra.mxu0 %v2135
    %3231 = vmatpush.bf16.msra.mxu0 %v2131
    %3232 = vmatpush.bf16.msra.mxu0 %v2127
    %3233 = vmatpush.bf16.msra.mxu0 %v2123
    %3234 = vmatpush.bf16.msra.mxu0 %v2119
    %3235 = vmatmul.bf16.gmra.mxu0 %v470
    %v3236 = vpop.f32.mrf.mxu0
    %v3237 = vadd.f32 %v3224, %v3236
    %v3238 = vpop.f32.mrf.mxu0
    %3239 = vdwg.mxu0
    %v3240 = vmax.f32 %v2730, 0.0
    %v3241 = vmax.f32 %v2899, 0.0
    %v3242 = vmax.f32 %v3068, 0.0
    %v3243 = vmax.f32 %v3237, 0.0
    %v3244 = vpack.c.bf16 %v3240, %v3240
    %v3245 = vpack.c.bf16 %v3241, %v3241
    %v3246 = vpack.c.bf16 %v3242, %v3242
    %v3247 = vpack.c.bf16 %v3243, %v3243
    %v3248 = vld [vmem:[%s3] sm:$0xf]
    %v3249 = vld [vmem:[%s3 + $0x4] sm:$0xf]
    %v3250 = vld [vmem:[%s3 + $0x8] sm:$0xf]
    %v3251 = vld [vmem:[%s3 + $0xc] sm:$0xf]
    %v3252 = vld [vmem:[%s3 + $0x10] sm:$0xf]
    %v3253 = vld [vmem:[%s3 + $0x14] sm:$0xf]
    %v3254 = vld [vmem:[%s3 + $0x18] sm:$0xf]
    %v3255 = vld [vmem:[%s3 + $0x1c] sm:$0xf]
    %v3256 = vld [vmem:[%s3 + $0x20] sm:$0xf]
    %v3257 = vld [vmem:[%s3 + $0x24] sm:$0xf]
    %v3258 = vld [vmem:[%s3 + $0x28] sm:$0xf]
    %v3259 = vld [vmem:[%s3 + $0x2c] sm:$0xf]
    %v3260 = vld [vmem:[%s3 + $0x30] sm:$0xf]
    %v3261 = vld [vmem:[%s3 + $0x34] sm:$0xf]
    %v3262 = vld [vmem:[%s3 + $0x38] sm:$0xf]
    %v3263 = vld [vmem:[%s3 + $0x3c] sm:$0xf]
    %v3264 = vld [vmem:[%s3 + $0x40] sm:$0xf]
    %v3265 = vld [vmem:[%s3 + $0x44] sm:$0xf]
    %v3266 = vld [vmem:[%s3 + $0x48] sm:$0xf]
    %v3267 = vld [vmem:[%s3 + $0x4c] sm:$0xf]
    %v3268 = vld [vmem:[%s3 + $0x50] sm:$0xf]
    %v3269 = vld [vmem:[%s3 + $0x54] sm:$0xf]
    %v3270 = vld [vmem:[%s3 + $0x58] sm:$0xf]
    %v3271 = vld [vmem:[%s3 + $0x5c] sm:$0xf]
    %v3272 = vld [vmem:[%s3 + $0x60] sm:$0xf]
    %v3273 = vld [vmem:[%s3 + $0x64] sm:$0xf]
    %v3274 = vld [vmem:[%s3 + $0x68] sm:$0xf]
    %v3275 = vld [vmem:[%s3 + $0x6c] sm:$0xf]
    %v3276 = vld [vmem:[%s3 + $0x70] sm:$0xf]
    %v3277 = vld [vmem:[%s3 + $0x74] sm:$0xf]
    %v3278 = vld [vmem:[%s3 + $0x78] sm:$0xf]
    %v3279 = vld [vmem:[%s3 + $0x7c] sm:$0xf]
    %v3280 = vld [vmem:[%s3 + $0x80] sm:$0xf]
    %v3281 = vld [vmem:[%s3 + $0x84] sm:$0xf]
    %v3282 = vld [vmem:[%s3 + $0x88] sm:$0xf]
    %v3283 = vld [vmem:[%s3 + $0x8c] sm:$0xf]
    %v3284 = vld [vmem:[%s3 + $0x90] sm:$0xf]
    %v3285 = vld [vmem:[%s3 + $0x94] sm:$0xf]
    %v3286 = vld [vmem:[%s3 + $0x98] sm:$0xf]
    %v3287 = vld [vmem:[%s3 + $0x9c] sm:$0xf]
    %v3288 = vld [vmem:[%s3 + $0xa0] sm:$0xf]
    %v3289 = vld [vmem:[%s3 + $0xa4] sm:$0xf]
    %v3290 = vld [vmem:[%s3 + $0xa8] sm:$0xf]
    %v3291 = vld [vmem:[%s3 + $0xac] sm:$0xf]
    %v3292 = vld [vmem:[%s3 + $0xb0] sm:$0xf]
    %v3293 = vld [vmem:[%s3 + $0xb4] sm:$0xf]
    %v3294 = vld [vmem:[%s3 + $0xb8] sm:$0xf]
    %v3295 = vld [vmem:[%s3 + $0xbc] sm:$0xf]
    %v3296 = vld [vmem:[%s3 + $0xc0] sm:$0xf]
    %v3297 = vld [vmem:[%s3 + $0xc4] sm:$0xf]
    %v3298 = vld [vmem:[%s3 + $0xc8] sm:$0xf]
    %v3299 = vld [vmem:[%s3 + $0xcc] sm:$0xf]
    %v3300 = vld [vmem:[%s3 + $0xd0] sm:$0xf]
    %v3301 = vld [vmem:[%s3 + $0xd4] sm:$0xf]
    %v3302 = vld [vmem:[%s3 + $0xd8] sm:$0xf]
    %v3303 = vld [vmem:[%s3 + $0xdc] sm:$0xf]
    %v3304 = vld [vmem:[%s3 + $0xe0] sm:$0xf]
    %v3305 = vld [vmem:[%s3 + $0xe4] sm:$0xf]
    %v3306 = vld [vmem:[%s3 + $0xe8] sm:$0xf]
    %v3307 = vld [vmem:[%s3 + $0xec] sm:$0xf]
    %v3308 = vld [vmem:[%s3 + $0xf0] sm:$0xf]
    %v3309 = vld [vmem:[%s3 + $0xf4] sm:$0xf]
    %v3310 = vld [vmem:[%s3 + $0xf8] sm:$0xf]
    %v3311 = vld [vmem:[%s3 + $0xfc] sm:$0xf]
    %v3376 = vunpack.c.l.b16 %v3248
    %v3377 = vunpack.c.l.b16 %v3249
    %v3378 = vunpack.c.l.b16 %v3250
    %v3379 = vunpack.c.l.b16 %v3251
    %v3380 = vunpack.c.l.b16 %v3252
    %v3381 = vunpack.c.l.b16 %v3253
    %v3382 = vunpack.c.l.b16 %v3254
    %v3383 = vunpack.c.l.b16 %v3255
    %v3384 = vunpack.c.l.b16 %v3256
    %v3385 = vunpack.c.l.b16 %v3257
    %v3386 = vunpack.c.l.b16 %v3258
    %v3387 = vunpack.c.l.b16 %v3259
    %v3388 = vunpack.c.l.b16 %v3260
    %v3389 = vunpack.c.l.b16 %v3261
    %v3390 = vunpack.c.l.b16 %v3262
    %v3391 = vunpack.c.l.b16 %v3263
    %v3392 = vunpack.c.l.b16 %v3264
    %v3393 = vunpack.c.l.b16 %v3265
    %v3394 = vunpack.c.l.b16 %v3266
    %v3395 = vunpack.c.l.b16 %v3267
    %v3396 = vunpack.c.l.b16 %v3268
    %v3397 = vunpack.c.l.b16 %v3269
    %v3398 = vunpack.c.l.b16 %v3270
    %v3399 = vunpack.c.l.b16 %v3271
    %v3400 = vunpack.c.l.b16 %v3272
    %v3401 = vunpack.c.l.b16 %v3273
    %v3402 = vunpack.c.l.b16 %v3274
    %v3403 = vunpack.c.l.b16 %v3275
    %v3404 = vunpack.c.l.b16 %v3276
    %v3405 = vunpack.c.l.b16 %v3277
    %v3406 = vunpack.c.l.b16 %v3278
    %v3407 = vunpack.c.l.b16 %v3279
    %v3408 = vunpack.c.l.b16 %v3280
    %v3409 = vunpack.c.l.b16 %v3281
    %v3410 = vunpack.c.l.b16 %v3282
    %v3411 = vunpack.c.l.b16 %v3283
    %v3412 = vunpack.c.l.b16 %v3284
    %v3413 = vunpack.c.l.b16 %v3285
    %v3414 = vunpack.c.l.b16 %v3286
    %v3415 = vunpack.c.l.b16 %v3287
    %v3416 = vunpack.c.l.b16 %v3288
    %v3417 = vunpack.c.l.b16 %v3289
    %v3418 = vunpack.c.l.b16 %v3290
    %v3419 = vunpack.c.l.b16 %v3291
    %v3420 = vunpack.c.l.b16 %v3292
    %v3421 = vunpack.c.l.b16 %v3293
    %v3422 = vunpack.c.l.b16 %v3294
    %v3423 = vunpack.c.l.b16 %v3295
    %v3424 = vunpack.c.l.b16 %v3296
    %v3425 = vunpack.c.l.b16 %v3297
    %v3426 = vunpack.c.l.b16 %v3298
    %v3427 = vunpack.c.l.b16 %v3299
    %v3428 = vunpack.c.l.b16 %v3300
    %v3429 = vunpack.c.l.b16 %v3301
    %v3430 = vunpack.c.l.b16 %v3302
    %v3431 = vunpack.c.l.b16 %v3303
    %v3432 = vunpack.c.l.b16 %v3304
    %v3433 = vunpack.c.l.b16 %v3305
    %v3434 = vunpack.c.l.b16 %v3306
    %v3435 = vunpack.c.l.b16 %v3307
    %v3436 = vunpack.c.l.b16 %v3308
    %v3437 = vunpack.c.l.b16 %v3309
    %v3438 = vunpack.c.l.b16 %v3310
    %v3439 = vunpack.c.l.b16 %v3311
    %v3440 = vpack.c.b16 %v3377, %v3376
    %v3441 = vpack.c.b16 %v3379, %v3378
    %v3442 = vpack.c.b16 %v3381, %v3380
    %v3443 = vpack.c.b16 %v3383, %v3382
    %v3444 = vpack.c.b16 %v3385, %v3384
    %v3445 = vpack.c.b16 %v3387, %v3386
    %v3446 = vpack.c.b16 %v3389, %v3388
    %v3447 = vpack.c.b16 %v3391, %v3390
    %v3448 = vpack.c.b16 %v3393, %v3392
    %v3449 = vpack.c.b16 %v3395, %v3394
    %v3450 = vpack.c.b16 %v3397, %v3396
    %v3451 = vpack.c.b16 %v3399, %v3398
    %v3452 = vpack.c.b16 %v3401, %v3400
    %v3453 = vpack.c.b16 %v3403, %v3402
    %v3454 = vpack.c.b16 %v3405, %v3404
    %v3455 = vpack.c.b16 %v3407, %v3406
    %v3456 = vpack.c.b16 %v3409, %v3408
    %v3457 = vpack.c.b16 %v3411, %v3410
    %v3458 = vpack.c.b16 %v3413, %v3412
    %v3459 = vpack.c.b16 %v3415, %v3414
    %v3460 = vpack.c.b16 %v3417, %v3416
    %v3461 = vpack.c.b16 %v3419, %v3418
    %v3462 = vpack.c.b16 %v3421, %v3420
    %v3463 = vpack.c.b16 %v3423, %v3422
    %v3464 = vpack.c.b16 %v3425, %v3424
    %v3465 = vpack.c.b16 %v3427, %v3426
    %v3466 = vpack.c.b16 %v3429, %v3428
    %v3467 = vpack.c.b16 %v3431, %v3430
    %v3468 = vpack.c.b16 %v3433, %v3432
    %v3469 = vpack.c.b16 %v3435, %v3434
    %v3470 = vpack.c.b16 %v3437, %v3436
    %v3471 = vpack.c.b16 %v3439, %v3438
    %3504 = vmatpush.bf16.msra.mxu0 %v3447
    %3505 = vmatpush.bf16.msra.mxu0 %v3446
    %3506 = vmatpush.bf16.msra.mxu0 %v3445
    %3507 = vmatpush.bf16.msra.mxu0 %v3444
    %3508 = vmatpush.bf16.msra.mxu0 %v3443
    %3509 = vmatpush.bf16.msra.mxu0 %v3442
    %3510 = vmatpush.bf16.msra.mxu0 %v3441
    %3511 = vmatpush.bf16.msra.mxu0 %v3440
    %3512 = vmatmul.bf16.gmra.mxu0 %v3244
    %v3513 = vpop.f32.mrf.mxu0
    %v3514 = vadd.f32 0.0, %v3513
    %v3515 = vpop.f32.mrf.mxu0
    %3516 = vdwg.mxu0
    %3517 = vmatpush.bf16.msra.mxu0 %v3455
    %3518 = vmatpush.bf16.msra.mxu0 %v3454
    %3519 = vmatpush.bf16.msra.mxu0 %v3453
    %3520 = vmatpush.bf16.msra.mxu0 %v3452
    %3521 = vmatpush.bf16.msra.mxu0 %v3451
    %3522 = vmatpush.bf16.msra.mxu0 %v3450
    %3523 = vmatpush.bf16.msra.mxu0 %v3449
    %3524 = vmatpush.bf16.msra.mxu0 %v3448
    %3525 = vmatmul.bf16.gmra.mxu0 %v3245
    %v3526 = vpop.f32.mrf.mxu0
    %v3527 = vadd.f32 %v3514, %v3526
    %v3528 = vpop.f32.mrf.mxu0
    %3529 = vdwg.mxu0
    %3530 = vmatpush.bf16.msra.mxu0 %v3463
    %3531 = vmatpush.bf16.msra.mxu0 %v3462
    %3532 = vmatpush.bf16.msra.mxu0 %v3461
    %3533 = vmatpush.bf16.msra.mxu0 %v3460
    %3534 = vmatpush.bf16.msra.mxu0 %v3459
    %3535 = vmatpush.bf16.msra.mxu0 %v3458
    %3536 = vmatpush.bf16.msra.mxu0 %v3457
    %3537 = vmatpush.bf16.msra.mxu0 %v3456
    %3538 = vmatmul.bf16.gmra.mxu0 %v3246
    %v3539 = vpop.f32.mrf.mxu0
    %v3540 = vadd.f32 %v3527, %v3539
    %v3541 = vpop.f32.mrf.mxu0
    %3542 = vdwg.mxu0
    %3543 = vmatpush.bf16.msra.mxu0 %v3471
    %3544 = vmatpush.bf16.msra.mxu0 %v3470
    %3545 = vmatpush.bf16.msra.mxu0 %v3469
    %3546 = vmatpush.bf16.msra.mxu0 %v3468
    %3547 = vmatpush.bf16.msra.mxu0 %v3467
    %3548 = vmatpush.bf16.msra.mxu0 %v3466
    %3549 = vmatpush.bf16.msra.mxu0 %v3465
    %3550 = vmatpush.bf16.msra.mxu0 %v3464
    %3551 = vmatmul.bf16.gmra.mxu0 %v3247
    %v3552 = vpop.f32.mrf.mxu0
    %v3553 = vadd.f32 %v3540, %v3552
    %v3554 = vpop.f32.mrf.mxu0
    %3555 = vdwg.mxu0
    %v3556 = vld [vmem:[%s4] sm:$0x1]
    %v3558 = vperm.slane %v3556, 0
    %v3560 = vadd.f32 %v3553, %v3558
    %3561 = vst [vmem:[%s7] sm:$0x3] %v3560
    %v3562 = vld [vmem:[%s5] sm:$0x1]
    %v3564 = vperm.slane %v3562, 0
    %v3566 = vadd.f32 %v3553, %v3564
    %vm3567 = vcmask 1041408
    %v3568 = vsel %vm3567, %v3566, -inf
    %3569 = vmax.xlane.f32.xlu0 %v3568
    %v3570 = vpop.xlane.xlu0 %3569
    %v3571 = vsub.f32 %v3566, %v3570
    %v3572 = vmul.f32 %v3571, 1.442695
    %v3573 = vpow.pop %v3572
    %v3574 = vsel %vm3567, %v3573, 0.0
    %3575 = vadd.xlane.f32.xlu0 %v3574
    %v3576 = vpop.xlane.xlu0 %3575
    %v3577 = vrcp.pop %v3576
    %v3578 = vmul.f32 %v3576, %v3577
    %v3579 = vsub.f32 1.0, %v3578
    %v3580 = vmul.f32 %v3577, %v3579
    %v3581 = vadd.f32 %v3577, %v3580
    %vm3582 = vweird.f32 %v3576
    %vm3583 = vweird.f32 %v3577
    %vm3584 = vmor %vm3582, %vm3583
    %v3585 = vsel %vm3584, %v3577, %v3581
    %v3586 = vand.u32 2147483647, %v3576
    %vm3587 = vcmp.eq.f32.partialorder %v3586, 8.507059e+37
    %v3588 = vand.u32 %v3576, 2147483648
    %v3589 = vor.u32 1.1754944e-38, %v3588
    %v3590 = vsel %vm3587, %v3589, %v3585
    %v3591 = vmul.f32 %v3573, %v3590
    %3592 = vst [vmem:[#allocation2] sm:$0x3] %v3591
    // Predicated region
    $region26: #{actor_critic_forward.3} parent=1 // pred_check
      _
    $region27: #{actor_critic_forward.3} parent=1 // pred_check_branch
      %3594 = sbr.rel (0) target = $region29
    $region28: #{actor_critic_forward.3} parent=1 // pred_region
      %3596 = vsyncadd [#allocation3], 0
      %s3598 = sshll.u32 [#allocation2], 4
      %s3599 = int_to_ptr.vmem [resolvable:$true] %s3598
      %s3600 = sshll.u32 %s6, 4
      %s3601 = int_to_ptr.hbm [resolvable:$true] %s3600
      %3603 = dma.vmem_to_hbm [thread:$0]  %s3599, 32, %s3601, [#allocation3]
    $region29: #{actor_critic_forward.3} parent=1 // pred_fallthru
      _
    // Predicated region
    $region30: #{actor_critic_forward.3} parent=1 // pred_check
      _
    $region31: #{actor_critic_forward.3} parent=1 // pred_check_branch
      %3605 = sbr.rel (0) target = $region33
    $region32: #{actor_critic_forward.3} parent=1 // pred_region
      _
    $region33: #{actor_critic_forward.3} parent=1 // pred_fallthru
      _
    // Predicated region
    $region34: #{actor_critic_forward.3} parent=1 // pred_check
      _
    $region35: #{actor_critic_forward.3} parent=1 // pred_check_branch
      %3607 = sbr.rel (0) target = $region37
    $region36: #{actor_critic_forward.3} parent=1 // pred_region
      %3609 = dma.done [#allocation3], 32
    $region37: #{actor_critic_forward.3} parent=1 // pred_fallthru
      _
    // Predicated region
    $region38: #{actor_critic_forward.3} parent=1 // pred_check
      _
    $region39: #{actor_critic_forward.3} parent=1 // pred_check_branch
      %3611 = sbr.rel (0) target = $region41
    $region40: #{actor_critic_forward.3} parent=1 // pred_region
      _
    $region41: #{actor_critic_forward.3} parent=1 // pred_fallthru
      _
    %3612 = vsyncpa [#allocation3], 1

</llo_original>
